<compile_context>
chip_gen: v6e
topology: v6e:2x2x1
jax: 0.10.0
libtpu: 0.0.40
codegen_flags: <defaults>
</compile_context>

<pallas_src>
import jax
import jax.numpy as jnp
from jax import lax
from jax.experimental import pallas as pl
from jax.experimental.pallas import tpu as pltpu


# ---------------------------------------------------------------- kernel ----
def sppf_kernel(x_ref, w1_ref, b1_ref, w2_ref, b2_ref, o_ref, padh_ref):
    H = o_ref.shape[1]
    W = o_ref.shape[2]
    HW = H * W
    Cp = padh_ref.shape[-1]       # padded hidden channels (multiple of 128)
    C1p = x_ref.shape[-1]
    C2p = o_ref.shape[-1]

    # Zero the halo rows of the H-pooling scratch.  Interior rows are fully
    # overwritten before every read.  (Deliberately not guarded with
    # program_id == 0 — see header note about megacore-private scratch.)
    padh_ref[0:2] = jnp.zeros((2, W, Cp), jnp.float32)
    padh_ref[H + 2:H + 4] = jnp.zeros((2, W, Cp), jnp.float32)

    x = x_ref[0]                                   # (H, W, C1p) bf16, NHWC
    xf = x.reshape(HW, C1p)                        # layout-free (W % 8 == 0)

    # cv1: 1x1 conv (BN folded into weights) + bias + ReLU.
    # bf16 operands on the MXU, f32 accumulate.
    a = jnp.maximum(
        jnp.dot(xf, w1_ref[...], preferred_element_type=jnp.float32)
        + b1_ref[...],
        0.0)                                       # (HW, Cp) f32, >= 0

    # Column index (broadcasts over H and lanes) used to zero the wrapped
    # columns of the circular rolls in the W-direction pooling.
    col = lax.broadcasted_iota(jnp.int32, (1, W, 1), 1)

    def maxpool5(t):
        """5x5 max pool, stride 1, pad 2.  t: (H, W, Cp) f32, t >= 0.

        Zero padding == -inf padding because the input is post-ReLU (>= 0).
        Separable:
          * H direction: shifted reads through a zero-halo VMEM scratch
            (offsets on the major dim -> aligned, unmasked loads/stores).
          * W direction: pltpu.roll along the sublane axis (XLU slot, no VMEM
            traffic) with masks zeroing the wrapped columns.
        """
        padh_ref[2:H + 2] = t
        r = padh_ref[0:H]
        for i in range(1, 5):
            r = jnp.maximum(r, padh_ref[i:i + H])
        out = r
        for k in (1, 2):
            # t[:, j+k] at column j (zero beyond the right edge)
            fwd = jnp.where(col < W - k,
                            pltpu.roll(r, shift=W - k, axis=1), 0.0)
            # t[:, j-k] at column j (zero beyond the left edge)
            bwd = jnp.where(col >= k,
                            pltpu.roll(r, shift=k, axis=1), 0.0)
            out = jnp.maximum(out, jnp.maximum(fwd, bwd))
        return out

    # cv2 as 4 accumulating partial matmuls over [a, y1, y2, y3] (no concat).
    acc = jnp.dot(a.astype(jnp.bfloat16), w2_ref[0],
                  preferred_element_type=jnp.float32)            # (HW, C2p)
    y = a.reshape(H, W, Cp)
    for i in range(1, 4):
        y = maxpool5(y)
        acc = acc + jnp.dot(y.reshape(HW, Cp).astype(jnp.bfloat16), w2_ref[i],
                            preferred_element_type=jnp.float32)

    out = jnp.maximum(acc + b2_ref[...], 0.0)      # (HW, C2p) f32
    o_ref[0] = out.reshape(H, W, C2p)


# --------------------------------------------------------------- wrapper ----
def _round_up(v, m):
    return (v + m - 1) // m * m


def sppf_forward(x_nchw, w1p, b1p, w2p, b2p, c2_out):
    """x_nchw: (N, C1, H, W) f32.  Params are pre-folded / padded (below)."""
    N, C1, H, W = x_nchw.shape
    C1p, Cp = w1p.shape
    C2p = w2p.shape[2]

    # NCHW -> NHWC (channels on lanes), bf16, zero-pad channels to lane width.
    # TODO(synk): in a full model keep activations NHWC/bf16 upstream so this
    # transpose/pad is fused into the producer rather than an extra HBM pass.
    xl = jnp.transpose(x_nchw.astype(jnp.bfloat16), (0, 2, 3, 1))
    if C1p > C1:
        xl = jnp.pad(xl, ((0, 0), (0, 0), (0, 0), (0, C1p - C1)))

    # Explicit scoped-VMEM budget sized from the per-step footprint
    # (defaults: 16 MiB v5e / 32 MiB v6e+), capped below v7x's 64 MiB.
    est = (2 * H * W * C1p * 2                    # x block, 2-buffered, bf16
           + 2 * H * W * C2p * 4                  # out block, 2-buffered, f32
           + 2 * (C1p * Cp + 4 * Cp * C2p) * 2    # bf16 weights, worst case x2
           + (H + 4) * W * Cp * 4                 # H-halo scratch, f32
           + 8 * H * W * max(Cp, C2p) * 4)        # live f32 intermediates
    vmem_limit = int(min(max(est + (4 << 20), 32 << 20), 56 << 20))

    def build(single_buffer_weights):
        def const_spec(shape):
            if single_buffer_weights:
                return pl.BlockSpec(shape, lambda n: (0,) * len(shape),
                                    pipeline_mode=pl.Buffered(1))
            return pl.BlockSpec(shape, lambda n: (0,) * len(shape))

        return pl.pallas_call(
            sppf_kernel,
            out_shape=jax.ShapeDtypeStruct((N, H, W, C2p), jnp.float32),
            grid_spec=pltpu.PrefetchScalarGridSpec(
                num_scalar_prefetch=0,
                grid=(N,),
                in_specs=[
                    pl.BlockSpec((1, H, W, C1p), lambda n: (n, 0, 0, 0)),
                    const_spec((C1p, Cp)),        # cv1 weight (bf16)
                    const_spec((1, Cp)),          # cv1 bias   (f32)
                    const_spec((4, Cp, C2p)),     # cv2 weight, 4 branch chunks
                    const_spec((1, C2p)),         # cv2 bias
                ],
                out_specs=pl.BlockSpec((1, H, W, C2p), lambda n: (n, 0, 0, 0)),
                scratch_shapes=[
                    pltpu.VMEM((H + 4, W, Cp), jnp.float32),   # H-halo buffer
                ]),
            compiler_params=pltpu.CompilerParams(
                dimension_semantics=("parallel",),
                vmem_limit_bytes=vmem_limit),
        )

    try:
        out_nhwc = build(True)(xl, w1p, b1p, w2p, b2p)
    except Exception:
        # Perf-only fallback for JAX builds that reject
        # pipeline_mode=pl.Buffered(1) on constant-index weight BlockSpecs.
        out_nhwc = build(False)(xl, w1p, b1p, w2p, b2p)

    # Slice off padded output channels, back to NCHW.
    return jnp.transpose(out_nhwc[..., :c2_out], (0, 3, 1, 2))


# ------------------------------------------------------- param folding ------
def fold_conv_bn(w, conv_b, gamma, beta, mean, var, eps=1e-5):
    """Fold eval-mode BatchNorm into the 1x1 conv weight and a bias.

    w: (Cout, Cin).  Returns (w_folded, bias): w_folded @ x + bias == BN(conv(x)).
    """
    scale = gamma / jnp.sqrt(var + eps)
    w_f = (w * scale[:, None]).astype(jnp.float32)
    b_f = (beta + scale * (conv_b - mean)).astype(jnp.float32)
    return w_f, b_f


def prepare_params(w1_f, b1_f, w2_f, b2_f, lane=128):
    """Transpose to channel-last matmul orientation, split cv2 into 4 branch
    chunks, zero-pad channel dims to `lane`, and cast weights to bf16."""
    C_, C1 = w1_f.shape
    C2, C4 = w2_f.shape
    assert C4 == 4 * C_
    C1p, Cp, C2p = _round_up(C1, lane), _round_up(C_, lane), _round_up(C2, lane)

    w1p = jnp.zeros((C1p, Cp), jnp.float32).at[:C1, :C_].set(w1_f.T)
    b1p = jnp.zeros((1, Cp), jnp.float32).at[0, :C_].set(b1_f)

    w2t = w2_f.T.reshape(4, C_, C2)              # chunks for [a, y1, y2, y3]
    w2p = jnp.zeros((4, Cp, C2p), jnp.float32).at[:, :C_, :C2].set(w2t)
    b2p = jnp.zeros((1, C2p), jnp.float32).at[0, :C2].set(b2_f)
    # bf16 weights for the MXU; biases stay f32 (added to the f32 accumulator).
    return w1p.astype(jnp.bfloat16), b1p, w2p.astype(jnp.bfloat16), b2p


# ------------------------------------------------------------- reference ----
def sppf_reference(x, w1_f, b1_f, w2_f, b2_f, mm_dtype=jnp.float32):
    """Pure-JAX SPPF reference.  mm_dtype=bf16 mirrors the kernel's matmul
    numerics (operands bf16, accumulate f32); mm_dtype=f32 is the exact
    module semantics."""
    def cna(t, w, b):
        y = jnp.einsum("oi,nihw->nohw", w.astype(mm_dtype), t.astype(mm_dtype),
                       preferred_element_type=jnp.float32)
        return jnp.maximum(y + b.reshape(1, -1, 1, 1), 0.0)

    def mp(t):
        return lax.reduce_window(
            t, -jnp.inf, lax.max,
            window_dimensions=(1, 1, 5, 5), window_strides=(1, 1, 1, 1),
            padding=((0, 0), (0, 0), (2, 2), (2, 2)))

    a = cna(x, w1_f, b1_f)
    y1 = mp(a)
    y2 = mp(y1)
    y3 = mp(y2)
    return cna(jnp.concatenate([a, y1, y2, y3], axis=1), w2_f, b2_f)


# ------------------------------------------------------------------ main ----
if __name__ == "__main__":
    key = jax.random.PRNGKey(0)
    N, C1, H, W = 2, 4, 16, 16
    C2 = 8
    C_ = C1 // 2

    ks = jax.random.split(key, 13)
    x = jax.random.normal(ks[0], (N, C1, H, W), jnp.float32)

    # cv1 parameters (conv 1x1 weight, conv bias, BN gamma/beta/mean/var)
    w1_raw = jax.random.normal(ks[1], (C_, C1), jnp.float32) * 0.5
    cb1 = jax.random.normal(ks[2], (C_,), jnp.float32) * 0.1
    g1 = 1.0 + 0.1 * jax.random.normal(ks[3], (C_,), jnp.float32)
    be1 = 0.1 * jax.random.normal(ks[4], (C_,), jnp.float32)
    m1 = 0.1 * jax.random.normal(ks[5], (C_,), jnp.float32)
    v1 = jax.random.uniform(ks[6], (C_,), jnp.float32, 0.5, 1.5)

    # cv2 parameters
    w2_raw = jax.random.normal(ks[7], (C2, 4 * C_), jnp.float32) * 0.5
    cb2 = jax.random.normal(ks[8], (C2,), jnp.float32) * 0.1
    g2 = 1.0 + 0.1 * jax.random.normal(ks[9], (C2,), jnp.float32)
    be2 = 0.1 * jax.random.normal(ks[10], (C2,), jnp.float32)
    m2 = 0.1 * jax.random.normal(ks[11], (C2,), jnp.float32)
    v2 = jax.random.uniform(ks[12], (C2,), jnp.float32, 0.5, 1.5)

    # TODO(synk): BatchNorm implemented in eval mode (running stats);
    # training-mode batch statistics are not reproduced.
    w1_f, b1_f = fold_conv_bn(w1_raw, cb1, g1, be1, m1, v1)
    w2_f, b2_f = fold_conv_bn(w2_raw, cb2, g2, be2, m2, v2)
    w1p, b1p, w2p, b2p = prepare_params(w1_f, b1_f, w2_f, b2_f)

    out = sppf_forward(x, w1p, b1p, w2p, b2p, C2)
    jax.block_until_ready(out)
    assert out.shape == (N, C2, H, W)

    # Tight check vs a reference with matching bf16-matmul numerics.
    ref_bf = sppf_reference(x, w1_f, b1_f, w2_f, b2_f, mm_dtype=jnp.bfloat16)
    assert jnp.allclose(out, ref_bf, atol=1e-2, rtol=1e-2), \
        "mismatch vs bf16-matmul reference"

    # Loose sanity check vs the exact f32 module semantics.
    ref32 = sppf_reference(x, w1_f, b1_f, w2_f, b2_f, mm_dtype=jnp.float32)
    assert jnp.allclose(out, ref32, atol=2.5e-1, rtol=5e-2), \
        "mismatch vs f32 reference"

    print("KERNEL_OK")
</pallas_src>

<mosaic_0001>
module attributes {stable_mosaic.version = 11 : i64} {
  func.func @sppf_kernel(%arg0: i32, %arg1: memref<1x16x16x128xbf16, #tpu.memory_space<vmem>>, %arg2: memref<128x128xbf16, #tpu.memory_space<vmem>>, %arg3: memref<1x128xf32, #tpu.memory_space<vmem>>, %arg4: memref<4x128x128xbf16, #tpu.memory_space<vmem>>, %arg5: memref<1x128xf32, #tpu.memory_space<vmem>>, %arg6: memref<1x16x16x128xf32, #tpu.memory_space<vmem>>, %arg7: memref<20x16x128xf32, #tpu.memory_space<vmem>>) attributes {dimension_semantics = [#tpu.dimension_semantics<parallel>], iteration_bounds = array<i64: 2>, scalar_prefetch = 0 : i64, scratch_operands = 1 : i64, tpu.core_type = #tpu.core_type<tc>, window_params = [{transform_indices = @transform_0, window_bounds = array<i64: 1, 16, 16, 128>}, {pipeline_mode = #tpu.pipeline_mode<synchronous>, transform_indices = @transform_1, window_bounds = array<i64: 128, 128>}, {pipeline_mode = #tpu.pipeline_mode<synchronous>, transform_indices = @transform_2, window_bounds = array<i64: 1, 128>}, {pipeline_mode = #tpu.pipeline_mode<synchronous>, transform_indices = @transform_3, window_bounds = array<i64: 4, 128, 128>}, {pipeline_mode = #tpu.pipeline_mode<synchronous>, transform_indices = @transform_4, window_bounds = array<i64: 1, 128>}, {transform_indices = @transform_5, window_bounds = array<i64: 1, 16, 16, 128>}]} {
    %cst = arith.constant 0.000000e+00 : f32
    %0 = vector.broadcast %cst : f32 to vector<2x16x128xf32>
    %c0 = arith.constant 0 : index
    %c0_0 = arith.constant 0 : index
    %c0_1 = arith.constant 0 : index
    %1 = vector.load %arg7[%c0, %c0_0, %c0_1] : memref<20x16x128xf32, #tpu.memory_space<vmem>>, vector<2x16x128xf32>
    tpu.vector_store %arg7[%c0, %c0_0, %c0_1], %0 {strides = array<i32>} : memref<20x16x128xf32, #tpu.memory_space<vmem>>, vector<2x16x128xf32>,
    %cst_2 = arith.constant 0.000000e+00 : f32
    %2 = vector.broadcast %cst_2 : f32 to vector<2x16x128xf32>
    %c18 = arith.constant 18 : index
    %c0_3 = arith.constant 0 : index
    %c0_4 = arith.constant 0 : index
    %3 = vector.load %arg7[%c18, %c0_3, %c0_4] : memref<20x16x128xf32, #tpu.memory_space<vmem>>, vector<2x16x128xf32>
    tpu.vector_store %arg7[%c18, %c0_3, %c0_4], %2 {strides = array<i32>} : memref<20x16x128xf32, #tpu.memory_space<vmem>>, vector<2x16x128xf32>,
    %c0_5 = arith.constant 0 : index
    %c0_6 = arith.constant 0 : index
    %c0_7 = arith.constant 0 : index
    %c0_8 = arith.constant 0 : index
    %4 = vector.load %arg1[%c0_5, %c0_6, %c0_7, %c0_8] : memref<1x16x16x128xbf16, #tpu.memory_space<vmem>>, vector<1x16x16x128xbf16>
    %5 = vector.shape_cast %4 : vector<1x16x16x128xbf16> to vector<16x16x128xbf16>
    %6 = vector.shape_cast %5 : vector<16x16x128xbf16> to vector<256x128xbf16>
    %c0_9 = arith.constant 0 : index
    %c0_10 = arith.constant 0 : index
    %7 = vector.load %arg2[%c0_9, %c0_10] : memref<128x128xbf16, #tpu.memory_space<vmem>>, vector<128x128xbf16>
    %cst_11 = arith.constant dense<0.000000e+00> : vector<256x128xf32>
    %8 = tpu.matmul %6, %7, %cst_11 {dimension_numbers = #tpu.dot_dimension_numbers<[1], [0], [0], [1], [0, 0, 1, 1], [], []>} : vector<256x128xbf16>, vector<128x128xbf16>, vector<256x128xf32> -> vector<256x128xf32>
    %c0_12 = arith.constant 0 : index
    %c0_13 = arith.constant 0 : index
    %9 = vector.load %arg3[%c0_12, %c0_13] : memref<1x128xf32, #tpu.memory_space<vmem>>, vector<1x128xf32>
    %10 = vector.broadcast %9 : vector<1x128xf32> to vector<256x128xf32>
    %11 = arith.addf %8, %10 : vector<256x128xf32>
    %cst_14 = arith.constant 0.000000e+00 : f32
    %12 = vector.broadcast %cst_14 : f32 to vector<256x128xf32>
    %13 = arith.maximumf %11, %12 : vector<256x128xf32>
    %14 = tpu.iota {dimensions = array<i32: 1>} : vector<1x16x1xi32>
    %15 = arith.truncf %13 : vector<256x128xf32> to vector<256x128xbf16>
    %c0_15 = arith.constant 0 : index
    %c0_16 = arith.constant 0 : index
    %c0_17 = arith.constant 0 : index
    %16 = vector.load %arg4[%c0_15, %c0_16, %c0_17] : memref<4x128x128xbf16, #tpu.memory_space<vmem>>, vector<1x128x128xbf16>
    %17 = vector.shape_cast %16 : vector<1x128x128xbf16> to vector<128x128xbf16>
    %cst_18 = arith.constant dense<0.000000e+00> : vector<256x128xf32>
    %18 = tpu.matmul %15, %17, %cst_18 {dimension_numbers = #tpu.dot_dimension_numbers<[1], [0], [0], [1], [0, 0, 1, 1], [], []>} : vector<256x128xbf16>, vector<128x128xbf16>, vector<256x128xf32> -> vector<256x128xf32>
    %19 = vector.shape_cast %13 : vector<256x128xf32> to vector<16x16x128xf32>
    %c2 = arith.constant 2 : index
    %c0_19 = arith.constant 0 : index
    %c0_20 = arith.constant 0 : index
    %20 = vector.load %arg7[%c2, %c0_19, %c0_20] : memref<20x16x128xf32, #tpu.memory_space<vmem>>, vector<16x16x128xf32>
    tpu.vector_store %arg7[%c2, %c0_19, %c0_20], %19 {strides = array<i32>} : memref<20x16x128xf32, #tpu.memory_space<vmem>>, vector<16x16x128xf32>,
    %c0_21 = arith.constant 0 : index
    %c0_22 = arith.constant 0 : index
    %c0_23 = arith.constant 0 : index
    %21 = vector.load %arg7[%c0_21, %c0_22, %c0_23] : memref<20x16x128xf32, #tpu.memory_space<vmem>>, vector<16x16x128xf32>
    %c1 = arith.constant 1 : index
    %c0_24 = arith.constant 0 : index
    %c0_25 = arith.constant 0 : index
    %22 = vector.load %arg7[%c1, %c0_24, %c0_25] : memref<20x16x128xf32, #tpu.memory_space<vmem>>, vector<16x16x128xf32>
    %23 = arith.maximumf %21, %22 : vector<16x16x128xf32>
    %c2_26 = arith.constant 2 : index
    %c0_27 = arith.constant 0 : index
    %c0_28 = arith.constant 0 : index
    %24 = vector.load %arg7[%c2_26, %c0_27, %c0_28] : memref<20x16x128xf32, #tpu.memory_space<vmem>>, vector<16x16x128xf32>
    %25 = arith.maximumf %23, %24 : vector<16x16x128xf32>
    %c3 = arith.constant 3 : index
    %c0_29 = arith.constant 0 : index
    %c0_30 = arith.constant 0 : index
    %26 = vector.load %arg7[%c3, %c0_29, %c0_30] : memref<20x16x128xf32, #tpu.memory_space<vmem>>, vector<16x16x128xf32>
    %27 = arith.maximumf %25, %26 : vector<16x16x128xf32>
    %c4 = arith.constant 4 : index
    %c0_31 = arith.constant 0 : index
    %c0_32 = arith.constant 0 : index
    %28 = vector.load %arg7[%c4, %c0_31, %c0_32] : memref<20x16x128xf32, #tpu.memory_space<vmem>>, vector<16x16x128xf32>
    %29 = arith.maximumf %27, %28 : vector<16x16x128xf32>
    %c15_i32 = arith.constant 15 : i32
    %30 = vector.broadcast %c15_i32 : i32 to vector<1x16x1xi32>
    %31 = arith.cmpi slt, %14, %30 : vector<1x16x1xi32>
    %c15_i32_33 = arith.constant 15 : i32
    %32 = tpu.dynamic_rotate %29 by %c15_i32_33 dim 1 : vector<16x16x128xf32>, i32 -> vector<16x16x128xf32>
    %cst_34 = arith.constant 0.000000e+00 : f32
    %33 = vector.shape_cast %31 : vector<1x16x1xi1> to vector<1x16x1xi1>
    %34 = vector.broadcast %33 : vector<1x16x1xi1> to vector<16x16x128xi1>
    %35 = vector.broadcast %cst_34 : f32 to vector<16x16x128xf32>
    %36 = arith.select %34, %32, %35 : vector<16x16x128xi1>, vector<16x16x128xf32>
    %c1_i32 = arith.constant 1 : i32
    %37 = vector.broadcast %c1_i32 : i32 to vector<1x16x1xi32>
    %38 = arith.cmpi sge, %14, %37 : vector<1x16x1xi32>
    %c1_i32_35 = arith.constant 1 : i32
    %39 = tpu.dynamic_rotate %29 by %c1_i32_35 dim 1 : vector<16x16x128xf32>, i32 -> vector<16x16x128xf32>
    %cst_36 = arith.constant 0.000000e+00 : f32
    %40 = vector.shape_cast %38 : vector<1x16x1xi1> to vector<1x16x1xi1>
    %41 = vector.broadcast %40 : vector<1x16x1xi1> to vector<16x16x128xi1>
    %42 = vector.broadcast %cst_36 : f32 to vector<16x16x128xf32>
    %43 = arith.select %41, %39, %42 : vector<16x16x128xi1>, vector<16x16x128xf32>
    %44 = arith.maximumf %36, %43 : vector<16x16x128xf32>
    %45 = arith.maximumf %29, %44 : vector<16x16x128xf32>
    %c14_i32 = arith.constant 14 : i32
    %46 = vector.broadcast %c14_i32 : i32 to vector<1x16x1xi32>
    %47 = arith.cmpi slt, %14, %46 : vector<1x16x1xi32>
    %c14_i32_37 = arith.constant 14 : i32
    %48 = tpu.dynamic_rotate %29 by %c14_i32_37 dim 1 : vector<16x16x128xf32>, i32 -> vector<16x16x128xf32>
    %cst_38 = arith.constant 0.000000e+00 : f32
    %49 = vector.shape_cast %47 : vector<1x16x1xi1> to vector<1x16x1xi1>
    %50 = vector.broadcast %49 : vector<1x16x1xi1> to vector<16x16x128xi1>
    %51 = vector.broadcast %cst_38 : f32 to vector<16x16x128xf32>
    %52 = arith.select %50, %48, %51 : vector<16x16x128xi1>, vector<16x16x128xf32>
    %c2_i32 = arith.constant 2 : i32
    %53 = vector.broadcast %c2_i32 : i32 to vector<1x16x1xi32>
    %54 = arith.cmpi sge, %14, %53 : vector<1x16x1xi32>
    %c2_i32_39 = arith.constant 2 : i32
    %55 = tpu.dynamic_rotate %29 by %c2_i32_39 dim 1 : vector<16x16x128xf32>, i32 -> vector<16x16x128xf32>
    %cst_40 = arith.constant 0.000000e+00 : f32
    %56 = vector.shape_cast %54 : vector<1x16x1xi1> to vector<1x16x1xi1>
    %57 = vector.broadcast %56 : vector<1x16x1xi1> to vector<16x16x128xi1>
    %58 = vector.broadcast %cst_40 : f32 to vector<16x16x128xf32>
    %59 = arith.select %57, %55, %58 : vector<16x16x128xi1>, vector<16x16x128xf32>
    %60 = arith.maximumf %52, %59 : vector<16x16x128xf32>
    %61 = arith.maximumf %45, %60 : vector<16x16x128xf32>
    %62 = vector.shape_cast %61 : vector<16x16x128xf32> to vector<256x128xf32>
    %63 = arith.truncf %62 : vector<256x128xf32> to vector<256x128xbf16>
    %c1_41 = arith.constant 1 : index
    %c0_42 = arith.constant 0 : index
    %c0_43 = arith.constant 0 : index
    %64 = vector.load %arg4[%c1_41, %c0_42, %c0_43] : memref<4x128x128xbf16, #tpu.memory_space<vmem>>, vector<1x128x128xbf16>
    %65 = vector.shape_cast %64 : vector<1x128x128xbf16> to vector<128x128xbf16>
    %cst_44 = arith.constant dense<0.000000e+00> : vector<256x128xf32>
    %66 = tpu.matmul %63, %65, %cst_44 {dimension_numbers = #tpu.dot_dimension_numbers<[1], [0], [0], [1], [0, 0, 1, 1], [], []>} : vector<256x128xbf16>, vector<128x128xbf16>, vector<256x128xf32> -> vector<256x128xf32>
    %67 = arith.addf %18, %66 : vector<256x128xf32>
    %c2_45 = arith.constant 2 : index
    %c0_46 = arith.constant 0 : index
    %c0_47 = arith.constant 0 : index
    %68 = vector.load %arg7[%c2_45, %c0_46, %c0_47] : memref<20x16x128xf32, #tpu.memory_space<vmem>>, vector<16x16x128xf32>
    tpu.vector_store %arg7[%c2_45, %c0_46, %c0_47], %61 {strides = array<i32>} : memref<20x16x128xf32, #tpu.memory_space<vmem>>, vector<16x16x128xf32>,
    %c0_48 = arith.constant 0 : index
    %c0_49 = arith.constant 0 : index
    %c0_50 = arith.constant 0 : index
    %69 = vector.load %arg7[%c0_48, %c0_49, %c0_50] : memref<20x16x128xf32, #tpu.memory_space<vmem>>, vector<16x16x128xf32>
    %c1_51 = arith.constant 1 : index
    %c0_52 = arith.constant 0 : index
    %c0_53 = arith.constant 0 : index
    %70 = vector.load %arg7[%c1_51, %c0_52, %c0_53] : memref<20x16x128xf32, #tpu.memory_space<vmem>>, vector<16x16x128xf32>
    %71 = arith.maximumf %69, %70 : vector<16x16x128xf32>
    %c2_54 = arith.constant 2 : index
    %c0_55 = arith.constant 0 : index
    %c0_56 = arith.constant 0 : index
    %72 = vector.load %arg7[%c2_54, %c0_55, %c0_56] : memref<20x16x128xf32, #tpu.memory_space<vmem>>, vector<16x16x128xf32>
    %73 = arith.maximumf %71, %72 : vector<16x16x128xf32>
    %c3_57 = arith.constant 3 : index
    %c0_58 = arith.constant 0 : index
    %c0_59 = arith.constant 0 : index
    %74 = vector.load %arg7[%c3_57, %c0_58, %c0_59] : memref<20x16x128xf32, #tpu.memory_space<vmem>>, vector<16x16x128xf32>
    %75 = arith.maximumf %73, %74 : vector<16x16x128xf32>
    %c4_60 = arith.constant 4 : index
    %c0_61 = arith.constant 0 : index
    %c0_62 = arith.constant 0 : index
    %76 = vector.load %arg7[%c4_60, %c0_61, %c0_62] : memref<20x16x128xf32, #tpu.memory_space<vmem>>, vector<16x16x128xf32>
    %77 = arith.maximumf %75, %76 : vector<16x16x128xf32>
    %c15_i32_63 = arith.constant 15 : i32
    %78 = vector.broadcast %c15_i32_63 : i32 to vector<1x16x1xi32>
    %79 = arith.cmpi slt, %14, %78 : vector<1x16x1xi32>
    %c15_i32_64 = arith.constant 15 : i32
    %80 = tpu.dynamic_rotate %77 by %c15_i32_64 dim 1 : vector<16x16x128xf32>, i32 -> vector<16x16x128xf32>
    %cst_65 = arith.constant 0.000000e+00 : f32
    %81 = vector.shape_cast %79 : vector<1x16x1xi1> to vector<1x16x1xi1>
    %82 = vector.broadcast %81 : vector<1x16x1xi1> to vector<16x16x128xi1>
    %83 = vector.broadcast %cst_65 : f32 to vector<16x16x128xf32>
    %84 = arith.select %82, %80, %83 : vector<16x16x128xi1>, vector<16x16x128xf32>
    %c1_i32_66 = arith.constant 1 : i32
    %85 = vector.broadcast %c1_i32_66 : i32 to vector<1x16x1xi32>
    %86 = arith.cmpi sge, %14, %85 : vector<1x16x1xi32>
    %c1_i32_67 = arith.constant 1 : i32
    %87 = tpu.dynamic_rotate %77 by %c1_i32_67 dim 1 : vector<16x16x128xf32>, i32 -> vector<16x16x128xf32>
    %cst_68 = arith.constant 0.000000e+00 : f32
    %88 = vector.shape_cast %86 : vector<1x16x1xi1> to vector<1x16x1xi1>
    %89 = vector.broadcast %88 : vector<1x16x1xi1> to vector<16x16x128xi1>
    %90 = vector.broadcast %cst_68 : f32 to vector<16x16x128xf32>
    %91 = arith.select %89, %87, %90 : vector<16x16x128xi1>, vector<16x16x128xf32>
    %92 = arith.maximumf %84, %91 : vector<16x16x128xf32>
    %93 = arith.maximumf %77, %92 : vector<16x16x128xf32>
    %c14_i32_69 = arith.constant 14 : i32
    %94 = vector.broadcast %c14_i32_69 : i32 to vector<1x16x1xi32>
    %95 = arith.cmpi slt, %14, %94 : vector<1x16x1xi32>
    %c14_i32_70 = arith.constant 14 : i32
    %96 = tpu.dynamic_rotate %77 by %c14_i32_70 dim 1 : vector<16x16x128xf32>, i32 -> vector<16x16x128xf32>
    %cst_71 = arith.constant 0.000000e+00 : f32
    %97 = vector.shape_cast %95 : vector<1x16x1xi1> to vector<1x16x1xi1>
    %98 = vector.broadcast %97 : vector<1x16x1xi1> to vector<16x16x128xi1>
    %99 = vector.broadcast %cst_71 : f32 to vector<16x16x128xf32>
    %100 = arith.select %98, %96, %99 : vector<16x16x128xi1>, vector<16x16x128xf32>
    %c2_i32_72 = arith.constant 2 : i32
    %101 = vector.broadcast %c2_i32_72 : i32 to vector<1x16x1xi32>
    %102 = arith.cmpi sge, %14, %101 : vector<1x16x1xi32>
    %c2_i32_73 = arith.constant 2 : i32
    %103 = tpu.dynamic_rotate %77 by %c2_i32_73 dim 1 : vector<16x16x128xf32>, i32 -> vector<16x16x128xf32>
    %cst_74 = arith.constant 0.000000e+00 : f32
    %104 = vector.shape_cast %102 : vector<1x16x1xi1> to vector<1x16x1xi1>
    %105 = vector.broadcast %104 : vector<1x16x1xi1> to vector<16x16x128xi1>
    %106 = vector.broadcast %cst_74 : f32 to vector<16x16x128xf32>
    %107 = arith.select %105, %103, %106 : vector<16x16x128xi1>, vector<16x16x128xf32>
    %108 = arith.maximumf %100, %107 : vector<16x16x128xf32>
    %109 = arith.maximumf %93, %108 : vector<16x16x128xf32>
    %110 = vector.shape_cast %109 : vector<16x16x128xf32> to vector<256x128xf32>
    %111 = arith.truncf %110 : vector<256x128xf32> to vector<256x128xbf16>
    %c2_75 = arith.constant 2 : index
    %c0_76 = arith.constant 0 : index
    %c0_77 = arith.constant 0 : index
    %112 = vector.load %arg4[%c2_75, %c0_76, %c0_77] : memref<4x128x128xbf16, #tpu.memory_space<vmem>>, vector<1x128x128xbf16>
    %113 = vector.shape_cast %112 : vector<1x128x128xbf16> to vector<128x128xbf16>
    %cst_78 = arith.constant dense<0.000000e+00> : vector<256x128xf32>
    %114 = tpu.matmul %111, %113, %cst_78 {dimension_numbers = #tpu.dot_dimension_numbers<[1], [0], [0], [1], [0, 0, 1, 1], [], []>} : vector<256x128xbf16>, vector<128x128xbf16>, vector<256x128xf32> -> vector<256x128xf32>
    %115 = arith.addf %67, %114 : vector<256x128xf32>
    %c2_79 = arith.constant 2 : index
    %c0_80 = arith.constant 0 : index
    %c0_81 = arith.constant 0 : index
    %116 = vector.load %arg7[%c2_79, %c0_80, %c0_81] : memref<20x16x128xf32, #tpu.memory_space<vmem>>, vector<16x16x128xf32>
    tpu.vector_store %arg7[%c2_79, %c0_80, %c0_81], %109 {strides = array<i32>} : memref<20x16x128xf32, #tpu.memory_space<vmem>>, vector<16x16x128xf32>,
    %c0_82 = arith.constant 0 : index
    %c0_83 = arith.constant 0 : index
    %c0_84 = arith.constant 0 : index
    %117 = vector.load %arg7[%c0_82, %c0_83, %c0_84] : memref<20x16x128xf32, #tpu.memory_space<vmem>>, vector<16x16x128xf32>
    %c1_85 = arith.constant 1 : index
    %c0_86 = arith.constant 0 : index
    %c0_87 = arith.constant 0 : index
    %118 = vector.load %arg7[%c1_85, %c0_86, %c0_87] : memref<20x16x128xf32, #tpu.memory_space<vmem>>, vector<16x16x128xf32>
    %119 = arith.maximumf %117, %118 : vector<16x16x128xf32>
    %c2_88 = arith.constant 2 : index
    %c0_89 = arith.constant 0 : index
    %c0_90 = arith.constant 0 : index
    %120 = vector.load %arg7[%c2_88, %c0_89, %c0_90] : memref<20x16x128xf32, #tpu.memory_space<vmem>>, vector<16x16x128xf32>
    %121 = arith.maximumf %119, %120 : vector<16x16x128xf32>
    %c3_91 = arith.constant 3 : index
    %c0_92 = arith.constant 0 : index
    %c0_93 = arith.constant 0 : index
    %122 = vector.load %arg7[%c3_91, %c0_92, %c0_93] : memref<20x16x128xf32, #tpu.memory_space<vmem>>, vector<16x16x128xf32>
    %123 = arith.maximumf %121, %122 : vector<16x16x128xf32>
    %c4_94 = arith.constant 4 : index
    %c0_95 = arith.constant 0 : index
    %c0_96 = arith.constant 0 : index
    %124 = vector.load %arg7[%c4_94, %c0_95, %c0_96] : memref<20x16x128xf32, #tpu.memory_space<vmem>>, vector<16x16x128xf32>
    %125 = arith.maximumf %123, %124 : vector<16x16x128xf32>
    %c15_i32_97 = arith.constant 15 : i32
    %126 = vector.broadcast %c15_i32_97 : i32 to vector<1x16x1xi32>
    %127 = arith.cmpi slt, %14, %126 : vector<1x16x1xi32>
    %c15_i32_98 = arith.constant 15 : i32
    %128 = tpu.dynamic_rotate %125 by %c15_i32_98 dim 1 : vector<16x16x128xf32>, i32 -> vector<16x16x128xf32>
    %cst_99 = arith.constant 0.000000e+00 : f32
    %129 = vector.shape_cast %127 : vector<1x16x1xi1> to vector<1x16x1xi1>
    %130 = vector.broadcast %129 : vector<1x16x1xi1> to vector<16x16x128xi1>
    %131 = vector.broadcast %cst_99 : f32 to vector<16x16x128xf32>
    %132 = arith.select %130, %128, %131 : vector<16x16x128xi1>, vector<16x16x128xf32>
    %c1_i32_100 = arith.constant 1 : i32
    %133 = vector.broadcast %c1_i32_100 : i32 to vector<1x16x1xi32>
    %134 = arith.cmpi sge, %14, %133 : vector<1x16x1xi32>
    %c1_i32_101 = arith.constant 1 : i32
    %135 = tpu.dynamic_rotate %125 by %c1_i32_101 dim 1 : vector<16x16x128xf32>, i32 -> vector<16x16x128xf32>
    %cst_102 = arith.constant 0.000000e+00 : f32
    %136 = vector.shape_cast %134 : vector<1x16x1xi1> to vector<1x16x1xi1>
    %137 = vector.broadcast %136 : vector<1x16x1xi1> to vector<16x16x128xi1>
    %138 = vector.broadcast %cst_102 : f32 to vector<16x16x128xf32>
    %139 = arith.select %137, %135, %138 : vector<16x16x128xi1>, vector<16x16x128xf32>
    %140 = arith.maximumf %132, %139 : vector<16x16x128xf32>
    %141 = arith.maximumf %125, %140 : vector<16x16x128xf32>
    %c14_i32_103 = arith.constant 14 : i32
    %142 = vector.broadcast %c14_i32_103 : i32 to vector<1x16x1xi32>
    %143 = arith.cmpi slt, %14, %142 : vector<1x16x1xi32>
    %c14_i32_104 = arith.constant 14 : i32
    %144 = tpu.dynamic_rotate %125 by %c14_i32_104 dim 1 : vector<16x16x128xf32>, i32 -> vector<16x16x128xf32>
    %cst_105 = arith.constant 0.000000e+00 : f32
    %145 = vector.shape_cast %143 : vector<1x16x1xi1> to vector<1x16x1xi1>
    %146 = vector.broadcast %145 : vector<1x16x1xi1> to vector<16x16x128xi1>
    %147 = vector.broadcast %cst_105 : f32 to vector<16x16x128xf32>
    %148 = arith.select %146, %144, %147 : vector<16x16x128xi1>, vector<16x16x128xf32>
    %c2_i32_106 = arith.constant 2 : i32
    %149 = vector.broadcast %c2_i32_106 : i32 to vector<1x16x1xi32>
    %150 = arith.cmpi sge, %14, %149 : vector<1x16x1xi32>
    %c2_i32_107 = arith.constant 2 : i32
    %151 = tpu.dynamic_rotate %125 by %c2_i32_107 dim 1 : vector<16x16x128xf32>, i32 -> vector<16x16x128xf32>
    %cst_108 = arith.constant 0.000000e+00 : f32
    %152 = vector.shape_cast %150 : vector<1x16x1xi1> to vector<1x16x1xi1>
    %153 = vector.broadcast %152 : vector<1x16x1xi1> to vector<16x16x128xi1>
    %154 = vector.broadcast %cst_108 : f32 to vector<16x16x128xf32>
    %155 = arith.select %153, %151, %154 : vector<16x16x128xi1>, vector<16x16x128xf32>
    %156 = arith.maximumf %148, %155 : vector<16x16x128xf32>
    %157 = arith.maximumf %141, %156 : vector<16x16x128xf32>
    %158 = vector.shape_cast %157 : vector<16x16x128xf32> to vector<256x128xf32>
    %159 = arith.truncf %158 : vector<256x128xf32> to vector<256x128xbf16>
    %c3_109 = arith.constant 3 : index
    %c0_110 = arith.constant 0 : index
    %c0_111 = arith.constant 0 : index
    %160 = vector.load %arg4[%c3_109, %c0_110, %c0_111] : memref<4x128x128xbf16, #tpu.memory_space<vmem>>, vector<1x128x128xbf16>
    %161 = vector.shape_cast %160 : vector<1x128x128xbf16> to vector<128x128xbf16>
    %cst_112 = arith.constant dense<0.000000e+00> : vector<256x128xf32>
    %162 = tpu.matmul %159, %161, %cst_112 {dimension_numbers = #tpu.dot_dimension_numbers<[1], [0], [0], [1], [0, 0, 1, 1], [], []>} : vector<256x128xbf16>, vector<128x128xbf16>, vector<256x128xf32> -> vector<256x128xf32>
    %163 = arith.addf %115, %162 : vector<256x128xf32>
    %c0_113 = arith.constant 0 : index
    %c0_114 = arith.constant 0 : index
    %164 = vector.load %arg5[%c0_113, %c0_114] : memref<1x128xf32, #tpu.memory_space<vmem>>, vector<1x128xf32>
    %165 = vector.broadcast %164 : vector<1x128xf32> to vector<256x128xf32>
    %166 = arith.addf %163, %165 : vector<256x128xf32>
    %cst_115 = arith.constant 0.000000e+00 : f32
    %167 = vector.broadcast %cst_115 : f32 to vector<256x128xf32>
    %168 = arith.maximumf %166, %167 : vector<256x128xf32>
    %169 = vector.shape_cast %168 : vector<256x128xf32> to vector<16x16x128xf32>
    %c0_116 = arith.constant 0 : index
    %c0_117 = arith.constant 0 : index
    %c0_118 = arith.constant 0 : index
    %c0_119 = arith.constant 0 : index
    %170 = vector.load %arg6[%c0_116, %c0_117, %c0_118, %c0_119] : memref<1x16x16x128xf32, #tpu.memory_space<vmem>>, vector<1x16x16x128xf32>
    %171 = vector.shape_cast %170 : vector<1x16x16x128xf32> to vector<16x16x128xf32>
    %172 = vector.shape_cast %169 : vector<16x16x128xf32> to vector<1x16x16x128xf32>
    tpu.vector_store %arg6[%c0_116, %c0_117, %c0_118, %c0_119], %172 {strides = array<i32>} : memref<1x16x16x128xf32, #tpu.memory_space<vmem>>, vector<1x16x16x128xf32>,
    return
  }
  func.func @transform_0(%arg0: i32) -> (i32, i32, i32, i32) {
    %c0_i32 = arith.constant 0 : i32
    %c0_i32_0 = arith.constant 0 : i32
    %c0_i32_1 = arith.constant 0 : i32
    %c0_i32_2 = arith.constant 0 : i32
    return %arg0, %c0_i32, %c0_i32_0, %c0_i32_1 : i32, i32, i32, i32
  }
  func.func @transform_1(%arg0: i32) -> (i32, i32) {
    %c0_i32 = arith.constant 0 : i32
    %c0_i32_0 = arith.constant 0 : i32
    %c0_i32_1 = arith.constant 0 : i32
    return %c0_i32, %c0_i32_0 : i32, i32
  }
  func.func @transform_2(%arg0: i32) -> (i32, i32) {
    %c0_i32 = arith.constant 0 : i32
    %c0_i32_0 = arith.constant 0 : i32
    %c0_i32_1 = arith.constant 0 : i32
    return %c0_i32, %c0_i32_0 : i32, i32
  }
  func.func @transform_3(%arg0: i32) -> (i32, i32, i32) {
    %c0_i32 = arith.constant 0 : i32
    %c0_i32_0 = arith.constant 0 : i32
    %c0_i32_1 = arith.constant 0 : i32
    %c0_i32_2 = arith.constant 0 : i32
    return %c0_i32, %c0_i32_0, %c0_i32_1 : i32, i32, i32
  }
  func.func @transform_4(%arg0: i32) -> (i32, i32) {
    %c0_i32 = arith.constant 0 : i32
    %c0_i32_0 = arith.constant 0 : i32
    %c0_i32_1 = arith.constant 0 : i32
    return %c0_i32, %c0_i32_0 : i32, i32
  }
  func.func @transform_5(%arg0: i32) -> (i32, i32, i32, i32) {
    %c0_i32 = arith.constant 0 : i32
    %c0_i32_0 = arith.constant 0 : i32
    %c0_i32_1 = arith.constant 0 : i32
    %c0_i32_2 = arith.constant 0 : i32
    return %arg0, %c0_i32, %c0_i32_0, %c0_i32_1 : i32, i32, i32, i32
  }
}

module attributes {stable_mosaic.version = 11 : i64} {
  func.func @sppf_kernel(%arg0: i32, %arg1: memref<1x16x16x128xbf16, #tpu.memory_space<vmem>>, %arg2: memref<128x128xbf16, #tpu.memory_space<vmem>>, %arg3: memref<1x128xf32, #tpu.memory_space<vmem>>, %arg4: memref<4x128x128xbf16, #tpu.memory_space<vmem>>, %arg5: memref<1x128xf32, #tpu.memory_space<vmem>>, %arg6: memref<1x16x16x128xf32, #tpu.memory_space<vmem>>, %arg7: memref<20x16x128xf32, #tpu.memory_space<vmem>>) attributes {dimension_semantics = [#tpu.dimension_semantics<parallel>], iteration_bounds = array<i64: 2>, scalar_prefetch = 0 : i64, scratch_operands = 1 : i64, tpu.core_type = #tpu.core_type<tc>, window_params = [{transform_indices = @transform_0, window_bounds = array<i64: 1, 16, 16, 128>}, {pipeline_mode = #tpu.pipeline_mode<synchronous>, transform_indices = @transform_1, window_bounds = array<i64: 128, 128>}, {pipeline_mode = #tpu.pipeline_mode<synchronous>, transform_indices = @transform_2, window_bounds = array<i64: 1, 128>}, {pipeline_mode = #tpu.pipeline_mode<synchronous>, transform_indices = @transform_3, window_bounds = array<i64: 4, 128, 128>}, {pipeline_mode = #tpu.pipeline_mode<synchronous>, transform_indices = @transform_4, window_bounds = array<i64: 1, 128>}, {transform_indices = @transform_5, window_bounds = array<i64: 1, 16, 16, 128>}]} {
    %cst = arith.constant 0.000000e+00 : f32
    %0 = vector.broadcast %cst : f32 to vector<2x16x128xf32>
    %c0 = arith.constant 0 : index
    %c0_0 = arith.constant 0 : index
    %c0_1 = arith.constant 0 : index
    %1 = vector.load %arg7[%c0, %c0_0, %c0_1] : memref<20x16x128xf32, #tpu.memory_space<vmem>>, vector<2x16x128xf32>
    tpu.vector_store %arg7[%c0, %c0_0, %c0_1], %0 {strides = array<i32>} : memref<20x16x128xf32, #tpu.memory_space<vmem>>, vector<2x16x128xf32>,
    %cst_2 = arith.constant 0.000000e+00 : f32
    %2 = vector.broadcast %cst_2 : f32 to vector<2x16x128xf32>
    %c18 = arith.constant 18 : index
    %c0_3 = arith.constant 0 : index
    %c0_4 = arith.constant 0 : index
    %3 = vector.load %arg7[%c18, %c0_3, %c0_4] : memref<20x16x128xf32, #tpu.memory_space<vmem>>, vector<2x16x128xf32>
    tpu.vector_store %arg7[%c18, %c0_3, %c0_4], %2 {strides = array<i32>} : memref<20x16x128xf32, #tpu.memory_space<vmem>>, vector<2x16x128xf32>,
    %c0_5 = arith.constant 0 : index
    %c0_6 = arith.constant 0 : index
    %c0_7 = arith.constant 0 : index
    %c0_8 = arith.constant 0 : index
    %4 = vector.load %arg1[%c0_5, %c0_6, %c0_7, %c0_8] : memref<1x16x16x128xbf16, #tpu.memory_space<vmem>>, vector<1x16x16x128xbf16>
    %5 = vector.shape_cast %4 : vector<1x16x16x128xbf16> to vector<16x16x128xbf16>
    %6 = vector.shape_cast %5 : vector<16x16x128xbf16> to vector<256x128xbf16>
    %c0_9 = arith.constant 0 : index
    %c0_10 = arith.constant 0 : index
    %7 = vector.load %arg2[%c0_9, %c0_10] : memref<128x128xbf16, #tpu.memory_space<vmem>>, vector<128x128xbf16>
    %cst_11 = arith.constant dense<0.000000e+00> : vector<256x128xf32>
    %8 = tpu.matmul %6, %7, %cst_11 {dimension_numbers = #tpu.dot_dimension_numbers<[1], [0], [0], [1], [0, 0, 1, 1], [], []>} : vector<256x128xbf16>, vector<128x128xbf16>, vector<256x128xf32> -> vector<256x128xf32>
    %c0_12 = arith.constant 0 : index
    %c0_13 = arith.constant 0 : index
    %9 = vector.load %arg3[%c0_12, %c0_13] : memref<1x128xf32, #tpu.memory_space<vmem>>, vector<1x128xf32>
    %10 = vector.broadcast %9 : vector<1x128xf32> to vector<256x128xf32>
    %11 = arith.addf %8, %10 : vector<256x128xf32>
    %cst_14 = arith.constant 0.000000e+00 : f32
    %12 = vector.broadcast %cst_14 : f32 to vector<256x128xf32>
    %13 = arith.maximumf %11, %12 : vector<256x128xf32>
    %14 = tpu.iota {dimensions = array<i32: 1>} : vector<1x16x1xi32>
    %15 = arith.truncf %13 : vector<256x128xf32> to vector<256x128xbf16>
    %c0_15 = arith.constant 0 : index
    %c0_16 = arith.constant 0 : index
    %c0_17 = arith.constant 0 : index
    %16 = vector.load %arg4[%c0_15, %c0_16, %c0_17] : memref<4x128x128xbf16, #tpu.memory_space<vmem>>, vector<1x128x128xbf16>
    %17 = vector.shape_cast %16 : vector<1x128x128xbf16> to vector<128x128xbf16>
    %cst_18 = arith.constant dense<0.000000e+00> : vector<256x128xf32>
    %18 = tpu.matmul %15, %17, %cst_18 {dimension_numbers = #tpu.dot_dimension_numbers<[1], [0], [0], [1], [0, 0, 1, 1], [], []>} : vector<256x128xbf16>, vector<128x128xbf16>, vector<256x128xf32> -> vector<256x128xf32>
    %19 = vector.shape_cast %13 : vector<256x128xf32> to vector<16x16x128xf32>
    %c2 = arith.constant 2 : index
    %c0_19 = arith.constant 0 : index
    %c0_20 = arith.constant 0 : index
    %20 = vector.load %arg7[%c2, %c0_19, %c0_20] : memref<20x16x128xf32, #tpu.memory_space<vmem>>, vector<16x16x128xf32>
    tpu.vector_store %arg7[%c2, %c0_19, %c0_20], %19 {strides = array<i32>} : memref<20x16x128xf32, #tpu.memory_space<vmem>>, vector<16x16x128xf32>,
    %c0_21 = arith.constant 0 : index
    %c0_22 = arith.constant 0 : index
    %c0_23 = arith.constant 0 : index
    %21 = vector.load %arg7[%c0_21, %c0_22, %c0_23] : memref<20x16x128xf32, #tpu.memory_space<vmem>>, vector<16x16x128xf32>
    %c1 = arith.constant 1 : index
    %c0_24 = arith.constant 0 : index
    %c0_25 = arith.constant 0 : index
    %22 = vector.load %arg7[%c1, %c0_24, %c0_25] : memref<20x16x128xf32, #tpu.memory_space<vmem>>, vector<16x16x128xf32>
    %23 = arith.maximumf %21, %22 : vector<16x16x128xf32>
    %c2_26 = arith.constant 2 : index
    %c0_27 = arith.constant 0 : index
    %c0_28 = arith.constant 0 : index
    %24 = vector.load %arg7[%c2_26, %c0_27, %c0_28] : memref<20x16x128xf32, #tpu.memory_space<vmem>>, vector<16x16x128xf32>
    %25 = arith.maximumf %23, %24 : vector<16x16x128xf32>
    %c3 = arith.constant 3 : index
    %c0_29 = arith.constant 0 : index
    %c0_30 = arith.constant 0 : index
    %26 = vector.load %arg7[%c3, %c0_29, %c0_30] : memref<20x16x128xf32, #tpu.memory_space<vmem>>, vector<16x16x128xf32>
    %27 = arith.maximumf %25, %26 : vector<16x16x128xf32>
    %c4 = arith.constant 4 : index
    %c0_31 = arith.constant 0 : index
    %c0_32 = arith.constant 0 : index
    %28 = vector.load %arg7[%c4, %c0_31, %c0_32] : memref<20x16x128xf32, #tpu.memory_space<vmem>>, vector<16x16x128xf32>
    %29 = arith.maximumf %27, %28 : vector<16x16x128xf32>
    %c15_i32 = arith.constant 15 : i32
    %30 = vector.broadcast %c15_i32 : i32 to vector<1x16x1xi32>
    %31 = arith.cmpi slt, %14, %30 : vector<1x16x1xi32>
    %c15_i32_33 = arith.constant 15 : i32
    %32 = tpu.dynamic_rotate %29 by %c15_i32_33 dim 1 : vector<16x16x128xf32>, i32 -> vector<16x16x128xf32>
    %cst_34 = arith.constant 0.000000e+00 : f32
    %33 = vector.shape_cast %31 : vector<1x16x1xi1> to vector<1x16x1xi1>
    %34 = vector.broadcast %33 : vector<1x16x1xi1> to vector<16x16x128xi1>
    %35 = vector.broadcast %cst_34 : f32 to vector<16x16x128xf32>
    %36 = arith.select %34, %32, %35 : vector<16x16x128xi1>, vector<16x16x128xf32>
    %c1_i32 = arith.constant 1 : i32
    %37 = vector.broadcast %c1_i32 : i32 to vector<1x16x1xi32>
    %38 = arith.cmpi sge, %14, %37 : vector<1x16x1xi32>
    %c1_i32_35 = arith.constant 1 : i32
    %39 = tpu.dynamic_rotate %29 by %c1_i32_35 dim 1 : vector<16x16x128xf32>, i32 -> vector<16x16x128xf32>
    %cst_36 = arith.constant 0.000000e+00 : f32
    %40 = vector.shape_cast %38 : vector<1x16x1xi1> to vector<1x16x1xi1>
    %41 = vector.broadcast %40 : vector<1x16x1xi1> to vector<16x16x128xi1>
    %42 = vector.broadcast %cst_36 : f32 to vector<16x16x128xf32>
    %43 = arith.select %41, %39, %42 : vector<16x16x128xi1>, vector<16x16x128xf32>
    %44 = arith.maximumf %36, %43 : vector<16x16x128xf32>
    %45 = arith.maximumf %29, %44 : vector<16x16x128xf32>
    %c14_i32 = arith.constant 14 : i32
    %46 = vector.broadcast %c14_i32 : i32 to vector<1x16x1xi32>
    %47 = arith.cmpi slt, %14, %46 : vector<1x16x1xi32>
    %c14_i32_37 = arith.constant 14 : i32
    %48 = tpu.dynamic_rotate %29 by %c14_i32_37 dim 1 : vector<16x16x128xf32>, i32 -> vector<16x16x128xf32>
    %cst_38 = arith.constant 0.000000e+00 : f32
    %49 = vector.shape_cast %47 : vector<1x16x1xi1> to vector<1x16x1xi1>
    %50 = vector.broadcast %49 : vector<1x16x1xi1> to vector<16x16x128xi1>
    %51 = vector.broadcast %cst_38 : f32 to vector<16x16x128xf32>
    %52 = arith.select %50, %48, %51 : vector<16x16x128xi1>, vector<16x16x128xf32>
    %c2_i32 = arith.constant 2 : i32
    %53 = vector.broadcast %c2_i32 : i32 to vector<1x16x1xi32>
    %54 = arith.cmpi sge, %14, %53 : vector<1x16x1xi32>
    %c2_i32_39 = arith.constant 2 : i32
    %55 = tpu.dynamic_rotate %29 by %c2_i32_39 dim 1 : vector<16x16x128xf32>, i32 -> vector<16x16x128xf32>
    %cst_40 = arith.constant 0.000000e+00 : f32
    %56 = vector.shape_cast %54 : vector<1x16x1xi1> to vector<1x16x1xi1>
    %57 = vector.broadcast %56 : vector<1x16x1xi1> to vector<16x16x128xi1>
    %58 = vector.broadcast %cst_40 : f32 to vector<16x16x128xf32>
    %59 = arith.select %57, %55, %58 : vector<16x16x128xi1>, vector<16x16x128xf32>
    %60 = arith.maximumf %52, %59 : vector<16x16x128xf32>
    %61 = arith.maximumf %45, %60 : vector<16x16x128xf32>
    %62 = vector.shape_cast %61 : vector<16x16x128xf32> to vector<256x128xf32>
    %63 = arith.truncf %62 : vector<256x128xf32> to vector<256x128xbf16>
    %c1_41 = arith.constant 1 : index
    %c0_42 = arith.constant 0 : index
    %c0_43 = arith.constant 0 : index
    %64 = vector.load %arg4[%c1_41, %c0_42, %c0_43] : memref<4x128x128xbf16, #tpu.memory_space<vmem>>, vector<1x128x128xbf16>
    %65 = vector.shape_cast %64 : vector<1x128x128xbf16> to vector<128x128xbf16>
    %cst_44 = arith.constant dense<0.000000e+00> : vector<256x128xf32>
    %66 = tpu.matmul %63, %65, %cst_44 {dimension_numbers = #tpu.dot_dimension_numbers<[1], [0], [0], [1], [0, 0, 1, 1], [], []>} : vector<256x128xbf16>, vector<128x128xbf16>, vector<256x128xf32> -> vector<256x128xf32>
    %67 = arith.addf %18, %66 : vector<256x128xf32>
    %c2_45 = arith.constant 2 : index
    %c0_46 = arith.constant 0 : index
    %c0_47 = arith.constant 0 : index
    %68 = vector.load %arg7[%c2_45, %c0_46, %c0_47] : memref<20x16x128xf32, #tpu.memory_space<vmem>>, vector<16x16x128xf32>
    tpu.vector_store %arg7[%c2_45, %c0_46, %c0_47], %61 {strides = array<i32>} : memref<20x16x128xf32, #tpu.memory_space<vmem>>, vector<16x16x128xf32>,
    %c0_48 = arith.constant 0 : index
    %c0_49 = arith.constant 0 : index
    %c0_50 = arith.constant 0 : index
    %69 = vector.load %arg7[%c0_48, %c0_49, %c0_50] : memref<20x16x128xf32, #tpu.memory_space<vmem>>, vector<16x16x128xf32>
    %c1_51 = arith.constant 1 : index
    %c0_52 = arith.constant 0 : index
    %c0_53 = arith.constant 0 : index
    %70 = vector.load %arg7[%c1_51, %c0_52, %c0_53] : memref<20x16x128xf32, #tpu.memory_space<vmem>>, vector<16x16x128xf32>
    %71 = arith.maximumf %69, %70 : vector<16x16x128xf32>
    %c2_54 = arith.constant 2 : index
    %c0_55 = arith.constant 0 : index
    %c0_56 = arith.constant 0 : index
    %72 = vector.load %arg7[%c2_54, %c0_55, %c0_56] : memref<20x16x128xf32, #tpu.memory_space<vmem>>, vector<16x16x128xf32>
    %73 = arith.maximumf %71, %72 : vector<16x16x128xf32>
    %c3_57 = arith.constant 3 : index
    %c0_58 = arith.constant 0 : index
    %c0_59 = arith.constant 0 : index
    %74 = vector.load %arg7[%c3_57, %c0_58, %c0_59] : memref<20x16x128xf32, #tpu.memory_space<vmem>>, vector<16x16x128xf32>
    %75 = arith.maximumf %73, %74 : vector<16x16x128xf32>
    %c4_60 = arith.constant 4 : index
    %c0_61 = arith.constant 0 : index
    %c0_62 = arith.constant 0 : index
    %76 = vector.load %arg7[%c4_60, %c0_61, %c0_62] : memref<20x16x128xf32, #tpu.memory_space<vmem>>, vector<16x16x128xf32>
    %77 = arith.maximumf %75, %76 : vector<16x16x128xf32>
    %c15_i32_63 = arith.constant 15 : i32
    %78 = vector.broadcast %c15_i32_63 : i32 to vector<1x16x1xi32>
    %79 = arith.cmpi slt, %14, %78 : vector<1x16x1xi32>
    %c15_i32_64 = arith.constant 15 : i32
    %80 = tpu.dynamic_rotate %77 by %c15_i32_64 dim 1 : vector<16x16x128xf32>, i32 -> vector<16x16x128xf32>
    %cst_65 = arith.constant 0.000000e+00 : f32
    %81 = vector.shape_cast %79 : vector<1x16x1xi1> to vector<1x16x1xi1>
    %82 = vector.broadcast %81 : vector<1x16x1xi1> to vector<16x16x128xi1>
    %83 = vector.broadcast %cst_65 : f32 to vector<16x16x128xf32>
    %84 = arith.select %82, %80, %83 : vector<16x16x128xi1>, vector<16x16x128xf32>
    %c1_i32_66 = arith.constant 1 : i32
    %85 = vector.broadcast %c1_i32_66 : i32 to vector<1x16x1xi32>
    %86 = arith.cmpi sge, %14, %85 : vector<1x16x1xi32>
    %c1_i32_67 = arith.constant 1 : i32
    %87 = tpu.dynamic_rotate %77 by %c1_i32_67 dim 1 : vector<16x16x128xf32>, i32 -> vector<16x16x128xf32>
    %cst_68 = arith.constant 0.000000e+00 : f32
    %88 = vector.shape_cast %86 : vector<1x16x1xi1> to vector<1x16x1xi1>
    %89 = vector.broadcast %88 : vector<1x16x1xi1> to vector<16x16x128xi1>
    %90 = vector.broadcast %cst_68 : f32 to vector<16x16x128xf32>
    %91 = arith.select %89, %87, %90 : vector<16x16x128xi1>, vector<16x16x128xf32>
    %92 = arith.maximumf %84, %91 : vector<16x16x128xf32>
    %93 = arith.maximumf %77, %92 : vector<16x16x128xf32>
    %c14_i32_69 = arith.constant 14 : i32
    %94 = vector.broadcast %c14_i32_69 : i32 to vector<1x16x1xi32>
    %95 = arith.cmpi slt, %14, %94 : vector<1x16x1xi32>
    %c14_i32_70 = arith.constant 14 : i32
    %96 = tpu.dynamic_rotate %77 by %c14_i32_70 dim 1 : vector<16x16x128xf32>, i32 -> vector<16x16x128xf32>
    %cst_71 = arith.constant 0.000000e+00 : f32
    %97 = vector.shape_cast %95 : vector<1x16x1xi1> to vector<1x16x1xi1>
    %98 = vector.broadcast %97 : vector<1x16x1xi1> to vector<16x16x128xi1>
    %99 = vector.broadcast %cst_71 : f32 to vector<16x16x128xf32>
    %100 = arith.select %98, %96, %99 : vector<16x16x128xi1>, vector<16x16x128xf32>
    %c2_i32_72 = arith.constant 2 : i32
    %101 = vector.broadcast %c2_i32_72 : i32 to vector<1x16x1xi32>
    %102 = arith.cmpi sge, %14, %101 : vector<1x16x1xi32>
    %c2_i32_73 = arith.constant 2 : i32
    %103 = tpu.dynamic_rotate %77 by %c2_i32_73 dim 1 : vector<16x16x128xf32>, i32 -> vector<16x16x128xf32>
    %cst_74 = arith.constant 0.000000e+00 : f32
    %104 = vector.shape_cast %102 : vector<1x16x1xi1> to vector<1x16x1xi1>
    %105 = vector.broadcast %104 : vector<1x16x1xi1> to vector<16x16x128xi1>
    %106 = vector.broadcast %cst_74 : f32 to vector<16x16x128xf32>
    %107 = arith.select %105, %103, %106 : vector<16x16x128xi1>, vector<16x16x128xf32>
    %108 = arith.maximumf %100, %107 : vector<16x16x128xf32>
    %109 = arith.maximumf %93, %108 : vector<16x16x128xf32>
    %110 = vector.shape_cast %109 : vector<16x16x128xf32> to vector<256x128xf32>
    %111 = arith.truncf %110 : vector<256x128xf32> to vector<256x128xbf16>
    %c2_75 = arith.constant 2 : index
    %c0_76 = arith.constant 0 : index
    %c0_77 = arith.constant 0 : index
    %112 = vector.load %arg4[%c2_75, %c0_76, %c0_77] : memref<4x128x128xbf16, #tpu.memory_space<vmem>>, vector<1x128x128xbf16>
    %113 = vector.shape_cast %112 : vector<1x128x128xbf16> to vector<128x128xbf16>
    %cst_78 = arith.constant dense<0.000000e+00> : vector<256x128xf32>
    %114 = tpu.matmul %111, %113, %cst_78 {dimension_numbers = #tpu.dot_dimension_numbers<[1], [0], [0], [1], [0, 0, 1, 1], [], []>} : vector<256x128xbf16>, vector<128x128xbf16>, vector<256x128xf32> -> vector<256x128xf32>
    %115 = arith.addf %67, %114 : vector<256x128xf32>
    %c2_79 = arith.constant 2 : index
    %c0_80 = arith.constant 0 : index
    %c0_81 = arith.constant 0 : index
    %116 = vector.load %arg7[%c2_79, %c0_80, %c0_81] : memref<20x16x128xf32, #tpu.memory_space<vmem>>, vector<16x16x128xf32>
    tpu.vector_store %arg7[%c2_79, %c0_80, %c0_81], %109 {strides = array<i32>} : memref<20x16x128xf32, #tpu.memory_space<vmem>>, vector<16x16x128xf32>,
    %c0_82 = arith.constant 0 : index
    %c0_83 = arith.constant 0 : index
    %c0_84 = arith.constant 0 : index
    %117 = vector.load %arg7[%c0_82, %c0_83, %c0_84] : memref<20x16x128xf32, #tpu.memory_space<vmem>>, vector<16x16x128xf32>
    %c1_85 = arith.constant 1 : index
    %c0_86 = arith.constant 0 : index
    %c0_87 = arith.constant 0 : index
    %118 = vector.load %arg7[%c1_85, %c0_86, %c0_87] : memref<20x16x128xf32, #tpu.memory_space<vmem>>, vector<16x16x128xf32>
    %119 = arith.maximumf %117, %118 : vector<16x16x128xf32>
    %c2_88 = arith.constant 2 : index
    %c0_89 = arith.constant 0 : index
    %c0_90 = arith.constant 0 : index
    %120 = vector.load %arg7[%c2_88, %c0_89, %c0_90] : memref<20x16x128xf32, #tpu.memory_space<vmem>>, vector<16x16x128xf32>
    %121 = arith.maximumf %119, %120 : vector<16x16x128xf32>
    %c3_91 = arith.constant 3 : index
    %c0_92 = arith.constant 0 : index
    %c0_93 = arith.constant 0 : index
    %122 = vector.load %arg7[%c3_91, %c0_92, %c0_93] : memref<20x16x128xf32, #tpu.memory_space<vmem>>, vector<16x16x128xf32>
    %123 = arith.maximumf %121, %122 : vector<16x16x128xf32>
    %c4_94 = arith.constant 4 : index
    %c0_95 = arith.constant 0 : index
    %c0_96 = arith.constant 0 : index
    %124 = vector.load %arg7[%c4_94, %c0_95, %c0_96] : memref<20x16x128xf32, #tpu.memory_space<vmem>>, vector<16x16x128xf32>
    %125 = arith.maximumf %123, %124 : vector<16x16x128xf32>
    %c15_i32_97 = arith.constant 15 : i32
    %126 = vector.broadcast %c15_i32_97 : i32 to vector<1x16x1xi32>
    %127 = arith.cmpi slt, %14, %126 : vector<1x16x1xi32>
    %c15_i32_98 = arith.constant 15 : i32
    %128 = tpu.dynamic_rotate %125 by %c15_i32_98 dim 1 : vector<16x16x128xf32>, i32 -> vector<16x16x128xf32>
    %cst_99 = arith.constant 0.000000e+00 : f32
    %129 = vector.shape_cast %127 : vector<1x16x1xi1> to vector<1x16x1xi1>
    %130 = vector.broadcast %129 : vector<1x16x1xi1> to vector<16x16x128xi1>
    %131 = vector.broadcast %cst_99 : f32 to vector<16x16x128xf32>
    %132 = arith.select %130, %128, %131 : vector<16x16x128xi1>, vector<16x16x128xf32>
    %c1_i32_100 = arith.constant 1 : i32
    %133 = vector.broadcast %c1_i32_100 : i32 to vector<1x16x1xi32>
    %134 = arith.cmpi sge, %14, %133 : vector<1x16x1xi32>
    %c1_i32_101 = arith.constant 1 : i32
    %135 = tpu.dynamic_rotate %125 by %c1_i32_101 dim 1 : vector<16x16x128xf32>, i32 -> vector<16x16x128xf32>
    %cst_102 = arith.constant 0.000000e+00 : f32
    %136 = vector.shape_cast %134 : vector<1x16x1xi1> to vector<1x16x1xi1>
    %137 = vector.broadcast %136 : vector<1x16x1xi1> to vector<16x16x128xi1>
    %138 = vector.broadcast %cst_102 : f32 to vector<16x16x128xf32>
    %139 = arith.select %137, %135, %138 : vector<16x16x128xi1>, vector<16x16x128xf32>
    %140 = arith.maximumf %132, %139 : vector<16x16x128xf32>
    %141 = arith.maximumf %125, %140 : vector<16x16x128xf32>
    %c14_i32_103 = arith.constant 14 : i32
    %142 = vector.broadcast %c14_i32_103 : i32 to vector<1x16x1xi32>
    %143 = arith.cmpi slt, %14, %142 : vector<1x16x1xi32>
    %c14_i32_104 = arith.constant 14 : i32
    %144 = tpu.dynamic_rotate %125 by %c14_i32_104 dim 1 : vector<16x16x128xf32>, i32 -> vector<16x16x128xf32>
    %cst_105 = arith.constant 0.000000e+00 : f32
    %145 = vector.shape_cast %143 : vector<1x16x1xi1> to vector<1x16x1xi1>
    %146 = vector.broadcast %145 : vector<1x16x1xi1> to vector<16x16x128xi1>
    %147 = vector.broadcast %cst_105 : f32 to vector<16x16x128xf32>
    %148 = arith.select %146, %144, %147 : vector<16x16x128xi1>, vector<16x16x128xf32>
    %c2_i32_106 = arith.constant 2 : i32
    %149 = vector.broadcast %c2_i32_106 : i32 to vector<1x16x1xi32>
    %150 = arith.cmpi sge, %14, %149 : vector<1x16x1xi32>
    %c2_i32_107 = arith.constant 2 : i32
    %151 = tpu.dynamic_rotate %125 by %c2_i32_107 dim 1 : vector<16x16x128xf32>, i32 -> vector<16x16x128xf32>
    %cst_108 = arith.constant 0.000000e+00 : f32
    %152 = vector.shape_cast %150 : vector<1x16x1xi1> to vector<1x16x1xi1>
    %153 = vector.broadcast %152 : vector<1x16x1xi1> to vector<16x16x128xi1>
    %154 = vector.broadcast %cst_108 : f32 to vector<16x16x128xf32>
    %155 = arith.select %153, %151, %154 : vector<16x16x128xi1>, vector<16x16x128xf32>
    %156 = arith.maximumf %148, %155 : vector<16x16x128xf32>
    %157 = arith.maximumf %141, %156 : vector<16x16x128xf32>
    %158 = vector.shape_cast %157 : vector<16x16x128xf32> to vector<256x128xf32>
    %159 = arith.truncf %158 : vector<256x128xf32> to vector<256x128xbf16>
    %c3_109 = arith.constant 3 : index
    %c0_110 = arith.constant 0 : index
    %c0_111 = arith.constant 0 : index
    %160 = vector.load %arg4[%c3_109, %c0_110, %c0_111] : memref<4x128x128xbf16, #tpu.memory_space<vmem>>, vector<1x128x128xbf16>
    %161 = vector.shape_cast %160 : vector<1x128x128xbf16> to vector<128x128xbf16>
    %cst_112 = arith.constant dense<0.000000e+00> : vector<256x128xf32>
    %162 = tpu.matmul %159, %161, %cst_112 {dimension_numbers = #tpu.dot_dimension_numbers<[1], [0], [0], [1], [0, 0, 1, 1], [], []>} : vector<256x128xbf16>, vector<128x128xbf16>, vector<256x128xf32> -> vector<256x128xf32>
    %163 = arith.addf %115, %162 : vector<256x128xf32>
    %c0_113 = arith.constant 0 : index
    %c0_114 = arith.constant 0 : index
    %164 = vector.load %arg5[%c0_113, %c0_114] : memref<1x128xf32, #tpu.memory_space<vmem>>, vector<1x128xf32>
    %165 = vector.broadcast %164 : vector<1x128xf32> to vector<256x128xf32>
    %166 = arith.addf %163, %165 : vector<256x128xf32>
    %cst_115 = arith.constant 0.000000e+00 : f32
    %167 = vector.broadcast %cst_115 : f32 to vector<256x128xf32>
    %168 = arith.maximumf %166, %167 : vector<256x128xf32>
    %169 = vector.shape_cast %168 : vector<256x128xf32> to vector<16x16x128xf32>
    %c0_116 = arith.constant 0 : index
    %c0_117 = arith.constant 0 : index
    %c0_118 = arith.constant 0 : index
    %c0_119 = arith.constant 0 : index
    %170 = vector.load %arg6[%c0_116, %c0_117, %c0_118, %c0_119] : memref<1x16x16x128xf32, #tpu.memory_space<vmem>>, vector<1x16x16x128xf32>
    %171 = vector.shape_cast %170 : vector<1x16x16x128xf32> to vector<16x16x128xf32>
    %172 = vector.shape_cast %169 : vector<16x16x128xf32> to vector<1x16x16x128xf32>
    tpu.vector_store %arg6[%c0_116, %c0_117, %c0_118, %c0_119], %172 {strides = array<i32>} : memref<1x16x16x128xf32, #tpu.memory_space<vmem>>, vector<1x16x16x128xf32>,
    return
  }
  func.func @transform_0(%arg0: i32) -> (i32, i32, i32, i32) {
    %c0_i32 = arith.constant 0 : i32
    %c0_i32_0 = arith.constant 0 : i32
    %c0_i32_1 = arith.constant 0 : i32
    %c0_i32_2 = arith.constant 0 : i32
    return %arg0, %c0_i32, %c0_i32_0, %c0_i32_1 : i32, i32, i32, i32
  }
  func.func @transform_1(%arg0: i32) -> (i32, i32) {
    %c0_i32 = arith.constant 0 : i32
    %c0_i32_0 = arith.constant 0 : i32
    %c0_i32_1 = arith.constant 0 : i32
    return %c0_i32, %c0_i32_0 : i32, i32
  }
  func.func @transform_2(%arg0: i32) -> (i32, i32) {
    %c0_i32 = arith.constant 0 : i32
    %c0_i32_0 = arith.constant 0 : i32
    %c0_i32_1 = arith.constant 0 : i32
    return %c0_i32, %c0_i32_0 : i32, i32
  }
  func.func @transform_3(%arg0: i32) -> (i32, i32, i32) {
    %c0_i32 = arith.constant 0 : i32
    %c0_i32_0 = arith.constant 0 : i32
    %c0_i32_1 = arith.constant 0 : i32
    %c0_i32_2 = arith.constant 0 : i32
    return %c0_i32, %c0_i32_0, %c0_i32_1 : i32, i32, i32
  }
  func.func @transform_4(%arg0: i32) -> (i32, i32) {
    %c0_i32 = arith.constant 0 : i32
    %c0_i32_0 = arith.constant 0 : i32
    %c0_i32_1 = arith.constant 0 : i32
    return %c0_i32, %c0_i32_0 : i32, i32
  }
  func.func @transform_5(%arg0: i32) -> (i32, i32, i32, i32) {
    %c0_i32 = arith.constant 0 : i32
    %c0_i32_0 = arith.constant 0 : i32
    %c0_i32_1 = arith.constant 0 : i32
    %c0_i32_2 = arith.constant 0 : i32
    return %arg0, %c0_i32, %c0_i32_0, %c0_i32_1 : i32, i32, i32, i32
  }
}

</mosaic_0001>

<llo_original>
// kernel: tpu_custom_call.1
$region0: #{tpu_custom_call.1}
  #allocation0 [shape = 'u32[]', space=smem, size = 0x4, offset = 0x4, fixed_abs, tag = 'smem constant byte address 0x4 - core index']
  #allocation1 [shape = 'u32[144,128]{1,0:T(1,128)}', space=vmem, size = 0x12000, scoped, tag = 'internal scratch']
  #allocation2 [shape = 'f32[20,16,128]{2,1,0:T(8,128)}', space=vmem, size = 0x28000, scoped, tag = 'scratch operand']
  %s0 = inlined_call_operand.hbm [shape: bf16[2,16,16,128], index: 0, kind: input, shape index: {}]
  %s1 = inlined_call_operand.hbm [shape: bf16[128,128], index: 1, kind: input, shape index: {}]
  %s2 = inlined_call_operand.vmem [shape: f32[1,128], index: 2, kind: input, shape index: {}]
  %s3 = inlined_call_operand.hbm [shape: bf16[4,128,128], index: 3, kind: input, shape index: {}]
  %s4 = inlined_call_operand.vmem [shape: f32[1,128], index: 4, kind: input, shape index: {}]
  %s5 = inlined_call_operand.hbm [shape: f32[2,16,16,128], index: 5, kind: output, shape index: {}]
  %s6 = sld [smem:[#allocation0]]
  $region65: #{tpu_custom_call.1} parent=0
    _
  %s8 = ssub.s32 1, %s6
  %s9 = scalar_select 0, %s8, %s6
  $region1: #{tpu_custom_call.1} parent=0
    #allocation3 [shape = 'u8[131072]{0}', space=vmem, size = 0x20000, scoped, tag = 'input window, operand 0']
    #allocation4 [shape = 's32[2]{0}', space=sflag, size = 0x8, scoped, tag = 'scoped memory for tpu_custom_call.1']
    #allocation5 [shape = 's32[2]{0}', space=sflag, size = 0x8, scoped, tag = 'scoped memory for tpu_custom_call.1']
    #allocation6 [shape = 'u8[32768]{0}', space=vmem, size = 0x8000, scoped, tag = 'input window, operand 1, single buffered']
    #allocation7 [shape = 's32[1]{0}', space=sflag, size = 0x4, scoped, tag = 'scoped memory for tpu_custom_call.1']
    #allocation8 [shape = 'u8[131072]{0}', space=vmem, size = 0x20000, scoped, tag = 'input window, operand 3, single buffered']
    #allocation9 [shape = 'u8[262144]{0}', space=vmem, size = 0x40000, scoped, tag = 'output window, operand 0']
    %10 = vsyncpa [#allocation4], 0
    %s11 = scalar_lea.sflag [#allocation4], 1
    %12 = vsyncpa %s11, 0
    %13 = vsyncpa [#allocation7], 0
    %14 = vsyncpa [#allocation5], 0
    %s15 = scalar_lea.sflag [#allocation5], 1
    %16 = vsyncpa %s15, 0
    loop: start=0, step=1, limit=4
    $region2: #{tpu_custom_call.1} parent=1 // loop_pre_header
      _
    $region3: #{tpu_custom_call.1} parent=1 // loop_header
      %s18 = sphi 0, %s22
      %p19 = scmp.ge.s32.totalorder %s18, 4
      %s28 = sphi 0, %s30
      %s31 = sphi 0, %s28
      %s32 = sphi 0, %s31
      %s48 = sphi 0, %s32
      %s52 = sphi 0, %s52
      %s54 = sphi 0, %s52
      %s55 = sphi 0, %s54
      %s69 = sphi 0, %s55
      %s73 = sphi 0, %s73
      %s75 = sphi 0, %s73
      %s76 = sphi 0, %s75
      %s90 = sphi 0, %s76
      %s94 = sphi 0, %s94
      %s96 = sphi 0, %s94
      %s97 = sphi 0, %s96
      %s111 = sphi 0, %s97
      %s115 = sphi 0, %s115
      %s117 = sphi 0, %s115
      %s118 = sphi 0, %s117
      %s132 = sphi 0, %s118
      %s138 = sphi 0, %s140
      %s141 = sphi 0, %s138
      %s142 = sphi 0, %s141
      %s158 = sphi 0, %s142
    $region4: #{tpu_custom_call.1} parent=1 // loop_header_branch
      %21 = sbr.rel (%p19) target = $region8
    $region5: #{tpu_custom_call.1} parent=1 // loop_body
      %s23 = ssub.s32 %s18, 1
      %s24 = ssub.s32 %s18, 2
      %s25 = sadd.s32 %s18, 1
      %s26 = ssub.s32 %s18, %s25
      %p27 = scmp.eq.s32.totalorder %s26, 0
      %s29 = sadd.s32 %s28, 1
      %s30 = scalar_select %p27, %s28, %s29
      %p33 = pneg %p27
      %p34 = scmp.eq.s32.totalorder %s18, 1
      %p35 = por %p33, %p34
      %p36 = scmp.ne.s32.totalorder %s28, %s31
      %p37 = scmp.eq.s32.totalorder %s18, 0
      %p38 = por %p36, %p37
      %p39 = scmp.ne.s32.totalorder %s28, %s31
      %p40 = scmp.eq.s32.totalorder %s23, 1
      %p41 = por %p39, %p40
      %p42 = scmp.ne.s32.totalorder %s31, %s32
      %p43 = scmp.eq.s32.totalorder %s23, 0
      %p44 = por %p42, %p43
      %p45 = scmp.ne.s32.totalorder %s31, %s32
      %p46 = scmp.eq.s32.totalorder %s24, 1
      %p47 = por %p45, %p46
      %p49 = scmp.ne.s32.totalorder %s32, %s48
      %p50 = scmp.eq.s32.totalorder %s24, 0
      %p51 = por %p49, %p50
      %s53 = sadd.s32 %s52, 1
      %p56 = scmp.eq.s32.totalorder %s18, 1
      %p57 = scmp.ne.s32.totalorder %s52, %s54
      %p58 = scmp.eq.s32.totalorder %s18, 0
      %p59 = por %p57, %p58
      %p60 = scmp.ne.s32.totalorder %s52, %s54
      %p61 = scmp.eq.s32.totalorder %s23, 1
      %p62 = por %p60, %p61
      %p63 = scmp.ne.s32.totalorder %s54, %s55
      %p64 = scmp.eq.s32.totalorder %s23, 0
      %p65 = por %p63, %p64
      %p66 = scmp.ne.s32.totalorder %s54, %s55
      %p67 = scmp.eq.s32.totalorder %s24, 1
      %p68 = por %p66, %p67
      %p70 = scmp.ne.s32.totalorder %s55, %s69
      %p71 = scmp.eq.s32.totalorder %s24, 0
      %p72 = por %p70, %p71
      %s74 = sadd.s32 %s73, 1
      %p77 = scmp.eq.s32.totalorder %s18, 1
      %p78 = scmp.ne.s32.totalorder %s73, %s75
      %p79 = scmp.eq.s32.totalorder %s18, 0
      %p80 = por %p78, %p79
      %p81 = scmp.ne.s32.totalorder %s73, %s75
      %p82 = scmp.eq.s32.totalorder %s23, 1
      %p83 = por %p81, %p82
      %p84 = scmp.ne.s32.totalorder %s75, %s76
      %p85 = scmp.eq.s32.totalorder %s23, 0
      %p86 = por %p84, %p85
      %p87 = scmp.ne.s32.totalorder %s75, %s76
      %p88 = scmp.eq.s32.totalorder %s24, 1
      %p89 = por %p87, %p88
      %p91 = scmp.ne.s32.totalorder %s76, %s90
      %p92 = scmp.eq.s32.totalorder %s24, 0
      %p93 = por %p91, %p92
      %s95 = sadd.s32 %s94, 1
      %p98 = scmp.eq.s32.totalorder %s18, 1
      %p99 = scmp.ne.s32.totalorder %s94, %s96
      %p100 = scmp.eq.s32.totalorder %s18, 0
      %p101 = por %p99, %p100
      %p102 = scmp.ne.s32.totalorder %s94, %s96
      %p103 = scmp.eq.s32.totalorder %s23, 1
      %p104 = por %p102, %p103
      %p105 = scmp.ne.s32.totalorder %s96, %s97
      %p106 = scmp.eq.s32.totalorder %s23, 0
      %p107 = por %p105, %p106
      %p108 = scmp.ne.s32.totalorder %s96, %s97
      %p109 = scmp.eq.s32.totalorder %s24, 1
      %p110 = por %p108, %p109
      %p112 = scmp.ne.s32.totalorder %s97, %s111
      %p113 = scmp.eq.s32.totalorder %s24, 0
      %p114 = por %p112, %p113
      %s116 = sadd.s32 %s115, 1
      %p119 = scmp.eq.s32.totalorder %s18, 1
      %p120 = scmp.ne.s32.totalorder %s115, %s117
      %p121 = scmp.eq.s32.totalorder %s18, 0
      %p122 = por %p120, %p121
      %p123 = scmp.ne.s32.totalorder %s115, %s117
      %p124 = scmp.eq.s32.totalorder %s23, 1
      %p125 = por %p123, %p124
      %p126 = scmp.ne.s32.totalorder %s117, %s118
      %p127 = scmp.eq.s32.totalorder %s23, 0
      %p128 = por %p126, %p127
      %p129 = scmp.ne.s32.totalorder %s117, %s118
      %p130 = scmp.eq.s32.totalorder %s24, 1
      %p131 = por %p129, %p130
      %p133 = scmp.ne.s32.totalorder %s118, %s132
      %p134 = scmp.eq.s32.totalorder %s24, 0
      %p135 = por %p133, %p134
      %s136 = ssub.s32 %s18, %s25
      %p137 = scmp.eq.s32.totalorder %s136, 0
      %s139 = sadd.s32 %s138, 1
      %s140 = scalar_select %p137, %s138, %s139
      %p143 = pneg %p137
      %p144 = scmp.eq.s32.totalorder %s18, 1
      %p145 = por %p143, %p144
      %p146 = scmp.ne.s32.totalorder %s138, %s141
      %p147 = scmp.eq.s32.totalorder %s18, 0
      %p148 = por %p146, %p147
      %p149 = scmp.ne.s32.totalorder %s138, %s141
      %p150 = scmp.eq.s32.totalorder %s23, 1
      %p151 = por %p149, %p150
      %p152 = scmp.ne.s32.totalorder %s141, %s142
      %p153 = scmp.eq.s32.totalorder %s23, 0
      %p154 = por %p152, %p153
      %p155 = scmp.ne.s32.totalorder %s141, %s142
      %p156 = scmp.eq.s32.totalorder %s24, 1
      %p157 = por %p155, %p156
      %p159 = scmp.ne.s32.totalorder %s142, %s158
      %p160 = scmp.eq.s32.totalorder %s24, 0
      %p161 = por %p159, %p160
      %p162 = scmp.le.s32.totalorder 1, %s18
      %p163 = scmp.lt.s32.totalorder %s18, 3
      %p164 = pnand %p162, %p163
      %p165 = pneg %p164
      // Predicated region
      $region9: #{tpu_custom_call.1} parent=5 // pred_check
        _
      $region10: #{tpu_custom_call.1} parent=5 // pred_check_branch
        %167 = sbr.rel (%p164) target = $region12
      $region11: #{tpu_custom_call.1} parent=5 // pred_region
        %s168 = ssub.s32 %s18, 1
        // Predicated region
        $region13: #{tpu_custom_call.1} parent=11 // pred_check
          %p169 = pneg %p65
        $region14: #{tpu_custom_call.1} parent=11 // pred_check_branch
          %171 = sbr.rel (%p169) target = $region16
        $region15: #{tpu_custom_call.1} parent=11 // pred_region
          %s173 = ssub.s32 1024, 1024
          %174 = vsyncadd [#allocation7], %s173
          %s175 = sshll.u32 [#allocation6], 4
          %s176 = int_to_ptr.vmem [resolvable:$true] %s175
          %181 = dma.hbm_to_vmem [thread:$0]  %s1, 1024, %s176, [#allocation7], 64, 64, 4
        $region16: #{tpu_custom_call.1} parent=11 // pred_fallthru
          _
        // Predicated region
        $region17: #{tpu_custom_call.1} parent=11 // pred_check
          %p182 = pneg %p86
        $region18: #{tpu_custom_call.1} parent=11 // pred_check_branch
          %184 = sbr.rel (%p182) target = $region20
        $region19: #{tpu_custom_call.1} parent=11 // pred_region
          _
        $region20: #{tpu_custom_call.1} parent=11 // pred_fallthru
          _
        // Predicated region
        $region21: #{tpu_custom_call.1} parent=11 // pred_check
          %p185 = pneg %p107
        $region22: #{tpu_custom_call.1} parent=11 // pred_check_branch
          %187 = sbr.rel (%p185) target = $region24
        $region23: #{tpu_custom_call.1} parent=11 // pred_region
          %s189 = ssub.s32 4096, 4096
          %190 = vsyncadd [#allocation7], %s189
          %s191 = sshll.u32 [#allocation8], 4
          %s192 = int_to_ptr.vmem [resolvable:$true] %s191
          %197 = dma.hbm_to_vmem [thread:$0]  %s3, 4096, %s192, [#allocation7], 64, 64, 4
        $region24: #{tpu_custom_call.1} parent=11 // pred_fallthru
          _
        // Predicated region
        $region25: #{tpu_custom_call.1} parent=11 // pred_check
          %p198 = pneg %p128
        $region26: #{tpu_custom_call.1} parent=11 // pred_check_branch
          %200 = sbr.rel (%p198) target = $region28
        $region27: #{tpu_custom_call.1} parent=11 // pred_region
          _
        $region28: #{tpu_custom_call.1} parent=11 // pred_fallthru
          _
      $region12: #{tpu_custom_call.1} parent=5 // pred_fallthru
        _
      %p201 = scmp.lt.s32.totalorder %s18, 2
      // Predicated region
      $region29: #{tpu_custom_call.1} parent=5 // pred_check
        %p202 = pneg %p201
      $region30: #{tpu_custom_call.1} parent=5 // pred_check_branch
        %204 = sbr.rel (%p202) target = $region32
      $region31: #{tpu_custom_call.1} parent=5 // pred_region
        // Predicated region
        $region33: #{tpu_custom_call.1} parent=31 // pred_check
          %p205 = pneg %p38
        $region34: #{tpu_custom_call.1} parent=31 // pred_check_branch
          %207 = sbr.rel (%p205) target = $region36
        $region35: #{tpu_custom_call.1} parent=31 // pred_region
          %s208 = sand.u32 %s28, 1
          %s209 = scalar_lea.sflag [#allocation4], %s208
          %s210 = sand.u32 %s28, 1
          %s211 = smul.addr %s210, 128
          %s212 = scalar_lea.vmem [#allocation3], %s211
          %s214 = ssub.s32 2048, 2048
          %215 = vsyncadd %s209, %s214
          %s216 = smul.addr %s18, 32
          %s217 = smul.addr %s216, 64
          %s218 = scalar_lea.hbm %s0, %s217
          %s219 = sshll.u32 %s212, 4
          %s220 = int_to_ptr.vmem [resolvable:$true] %s219
          %225 = dma.hbm_to_vmem [thread:$0]  %s218, 2048, %s220, %s209, 64, 64, 4
        $region36: #{tpu_custom_call.1} parent=31 // pred_fallthru
          _
      $region32: #{tpu_custom_call.1} parent=5 // pred_fallthru
        _
      %p226 = scmp.le.s32.totalorder 1, %s18
      %p227 = scmp.lt.s32.totalorder %s18, 3
      %p228 = pnand %p226, %p227
      %p229 = pneg %p228
      // Predicated region
      $region37: #{tpu_custom_call.1} parent=5 // pred_check
        _
      $region38: #{tpu_custom_call.1} parent=5 // pred_check_branch
        %231 = sbr.rel (%p228) target = $region40
      $region39: #{tpu_custom_call.1} parent=5 // pred_region
        %s232 = ssub.s32 %s18, 1
        %s233 = sand.u32 %s31, 1
        %s234 = scalar_lea.sflag [#allocation4], %s233
        %s235 = sand.u32 %s31, 1
        %s236 = smul.addr %s235, 128
        %s237 = scalar_lea.vmem [#allocation3], %s236
        // Predicated region
        $region41: #{tpu_custom_call.1} parent=39 // pred_check
          %p238 = pneg %p44
        $region42: #{tpu_custom_call.1} parent=39 // pred_check_branch
          %240 = sbr.rel (%p238) target = $region44
        $region43: #{tpu_custom_call.1} parent=39 // pred_region
          %241 = dma.done %s234, 2048
        $region44: #{tpu_custom_call.1} parent=39 // pred_fallthru
          _
        // Predicated region
        $region45: #{tpu_custom_call.1} parent=39 // pred_check
          %p242 = pneg %p65
        $region46: #{tpu_custom_call.1} parent=39 // pred_check_branch
          %244 = sbr.rel (%p242) target = $region48
        $region47: #{tpu_custom_call.1} parent=39 // pred_region
          %245 = dma.done [#allocation7], 1024
        $region48: #{tpu_custom_call.1} parent=39 // pred_fallthru
          _
        // Predicated region
        $region49: #{tpu_custom_call.1} parent=39 // pred_check
          %p246 = pneg %p107
        $region50: #{tpu_custom_call.1} parent=39 // pred_check_branch
          %248 = sbr.rel (%p246) target = $region52
        $region51: #{tpu_custom_call.1} parent=39 // pred_region
          %249 = dma.done [#allocation7], 4096
        $region52: #{tpu_custom_call.1} parent=39 // pred_fallthru
          _
        %s250 = sand.u32 %s31, 1
        %s251 = scalar_lea.sflag [#allocation4], %s250
        %s252 = sand.u32 %s31, 1
        %s253 = smul.addr %s252, 128
        %s254 = scalar_lea.vmem [#allocation3], %s253
        %p255 = pneg %p44
        %p256 = pneg %p41
        %p257 = pneg %p65
        %p258 = pneg %p62
        %p259 = pneg %p86
        %p260 = pneg %p83
        %p261 = pneg %p107
        %p262 = pneg %p104
        %p263 = pneg %p128
        %p264 = pneg %p125
        %p265 = pneg %p154
        %p266 = pneg %p151
        %s267 = sand.u32 %s141, 1
        %s268 = scalar_lea.sflag [#allocation5], %s267
        %s269 = sand.u32 %s141, 1
        %s270 = smul.addr %s269, 256
        %s271 = scalar_lea.vmem [#allocation9], %s270
        %273 = vst [vmem:[#allocation2] sm:$0xff] 0.0
        %274 = vst [vmem:[#allocation2 + $0x8] sm:$0xff] 0.0
        %275 = vst [vmem:[#allocation2 + $0x10] sm:$0xff] 0.0
        %276 = vst [vmem:[#allocation2 + $0x18] sm:$0xff] 0.0
        %s277 = scalar_lea.vmem [#allocation2], 288
        %278 = vst [vmem:[%s277] sm:$0xff] 0.0
        %279 = vst [vmem:[%s277 + $0x8] sm:$0xff] 0.0
        %280 = vst [vmem:[%s277 + $0x10] sm:$0xff] 0.0
        %281 = vst [vmem:[%s277 + $0x18] sm:$0xff] 0.0
        %v282 = vld [vmem:[%s237] sm:$0xf]
        %v283 = vld [vmem:[%s237 + $0x4] sm:$0xf]
        %v284 = vld [vmem:[%s237 + $0x8] sm:$0xf]
        %v285 = vld [vmem:[%s237 + $0xc] sm:$0xf]
        %v286 = vld [vmem:[%s237 + $0x10] sm:$0xf]
        %v287 = vld [vmem:[%s237 + $0x14] sm:$0xf]
        %v288 = vld [vmem:[%s237 + $0x18] sm:$0xf]
        %v289 = vld [vmem:[%s237 + $0x1c] sm:$0xf]
        %v290 = vld [vmem:[%s237 + $0x20] sm:$0xf]
        %v291 = vld [vmem:[%s237 + $0x24] sm:$0xf]
        %v292 = vld [vmem:[%s237 + $0x28] sm:$0xf]
        %v293 = vld [vmem:[%s237 + $0x2c] sm:$0xf]
        %v294 = vld [vmem:[%s237 + $0x30] sm:$0xf]
        %v295 = vld [vmem:[%s237 + $0x34] sm:$0xf]
        %v296 = vld [vmem:[%s237 + $0x38] sm:$0xf]
        %v297 = vld [vmem:[%s237 + $0x3c] sm:$0xf]
        %v298 = vld [vmem:[%s237 + $0x40] sm:$0xf]
        %v299 = vld [vmem:[%s237 + $0x44] sm:$0xf]
        %v300 = vld [vmem:[%s237 + $0x48] sm:$0xf]
        %v301 = vld [vmem:[%s237 + $0x4c] sm:$0xf]
        %v302 = vld [vmem:[%s237 + $0x50] sm:$0xf]
        %v303 = vld [vmem:[%s237 + $0x54] sm:$0xf]
        %v304 = vld [vmem:[%s237 + $0x58] sm:$0xf]
        %v305 = vld [vmem:[%s237 + $0x5c] sm:$0xf]
        %v306 = vld [vmem:[%s237 + $0x60] sm:$0xf]
        %v307 = vld [vmem:[%s237 + $0x64] sm:$0xf]
        %v308 = vld [vmem:[%s237 + $0x68] sm:$0xf]
        %v309 = vld [vmem:[%s237 + $0x6c] sm:$0xf]
        %v310 = vld [vmem:[%s237 + $0x70] sm:$0xf]
        %v311 = vld [vmem:[%s237 + $0x74] sm:$0xf]
        %v312 = vld [vmem:[%s237 + $0x78] sm:$0xf]
        %v313 = vld [vmem:[%s237 + $0x7c] sm:$0xf]
        %v314 = vld [vmem:[#allocation6] sm:$0xf]
        %v315 = vld [vmem:[#allocation6 + $0x4] sm:$0xf]
        %v316 = vld [vmem:[#allocation6 + $0x8] sm:$0xf]
        %v317 = vld [vmem:[#allocation6 + $0xc] sm:$0xf]
        %v318 = vld [vmem:[#allocation6 + $0x10] sm:$0xf]
        %v319 = vld [vmem:[#allocation6 + $0x14] sm:$0xf]
        %v320 = vld [vmem:[#allocation6 + $0x18] sm:$0xf]
        %v321 = vld [vmem:[#allocation6 + $0x1c] sm:$0xf]
        %v322 = vld [vmem:[#allocation6 + $0x20] sm:$0xf]
        %v323 = vld [vmem:[#allocation6 + $0x24] sm:$0xf]
        %v324 = vld [vmem:[#allocation6 + $0x28] sm:$0xf]
        %v325 = vld [vmem:[#allocation6 + $0x2c] sm:$0xf]
        %v326 = vld [vmem:[#allocation6 + $0x30] sm:$0xf]
        %v327 = vld [vmem:[#allocation6 + $0x34] sm:$0xf]
        %v328 = vld [vmem:[#allocation6 + $0x38] sm:$0xf]
        %v329 = vld [vmem:[#allocation6 + $0x3c] sm:$0xf]
        %v330 = vld [vmem:[%s2] sm:$0x1]
        %v332 = vlaneseq
        %v333 = vshrl.u32 %v332, 7
        %v334 = vsub.s32 0, %v333
        %v335 = vrot.slane %v330, %v334
        %v369 = vunpack.c.l.b16 %v282
        %v370 = vunpack.c.l.b16 %v283
        %v371 = vunpack.c.l.b16 %v284
        %v372 = vunpack.c.l.b16 %v285
        %v373 = vunpack.c.l.b16 %v286
        %v374 = vunpack.c.l.b16 %v287
        %v375 = vunpack.c.l.b16 %v288
        %v376 = vunpack.c.l.b16 %v289
        %v377 = vunpack.c.l.b16 %v290
        %v378 = vunpack.c.l.b16 %v291
        %v379 = vunpack.c.l.b16 %v292
        %v380 = vunpack.c.l.b16 %v293
        %v381 = vunpack.c.l.b16 %v294
        %v382 = vunpack.c.l.b16 %v295
        %v383 = vunpack.c.l.b16 %v296
        %v384 = vunpack.c.l.b16 %v297
        %v385 = vunpack.c.l.b16 %v298
        %v386 = vunpack.c.l.b16 %v299
        %v387 = vunpack.c.l.b16 %v300
        %v388 = vunpack.c.l.b16 %v301
        %v389 = vunpack.c.l.b16 %v302
        %v390 = vunpack.c.l.b16 %v303
        %v391 = vunpack.c.l.b16 %v304
        %v392 = vunpack.c.l.b16 %v305
        %v393 = vunpack.c.l.b16 %v306
        %v394 = vunpack.c.l.b16 %v307
        %v395 = vunpack.c.l.b16 %v308
        %v396 = vunpack.c.l.b16 %v309
        %v397 = vunpack.c.l.b16 %v310
        %v398 = vunpack.c.l.b16 %v311
        %v399 = vunpack.c.l.b16 %v312
        %v400 = vunpack.c.l.b16 %v313
        %v401 = vpack.c.b16 %v370, %v369
        %v402 = vpack.c.b16 %v372, %v371
        %v403 = vpack.c.b16 %v374, %v373
        %v404 = vpack.c.b16 %v376, %v375
        %v405 = vpack.c.b16 %v378, %v377
        %v406 = vpack.c.b16 %v380, %v379
        %v407 = vpack.c.b16 %v382, %v381
        %v408 = vpack.c.b16 %v384, %v383
        %v409 = vpack.c.b16 %v386, %v385
        %v410 = vpack.c.b16 %v388, %v387
        %v411 = vpack.c.b16 %v390, %v389
        %v412 = vpack.c.b16 %v392, %v391
        %v413 = vpack.c.b16 %v394, %v393
        %v414 = vpack.c.b16 %v396, %v395
        %v415 = vpack.c.b16 %v398, %v397
        %v416 = vpack.c.b16 %v400, %v399
        %v449 = vunpack.c.l.b16 %v314
        %v450 = vunpack.c.l.b16 %v315
        %v451 = vunpack.c.l.b16 %v316
        %v452 = vunpack.c.l.b16 %v317
        %v453 = vunpack.c.l.b16 %v318
        %v454 = vunpack.c.l.b16 %v319
        %v455 = vunpack.c.l.b16 %v320
        %v456 = vunpack.c.l.b16 %v321
        %v457 = vunpack.c.l.b16 %v322
        %v458 = vunpack.c.l.b16 %v323
        %v459 = vunpack.c.l.b16 %v324
        %v460 = vunpack.c.l.b16 %v325
        %v461 = vunpack.c.l.b16 %v326
        %v462 = vunpack.c.l.b16 %v327
        %v463 = vunpack.c.l.b16 %v328
        %v464 = vunpack.c.l.b16 %v329
        %v465 = vpack.c.b16 %v450, %v449
        %v466 = vpack.c.b16 %v452, %v451
        %v467 = vpack.c.b16 %v454, %v453
        %v468 = vpack.c.b16 %v456, %v455
        %v469 = vpack.c.b16 %v458, %v457
        %v470 = vpack.c.b16 %v460, %v459
        %v471 = vpack.c.b16 %v462, %v461
        %v472 = vpack.c.b16 %v464, %v463
        %481 = vmatprep.subr.bf16.mxu0 0
        %482 = vmatpush1.bf16.msra.mxu0 %v472
        %483 = vmatprep.subr.bf16.mxu0 0
        %484 = vmatpush1.bf16.msra.mxu0 %v471
        %485 = vmatprep.subr.bf16.mxu0 0
        %486 = vmatpush1.bf16.msra.mxu0 %v470
        %487 = vmatprep.subr.bf16.mxu0 0
        %488 = vmatpush1.bf16.msra.mxu0 %v469
        %489 = vmatprep.subr.bf16.mxu0 0
        %490 = vmatpush1.bf16.msra.mxu0 %v468
        %491 = vmatprep.subr.bf16.mxu0 0
        %492 = vmatpush1.bf16.msra.mxu0 %v467
        %493 = vmatprep.subr.bf16.mxu0 0
        %494 = vmatpush1.bf16.msra.mxu0 %v466
        %495 = vmatprep.subr.bf16.mxu0 0
        %496 = vmatpush1.bf16.msra.mxu0 %v465
        %497 = vmatprep.subr.bf16.mxu0 0
        %498 = vmatpush2.bf16.msra.mxu0 0
        %499 = vmatprep.subr.bf16.mxu0 0
        %500 = vmatpush2.bf16.msra.mxu0 0
        %501 = vmatprep.subr.bf16.mxu0 0
        %502 = vmatpush2.bf16.msra.mxu0 0
        %503 = vmatprep.subr.bf16.mxu0 0
        %504 = vmatpush2.bf16.msra.mxu0 0
        %505 = vmatprep.subr.bf16.mxu0 0
        %506 = vmatpush2.bf16.msra.mxu0 0
        %507 = vmatprep.subr.bf16.mxu0 0
        %508 = vmatpush2.bf16.msra.mxu0 0
        %509 = vmatprep.subr.bf16.mxu0 0
        %510 = vmatpush2.bf16.msra.mxu0 0
        %511 = vmatprep.subr.bf16.mxu0 0
        %512 = vmatpush2.bf16.msra.mxu0 0
        %513 = vmatprep.mubr.bf16.mxu0 0
        %514 = vmatmul.mubr.bf16.gmra.mxu0 %v401
        %v515 = vpop.f32.mrf.mxu0
        %v516 = vadd.f32 %v335, %v515
        %v517 = vpop.f32.mrf.mxu0
        %v518 = vpop.f32.mrf.mxu0
        %v519 = vadd.f32 %v335, %v518
        %v520 = vpop.f32.mrf.mxu0
        %521 = vmatprep.mubr.bf16.mxu0 0
        %522 = vmatmul.mubr.bf16.gmra.mxu0 %v402
        %v523 = vpop.f32.mrf.mxu0
        %v524 = vadd.f32 %v335, %v523
        %v525 = vpop.f32.mrf.mxu0
        %v526 = vpop.f32.mrf.mxu0
        %v527 = vadd.f32 %v335, %v526
        %v528 = vpop.f32.mrf.mxu0
        %529 = vmatprep.mubr.bf16.mxu0 0
        %530 = vmatmul.mubr.bf16.gmra.mxu0 %v403
        %v531 = vpop.f32.mrf.mxu0
        %v532 = vadd.f32 %v335, %v531
        %v533 = vpop.f32.mrf.mxu0
        %v534 = vpop.f32.mrf.mxu0
        %v535 = vadd.f32 %v335, %v534
        %v536 = vpop.f32.mrf.mxu0
        %537 = vmatprep.mubr.bf16.mxu0 0
        %538 = vmatmul.mubr.bf16.gmra.mxu0 %v404
        %v539 = vpop.f32.mrf.mxu0
        %v540 = vadd.f32 %v335, %v539
        %v541 = vpop.f32.mrf.mxu0
        %v542 = vpop.f32.mrf.mxu0
        %v543 = vadd.f32 %v335, %v542
        %v544 = vpop.f32.mrf.mxu0
        %545 = vmatprep.mubr.bf16.mxu0 0
        %546 = vmatmul.mubr.bf16.gmra.mxu0 %v405
        %v547 = vpop.f32.mrf.mxu0
        %v548 = vadd.f32 %v335, %v547
        %v549 = vpop.f32.mrf.mxu0
        %v550 = vpop.f32.mrf.mxu0
        %v551 = vadd.f32 %v335, %v550
        %v552 = vpop.f32.mrf.mxu0
        %553 = vmatprep.mubr.bf16.mxu0 0
        %554 = vmatmul.mubr.bf16.gmra.mxu0 %v406
        %v555 = vpop.f32.mrf.mxu0
        %v556 = vadd.f32 %v335, %v555
        %v557 = vpop.f32.mrf.mxu0
        %v558 = vpop.f32.mrf.mxu0
        %v559 = vadd.f32 %v335, %v558
        %v560 = vpop.f32.mrf.mxu0
        %561 = vmatprep.mubr.bf16.mxu0 0
        %562 = vmatmul.mubr.bf16.gmra.mxu0 %v407
        %v563 = vpop.f32.mrf.mxu0
        %v564 = vadd.f32 %v335, %v563
        %v565 = vpop.f32.mrf.mxu0
        %v566 = vpop.f32.mrf.mxu0
        %v567 = vadd.f32 %v335, %v566
        %v568 = vpop.f32.mrf.mxu0
        %569 = vmatprep.mubr.bf16.mxu0 0
        %570 = vmatmul.mubr.bf16.gmra.mxu0 %v408
        %v571 = vpop.f32.mrf.mxu0
        %v572 = vadd.f32 %v335, %v571
        %v573 = vpop.f32.mrf.mxu0
        %v574 = vpop.f32.mrf.mxu0
        %v575 = vadd.f32 %v335, %v574
        %v576 = vpop.f32.mrf.mxu0
        %577 = vmatprep.mubr.bf16.mxu0 0
        %578 = vmatmul.mubr.bf16.gmra.mxu0 %v409
        %v579 = vpop.f32.mrf.mxu0
        %v580 = vadd.f32 %v335, %v579
        %v581 = vpop.f32.mrf.mxu0
        %v582 = vpop.f32.mrf.mxu0
        %v583 = vadd.f32 %v335, %v582
        %v584 = vpop.f32.mrf.mxu0
        %585 = vmatprep.mubr.bf16.mxu0 0
        %586 = vmatmul.mubr.bf16.gmra.mxu0 %v410
        %v587 = vpop.f32.mrf.mxu0
        %v588 = vadd.f32 %v335, %v587
        %v589 = vpop.f32.mrf.mxu0
        %v590 = vpop.f32.mrf.mxu0
        %v591 = vadd.f32 %v335, %v590
        %v592 = vpop.f32.mrf.mxu0
        %593 = vmatprep.mubr.bf16.mxu0 0
        %594 = vmatmul.mubr.bf16.gmra.mxu0 %v411
        %v595 = vpop.f32.mrf.mxu0
        %v596 = vadd.f32 %v335, %v595
        %v597 = vpop.f32.mrf.mxu0
        %v598 = vpop.f32.mrf.mxu0
        %v599 = vadd.f32 %v335, %v598
        %v600 = vpop.f32.mrf.mxu0
        %601 = vmatprep.mubr.bf16.mxu0 0
        %602 = vmatmul.mubr.bf16.gmra.mxu0 %v412
        %v603 = vpop.f32.mrf.mxu0
        %v604 = vadd.f32 %v335, %v603
        %v605 = vpop.f32.mrf.mxu0
        %v606 = vpop.f32.mrf.mxu0
        %v607 = vadd.f32 %v335, %v606
        %v608 = vpop.f32.mrf.mxu0
        %609 = vmatprep.mubr.bf16.mxu0 0
        %610 = vmatmul.mubr.bf16.gmra.mxu0 %v413
        %v611 = vpop.f32.mrf.mxu0
        %v612 = vadd.f32 %v335, %v611
        %v613 = vpop.f32.mrf.mxu0
        %v614 = vpop.f32.mrf.mxu0
        %v615 = vadd.f32 %v335, %v614
        %v616 = vpop.f32.mrf.mxu0
        %617 = vmatprep.mubr.bf16.mxu0 0
        %618 = vmatmul.mubr.bf16.gmra.mxu0 %v414
        %v619 = vpop.f32.mrf.mxu0
        %v620 = vadd.f32 %v335, %v619
        %v621 = vpop.f32.mrf.mxu0
        %v622 = vpop.f32.mrf.mxu0
        %v623 = vadd.f32 %v335, %v622
        %v624 = vpop.f32.mrf.mxu0
        %625 = vmatprep.mubr.bf16.mxu0 0
        %626 = vmatmul.mubr.bf16.gmra.mxu0 %v415
        %v627 = vpop.f32.mrf.mxu0
        %v628 = vadd.f32 %v335, %v627
        %v629 = vpop.f32.mrf.mxu0
        %v630 = vpop.f32.mrf.mxu0
        %v631 = vadd.f32 %v335, %v630
        %v632 = vpop.f32.mrf.mxu0
        %633 = vmatprep.mubr.bf16.mxu0 0
        %634 = vmatmul.mubr.bf16.gmra.mxu0 %v416
        %v635 = vpop.f32.mrf.mxu0
        %v636 = vadd.f32 %v335, %v635
        %v637 = vpop.f32.mrf.mxu0
        %v638 = vpop.f32.mrf.mxu0
        %v639 = vadd.f32 %v335, %v638
        %v640 = vpop.f32.mrf.mxu0
        %641 = vdwg.mxu0
        %v642 = vmax.f32 %v516, 0.0
        %v643 = vmax.f32 %v519, 0.0
        %v644 = vmax.f32 %v524, 0.0
        %v645 = vmax.f32 %v527, 0.0
        %v646 = vmax.f32 %v532, 0.0
        %v647 = vmax.f32 %v535, 0.0
        %v648 = vmax.f32 %v540, 0.0
        %v649 = vmax.f32 %v543, 0.0
        %v650 = vmax.f32 %v548, 0.0
        %v651 = vmax.f32 %v551, 0.0
        %v652 = vmax.f32 %v556, 0.0
        %v653 = vmax.f32 %v559, 0.0
        %v654 = vmax.f32 %v564, 0.0
        %v655 = vmax.f32 %v567, 0.0
        %v656 = vmax.f32 %v572, 0.0
        %v657 = vmax.f32 %v575, 0.0
        %v658 = vmax.f32 %v580, 0.0
        %v659 = vmax.f32 %v583, 0.0
        %v660 = vmax.f32 %v588, 0.0
        %v661 = vmax.f32 %v591, 0.0
        %v662 = vmax.f32 %v596, 0.0
        %v663 = vmax.f32 %v599, 0.0
        %v664 = vmax.f32 %v604, 0.0
        %v665 = vmax.f32 %v607, 0.0
        %v666 = vmax.f32 %v612, 0.0
        %v667 = vmax.f32 %v615, 0.0
        %v668 = vmax.f32 %v620, 0.0
        %v669 = vmax.f32 %v623, 0.0
        %v670 = vmax.f32 %v628, 0.0
        %v671 = vmax.f32 %v631, 0.0
        %v672 = vmax.f32 %v636, 0.0
        %v673 = vmax.f32 %v639, 0.0
        %v674 = vlaneseq
        %v675 = vshrl.u32 %v674, 7
        %v676 = vadd.s32 %v675, 8
        %v677 = vpack.c.bf16 %v643, %v642
        %v678 = vpack.c.bf16 %v645, %v644
        %v679 = vpack.c.bf16 %v647, %v646
        %v680 = vpack.c.bf16 %v649, %v648
        %v681 = vpack.c.bf16 %v651, %v650
        %v682 = vpack.c.bf16 %v653, %v652
        %v683 = vpack.c.bf16 %v655, %v654
        %v684 = vpack.c.bf16 %v657, %v656
        %v685 = vpack.c.bf16 %v659, %v658
        %v686 = vpack.c.bf16 %v661, %v660
        %v687 = vpack.c.bf16 %v663, %v662
        %v688 = vpack.c.bf16 %v665, %v664
        %v689 = vpack.c.bf16 %v667, %v666
        %v690 = vpack.c.bf16 %v669, %v668
        %v691 = vpack.c.bf16 %v671, %v670
        %v692 = vpack.c.bf16 %v673, %v672
        %v693 = vld [vmem:[#allocation8] sm:$0xf]
        %v694 = vld [vmem:[#allocation8 + $0x4] sm:$0xf]
        %v695 = vld [vmem:[#allocation8 + $0x8] sm:$0xf]
        %v696 = vld [vmem:[#allocation8 + $0xc] sm:$0xf]
        %v697 = vld [vmem:[#allocation8 + $0x10] sm:$0xf]
        %v698 = vld [vmem:[#allocation8 + $0x14] sm:$0xf]
        %v699 = vld [vmem:[#allocation8 + $0x18] sm:$0xf]
        %v700 = vld [vmem:[#allocation8 + $0x1c] sm:$0xf]
        %v701 = vld [vmem:[#allocation8 + $0x20] sm:$0xf]
        %v702 = vld [vmem:[#allocation8 + $0x24] sm:$0xf]
        %v703 = vld [vmem:[#allocation8 + $0x28] sm:$0xf]
        %v704 = vld [vmem:[#allocation8 + $0x2c] sm:$0xf]
        %v705 = vld [vmem:[#allocation8 + $0x30] sm:$0xf]
        %v706 = vld [vmem:[#allocation8 + $0x34] sm:$0xf]
        %v707 = vld [vmem:[#allocation8 + $0x38] sm:$0xf]
        %v708 = vld [vmem:[#allocation8 + $0x3c] sm:$0xf]
        %s709 = scalar_lea.vmem [#allocation2], 32
        %710 = vst [vmem:[%s709] sm:$0xff] %v642
        %711 = vst [vmem:[%s709 + $0x8] sm:$0xff] %v643
        %712 = vst [vmem:[%s709 + $0x10] sm:$0xff] %v644
        %713 = vst [vmem:[%s709 + $0x18] sm:$0xff] %v645
        %714 = vst [vmem:[%s709 + $0x20] sm:$0xff] %v646
        %715 = vst [vmem:[%s709 + $0x28] sm:$0xff] %v647
        %716 = vst [vmem:[%s709 + $0x30] sm:$0xff] %v648
        %717 = vst [vmem:[%s709 + $0x38] sm:$0xff] %v649
        %718 = vst [vmem:[%s709 + $0x40] sm:$0xff] %v650
        %719 = vst [vmem:[%s709 + $0x48] sm:$0xff] %v651
        %720 = vst [vmem:[%s709 + $0x50] sm:$0xff] %v652
        %721 = vst [vmem:[%s709 + $0x58] sm:$0xff] %v653
        %722 = vst [vmem:[%s709 + $0x60] sm:$0xff] %v654
        %723 = vst [vmem:[%s709 + $0x68] sm:$0xff] %v655
        %724 = vst [vmem:[%s709 + $0x70] sm:$0xff] %v656
        %725 = vst [vmem:[%s709 + $0x78] sm:$0xff] %v657
        %726 = vst [vmem:[%s709 + $0x80] sm:$0xff] %v658
        %727 = vst [vmem:[%s709 + $0x88] sm:$0xff] %v659
        %728 = vst [vmem:[%s709 + $0x90] sm:$0xff] %v660
        %729 = vst [vmem:[%s709 + $0x98] sm:$0xff] %v661
        %730 = vst [vmem:[%s709 + $0xa0] sm:$0xff] %v662
        %731 = vst [vmem:[%s709 + $0xa8] sm:$0xff] %v663
        %732 = vst [vmem:[%s709 + $0xb0] sm:$0xff] %v664
        %733 = vst [vmem:[%s709 + $0xb8] sm:$0xff] %v665
        %734 = vst [vmem:[%s709 + $0xc0] sm:$0xff] %v666
        %735 = vst [vmem:[%s709 + $0xc8] sm:$0xff] %v667
        %736 = vst [vmem:[%s709 + $0xd0] sm:$0xff] %v668
        %737 = vst [vmem:[%s709 + $0xd8] sm:$0xff] %v669
        %738 = vst [vmem:[%s709 + $0xe0] sm:$0xff] %v670
        %739 = vst [vmem:[%s709 + $0xe8] sm:$0xff] %v671
        %740 = vst [vmem:[%s709 + $0xf0] sm:$0xff] %v672
        %741 = vst [vmem:[%s709 + $0xf8] sm:$0xff] %v673
        %v742 = vld [vmem:[#allocation2] sm:$0xff]
        %v743 = vld [vmem:[#allocation2 + $0x8] sm:$0xff]
        %v744 = vld [vmem:[#allocation2 + $0x10] sm:$0xff]
        %v745 = vld [vmem:[#allocation2 + $0x18] sm:$0xff]
        %v746 = vld [vmem:[#allocation2 + $0x20] sm:$0xff]
        %v747 = vld [vmem:[#allocation2 + $0x28] sm:$0xff]
        %v748 = vld [vmem:[#allocation2 + $0x30] sm:$0xff]
        %v749 = vld [vmem:[#allocation2 + $0x38] sm:$0xff]
        %v750 = vld [vmem:[#allocation2 + $0x40] sm:$0xff]
        %v751 = vld [vmem:[#allocation2 + $0x48] sm:$0xff]
        %v752 = vld [vmem:[#allocation2 + $0x50] sm:$0xff]
        %v753 = vld [vmem:[#allocation2 + $0x58] sm:$0xff]
        %v754 = vld [vmem:[#allocation2 + $0x60] sm:$0xff]
        %v755 = vld [vmem:[#allocation2 + $0x68] sm:$0xff]
        %v756 = vld [vmem:[#allocation2 + $0x70] sm:$0xff]
        %v757 = vld [vmem:[#allocation2 + $0x78] sm:$0xff]
        %v758 = vld [vmem:[#allocation2 + $0x80] sm:$0xff]
        %v759 = vld [vmem:[#allocation2 + $0x88] sm:$0xff]
        %v760 = vld [vmem:[#allocation2 + $0x90] sm:$0xff]
        %v761 = vld [vmem:[#allocation2 + $0x98] sm:$0xff]
        %v762 = vld [vmem:[#allocation2 + $0xa0] sm:$0xff]
        %v763 = vld [vmem:[#allocation2 + $0xa8] sm:$0xff]
        %v764 = vld [vmem:[#allocation2 + $0xb0] sm:$0xff]
        %v765 = vld [vmem:[#allocation2 + $0xb8] sm:$0xff]
        %v766 = vld [vmem:[#allocation2 + $0xc0] sm:$0xff]
        %v767 = vld [vmem:[#allocation2 + $0xc8] sm:$0xff]
        %v768 = vld [vmem:[#allocation2 + $0xd0] sm:$0xff]
        %v769 = vld [vmem:[#allocation2 + $0xd8] sm:$0xff]
        %v770 = vld [vmem:[#allocation2 + $0xe0] sm:$0xff]
        %v771 = vld [vmem:[#allocation2 + $0xe8] sm:$0xff]
        %v772 = vld [vmem:[#allocation2 + $0xf0] sm:$0xff]
        %v773 = vld [vmem:[#allocation2 + $0xf8] sm:$0xff]
        %s774 = scalar_lea.vmem [#allocation2], 16
        %v775 = vld [vmem:[%s774] sm:$0xff]
        %v776 = vld [vmem:[%s774 + $0x8] sm:$0xff]
        %v777 = vld [vmem:[%s774 + $0x10] sm:$0xff]
        %v778 = vld [vmem:[%s774 + $0x18] sm:$0xff]
        %v779 = vld [vmem:[%s774 + $0x20] sm:$0xff]
        %v780 = vld [vmem:[%s774 + $0x28] sm:$0xff]
        %v781 = vld [vmem:[%s774 + $0x30] sm:$0xff]
        %v782 = vld [vmem:[%s774 + $0x38] sm:$0xff]
        %v783 = vld [vmem:[%s774 + $0x40] sm:$0xff]
        %v784 = vld [vmem:[%s774 + $0x48] sm:$0xff]
        %v785 = vld [vmem:[%s774 + $0x50] sm:$0xff]
        %v786 = vld [vmem:[%s774 + $0x58] sm:$0xff]
        %v787 = vld [vmem:[%s774 + $0x60] sm:$0xff]
        %v788 = vld [vmem:[%s774 + $0x68] sm:$0xff]
        %v789 = vld [vmem:[%s774 + $0x70] sm:$0xff]
        %v790 = vld [vmem:[%s774 + $0x78] sm:$0xff]
        %v791 = vld [vmem:[%s774 + $0x80] sm:$0xff]
        %v792 = vld [vmem:[%s774 + $0x88] sm:$0xff]
        %v793 = vld [vmem:[%s774 + $0x90] sm:$0xff]
        %v794 = vld [vmem:[%s774 + $0x98] sm:$0xff]
        %v795 = vld [vmem:[%s774 + $0xa0] sm:$0xff]
        %v796 = vld [vmem:[%s774 + $0xa8] sm:$0xff]
        %v797 = vld [vmem:[%s774 + $0xb0] sm:$0xff]
        %v798 = vld [vmem:[%s774 + $0xb8] sm:$0xff]
        %v799 = vld [vmem:[%s774 + $0xc0] sm:$0xff]
        %v800 = vld [vmem:[%s774 + $0xc8] sm:$0xff]
        %v801 = vld [vmem:[%s774 + $0xd0] sm:$0xff]
        %v802 = vld [vmem:[%s774 + $0xd8] sm:$0xff]
        %v803 = vld [vmem:[%s774 + $0xe0] sm:$0xff]
        %v804 = vld [vmem:[%s774 + $0xe8] sm:$0xff]
        %v805 = vld [vmem:[%s774 + $0xf0] sm:$0xff]
        %v806 = vld [vmem:[%s774 + $0xf8] sm:$0xff]
        %v807 = vmax.f32 %v742, %v775
        %v808 = vmax.f32 %v743, %v776
        %v809 = vmax.f32 %v744, %v777
        %v810 = vmax.f32 %v745, %v778
        %v811 = vmax.f32 %v746, %v779
        %v812 = vmax.f32 %v747, %v780
        %v813 = vmax.f32 %v748, %v781
        %v814 = vmax.f32 %v749, %v782
        %v815 = vmax.f32 %v750, %v783
        %v816 = vmax.f32 %v751, %v784
        %v817 = vmax.f32 %v752, %v785
        %v818 = vmax.f32 %v753, %v786
        %v819 = vmax.f32 %v754, %v787
        %v820 = vmax.f32 %v755, %v788
        %v821 = vmax.f32 %v756, %v789
        %v822 = vmax.f32 %v757, %v790
        %v823 = vmax.f32 %v758, %v791
        %v824 = vmax.f32 %v759, %v792
        %v825 = vmax.f32 %v760, %v793
        %v826 = vmax.f32 %v761, %v794
        %v827 = vmax.f32 %v762, %v795
        %v828 = vmax.f32 %v763, %v796
        %v829 = vmax.f32 %v764, %v797
        %v830 = vmax.f32 %v765, %v798
        %v831 = vmax.f32 %v766, %v799
        %v832 = vmax.f32 %v767, %v800
        %v833 = vmax.f32 %v768, %v801
        %v834 = vmax.f32 %v769, %v802
        %v835 = vmax.f32 %v770, %v803
        %v836 = vmax.f32 %v771, %v804
        %v837 = vmax.f32 %v772, %v805
        %v838 = vmax.f32 %v773, %v806
        %v839 = vld [vmem:[%s709] sm:$0xff]
        %v840 = vld [vmem:[%s709 + $0x8] sm:$0xff]
        %v841 = vld [vmem:[%s709 + $0x10] sm:$0xff]
        %v842 = vld [vmem:[%s709 + $0x18] sm:$0xff]
        %v843 = vld [vmem:[%s709 + $0x20] sm:$0xff]
        %v844 = vld [vmem:[%s709 + $0x28] sm:$0xff]
        %v845 = vld [vmem:[%s709 + $0x30] sm:$0xff]
        %v846 = vld [vmem:[%s709 + $0x38] sm:$0xff]
        %v847 = vld [vmem:[%s709 + $0x40] sm:$0xff]
        %v848 = vld [vmem:[%s709 + $0x48] sm:$0xff]
        %v849 = vld [vmem:[%s709 + $0x50] sm:$0xff]
        %v850 = vld [vmem:[%s709 + $0x58] sm:$0xff]
        %v851 = vld [vmem:[%s709 + $0x60] sm:$0xff]
        %v852 = vld [vmem:[%s709 + $0x68] sm:$0xff]
        %v853 = vld [vmem:[%s709 + $0x70] sm:$0xff]
        %v854 = vld [vmem:[%s709 + $0x78] sm:$0xff]
        %v855 = vld [vmem:[%s709 + $0x80] sm:$0xff]
        %v856 = vld [vmem:[%s709 + $0x88] sm:$0xff]
        %v857 = vld [vmem:[%s709 + $0x90] sm:$0xff]
        %v858 = vld [vmem:[%s709 + $0x98] sm:$0xff]
        %v859 = vld [vmem:[%s709 + $0xa0] sm:$0xff]
        %v860 = vld [vmem:[%s709 + $0xa8] sm:$0xff]
        %v861 = vld [vmem:[%s709 + $0xb0] sm:$0xff]
        %v862 = vld [vmem:[%s709 + $0xb8] sm:$0xff]
        %v863 = vld [vmem:[%s709 + $0xc0] sm:$0xff]
        %v864 = vld [vmem:[%s709 + $0xc8] sm:$0xff]
        %v865 = vld [vmem:[%s709 + $0xd0] sm:$0xff]
        %v866 = vld [vmem:[%s709 + $0xd8] sm:$0xff]
        %v867 = vld [vmem:[%s709 + $0xe0] sm:$0xff]
        %v868 = vld [vmem:[%s709 + $0xe8] sm:$0xff]
        %v869 = vld [vmem:[%s709 + $0xf0] sm:$0xff]
        %v870 = vld [vmem:[%s709 + $0xf8] sm:$0xff]
        %v871 = vmax.f32 %v807, %v839
        %v872 = vmax.f32 %v808, %v840
        %v873 = vmax.f32 %v809, %v841
        %v874 = vmax.f32 %v810, %v842
        %v875 = vmax.f32 %v811, %v843
        %v876 = vmax.f32 %v812, %v844
        %v877 = vmax.f32 %v813, %v845
        %v878 = vmax.f32 %v814, %v846
        %v879 = vmax.f32 %v815, %v847
        %v880 = vmax.f32 %v816, %v848
        %v881 = vmax.f32 %v817, %v849
        %v882 = vmax.f32 %v818, %v850
        %v883 = vmax.f32 %v819, %v851
        %v884 = vmax.f32 %v820, %v852
        %v885 = vmax.f32 %v821, %v853
        %v886 = vmax.f32 %v822, %v854
        %v887 = vmax.f32 %v823, %v855
        %v888 = vmax.f32 %v824, %v856
        %v889 = vmax.f32 %v825, %v857
        %v890 = vmax.f32 %v826, %v858
        %v891 = vmax.f32 %v827, %v859
        %v892 = vmax.f32 %v828, %v860
        %v893 = vmax.f32 %v829, %v861
        %v894 = vmax.f32 %v830, %v862
        %v895 = vmax.f32 %v831, %v863
        %v896 = vmax.f32 %v832, %v864
        %v897 = vmax.f32 %v833, %v865
        %v898 = vmax.f32 %v834, %v866
        %v899 = vmax.f32 %v835, %v867
        %v900 = vmax.f32 %v836, %v868
        %v901 = vmax.f32 %v837, %v869
        %v902 = vmax.f32 %v838, %v870
        %s903 = scalar_lea.vmem [#allocation2], 48
        %v904 = vld [vmem:[%s903] sm:$0xff]
        %v905 = vld [vmem:[%s903 + $0x8] sm:$0xff]
        %v906 = vld [vmem:[%s903 + $0x10] sm:$0xff]
        %v907 = vld [vmem:[%s903 + $0x18] sm:$0xff]
        %v908 = vld [vmem:[%s903 + $0x20] sm:$0xff]
        %v909 = vld [vmem:[%s903 + $0x28] sm:$0xff]
        %v910 = vld [vmem:[%s903 + $0x30] sm:$0xff]
        %v911 = vld [vmem:[%s903 + $0x38] sm:$0xff]
        %v912 = vld [vmem:[%s903 + $0x40] sm:$0xff]
        %v913 = vld [vmem:[%s903 + $0x48] sm:$0xff]
        %v914 = vld [vmem:[%s903 + $0x50] sm:$0xff]
        %v915 = vld [vmem:[%s903 + $0x58] sm:$0xff]
        %v916 = vld [vmem:[%s903 + $0x60] sm:$0xff]
        %v917 = vld [vmem:[%s903 + $0x68] sm:$0xff]
        %v918 = vld [vmem:[%s903 + $0x70] sm:$0xff]
        %v919 = vld [vmem:[%s903 + $0x78] sm:$0xff]
        %v920 = vld [vmem:[%s903 + $0x80] sm:$0xff]
        %v921 = vld [vmem:[%s903 + $0x88] sm:$0xff]
        %v922 = vld [vmem:[%s903 + $0x90] sm:$0xff]
        %v923 = vld [vmem:[%s903 + $0x98] sm:$0xff]
        %v924 = vld [vmem:[%s903 + $0xa0] sm:$0xff]
        %v925 = vld [vmem:[%s903 + $0xa8] sm:$0xff]
        %v926 = vld [vmem:[%s903 + $0xb0] sm:$0xff]
        %v927 = vld [vmem:[%s903 + $0xb8] sm:$0xff]
        %v928 = vld [vmem:[%s903 + $0xc0] sm:$0xff]
        %v929 = vld [vmem:[%s903 + $0xc8] sm:$0xff]
        %v930 = vld [vmem:[%s903 + $0xd0] sm:$0xff]
        %v931 = vld [vmem:[%s903 + $0xd8] sm:$0xff]
        %v932 = vld [vmem:[%s903 + $0xe0] sm:$0xff]
        %v933 = vld [vmem:[%s903 + $0xe8] sm:$0xff]
        %v934 = vld [vmem:[%s903 + $0xf0] sm:$0xff]
        %v935 = vld [vmem:[%s903 + $0xf8] sm:$0xff]
        %v936 = vmax.f32 %v871, %v904
        %v937 = vmax.f32 %v872, %v905
        %v938 = vmax.f32 %v873, %v906
        %v939 = vmax.f32 %v874, %v907
        %v940 = vmax.f32 %v875, %v908
        %v941 = vmax.f32 %v876, %v909
        %v942 = vmax.f32 %v877, %v910
        %v943 = vmax.f32 %v878, %v911
        %v944 = vmax.f32 %v879, %v912
        %v945 = vmax.f32 %v880, %v913
        %v946 = vmax.f32 %v881, %v914
        %v947 = vmax.f32 %v882, %v915
        %v948 = vmax.f32 %v883, %v916
        %v949 = vmax.f32 %v884, %v917
        %v950 = vmax.f32 %v885, %v918
        %v951 = vmax.f32 %v886, %v919
        %v952 = vmax.f32 %v887, %v920
        %v953 = vmax.f32 %v888, %v921
        %v954 = vmax.f32 %v889, %v922
        %v955 = vmax.f32 %v890, %v923
        %v956 = vmax.f32 %v891, %v924
        %v957 = vmax.f32 %v892, %v925
        %v958 = vmax.f32 %v893, %v926
        %v959 = vmax.f32 %v894, %v927
        %v960 = vmax.f32 %v895, %v928
        %v961 = vmax.f32 %v896, %v929
        %v962 = vmax.f32 %v897, %v930
        %v963 = vmax.f32 %v898, %v931
        %v964 = vmax.f32 %v899, %v932
        %v965 = vmax.f32 %v900, %v933
        %v966 = vmax.f32 %v901, %v934
        %v967 = vmax.f32 %v902, %v935
        %s968 = scalar_lea.vmem [#allocation2], 64
        %v969 = vld [vmem:[%s968] sm:$0xff]
        %v970 = vld [vmem:[%s968 + $0x8] sm:$0xff]
        %v971 = vld [vmem:[%s968 + $0x10] sm:$0xff]
        %v972 = vld [vmem:[%s968 + $0x18] sm:$0xff]
        %v973 = vld [vmem:[%s968 + $0x20] sm:$0xff]
        %v974 = vld [vmem:[%s968 + $0x28] sm:$0xff]
        %v975 = vld [vmem:[%s968 + $0x30] sm:$0xff]
        %v976 = vld [vmem:[%s968 + $0x38] sm:$0xff]
        %v977 = vld [vmem:[%s968 + $0x40] sm:$0xff]
        %v978 = vld [vmem:[%s968 + $0x48] sm:$0xff]
        %v979 = vld [vmem:[%s968 + $0x50] sm:$0xff]
        %v980 = vld [vmem:[%s968 + $0x58] sm:$0xff]
        %v981 = vld [vmem:[%s968 + $0x60] sm:$0xff]
        %v982 = vld [vmem:[%s968 + $0x68] sm:$0xff]
        %v983 = vld [vmem:[%s968 + $0x70] sm:$0xff]
        %v984 = vld [vmem:[%s968 + $0x78] sm:$0xff]
        %v985 = vld [vmem:[%s968 + $0x80] sm:$0xff]
        %v986 = vld [vmem:[%s968 + $0x88] sm:$0xff]
        %v987 = vld [vmem:[%s968 + $0x90] sm:$0xff]
        %v988 = vld [vmem:[%s968 + $0x98] sm:$0xff]
        %v989 = vld [vmem:[%s968 + $0xa0] sm:$0xff]
        %v990 = vld [vmem:[%s968 + $0xa8] sm:$0xff]
        %v991 = vld [vmem:[%s968 + $0xb0] sm:$0xff]
        %v992 = vld [vmem:[%s968 + $0xb8] sm:$0xff]
        %v993 = vld [vmem:[%s968 + $0xc0] sm:$0xff]
        %v994 = vld [vmem:[%s968 + $0xc8] sm:$0xff]
        %v995 = vld [vmem:[%s968 + $0xd0] sm:$0xff]
        %v996 = vld [vmem:[%s968 + $0xd8] sm:$0xff]
        %v997 = vld [vmem:[%s968 + $0xe0] sm:$0xff]
        %v998 = vld [vmem:[%s968 + $0xe8] sm:$0xff]
        %v999 = vld [vmem:[%s968 + $0xf0] sm:$0xff]
        %v1000 = vld [vmem:[%s968 + $0xf8] sm:$0xff]
        %v1001 = vmax.f32 %v936, %v969
        %v1002 = vmax.f32 %v937, %v970
        %v1003 = vmax.f32 %v938, %v971
        %v1004 = vmax.f32 %v939, %v972
        %v1005 = vmax.f32 %v940, %v973
        %v1006 = vmax.f32 %v941, %v974
        %v1007 = vmax.f32 %v942, %v975
        %v1008 = vmax.f32 %v943, %v976
        %v1009 = vmax.f32 %v944, %v977
        %v1010 = vmax.f32 %v945, %v978
        %v1011 = vmax.f32 %v946, %v979
        %v1012 = vmax.f32 %v947, %v980
        %v1013 = vmax.f32 %v948, %v981
        %v1014 = vmax.f32 %v949, %v982
        %v1015 = vmax.f32 %v950, %v983
        %v1016 = vmax.f32 %v951, %v984
        %v1017 = vmax.f32 %v952, %v985
        %v1018 = vmax.f32 %v953, %v986
        %v1019 = vmax.f32 %v954, %v987
        %v1020 = vmax.f32 %v955, %v988
        %v1021 = vmax.f32 %v956, %v989
        %v1022 = vmax.f32 %v957, %v990
        %v1023 = vmax.f32 %v958, %v991
        %v1024 = vmax.f32 %v959, %v992
        %v1025 = vmax.f32 %v960, %v993
        %v1026 = vmax.f32 %v961, %v994
        %v1027 = vmax.f32 %v962, %v995
        %v1028 = vmax.f32 %v963, %v996
        %v1029 = vmax.f32 %v964, %v997
        %v1030 = vmax.f32 %v965, %v998
        %v1031 = vmax.f32 %v966, %v999
        %v1032 = vmax.f32 %v967, %v1000
        %vm1033 = vcmp.lt.s32.totalorder %v675, 15
        %vm1034 = vcmp.lt.s32.totalorder %v676, 15
        %v1035 = vrot.slane %v1001, 1
        %v1036 = vrot.slane %v1003, 1
        %v1037 = vrot.slane %v1005, 1
        %v1038 = vrot.slane %v1007, 1
        %v1039 = vrot.slane %v1009, 1
        %v1040 = vrot.slane %v1011, 1
        %v1041 = vrot.slane %v1013, 1
        %v1042 = vrot.slane %v1015, 1
        %v1043 = vrot.slane %v1017, 1
        %v1044 = vrot.slane %v1019, 1
        %v1045 = vrot.slane %v1021, 1
        %v1046 = vrot.slane %v1023, 1
        %v1047 = vrot.slane %v1025, 1
        %v1048 = vrot.slane %v1027, 1
        %v1049 = vrot.slane %v1029, 1
        %v1050 = vrot.slane %v1031, 1
        %v1051 = vrot.slane %v1002, 1
        %v1052 = vrot.slane %v1004, 1
        %v1053 = vrot.slane %v1006, 1
        %v1054 = vrot.slane %v1008, 1
        %v1055 = vrot.slane %v1010, 1
        %v1056 = vrot.slane %v1012, 1
        %v1057 = vrot.slane %v1014, 1
        %v1058 = vrot.slane %v1016, 1
        %v1059 = vrot.slane %v1018, 1
        %v1060 = vrot.slane %v1020, 1
        %v1061 = vrot.slane %v1022, 1
        %v1062 = vrot.slane %v1024, 1
        %v1063 = vrot.slane %v1026, 1
        %v1064 = vrot.slane %v1028, 1
        %v1065 = vrot.slane %v1030, 1
        %v1066 = vrot.slane %v1032, 1
        %vm1067 = vcmp.lt.s32.totalorder %v675, 7
        %v1068 = vsel %vm1067, %v1035, %v1051
        %v1069 = vsel %vm1067, %v1036, %v1052
        %v1070 = vsel %vm1067, %v1037, %v1053
        %v1071 = vsel %vm1067, %v1038, %v1054
        %v1072 = vsel %vm1067, %v1039, %v1055
        %v1073 = vsel %vm1067, %v1040, %v1056
        %v1074 = vsel %vm1067, %v1041, %v1057
        %v1075 = vsel %vm1067, %v1042, %v1058
        %v1076 = vsel %vm1067, %v1043, %v1059
        %v1077 = vsel %vm1067, %v1044, %v1060
        %v1078 = vsel %vm1067, %v1045, %v1061
        %v1079 = vsel %vm1067, %v1046, %v1062
        %v1080 = vsel %vm1067, %v1047, %v1063
        %v1081 = vsel %vm1067, %v1048, %v1064
        %v1082 = vsel %vm1067, %v1049, %v1065
        %v1083 = vsel %vm1067, %v1050, %v1066
        %v1084 = vsel %vm1067, %v1051, %v1035
        %v1085 = vsel %vm1067, %v1052, %v1036
        %v1086 = vsel %vm1067, %v1053, %v1037
        %v1087 = vsel %vm1067, %v1054, %v1038
        %v1088 = vsel %vm1067, %v1055, %v1039
        %v1089 = vsel %vm1067, %v1056, %v1040
        %v1090 = vsel %vm1067, %v1057, %v1041
        %v1091 = vsel %vm1067, %v1058, %v1042
        %v1092 = vsel %vm1067, %v1059, %v1043
        %v1093 = vsel %vm1067, %v1060, %v1044
        %v1094 = vsel %vm1067, %v1061, %v1045
        %v1095 = vsel %vm1067, %v1062, %v1046
        %v1096 = vsel %vm1067, %v1063, %v1047
        %v1097 = vsel %vm1067, %v1064, %v1048
        %v1098 = vsel %vm1067, %v1065, %v1049
        %v1099 = vsel %vm1067, %v1066, %v1050
        %v1100 = vsel %vm1033, 1, 0
        %v1101 = vsel %vm1034, 1, 0
        %vm1102 = vcmp.eq.s32.totalorder %v1100, 1
        %vm1103 = vcmp.eq.s32.totalorder %v1101, 1
        %v1104 = vsel %vm1102, %v1068, 0.0
        %v1105 = vsel %vm1103, %v1084, 0.0
        %v1106 = vsel %vm1102, %v1069, 0.0
        %v1107 = vsel %vm1103, %v1085, 0.0
        %v1108 = vsel %vm1102, %v1070, 0.0
        %v1109 = vsel %vm1103, %v1086, 0.0
        %v1110 = vsel %vm1102, %v1071, 0.0
        %v1111 = vsel %vm1103, %v1087, 0.0
        %v1112 = vsel %vm1102, %v1072, 0.0
        %v1113 = vsel %vm1103, %v1088, 0.0
        %v1114 = vsel %vm1102, %v1073, 0.0
        %v1115 = vsel %vm1103, %v1089, 0.0
        %v1116 = vsel %vm1102, %v1074, 0.0
        %v1117 = vsel %vm1103, %v1090, 0.0
        %v1118 = vsel %vm1102, %v1075, 0.0
        %v1119 = vsel %vm1103, %v1091, 0.0
        %v1120 = vsel %vm1102, %v1076, 0.0
        %v1121 = vsel %vm1103, %v1092, 0.0
        %v1122 = vsel %vm1102, %v1077, 0.0
        %v1123 = vsel %vm1103, %v1093, 0.0
        %v1124 = vsel %vm1102, %v1078, 0.0
        %v1125 = vsel %vm1103, %v1094, 0.0
        %v1126 = vsel %vm1102, %v1079, 0.0
        %v1127 = vsel %vm1103, %v1095, 0.0
        %v1128 = vsel %vm1102, %v1080, 0.0
        %v1129 = vsel %vm1103, %v1096, 0.0
        %v1130 = vsel %vm1102, %v1081, 0.0
        %v1131 = vsel %vm1103, %v1097, 0.0
        %v1132 = vsel %vm1102, %v1082, 0.0
        %v1133 = vsel %vm1103, %v1098, 0.0
        %v1134 = vsel %vm1102, %v1083, 0.0
        %v1135 = vsel %vm1103, %v1099, 0.0
        %vm1136 = vcmp.ge.s32.totalorder %v675, 1
        %vm1137 = vcmp.ge.s32.totalorder %v676, 1
        %v1138 = vrot.slane %v1001, 7
        %v1139 = vrot.slane %v1003, 7
        %v1140 = vrot.slane %v1005, 7
        %v1141 = vrot.slane %v1007, 7
        %v1142 = vrot.slane %v1009, 7
        %v1143 = vrot.slane %v1011, 7
        %v1144 = vrot.slane %v1013, 7
        %v1145 = vrot.slane %v1015, 7
        %v1146 = vrot.slane %v1017, 7
        %v1147 = vrot.slane %v1019, 7
        %v1148 = vrot.slane %v1021, 7
        %v1149 = vrot.slane %v1023, 7
        %v1150 = vrot.slane %v1025, 7
        %v1151 = vrot.slane %v1027, 7
        %v1152 = vrot.slane %v1029, 7
        %v1153 = vrot.slane %v1031, 7
        %v1154 = vrot.slane %v1002, 7
        %v1155 = vrot.slane %v1004, 7
        %v1156 = vrot.slane %v1006, 7
        %v1157 = vrot.slane %v1008, 7
        %v1158 = vrot.slane %v1010, 7
        %v1159 = vrot.slane %v1012, 7
        %v1160 = vrot.slane %v1014, 7
        %v1161 = vrot.slane %v1016, 7
        %v1162 = vrot.slane %v1018, 7
        %v1163 = vrot.slane %v1020, 7
        %v1164 = vrot.slane %v1022, 7
        %v1165 = vrot.slane %v1024, 7
        %v1166 = vrot.slane %v1026, 7
        %v1167 = vrot.slane %v1028, 7
        %v1168 = vrot.slane %v1030, 7
        %v1169 = vrot.slane %v1032, 7
        %vm1170 = vcmp.lt.s32.totalorder %v675, 1
        %v1171 = vsel %vm1170, %v1138, %v1154
        %v1172 = vsel %vm1170, %v1139, %v1155
        %v1173 = vsel %vm1170, %v1140, %v1156
        %v1174 = vsel %vm1170, %v1141, %v1157
        %v1175 = vsel %vm1170, %v1142, %v1158
        %v1176 = vsel %vm1170, %v1143, %v1159
        %v1177 = vsel %vm1170, %v1144, %v1160
        %v1178 = vsel %vm1170, %v1145, %v1161
        %v1179 = vsel %vm1170, %v1146, %v1162
        %v1180 = vsel %vm1170, %v1147, %v1163
        %v1181 = vsel %vm1170, %v1148, %v1164
        %v1182 = vsel %vm1170, %v1149, %v1165
        %v1183 = vsel %vm1170, %v1150, %v1166
        %v1184 = vsel %vm1170, %v1151, %v1167
        %v1185 = vsel %vm1170, %v1152, %v1168
        %v1186 = vsel %vm1170, %v1153, %v1169
        %v1187 = vsel %vm1170, %v1154, %v1138
        %v1188 = vsel %vm1170, %v1155, %v1139
        %v1189 = vsel %vm1170, %v1156, %v1140
        %v1190 = vsel %vm1170, %v1157, %v1141
        %v1191 = vsel %vm1170, %v1158, %v1142
        %v1192 = vsel %vm1170, %v1159, %v1143
        %v1193 = vsel %vm1170, %v1160, %v1144
        %v1194 = vsel %vm1170, %v1161, %v1145
        %v1195 = vsel %vm1170, %v1162, %v1146
        %v1196 = vsel %vm1170, %v1163, %v1147
        %v1197 = vsel %vm1170, %v1164, %v1148
        %v1198 = vsel %vm1170, %v1165, %v1149
        %v1199 = vsel %vm1170, %v1166, %v1150
        %v1200 = vsel %vm1170, %v1167, %v1151
        %v1201 = vsel %vm1170, %v1168, %v1152
        %v1202 = vsel %vm1170, %v1169, %v1153
        %v1203 = vsel %vm1136, 1, 0
        %v1204 = vsel %vm1137, 1, 0
        %vm1205 = vcmp.eq.s32.totalorder %v1203, 1
        %vm1206 = vcmp.eq.s32.totalorder %v1204, 1
        %v1207 = vsel %vm1205, %v1187, 0.0
        %v1208 = vsel %vm1206, %v1171, 0.0
        %v1209 = vsel %vm1205, %v1188, 0.0
        %v1210 = vsel %vm1206, %v1172, 0.0
        %v1211 = vsel %vm1205, %v1189, 0.0
        %v1212 = vsel %vm1206, %v1173, 0.0
        %v1213 = vsel %vm1205, %v1190, 0.0
        %v1214 = vsel %vm1206, %v1174, 0.0
        %v1215 = vsel %vm1205, %v1191, 0.0
        %v1216 = vsel %vm1206, %v1175, 0.0
        %v1217 = vsel %vm1205, %v1192, 0.0
        %v1218 = vsel %vm1206, %v1176, 0.0
        %v1219 = vsel %vm1205, %v1193, 0.0
        %v1220 = vsel %vm1206, %v1177, 0.0
        %v1221 = vsel %vm1205, %v1194, 0.0
        %v1222 = vsel %vm1206, %v1178, 0.0
        %v1223 = vsel %vm1205, %v1195, 0.0
        %v1224 = vsel %vm1206, %v1179, 0.0
        %v1225 = vsel %vm1205, %v1196, 0.0
        %v1226 = vsel %vm1206, %v1180, 0.0
        %v1227 = vsel %vm1205, %v1197, 0.0
        %v1228 = vsel %vm1206, %v1181, 0.0
        %v1229 = vsel %vm1205, %v1198, 0.0
        %v1230 = vsel %vm1206, %v1182, 0.0
        %v1231 = vsel %vm1205, %v1199, 0.0
        %v1232 = vsel %vm1206, %v1183, 0.0
        %v1233 = vsel %vm1205, %v1200, 0.0
        %v1234 = vsel %vm1206, %v1184, 0.0
        %v1235 = vsel %vm1205, %v1201, 0.0
        %v1236 = vsel %vm1206, %v1185, 0.0
        %v1237 = vsel %vm1205, %v1202, 0.0
        %v1238 = vsel %vm1206, %v1186, 0.0
        %v1239 = vmax.f32 %v1104, %v1207
        %v1240 = vmax.f32 %v1105, %v1208
        %v1241 = vmax.f32 %v1106, %v1209
        %v1242 = vmax.f32 %v1107, %v1210
        %v1243 = vmax.f32 %v1108, %v1211
        %v1244 = vmax.f32 %v1109, %v1212
        %v1245 = vmax.f32 %v1110, %v1213
        %v1246 = vmax.f32 %v1111, %v1214
        %v1247 = vmax.f32 %v1112, %v1215
        %v1248 = vmax.f32 %v1113, %v1216
        %v1249 = vmax.f32 %v1114, %v1217
        %v1250 = vmax.f32 %v1115, %v1218
        %v1251 = vmax.f32 %v1116, %v1219
        %v1252 = vmax.f32 %v1117, %v1220
        %v1253 = vmax.f32 %v1118, %v1221
        %v1254 = vmax.f32 %v1119, %v1222
        %v1255 = vmax.f32 %v1120, %v1223
        %v1256 = vmax.f32 %v1121, %v1224
        %v1257 = vmax.f32 %v1122, %v1225
        %v1258 = vmax.f32 %v1123, %v1226
        %v1259 = vmax.f32 %v1124, %v1227
        %v1260 = vmax.f32 %v1125, %v1228
        %v1261 = vmax.f32 %v1126, %v1229
        %v1262 = vmax.f32 %v1127, %v1230
        %v1263 = vmax.f32 %v1128, %v1231
        %v1264 = vmax.f32 %v1129, %v1232
        %v1265 = vmax.f32 %v1130, %v1233
        %v1266 = vmax.f32 %v1131, %v1234
        %v1267 = vmax.f32 %v1132, %v1235
        %v1268 = vmax.f32 %v1133, %v1236
        %v1269 = vmax.f32 %v1134, %v1237
        %v1270 = vmax.f32 %v1135, %v1238
        %v1271 = vmax.f32 %v1001, %v1239
        %v1272 = vmax.f32 %v1002, %v1240
        %v1273 = vmax.f32 %v1003, %v1241
        %v1274 = vmax.f32 %v1004, %v1242
        %v1275 = vmax.f32 %v1005, %v1243
        %v1276 = vmax.f32 %v1006, %v1244
        %v1277 = vmax.f32 %v1007, %v1245
        %v1278 = vmax.f32 %v1008, %v1246
        %v1279 = vmax.f32 %v1009, %v1247
        %v1280 = vmax.f32 %v1010, %v1248
        %v1281 = vmax.f32 %v1011, %v1249
        %v1282 = vmax.f32 %v1012, %v1250
        %v1283 = vmax.f32 %v1013, %v1251
        %v1284 = vmax.f32 %v1014, %v1252
        %v1285 = vmax.f32 %v1015, %v1253
        %v1286 = vmax.f32 %v1016, %v1254
        %v1287 = vmax.f32 %v1017, %v1255
        %v1288 = vmax.f32 %v1018, %v1256
        %v1289 = vmax.f32 %v1019, %v1257
        %v1290 = vmax.f32 %v1020, %v1258
        %v1291 = vmax.f32 %v1021, %v1259
        %v1292 = vmax.f32 %v1022, %v1260
        %v1293 = vmax.f32 %v1023, %v1261
        %v1294 = vmax.f32 %v1024, %v1262
        %v1295 = vmax.f32 %v1025, %v1263
        %v1296 = vmax.f32 %v1026, %v1264
        %v1297 = vmax.f32 %v1027, %v1265
        %v1298 = vmax.f32 %v1028, %v1266
        %v1299 = vmax.f32 %v1029, %v1267
        %v1300 = vmax.f32 %v1030, %v1268
        %v1301 = vmax.f32 %v1031, %v1269
        %v1302 = vmax.f32 %v1032, %v1270
        %vm1303 = vcmp.lt.s32.totalorder %v675, 14
        %vm1304 = vcmp.lt.s32.totalorder %v676, 14
        %v1305 = vrot.slane %v1001, 2
        %v1306 = vrot.slane %v1003, 2
        %v1307 = vrot.slane %v1005, 2
        %v1308 = vrot.slane %v1007, 2
        %v1309 = vrot.slane %v1009, 2
        %v1310 = vrot.slane %v1011, 2
        %v1311 = vrot.slane %v1013, 2
        %v1312 = vrot.slane %v1015, 2
        %v1313 = vrot.slane %v1017, 2
        %v1314 = vrot.slane %v1019, 2
        %v1315 = vrot.slane %v1021, 2
        %v1316 = vrot.slane %v1023, 2
        %v1317 = vrot.slane %v1025, 2
        %v1318 = vrot.slane %v1027, 2
        %v1319 = vrot.slane %v1029, 2
        %v1320 = vrot.slane %v1031, 2
        %v1321 = vrot.slane %v1002, 2
        %v1322 = vrot.slane %v1004, 2
        %v1323 = vrot.slane %v1006, 2
        %v1324 = vrot.slane %v1008, 2
        %v1325 = vrot.slane %v1010, 2
        %v1326 = vrot.slane %v1012, 2
        %v1327 = vrot.slane %v1014, 2
        %v1328 = vrot.slane %v1016, 2
        %v1329 = vrot.slane %v1018, 2
        %v1330 = vrot.slane %v1020, 2
        %v1331 = vrot.slane %v1022, 2
        %v1332 = vrot.slane %v1024, 2
        %v1333 = vrot.slane %v1026, 2
        %v1334 = vrot.slane %v1028, 2
        %v1335 = vrot.slane %v1030, 2
        %v1336 = vrot.slane %v1032, 2
        %vm1337 = vcmp.lt.s32.totalorder %v675, 6
        %v1338 = vsel %vm1337, %v1305, %v1321
        %v1339 = vsel %vm1337, %v1306, %v1322
        %v1340 = vsel %vm1337, %v1307, %v1323
        %v1341 = vsel %vm1337, %v1308, %v1324
        %v1342 = vsel %vm1337, %v1309, %v1325
        %v1343 = vsel %vm1337, %v1310, %v1326
        %v1344 = vsel %vm1337, %v1311, %v1327
        %v1345 = vsel %vm1337, %v1312, %v1328
        %v1346 = vsel %vm1337, %v1313, %v1329
        %v1347 = vsel %vm1337, %v1314, %v1330
        %v1348 = vsel %vm1337, %v1315, %v1331
        %v1349 = vsel %vm1337, %v1316, %v1332
        %v1350 = vsel %vm1337, %v1317, %v1333
        %v1351 = vsel %vm1337, %v1318, %v1334
        %v1352 = vsel %vm1337, %v1319, %v1335
        %v1353 = vsel %vm1337, %v1320, %v1336
        %v1354 = vsel %vm1337, %v1321, %v1305
        %v1355 = vsel %vm1337, %v1322, %v1306
        %v1356 = vsel %vm1337, %v1323, %v1307
        %v1357 = vsel %vm1337, %v1324, %v1308
        %v1358 = vsel %vm1337, %v1325, %v1309
        %v1359 = vsel %vm1337, %v1326, %v1310
        %v1360 = vsel %vm1337, %v1327, %v1311
        %v1361 = vsel %vm1337, %v1328, %v1312
        %v1362 = vsel %vm1337, %v1329, %v1313
        %v1363 = vsel %vm1337, %v1330, %v1314
        %v1364 = vsel %vm1337, %v1331, %v1315
        %v1365 = vsel %vm1337, %v1332, %v1316
        %v1366 = vsel %vm1337, %v1333, %v1317
        %v1367 = vsel %vm1337, %v1334, %v1318
        %v1368 = vsel %vm1337, %v1335, %v1319
        %v1369 = vsel %vm1337, %v1336, %v1320
        %v1370 = vsel %vm1303, 1, 0
        %v1371 = vsel %vm1304, 1, 0
        %vm1372 = vcmp.eq.s32.totalorder %v1370, 1
        %vm1373 = vcmp.eq.s32.totalorder %v1371, 1
        %v1374 = vsel %vm1372, %v1338, 0.0
        %v1375 = vsel %vm1373, %v1354, 0.0
        %v1376 = vsel %vm1372, %v1339, 0.0
        %v1377 = vsel %vm1373, %v1355, 0.0
        %v1378 = vsel %vm1372, %v1340, 0.0
        %v1379 = vsel %vm1373, %v1356, 0.0
        %v1380 = vsel %vm1372, %v1341, 0.0
        %v1381 = vsel %vm1373, %v1357, 0.0
        %v1382 = vsel %vm1372, %v1342, 0.0
        %v1383 = vsel %vm1373, %v1358, 0.0
        %v1384 = vsel %vm1372, %v1343, 0.0
        %v1385 = vsel %vm1373, %v1359, 0.0
        %v1386 = vsel %vm1372, %v1344, 0.0
        %v1387 = vsel %vm1373, %v1360, 0.0
        %v1388 = vsel %vm1372, %v1345, 0.0
        %v1389 = vsel %vm1373, %v1361, 0.0
        %v1390 = vsel %vm1372, %v1346, 0.0
        %v1391 = vsel %vm1373, %v1362, 0.0
        %v1392 = vsel %vm1372, %v1347, 0.0
        %v1393 = vsel %vm1373, %v1363, 0.0
        %v1394 = vsel %vm1372, %v1348, 0.0
        %v1395 = vsel %vm1373, %v1364, 0.0
        %v1396 = vsel %vm1372, %v1349, 0.0
        %v1397 = vsel %vm1373, %v1365, 0.0
        %v1398 = vsel %vm1372, %v1350, 0.0
        %v1399 = vsel %vm1373, %v1366, 0.0
        %v1400 = vsel %vm1372, %v1351, 0.0
        %v1401 = vsel %vm1373, %v1367, 0.0
        %v1402 = vsel %vm1372, %v1352, 0.0
        %v1403 = vsel %vm1373, %v1368, 0.0
        %v1404 = vsel %vm1372, %v1353, 0.0
        %v1405 = vsel %vm1373, %v1369, 0.0
        %vm1406 = vcmp.ge.s32.totalorder %v675, 2
        %vm1407 = vcmp.ge.s32.totalorder %v676, 2
        %v1408 = vrot.slane %v1001, 6
        %v1409 = vrot.slane %v1003, 6
        %v1410 = vrot.slane %v1005, 6
        %v1411 = vrot.slane %v1007, 6
        %v1412 = vrot.slane %v1009, 6
        %v1413 = vrot.slane %v1011, 6
        %v1414 = vrot.slane %v1013, 6
        %v1415 = vrot.slane %v1015, 6
        %v1416 = vrot.slane %v1017, 6
        %v1417 = vrot.slane %v1019, 6
        %v1418 = vrot.slane %v1021, 6
        %v1419 = vrot.slane %v1023, 6
        %v1420 = vrot.slane %v1025, 6
        %v1421 = vrot.slane %v1027, 6
        %v1422 = vrot.slane %v1029, 6
        %v1423 = vrot.slane %v1031, 6
        %v1424 = vrot.slane %v1002, 6
        %v1425 = vrot.slane %v1004, 6
        %v1426 = vrot.slane %v1006, 6
        %v1427 = vrot.slane %v1008, 6
        %v1428 = vrot.slane %v1010, 6
        %v1429 = vrot.slane %v1012, 6
        %v1430 = vrot.slane %v1014, 6
        %v1431 = vrot.slane %v1016, 6
        %v1432 = vrot.slane %v1018, 6
        %v1433 = vrot.slane %v1020, 6
        %v1434 = vrot.slane %v1022, 6
        %v1435 = vrot.slane %v1024, 6
        %v1436 = vrot.slane %v1026, 6
        %v1437 = vrot.slane %v1028, 6
        %v1438 = vrot.slane %v1030, 6
        %v1439 = vrot.slane %v1032, 6
        %vm1440 = vcmp.lt.s32.totalorder %v675, 2
        %v1441 = vsel %vm1440, %v1408, %v1424
        %v1442 = vsel %vm1440, %v1409, %v1425
        %v1443 = vsel %vm1440, %v1410, %v1426
        %v1444 = vsel %vm1440, %v1411, %v1427
        %v1445 = vsel %vm1440, %v1412, %v1428
        %v1446 = vsel %vm1440, %v1413, %v1429
        %v1447 = vsel %vm1440, %v1414, %v1430
        %v1448 = vsel %vm1440, %v1415, %v1431
        %v1449 = vsel %vm1440, %v1416, %v1432
        %v1450 = vsel %vm1440, %v1417, %v1433
        %v1451 = vsel %vm1440, %v1418, %v1434
        %v1452 = vsel %vm1440, %v1419, %v1435
        %v1453 = vsel %vm1440, %v1420, %v1436
        %v1454 = vsel %vm1440, %v1421, %v1437
        %v1455 = vsel %vm1440, %v1422, %v1438
        %v1456 = vsel %vm1440, %v1423, %v1439
        %v1457 = vsel %vm1440, %v1424, %v1408
        %v1458 = vsel %vm1440, %v1425, %v1409
        %v1459 = vsel %vm1440, %v1426, %v1410
        %v1460 = vsel %vm1440, %v1427, %v1411
        %v1461 = vsel %vm1440, %v1428, %v1412
        %v1462 = vsel %vm1440, %v1429, %v1413
        %v1463 = vsel %vm1440, %v1430, %v1414
        %v1464 = vsel %vm1440, %v1431, %v1415
        %v1465 = vsel %vm1440, %v1432, %v1416
        %v1466 = vsel %vm1440, %v1433, %v1417
        %v1467 = vsel %vm1440, %v1434, %v1418
        %v1468 = vsel %vm1440, %v1435, %v1419
        %v1469 = vsel %vm1440, %v1436, %v1420
        %v1470 = vsel %vm1440, %v1437, %v1421
        %v1471 = vsel %vm1440, %v1438, %v1422
        %v1472 = vsel %vm1440, %v1439, %v1423
        %v1473 = vsel %vm1406, 1, 0
        %v1474 = vsel %vm1407, 1, 0
        %vm1475 = vcmp.eq.s32.totalorder %v1473, 1
        %vm1476 = vcmp.eq.s32.totalorder %v1474, 1
        %v1477 = vsel %vm1475, %v1457, 0.0
        %v1478 = vsel %vm1476, %v1441, 0.0
        %v1479 = vsel %vm1475, %v1458, 0.0
        %v1480 = vsel %vm1476, %v1442, 0.0
        %v1481 = vsel %vm1475, %v1459, 0.0
        %v1482 = vsel %vm1476, %v1443, 0.0
        %v1483 = vsel %vm1475, %v1460, 0.0
        %v1484 = vsel %vm1476, %v1444, 0.0
        %v1485 = vsel %vm1475, %v1461, 0.0
        %v1486 = vsel %vm1476, %v1445, 0.0
        %v1487 = vsel %vm1475, %v1462, 0.0
        %v1488 = vsel %vm1476, %v1446, 0.0
        %v1489 = vsel %vm1475, %v1463, 0.0
        %v1490 = vsel %vm1476, %v1447, 0.0
        %v1491 = vsel %vm1475, %v1464, 0.0
        %v1492 = vsel %vm1476, %v1448, 0.0
        %v1493 = vsel %vm1475, %v1465, 0.0
        %v1494 = vsel %vm1476, %v1449, 0.0
        %v1495 = vsel %vm1475, %v1466, 0.0
        %v1496 = vsel %vm1476, %v1450, 0.0
        %v1497 = vsel %vm1475, %v1467, 0.0
        %v1498 = vsel %vm1476, %v1451, 0.0
        %v1499 = vsel %vm1475, %v1468, 0.0
        %v1500 = vsel %vm1476, %v1452, 0.0
        %v1501 = vsel %vm1475, %v1469, 0.0
        %v1502 = vsel %vm1476, %v1453, 0.0
        %v1503 = vsel %vm1475, %v1470, 0.0
        %v1504 = vsel %vm1476, %v1454, 0.0
        %v1505 = vsel %vm1475, %v1471, 0.0
        %v1506 = vsel %vm1476, %v1455, 0.0
        %v1507 = vsel %vm1475, %v1472, 0.0
        %v1508 = vsel %vm1476, %v1456, 0.0
        %v1509 = vmax.f32 %v1374, %v1477
        %v1510 = vmax.f32 %v1375, %v1478
        %v1511 = vmax.f32 %v1376, %v1479
        %v1512 = vmax.f32 %v1377, %v1480
        %v1513 = vmax.f32 %v1378, %v1481
        %v1514 = vmax.f32 %v1379, %v1482
        %v1515 = vmax.f32 %v1380, %v1483
        %v1516 = vmax.f32 %v1381, %v1484
        %v1517 = vmax.f32 %v1382, %v1485
        %v1518 = vmax.f32 %v1383, %v1486
        %v1519 = vmax.f32 %v1384, %v1487
        %v1520 = vmax.f32 %v1385, %v1488
        %v1521 = vmax.f32 %v1386, %v1489
        %v1522 = vmax.f32 %v1387, %v1490
        %v1523 = vmax.f32 %v1388, %v1491
        %v1524 = vmax.f32 %v1389, %v1492
        %v1525 = vmax.f32 %v1390, %v1493
        %v1526 = vmax.f32 %v1391, %v1494
        %v1527 = vmax.f32 %v1392, %v1495
        %v1528 = vmax.f32 %v1393, %v1496
        %v1529 = vmax.f32 %v1394, %v1497
        %v1530 = vmax.f32 %v1395, %v1498
        %v1531 = vmax.f32 %v1396, %v1499
        %v1532 = vmax.f32 %v1397, %v1500
        %v1533 = vmax.f32 %v1398, %v1501
        %v1534 = vmax.f32 %v1399, %v1502
        %v1535 = vmax.f32 %v1400, %v1503
        %v1536 = vmax.f32 %v1401, %v1504
        %v1537 = vmax.f32 %v1402, %v1505
        %v1538 = vmax.f32 %v1403, %v1506
        %v1539 = vmax.f32 %v1404, %v1507
        %v1540 = vmax.f32 %v1405, %v1508
        %v1541 = vmax.f32 %v1271, %v1509
        %v1542 = vmax.f32 %v1272, %v1510
        %v1543 = vmax.f32 %v1273, %v1511
        %v1544 = vmax.f32 %v1274, %v1512
        %v1545 = vmax.f32 %v1275, %v1513
        %v1546 = vmax.f32 %v1276, %v1514
        %v1547 = vmax.f32 %v1277, %v1515
        %v1548 = vmax.f32 %v1278, %v1516
        %v1549 = vmax.f32 %v1279, %v1517
        %v1550 = vmax.f32 %v1280, %v1518
        %v1551 = vmax.f32 %v1281, %v1519
        %v1552 = vmax.f32 %v1282, %v1520
        %v1553 = vmax.f32 %v1283, %v1521
        %v1554 = vmax.f32 %v1284, %v1522
        %v1555 = vmax.f32 %v1285, %v1523
        %v1556 = vmax.f32 %v1286, %v1524
        %v1557 = vmax.f32 %v1287, %v1525
        %v1558 = vmax.f32 %v1288, %v1526
        %v1559 = vmax.f32 %v1289, %v1527
        %v1560 = vmax.f32 %v1290, %v1528
        %v1561 = vmax.f32 %v1291, %v1529
        %v1562 = vmax.f32 %v1292, %v1530
        %v1563 = vmax.f32 %v1293, %v1531
        %v1564 = vmax.f32 %v1294, %v1532
        %v1565 = vmax.f32 %v1295, %v1533
        %v1566 = vmax.f32 %v1296, %v1534
        %v1567 = vmax.f32 %v1297, %v1535
        %v1568 = vmax.f32 %v1298, %v1536
        %v1569 = vmax.f32 %v1299, %v1537
        %v1570 = vmax.f32 %v1300, %v1538
        %v1571 = vmax.f32 %v1301, %v1539
        %v1572 = vmax.f32 %v1302, %v1540
        %v1573 = vpack.c.bf16 %v1542, %v1541
        %v1574 = vpack.c.bf16 %v1544, %v1543
        %v1575 = vpack.c.bf16 %v1546, %v1545
        %v1576 = vpack.c.bf16 %v1548, %v1547
        %v1577 = vpack.c.bf16 %v1550, %v1549
        %v1578 = vpack.c.bf16 %v1552, %v1551
        %v1579 = vpack.c.bf16 %v1554, %v1553
        %v1580 = vpack.c.bf16 %v1556, %v1555
        %v1581 = vpack.c.bf16 %v1558, %v1557
        %v1582 = vpack.c.bf16 %v1560, %v1559
        %v1583 = vpack.c.bf16 %v1562, %v1561
        %v1584 = vpack.c.bf16 %v1564, %v1563
        %v1585 = vpack.c.bf16 %v1566, %v1565
        %v1586 = vpack.c.bf16 %v1568, %v1567
        %v1587 = vpack.c.bf16 %v1570, %v1569
        %v1588 = vpack.c.bf16 %v1572, %v1571
        %s1589 = scalar_lea.vmem [#allocation8], 64
        %v1590 = vld [vmem:[%s1589] sm:$0xf]
        %v1591 = vld [vmem:[%s1589 + $0x4] sm:$0xf]
        %v1592 = vld [vmem:[%s1589 + $0x8] sm:$0xf]
        %v1593 = vld [vmem:[%s1589 + $0xc] sm:$0xf]
        %v1594 = vld [vmem:[%s1589 + $0x10] sm:$0xf]
        %v1595 = vld [vmem:[%s1589 + $0x14] sm:$0xf]
        %v1596 = vld [vmem:[%s1589 + $0x18] sm:$0xf]
        %v1597 = vld [vmem:[%s1589 + $0x1c] sm:$0xf]
        %v1598 = vld [vmem:[%s1589 + $0x20] sm:$0xf]
        %v1599 = vld [vmem:[%s1589 + $0x24] sm:$0xf]
        %v1600 = vld [vmem:[%s1589 + $0x28] sm:$0xf]
        %v1601 = vld [vmem:[%s1589 + $0x2c] sm:$0xf]
        %v1602 = vld [vmem:[%s1589 + $0x30] sm:$0xf]
        %v1603 = vld [vmem:[%s1589 + $0x34] sm:$0xf]
        %v1604 = vld [vmem:[%s1589 + $0x38] sm:$0xf]
        %v1605 = vld [vmem:[%s1589 + $0x3c] sm:$0xf]
        %v1622 = vunpack.c.l.b16 %v1590
        %v1623 = vunpack.c.l.b16 %v1591
        %v1624 = vunpack.c.l.b16 %v1592
        %v1625 = vunpack.c.l.b16 %v1593
        %v1626 = vunpack.c.l.b16 %v1594
        %v1627 = vunpack.c.l.b16 %v1595
        %v1628 = vunpack.c.l.b16 %v1596
        %v1629 = vunpack.c.l.b16 %v1597
        %v1630 = vunpack.c.l.b16 %v1598
        %v1631 = vunpack.c.l.b16 %v1599
        %v1632 = vunpack.c.l.b16 %v1600
        %v1633 = vunpack.c.l.b16 %v1601
        %v1634 = vunpack.c.l.b16 %v1602
        %v1635 = vunpack.c.l.b16 %v1603
        %v1636 = vunpack.c.l.b16 %v1604
        %v1637 = vunpack.c.l.b16 %v1605
        %v1638 = vpack.c.b16 %v1623, %v1622
        %v1639 = vpack.c.b16 %v1625, %v1624
        %v1640 = vpack.c.b16 %v1627, %v1626
        %v1641 = vpack.c.b16 %v1629, %v1628
        %v1642 = vpack.c.b16 %v1631, %v1630
        %v1643 = vpack.c.b16 %v1633, %v1632
        %v1644 = vpack.c.b16 %v1635, %v1634
        %v1645 = vpack.c.b16 %v1637, %v1636
        %1654 = vmatprep.subr.bf16.mxu0 0
        %1655 = vmatpush1.bf16.msra.mxu0 %v1645
        %1656 = vmatprep.subr.bf16.mxu0 0
        %1657 = vmatpush1.bf16.msra.mxu0 %v1644
        %1658 = vmatprep.subr.bf16.mxu0 0
        %1659 = vmatpush1.bf16.msra.mxu0 %v1643
        %1660 = vmatprep.subr.bf16.mxu0 0
        %1661 = vmatpush1.bf16.msra.mxu0 %v1642
        %1662 = vmatprep.subr.bf16.mxu0 0
        %1663 = vmatpush1.bf16.msra.mxu0 %v1641
        %1664 = vmatprep.subr.bf16.mxu0 0
        %1665 = vmatpush1.bf16.msra.mxu0 %v1640
        %1666 = vmatprep.subr.bf16.mxu0 0
        %1667 = vmatpush1.bf16.msra.mxu0 %v1639
        %1668 = vmatprep.subr.bf16.mxu0 0
        %1669 = vmatpush1.bf16.msra.mxu0 %v1638
        %1670 = vmatprep.subr.bf16.mxu0 0
        %1671 = vmatpush2.bf16.msra.mxu0 0
        %1672 = vmatprep.subr.bf16.mxu0 0
        %1673 = vmatpush2.bf16.msra.mxu0 0
        %1674 = vmatprep.subr.bf16.mxu0 0
        %1675 = vmatpush2.bf16.msra.mxu0 0
        %1676 = vmatprep.subr.bf16.mxu0 0
        %1677 = vmatpush2.bf16.msra.mxu0 0
        %1678 = vmatprep.subr.bf16.mxu0 0
        %1679 = vmatpush2.bf16.msra.mxu0 0
        %1680 = vmatprep.subr.bf16.mxu0 0
        %1681 = vmatpush2.bf16.msra.mxu0 0
        %1682 = vmatprep.subr.bf16.mxu0 0
        %1683 = vmatpush2.bf16.msra.mxu0 0
        %1684 = vmatprep.subr.bf16.mxu0 0
        %1685 = vmatpush2.bf16.msra.mxu0 0
        %1686 = vmatprep.mubr.bf16.mxu0 0
        %1687 = vmatmul.mubr.bf16.gmra.mxu0 %v1573
        %v1688 = vpop.f32.mrf.mxu0
        %v1689 = vadd.f32 0.0, %v1688
        %v1690 = vpop.f32.mrf.mxu0
        %v1691 = vpop.f32.mrf.mxu0
        %v1692 = vadd.f32 0.0, %v1691
        %v1693 = vpop.f32.mrf.mxu0
        %1694 = vmatprep.mubr.bf16.mxu0 0
        %1695 = vmatmul.mubr.bf16.gmra.mxu0 %v1574
        %v1696 = vpop.f32.mrf.mxu0
        %v1697 = vadd.f32 0.0, %v1696
        %v1698 = vpop.f32.mrf.mxu0
        %v1699 = vpop.f32.mrf.mxu0
        %v1700 = vadd.f32 0.0, %v1699
        %v1701 = vpop.f32.mrf.mxu0
        %1702 = vmatprep.mubr.bf16.mxu0 0
        %1703 = vmatmul.mubr.bf16.gmra.mxu0 %v1575
        %v1704 = vpop.f32.mrf.mxu0
        %v1705 = vadd.f32 0.0, %v1704
        %v1706 = vpop.f32.mrf.mxu0
        %v1707 = vpop.f32.mrf.mxu0
        %v1708 = vadd.f32 0.0, %v1707
        %v1709 = vpop.f32.mrf.mxu0
        %1710 = vmatprep.mubr.bf16.mxu0 0
        %1711 = vmatmul.mubr.bf16.gmra.mxu0 %v1576
        %v1712 = vpop.f32.mrf.mxu0
        %v1713 = vadd.f32 0.0, %v1712
        %v1714 = vpop.f32.mrf.mxu0
        %v1715 = vpop.f32.mrf.mxu0
        %v1716 = vadd.f32 0.0, %v1715
        %v1717 = vpop.f32.mrf.mxu0
        %1718 = vmatprep.mubr.bf16.mxu0 0
        %1719 = vmatmul.mubr.bf16.gmra.mxu0 %v1577
        %v1720 = vpop.f32.mrf.mxu0
        %v1721 = vadd.f32 0.0, %v1720
        %v1722 = vpop.f32.mrf.mxu0
        %v1723 = vpop.f32.mrf.mxu0
        %v1724 = vadd.f32 0.0, %v1723
        %v1725 = vpop.f32.mrf.mxu0
        %1726 = vmatprep.mubr.bf16.mxu0 0
        %1727 = vmatmul.mubr.bf16.gmra.mxu0 %v1578
        %v1728 = vpop.f32.mrf.mxu0
        %v1729 = vadd.f32 0.0, %v1728
        %v1730 = vpop.f32.mrf.mxu0
        %v1731 = vpop.f32.mrf.mxu0
        %v1732 = vadd.f32 0.0, %v1731
        %v1733 = vpop.f32.mrf.mxu0
        %1734 = vmatprep.mubr.bf16.mxu0 0
        %1735 = vmatmul.mubr.bf16.gmra.mxu0 %v1579
        %v1736 = vpop.f32.mrf.mxu0
        %v1737 = vadd.f32 0.0, %v1736
        %v1738 = vpop.f32.mrf.mxu0
        %v1739 = vpop.f32.mrf.mxu0
        %v1740 = vadd.f32 0.0, %v1739
        %v1741 = vpop.f32.mrf.mxu0
        %1742 = vmatprep.mubr.bf16.mxu0 0
        %1743 = vmatmul.mubr.bf16.gmra.mxu0 %v1580
        %v1744 = vpop.f32.mrf.mxu0
        %v1745 = vadd.f32 0.0, %v1744
        %v1746 = vpop.f32.mrf.mxu0
        %v1747 = vpop.f32.mrf.mxu0
        %v1748 = vadd.f32 0.0, %v1747
        %v1749 = vpop.f32.mrf.mxu0
        %1750 = vmatprep.mubr.bf16.mxu0 0
        %1751 = vmatmul.mubr.bf16.gmra.mxu0 %v1581
        %v1752 = vpop.f32.mrf.mxu0
        %v1753 = vadd.f32 0.0, %v1752
        %v1754 = vpop.f32.mrf.mxu0
        %v1755 = vpop.f32.mrf.mxu0
        %v1756 = vadd.f32 0.0, %v1755
        %v1757 = vpop.f32.mrf.mxu0
        %1758 = vmatprep.mubr.bf16.mxu0 0
        %1759 = vmatmul.mubr.bf16.gmra.mxu0 %v1582
        %v1760 = vpop.f32.mrf.mxu0
        %v1761 = vadd.f32 0.0, %v1760
        %v1762 = vpop.f32.mrf.mxu0
        %v1763 = vpop.f32.mrf.mxu0
        %v1764 = vadd.f32 0.0, %v1763
        %v1765 = vpop.f32.mrf.mxu0
        %1766 = vmatprep.mubr.bf16.mxu0 0
        %1767 = vmatmul.mubr.bf16.gmra.mxu0 %v1583
        %v1768 = vpop.f32.mrf.mxu0
        %v1769 = vadd.f32 0.0, %v1768
        %v1770 = vpop.f32.mrf.mxu0
        %v1771 = vpop.f32.mrf.mxu0
        %v1772 = vadd.f32 0.0, %v1771
        %v1773 = vpop.f32.mrf.mxu0
        %1774 = vmatprep.mubr.bf16.mxu0 0
        %1775 = vmatmul.mubr.bf16.gmra.mxu0 %v1584
        %v1776 = vpop.f32.mrf.mxu0
        %v1777 = vadd.f32 0.0, %v1776
        %v1778 = vpop.f32.mrf.mxu0
        %v1779 = vpop.f32.mrf.mxu0
        %v1780 = vadd.f32 0.0, %v1779
        %v1781 = vpop.f32.mrf.mxu0
        %1782 = vmatprep.mubr.bf16.mxu0 0
        %1783 = vmatmul.mubr.bf16.gmra.mxu0 %v1585
        %v1784 = vpop.f32.mrf.mxu0
        %v1785 = vadd.f32 0.0, %v1784
        %v1786 = vpop.f32.mrf.mxu0
        %v1787 = vpop.f32.mrf.mxu0
        %v1788 = vadd.f32 0.0, %v1787
        %v1789 = vpop.f32.mrf.mxu0
        %1790 = vmatprep.mubr.bf16.mxu0 0
        %1791 = vmatmul.mubr.bf16.gmra.mxu0 %v1586
        %v1792 = vpop.f32.mrf.mxu0
        %v1793 = vadd.f32 0.0, %v1792
        %v1794 = vpop.f32.mrf.mxu0
        %v1795 = vpop.f32.mrf.mxu0
        %v1796 = vadd.f32 0.0, %v1795
        %v1797 = vpop.f32.mrf.mxu0
        %1798 = vmatprep.mubr.bf16.mxu0 0
        %1799 = vmatmul.mubr.bf16.gmra.mxu0 %v1587
        %v1800 = vpop.f32.mrf.mxu0
        %v1801 = vadd.f32 0.0, %v1800
        %v1802 = vpop.f32.mrf.mxu0
        %v1803 = vpop.f32.mrf.mxu0
        %v1804 = vadd.f32 0.0, %v1803
        %v1805 = vpop.f32.mrf.mxu0
        %1806 = vmatprep.mubr.bf16.mxu0 0
        %1807 = vmatmul.mubr.bf16.gmra.mxu0 %v1588
        %v1808 = vpop.f32.mrf.mxu0
        %v1809 = vadd.f32 0.0, %v1808
        %v1810 = vpop.f32.mrf.mxu0
        %v1811 = vpop.f32.mrf.mxu0
        %v1812 = vadd.f32 0.0, %v1811
        %v1813 = vpop.f32.mrf.mxu0
        %1814 = vdwg.mxu0
        %v1831 = vunpack.c.l.b16 %v693
        %v1832 = vunpack.c.l.b16 %v694
        %v1833 = vunpack.c.l.b16 %v695
        %v1834 = vunpack.c.l.b16 %v696
        %v1835 = vunpack.c.l.b16 %v697
        %v1836 = vunpack.c.l.b16 %v698
        %v1837 = vunpack.c.l.b16 %v699
        %v1838 = vunpack.c.l.b16 %v700
        %v1839 = vunpack.c.l.b16 %v701
        %v1840 = vunpack.c.l.b16 %v702
        %v1841 = vunpack.c.l.b16 %v703
        %v1842 = vunpack.c.l.b16 %v704
        %v1843 = vunpack.c.l.b16 %v705
        %v1844 = vunpack.c.l.b16 %v706
        %v1845 = vunpack.c.l.b16 %v707
        %v1846 = vunpack.c.l.b16 %v708
        %v1847 = vpack.c.b16 %v1832, %v1831
        %v1848 = vpack.c.b16 %v1834, %v1833
        %v1849 = vpack.c.b16 %v1836, %v1835
        %v1850 = vpack.c.b16 %v1838, %v1837
        %v1851 = vpack.c.b16 %v1840, %v1839
        %v1852 = vpack.c.b16 %v1842, %v1841
        %v1853 = vpack.c.b16 %v1844, %v1843
        %v1854 = vpack.c.b16 %v1846, %v1845
        %1863 = vmatprep.subr.bf16.mxu0 0
        %1864 = vmatpush1.bf16.msra.mxu0 %v1854
        %1865 = vmatprep.subr.bf16.mxu0 0
        %1866 = vmatpush1.bf16.msra.mxu0 %v1853
        %1867 = vmatprep.subr.bf16.mxu0 0
        %1868 = vmatpush1.bf16.msra.mxu0 %v1852
        %1869 = vmatprep.subr.bf16.mxu0 0
        %1870 = vmatpush1.bf16.msra.mxu0 %v1851
        %1871 = vmatprep.subr.bf16.mxu0 0
        %1872 = vmatpush1.bf16.msra.mxu0 %v1850
        %1873 = vmatprep.subr.bf16.mxu0 0
        %1874 = vmatpush1.bf16.msra.mxu0 %v1849
        %1875 = vmatprep.subr.bf16.mxu0 0
        %1876 = vmatpush1.bf16.msra.mxu0 %v1848
        %1877 = vmatprep.subr.bf16.mxu0 0
        %1878 = vmatpush1.bf16.msra.mxu0 %v1847
        %1879 = vmatprep.subr.bf16.mxu0 0
        %1880 = vmatpush2.bf16.msra.mxu0 0
        %1881 = vmatprep.subr.bf16.mxu0 0
        %1882 = vmatpush2.bf16.msra.mxu0 0
        %1883 = vmatprep.subr.bf16.mxu0 0
        %1884 = vmatpush2.bf16.msra.mxu0 0
        %1885 = vmatprep.subr.bf16.mxu0 0
        %1886 = vmatpush2.bf16.msra.mxu0 0
        %1887 = vmatprep.subr.bf16.mxu0 0
        %1888 = vmatpush2.bf16.msra.mxu0 0
        %1889 = vmatprep.subr.bf16.mxu0 0
        %1890 = vmatpush2.bf16.msra.mxu0 0
        %1891 = vmatprep.subr.bf16.mxu0 0
        %1892 = vmatpush2.bf16.msra.mxu0 0
        %1893 = vmatprep.subr.bf16.mxu0 0
        %1894 = vmatpush2.bf16.msra.mxu0 0
        %1895 = vmatprep.mubr.bf16.mxu0 0
        %1896 = vmatmul.mubr.bf16.gmra.mxu0 %v677
        %v1897 = vpop.f32.mrf.mxu0
        %v1898 = vadd.f32 %v1689, %v1897
        %v1899 = vpop.f32.mrf.mxu0
        %v1900 = vpop.f32.mrf.mxu0
        %v1901 = vadd.f32 %v1692, %v1900
        %v1902 = vpop.f32.mrf.mxu0
        %1903 = vmatprep.mubr.bf16.mxu0 0
        %1904 = vmatmul.mubr.bf16.gmra.mxu0 %v678
        %v1905 = vpop.f32.mrf.mxu0
        %v1906 = vadd.f32 %v1697, %v1905
        %v1907 = vpop.f32.mrf.mxu0
        %v1908 = vpop.f32.mrf.mxu0
        %v1909 = vadd.f32 %v1700, %v1908
        %v1910 = vpop.f32.mrf.mxu0
        %1911 = vmatprep.mubr.bf16.mxu0 0
        %1912 = vmatmul.mubr.bf16.gmra.mxu0 %v679
        %v1913 = vpop.f32.mrf.mxu0
        %v1914 = vadd.f32 %v1705, %v1913
        %v1915 = vpop.f32.mrf.mxu0
        %v1916 = vpop.f32.mrf.mxu0
        %v1917 = vadd.f32 %v1708, %v1916
        %v1918 = vpop.f32.mrf.mxu0
        %1919 = vmatprep.mubr.bf16.mxu0 0
        %1920 = vmatmul.mubr.bf16.gmra.mxu0 %v680
        %v1921 = vpop.f32.mrf.mxu0
        %v1922 = vadd.f32 %v1713, %v1921
        %v1923 = vpop.f32.mrf.mxu0
        %v1924 = vpop.f32.mrf.mxu0
        %v1925 = vadd.f32 %v1716, %v1924
        %v1926 = vpop.f32.mrf.mxu0
        %1927 = vmatprep.mubr.bf16.mxu0 0
        %1928 = vmatmul.mubr.bf16.gmra.mxu0 %v681
        %v1929 = vpop.f32.mrf.mxu0
        %v1930 = vadd.f32 %v1721, %v1929
        %v1931 = vpop.f32.mrf.mxu0
        %v1932 = vpop.f32.mrf.mxu0
        %v1933 = vadd.f32 %v1724, %v1932
        %v1934 = vpop.f32.mrf.mxu0
        %1935 = vmatprep.mubr.bf16.mxu0 0
        %1936 = vmatmul.mubr.bf16.gmra.mxu0 %v682
        %v1937 = vpop.f32.mrf.mxu0
        %v1938 = vadd.f32 %v1729, %v1937
        %v1939 = vpop.f32.mrf.mxu0
        %v1940 = vpop.f32.mrf.mxu0
        %v1941 = vadd.f32 %v1732, %v1940
        %v1942 = vpop.f32.mrf.mxu0
        %1943 = vmatprep.mubr.bf16.mxu0 0
        %1944 = vmatmul.mubr.bf16.gmra.mxu0 %v683
        %v1945 = vpop.f32.mrf.mxu0
        %v1946 = vadd.f32 %v1737, %v1945
        %v1947 = vpop.f32.mrf.mxu0
        %v1948 = vpop.f32.mrf.mxu0
        %v1949 = vadd.f32 %v1740, %v1948
        %v1950 = vpop.f32.mrf.mxu0
        %1951 = vmatprep.mubr.bf16.mxu0 0
        %1952 = vmatmul.mubr.bf16.gmra.mxu0 %v684
        %v1953 = vpop.f32.mrf.mxu0
        %v1954 = vadd.f32 %v1745, %v1953
        %v1955 = vpop.f32.mrf.mxu0
        %v1956 = vpop.f32.mrf.mxu0
        %v1957 = vadd.f32 %v1748, %v1956
        %v1958 = vpop.f32.mrf.mxu0
        %1959 = vmatprep.mubr.bf16.mxu0 0
        %1960 = vmatmul.mubr.bf16.gmra.mxu0 %v685
        %v1961 = vpop.f32.mrf.mxu0
        %v1962 = vadd.f32 %v1753, %v1961
        %v1963 = vpop.f32.mrf.mxu0
        %v1964 = vpop.f32.mrf.mxu0
        %v1965 = vadd.f32 %v1756, %v1964
        %v1966 = vpop.f32.mrf.mxu0
        %1967 = vmatprep.mubr.bf16.mxu0 0
        %1968 = vmatmul.mubr.bf16.gmra.mxu0 %v686
        %v1969 = vpop.f32.mrf.mxu0
        %v1970 = vadd.f32 %v1761, %v1969
        %v1971 = vpop.f32.mrf.mxu0
        %v1972 = vpop.f32.mrf.mxu0
        %v1973 = vadd.f32 %v1764, %v1972
        %v1974 = vpop.f32.mrf.mxu0
        %1975 = vmatprep.mubr.bf16.mxu0 0
        %1976 = vmatmul.mubr.bf16.gmra.mxu0 %v687
        %v1977 = vpop.f32.mrf.mxu0
        %v1978 = vadd.f32 %v1769, %v1977
        %v1979 = vpop.f32.mrf.mxu0
        %v1980 = vpop.f32.mrf.mxu0
        %v1981 = vadd.f32 %v1772, %v1980
        %v1982 = vpop.f32.mrf.mxu0
        %1983 = vmatprep.mubr.bf16.mxu0 0
        %1984 = vmatmul.mubr.bf16.gmra.mxu0 %v688
        %v1985 = vpop.f32.mrf.mxu0
        %v1986 = vadd.f32 %v1777, %v1985
        %v1987 = vpop.f32.mrf.mxu0
        %v1988 = vpop.f32.mrf.mxu0
        %v1989 = vadd.f32 %v1780, %v1988
        %v1990 = vpop.f32.mrf.mxu0
        %1991 = vmatprep.mubr.bf16.mxu0 0
        %1992 = vmatmul.mubr.bf16.gmra.mxu0 %v689
        %v1993 = vpop.f32.mrf.mxu0
        %v1994 = vadd.f32 %v1785, %v1993
        %v1995 = vpop.f32.mrf.mxu0
        %v1996 = vpop.f32.mrf.mxu0
        %v1997 = vadd.f32 %v1788, %v1996
        %v1998 = vpop.f32.mrf.mxu0
        %1999 = vmatprep.mubr.bf16.mxu0 0
        %2000 = vmatmul.mubr.bf16.gmra.mxu0 %v690
        %v2001 = vpop.f32.mrf.mxu0
        %v2002 = vadd.f32 %v1793, %v2001
        %v2003 = vpop.f32.mrf.mxu0
        %v2004 = vpop.f32.mrf.mxu0
        %v2005 = vadd.f32 %v1796, %v2004
        %v2006 = vpop.f32.mrf.mxu0
        %2007 = vmatprep.mubr.bf16.mxu0 0
        %2008 = vmatmul.mubr.bf16.gmra.mxu0 %v691
        %v2009 = vpop.f32.mrf.mxu0
        %v2010 = vadd.f32 %v1801, %v2009
        %v2011 = vpop.f32.mrf.mxu0
        %v2012 = vpop.f32.mrf.mxu0
        %v2013 = vadd.f32 %v1804, %v2012
        %v2014 = vpop.f32.mrf.mxu0
        %2015 = vmatprep.mubr.bf16.mxu0 0
        %2016 = vmatmul.mubr.bf16.gmra.mxu0 %v692
        %v2017 = vpop.f32.mrf.mxu0
        %v2018 = vadd.f32 %v1809, %v2017
        %v2019 = vpop.f32.mrf.mxu0
        %v2020 = vpop.f32.mrf.mxu0
        %v2021 = vadd.f32 %v1812, %v2020
        %v2022 = vpop.f32.mrf.mxu0
        %2023 = vdwg.mxu0
        %2024 = vst [vmem:[%s709] sm:$0xff] %v1541
        %2025 = vst [vmem:[%s709 + $0x8] sm:$0xff] %v1542
        %2026 = vst [vmem:[%s709 + $0x10] sm:$0xff] %v1543
        %2027 = vst [vmem:[%s709 + $0x18] sm:$0xff] %v1544
        %2028 = vst [vmem:[%s709 + $0x20] sm:$0xff] %v1545
        %2029 = vst [vmem:[%s709 + $0x28] sm:$0xff] %v1546
        %2030 = vst [vmem:[%s709 + $0x30] sm:$0xff] %v1547
        %2031 = vst [vmem:[%s709 + $0x38] sm:$0xff] %v1548
        %2032 = vst [vmem:[%s709 + $0x40] sm:$0xff] %v1549
        %2033 = vst [vmem:[%s709 + $0x48] sm:$0xff] %v1550
        %2034 = vst [vmem:[%s709 + $0x50] sm:$0xff] %v1551
        %2035 = vst [vmem:[%s709 + $0x58] sm:$0xff] %v1552
        %2036 = vst [vmem:[%s709 + $0x60] sm:$0xff] %v1553
        %2037 = vst [vmem:[%s709 + $0x68] sm:$0xff] %v1554
        %2038 = vst [vmem:[%s709 + $0x70] sm:$0xff] %v1555
        %2039 = vst [vmem:[%s709 + $0x78] sm:$0xff] %v1556
        %2040 = vst [vmem:[%s709 + $0x80] sm:$0xff] %v1557
        %2041 = vst [vmem:[%s709 + $0x88] sm:$0xff] %v1558
        %2042 = vst [vmem:[%s709 + $0x90] sm:$0xff] %v1559
        %2043 = vst [vmem:[%s709 + $0x98] sm:$0xff] %v1560
        %2044 = vst [vmem:[%s709 + $0xa0] sm:$0xff] %v1561
        %2045 = vst [vmem:[%s709 + $0xa8] sm:$0xff] %v1562
        %2046 = vst [vmem:[%s709 + $0xb0] sm:$0xff] %v1563
        %2047 = vst [vmem:[%s709 + $0xb8] sm:$0xff] %v1564
        %2048 = vst [vmem:[%s709 + $0xc0] sm:$0xff] %v1565
        %2049 = vst [vmem:[%s709 + $0xc8] sm:$0xff] %v1566
        %2050 = vst [vmem:[%s709 + $0xd0] sm:$0xff] %v1567
        %2051 = vst [vmem:[%s709 + $0xd8] sm:$0xff] %v1568
        %2052 = vst [vmem:[%s709 + $0xe0] sm:$0xff] %v1569
        %2053 = vst [vmem:[%s709 + $0xe8] sm:$0xff] %v1570
        %2054 = vst [vmem:[%s709 + $0xf0] sm:$0xff] %v1571
        %2055 = vst [vmem:[%s709 + $0xf8] sm:$0xff] %v1572
        %v2056 = vld [vmem:[#allocation2] sm:$0xff]
        %v2057 = vld [vmem:[#allocation2 + $0x8] sm:$0xff]
        %v2058 = vld [vmem:[#allocation2 + $0x10] sm:$0xff]
        %v2059 = vld [vmem:[#allocation2 + $0x18] sm:$0xff]
        %v2060 = vld [vmem:[#allocation2 + $0x20] sm:$0xff]
        %v2061 = vld [vmem:[#allocation2 + $0x28] sm:$0xff]
        %v2062 = vld [vmem:[#allocation2 + $0x30] sm:$0xff]
        %v2063 = vld [vmem:[#allocation2 + $0x38] sm:$0xff]
        %v2064 = vld [vmem:[#allocation2 + $0x40] sm:$0xff]
        %v2065 = vld [vmem:[#allocation2 + $0x48] sm:$0xff]
        %v2066 = vld [vmem:[#allocation2 + $0x50] sm:$0xff]
        %v2067 = vld [vmem:[#allocation2 + $0x58] sm:$0xff]
        %v2068 = vld [vmem:[#allocation2 + $0x60] sm:$0xff]
        %v2069 = vld [vmem:[#allocation2 + $0x68] sm:$0xff]
        %v2070 = vld [vmem:[#allocation2 + $0x70] sm:$0xff]
        %v2071 = vld [vmem:[#allocation2 + $0x78] sm:$0xff]
        %v2072 = vld [vmem:[#allocation2 + $0x80] sm:$0xff]
        %v2073 = vld [vmem:[#allocation2 + $0x88] sm:$0xff]
        %v2074 = vld [vmem:[#allocation2 + $0x90] sm:$0xff]
        %v2075 = vld [vmem:[#allocation2 + $0x98] sm:$0xff]
        %v2076 = vld [vmem:[#allocation2 + $0xa0] sm:$0xff]
        %v2077 = vld [vmem:[#allocation2 + $0xa8] sm:$0xff]
        %v2078 = vld [vmem:[#allocation2 + $0xb0] sm:$0xff]
        %v2079 = vld [vmem:[#allocation2 + $0xb8] sm:$0xff]
        %v2080 = vld [vmem:[#allocation2 + $0xc0] sm:$0xff]
        %v2081 = vld [vmem:[#allocation2 + $0xc8] sm:$0xff]
        %v2082 = vld [vmem:[#allocation2 + $0xd0] sm:$0xff]
        %v2083 = vld [vmem:[#allocation2 + $0xd8] sm:$0xff]
        %v2084 = vld [vmem:[#allocation2 + $0xe0] sm:$0xff]
        %v2085 = vld [vmem:[#allocation2 + $0xe8] sm:$0xff]
        %v2086 = vld [vmem:[#allocation2 + $0xf0] sm:$0xff]
        %v2087 = vld [vmem:[#allocation2 + $0xf8] sm:$0xff]
        %v2088 = vld [vmem:[%s774] sm:$0xff]
        %v2089 = vld [vmem:[%s774 + $0x8] sm:$0xff]
        %v2090 = vld [vmem:[%s774 + $0x10] sm:$0xff]
        %v2091 = vld [vmem:[%s774 + $0x18] sm:$0xff]
        %v2092 = vld [vmem:[%s774 + $0x20] sm:$0xff]
        %v2093 = vld [vmem:[%s774 + $0x28] sm:$0xff]
        %v2094 = vld [vmem:[%s774 + $0x30] sm:$0xff]
        %v2095 = vld [vmem:[%s774 + $0x38] sm:$0xff]
        %v2096 = vld [vmem:[%s774 + $0x40] sm:$0xff]
        %v2097 = vld [vmem:[%s774 + $0x48] sm:$0xff]
        %v2098 = vld [vmem:[%s774 + $0x50] sm:$0xff]
        %v2099 = vld [vmem:[%s774 + $0x58] sm:$0xff]
        %v2100 = vld [vmem:[%s774 + $0x60] sm:$0xff]
        %v2101 = vld [vmem:[%s774 + $0x68] sm:$0xff]
        %v2102 = vld [vmem:[%s774 + $0x70] sm:$0xff]
        %v2103 = vld [vmem:[%s774 + $0x78] sm:$0xff]
        %v2104 = vld [vmem:[%s774 + $0x80] sm:$0xff]
        %v2105 = vld [vmem:[%s774 + $0x88] sm:$0xff]
        %v2106 = vld [vmem:[%s774 + $0x90] sm:$0xff]
        %v2107 = vld [vmem:[%s774 + $0x98] sm:$0xff]
        %v2108 = vld [vmem:[%s774 + $0xa0] sm:$0xff]
        %v2109 = vld [vmem:[%s774 + $0xa8] sm:$0xff]
        %v2110 = vld [vmem:[%s774 + $0xb0] sm:$0xff]
        %v2111 = vld [vmem:[%s774 + $0xb8] sm:$0xff]
        %v2112 = vld [vmem:[%s774 + $0xc0] sm:$0xff]
        %v2113 = vld [vmem:[%s774 + $0xc8] sm:$0xff]
        %v2114 = vld [vmem:[%s774 + $0xd0] sm:$0xff]
        %v2115 = vld [vmem:[%s774 + $0xd8] sm:$0xff]
        %v2116 = vld [vmem:[%s774 + $0xe0] sm:$0xff]
        %v2117 = vld [vmem:[%s774 + $0xe8] sm:$0xff]
        %v2118 = vld [vmem:[%s774 + $0xf0] sm:$0xff]
        %v2119 = vld [vmem:[%s774 + $0xf8] sm:$0xff]
        %v2120 = vmax.f32 %v2056, %v2088
        %v2121 = vmax.f32 %v2057, %v2089
        %v2122 = vmax.f32 %v2058, %v2090
        %v2123 = vmax.f32 %v2059, %v2091
        %v2124 = vmax.f32 %v2060, %v2092
        %v2125 = vmax.f32 %v2061, %v2093
        %v2126 = vmax.f32 %v2062, %v2094
        %v2127 = vmax.f32 %v2063, %v2095
        %v2128 = vmax.f32 %v2064, %v2096
        %v2129 = vmax.f32 %v2065, %v2097
        %v2130 = vmax.f32 %v2066, %v2098
        %v2131 = vmax.f32 %v2067, %v2099
        %v2132 = vmax.f32 %v2068, %v2100
        %v2133 = vmax.f32 %v2069, %v2101
        %v2134 = vmax.f32 %v2070, %v2102
        %v2135 = vmax.f32 %v2071, %v2103
        %v2136 = vmax.f32 %v2072, %v2104
        %v2137 = vmax.f32 %v2073, %v2105
        %v2138 = vmax.f32 %v2074, %v2106
        %v2139 = vmax.f32 %v2075, %v2107
        %v2140 = vmax.f32 %v2076, %v2108
        %v2141 = vmax.f32 %v2077, %v2109
        %v2142 = vmax.f32 %v2078, %v2110
        %v2143 = vmax.f32 %v2079, %v2111
        %v2144 = vmax.f32 %v2080, %v2112
        %v2145 = vmax.f32 %v2081, %v2113
        %v2146 = vmax.f32 %v2082, %v2114
        %v2147 = vmax.f32 %v2083, %v2115
        %v2148 = vmax.f32 %v2084, %v2116
        %v2149 = vmax.f32 %v2085, %v2117
        %v2150 = vmax.f32 %v2086, %v2118
        %v2151 = vmax.f32 %v2087, %v2119
        %v2152 = vld [vmem:[%s709] sm:$0xff]
        %v2153 = vld [vmem:[%s709 + $0x8] sm:$0xff]
        %v2154 = vld [vmem:[%s709 + $0x10] sm:$0xff]
        %v2155 = vld [vmem:[%s709 + $0x18] sm:$0xff]
        %v2156 = vld [vmem:[%s709 + $0x20] sm:$0xff]
        %v2157 = vld [vmem:[%s709 + $0x28] sm:$0xff]
        %v2158 = vld [vmem:[%s709 + $0x30] sm:$0xff]
        %v2159 = vld [vmem:[%s709 + $0x38] sm:$0xff]
        %v2160 = vld [vmem:[%s709 + $0x40] sm:$0xff]
        %v2161 = vld [vmem:[%s709 + $0x48] sm:$0xff]
        %v2162 = vld [vmem:[%s709 + $0x50] sm:$0xff]
        %v2163 = vld [vmem:[%s709 + $0x58] sm:$0xff]
        %v2164 = vld [vmem:[%s709 + $0x60] sm:$0xff]
        %v2165 = vld [vmem:[%s709 + $0x68] sm:$0xff]
        %v2166 = vld [vmem:[%s709 + $0x70] sm:$0xff]
        %v2167 = vld [vmem:[%s709 + $0x78] sm:$0xff]
        %v2168 = vld [vmem:[%s709 + $0x80] sm:$0xff]
        %v2169 = vld [vmem:[%s709 + $0x88] sm:$0xff]
        %v2170 = vld [vmem:[%s709 + $0x90] sm:$0xff]
        %v2171 = vld [vmem:[%s709 + $0x98] sm:$0xff]
        %v2172 = vld [vmem:[%s709 + $0xa0] sm:$0xff]
        %v2173 = vld [vmem:[%s709 + $0xa8] sm:$0xff]
        %v2174 = vld [vmem:[%s709 + $0xb0] sm:$0xff]
        %v2175 = vld [vmem:[%s709 + $0xb8] sm:$0xff]
        %v2176 = vld [vmem:[%s709 + $0xc0] sm:$0xff]
        %v2177 = vld [vmem:[%s709 + $0xc8] sm:$0xff]
        %v2178 = vld [vmem:[%s709 + $0xd0] sm:$0xff]
        %v2179 = vld [vmem:[%s709 + $0xd8] sm:$0xff]
        %v2180 = vld [vmem:[%s709 + $0xe0] sm:$0xff]
        %v2181 = vld [vmem:[%s709 + $0xe8] sm:$0xff]
        %v2182 = vld [vmem:[%s709 + $0xf0] sm:$0xff]
        %v2183 = vld [vmem:[%s709 + $0xf8] sm:$0xff]
        %v2184 = vmax.f32 %v2120, %v2152
        %v2185 = vmax.f32 %v2121, %v2153
        %v2186 = vmax.f32 %v2122, %v2154
        %v2187 = vmax.f32 %v2123, %v2155
        %v2188 = vmax.f32 %v2124, %v2156
        %v2189 = vmax.f32 %v2125, %v2157
        %v2190 = vmax.f32 %v2126, %v2158
        %v2191 = vmax.f32 %v2127, %v2159
        %v2192 = vmax.f32 %v2128, %v2160
        %v2193 = vmax.f32 %v2129, %v2161
        %v2194 = vmax.f32 %v2130, %v2162
        %v2195 = vmax.f32 %v2131, %v2163
        %v2196 = vmax.f32 %v2132, %v2164
        %v2197 = vmax.f32 %v2133, %v2165
        %v2198 = vmax.f32 %v2134, %v2166
        %v2199 = vmax.f32 %v2135, %v2167
        %v2200 = vmax.f32 %v2136, %v2168
        %v2201 = vmax.f32 %v2137, %v2169
        %v2202 = vmax.f32 %v2138, %v2170
        %v2203 = vmax.f32 %v2139, %v2171
        %v2204 = vmax.f32 %v2140, %v2172
        %v2205 = vmax.f32 %v2141, %v2173
        %v2206 = vmax.f32 %v2142, %v2174
        %v2207 = vmax.f32 %v2143, %v2175
        %v2208 = vmax.f32 %v2144, %v2176
        %v2209 = vmax.f32 %v2145, %v2177
        %v2210 = vmax.f32 %v2146, %v2178
        %v2211 = vmax.f32 %v2147, %v2179
        %v2212 = vmax.f32 %v2148, %v2180
        %v2213 = vmax.f32 %v2149, %v2181
        %v2214 = vmax.f32 %v2150, %v2182
        %v2215 = vmax.f32 %v2151, %v2183
        %v2216 = vld [vmem:[%s903] sm:$0xff]
        %v2217 = vld [vmem:[%s903 + $0x8] sm:$0xff]
        %v2218 = vld [vmem:[%s903 + $0x10] sm:$0xff]
        %v2219 = vld [vmem:[%s903 + $0x18] sm:$0xff]
        %v2220 = vld [vmem:[%s903 + $0x20] sm:$0xff]
        %v2221 = vld [vmem:[%s903 + $0x28] sm:$0xff]
        %v2222 = vld [vmem:[%s903 + $0x30] sm:$0xff]
        %v2223 = vld [vmem:[%s903 + $0x38] sm:$0xff]
        %v2224 = vld [vmem:[%s903 + $0x40] sm:$0xff]
        %v2225 = vld [vmem:[%s903 + $0x48] sm:$0xff]
        %v2226 = vld [vmem:[%s903 + $0x50] sm:$0xff]
        %v2227 = vld [vmem:[%s903 + $0x58] sm:$0xff]
        %v2228 = vld [vmem:[%s903 + $0x60] sm:$0xff]
        %v2229 = vld [vmem:[%s903 + $0x68] sm:$0xff]
        %v2230 = vld [vmem:[%s903 + $0x70] sm:$0xff]
        %v2231 = vld [vmem:[%s903 + $0x78] sm:$0xff]
        %v2232 = vld [vmem:[%s903 + $0x80] sm:$0xff]
        %v2233 = vld [vmem:[%s903 + $0x88] sm:$0xff]
        %v2234 = vld [vmem:[%s903 + $0x90] sm:$0xff]
        %v2235 = vld [vmem:[%s903 + $0x98] sm:$0xff]
        %v2236 = vld [vmem:[%s903 + $0xa0] sm:$0xff]
        %v2237 = vld [vmem:[%s903 + $0xa8] sm:$0xff]
        %v2238 = vld [vmem:[%s903 + $0xb0] sm:$0xff]
        %v2239 = vld [vmem:[%s903 + $0xb8] sm:$0xff]
        %v2240 = vld [vmem:[%s903 + $0xc0] sm:$0xff]
        %v2241 = vld [vmem:[%s903 + $0xc8] sm:$0xff]
        %v2242 = vld [vmem:[%s903 + $0xd0] sm:$0xff]
        %v2243 = vld [vmem:[%s903 + $0xd8] sm:$0xff]
        %v2244 = vld [vmem:[%s903 + $0xe0] sm:$0xff]
        %v2245 = vld [vmem:[%s903 + $0xe8] sm:$0xff]
        %v2246 = vld [vmem:[%s903 + $0xf0] sm:$0xff]
        %v2247 = vld [vmem:[%s903 + $0xf8] sm:$0xff]
        %v2248 = vmax.f32 %v2184, %v2216
        %v2249 = vmax.f32 %v2185, %v2217
        %v2250 = vmax.f32 %v2186, %v2218
        %v2251 = vmax.f32 %v2187, %v2219
        %v2252 = vmax.f32 %v2188, %v2220
        %v2253 = vmax.f32 %v2189, %v2221
        %v2254 = vmax.f32 %v2190, %v2222
        %v2255 = vmax.f32 %v2191, %v2223
        %v2256 = vmax.f32 %v2192, %v2224
        %v2257 = vmax.f32 %v2193, %v2225
        %v2258 = vmax.f32 %v2194, %v2226
        %v2259 = vmax.f32 %v2195, %v2227
        %v2260 = vmax.f32 %v2196, %v2228
        %v2261 = vmax.f32 %v2197, %v2229
        %v2262 = vmax.f32 %v2198, %v2230
        %v2263 = vmax.f32 %v2199, %v2231
        %v2264 = vmax.f32 %v2200, %v2232
        %v2265 = vmax.f32 %v2201, %v2233
        %v2266 = vmax.f32 %v2202, %v2234
        %v2267 = vmax.f32 %v2203, %v2235
        %v2268 = vmax.f32 %v2204, %v2236
        %v2269 = vmax.f32 %v2205, %v2237
        %v2270 = vmax.f32 %v2206, %v2238
        %v2271 = vmax.f32 %v2207, %v2239
        %v2272 = vmax.f32 %v2208, %v2240
        %v2273 = vmax.f32 %v2209, %v2241
        %v2274 = vmax.f32 %v2210, %v2242
        %v2275 = vmax.f32 %v2211, %v2243
        %v2276 = vmax.f32 %v2212, %v2244
        %v2277 = vmax.f32 %v2213, %v2245
        %v2278 = vmax.f32 %v2214, %v2246
        %v2279 = vmax.f32 %v2215, %v2247
        %v2280 = vld [vmem:[%s968] sm:$0xff]
        %v2281 = vld [vmem:[%s968 + $0x8] sm:$0xff]
        %v2282 = vld [vmem:[%s968 + $0x10] sm:$0xff]
        %v2283 = vld [vmem:[%s968 + $0x18] sm:$0xff]
        %v2284 = vld [vmem:[%s968 + $0x20] sm:$0xff]
        %v2285 = vld [vmem:[%s968 + $0x28] sm:$0xff]
        %v2286 = vld [vmem:[%s968 + $0x30] sm:$0xff]
        %v2287 = vld [vmem:[%s968 + $0x38] sm:$0xff]
        %v2288 = vld [vmem:[%s968 + $0x40] sm:$0xff]
        %v2289 = vld [vmem:[%s968 + $0x48] sm:$0xff]
        %v2290 = vld [vmem:[%s968 + $0x50] sm:$0xff]
        %v2291 = vld [vmem:[%s968 + $0x58] sm:$0xff]
        %v2292 = vld [vmem:[%s968 + $0x60] sm:$0xff]
        %v2293 = vld [vmem:[%s968 + $0x68] sm:$0xff]
        %v2294 = vld [vmem:[%s968 + $0x70] sm:$0xff]
        %v2295 = vld [vmem:[%s968 + $0x78] sm:$0xff]
        %v2296 = vld [vmem:[%s968 + $0x80] sm:$0xff]
        %v2297 = vld [vmem:[%s968 + $0x88] sm:$0xff]
        %v2298 = vld [vmem:[%s968 + $0x90] sm:$0xff]
        %v2299 = vld [vmem:[%s968 + $0x98] sm:$0xff]
        %v2300 = vld [vmem:[%s968 + $0xa0] sm:$0xff]
        %v2301 = vld [vmem:[%s968 + $0xa8] sm:$0xff]
        %v2302 = vld [vmem:[%s968 + $0xb0] sm:$0xff]
        %v2303 = vld [vmem:[%s968 + $0xb8] sm:$0xff]
        %v2304 = vld [vmem:[%s968 + $0xc0] sm:$0xff]
        %v2305 = vld [vmem:[%s968 + $0xc8] sm:$0xff]
        %v2306 = vld [vmem:[%s968 + $0xd0] sm:$0xff]
        %v2307 = vld [vmem:[%s968 + $0xd8] sm:$0xff]
        %v2308 = vld [vmem:[%s968 + $0xe0] sm:$0xff]
        %v2309 = vld [vmem:[%s968 + $0xe8] sm:$0xff]
        %v2310 = vld [vmem:[%s968 + $0xf0] sm:$0xff]
        %v2311 = vld [vmem:[%s968 + $0xf8] sm:$0xff]
        %v2312 = vmax.f32 %v2248, %v2280
        %v2313 = vmax.f32 %v2249, %v2281
        %v2314 = vmax.f32 %v2250, %v2282
        %v2315 = vmax.f32 %v2251, %v2283
        %v2316 = vmax.f32 %v2252, %v2284
        %v2317 = vmax.f32 %v2253, %v2285
        %v2318 = vmax.f32 %v2254, %v2286
        %v2319 = vmax.f32 %v2255, %v2287
        %v2320 = vmax.f32 %v2256, %v2288
        %v2321 = vmax.f32 %v2257, %v2289
        %v2322 = vmax.f32 %v2258, %v2290
        %v2323 = vmax.f32 %v2259, %v2291
        %v2324 = vmax.f32 %v2260, %v2292
        %v2325 = vmax.f32 %v2261, %v2293
        %v2326 = vmax.f32 %v2262, %v2294
        %v2327 = vmax.f32 %v2263, %v2295
        %v2328 = vmax.f32 %v2264, %v2296
        %v2329 = vmax.f32 %v2265, %v2297
        %v2330 = vmax.f32 %v2266, %v2298
        %v2331 = vmax.f32 %v2267, %v2299
        %v2332 = vmax.f32 %v2268, %v2300
        %v2333 = vmax.f32 %v2269, %v2301
        %v2334 = vmax.f32 %v2270, %v2302
        %v2335 = vmax.f32 %v2271, %v2303
        %v2336 = vmax.f32 %v2272, %v2304
        %v2337 = vmax.f32 %v2273, %v2305
        %v2338 = vmax.f32 %v2274, %v2306
        %v2339 = vmax.f32 %v2275, %v2307
        %v2340 = vmax.f32 %v2276, %v2308
        %v2341 = vmax.f32 %v2277, %v2309
        %v2342 = vmax.f32 %v2278, %v2310
        %v2343 = vmax.f32 %v2279, %v2311
        %v2344 = vrot.slane %v2312, 1
        %v2345 = vrot.slane %v2314, 1
        %v2346 = vrot.slane %v2316, 1
        %v2347 = vrot.slane %v2318, 1
        %v2348 = vrot.slane %v2320, 1
        %v2349 = vrot.slane %v2322, 1
        %v2350 = vrot.slane %v2324, 1
        %v2351 = vrot.slane %v2326, 1
        %v2352 = vrot.slane %v2328, 1
        %v2353 = vrot.slane %v2330, 1
        %v2354 = vrot.slane %v2332, 1
        %v2355 = vrot.slane %v2334, 1
        %v2356 = vrot.slane %v2336, 1
        %v2357 = vrot.slane %v2338, 1
        %v2358 = vrot.slane %v2340, 1
        %v2359 = vrot.slane %v2342, 1
        %v2360 = vrot.slane %v2313, 1
        %v2361 = vrot.slane %v2315, 1
        %v2362 = vrot.slane %v2317, 1
        %v2363 = vrot.slane %v2319, 1
        %v2364 = vrot.slane %v2321, 1
        %v2365 = vrot.slane %v2323, 1
        %v2366 = vrot.slane %v2325, 1
        %v2367 = vrot.slane %v2327, 1
        %v2368 = vrot.slane %v2329, 1
        %v2369 = vrot.slane %v2331, 1
        %v2370 = vrot.slane %v2333, 1
        %v2371 = vrot.slane %v2335, 1
        %v2372 = vrot.slane %v2337, 1
        %v2373 = vrot.slane %v2339, 1
        %v2374 = vrot.slane %v2341, 1
        %v2375 = vrot.slane %v2343, 1
        %v2376 = vsel %vm1067, %v2344, %v2360
        %v2377 = vsel %vm1067, %v2345, %v2361
        %v2378 = vsel %vm1067, %v2346, %v2362
        %v2379 = vsel %vm1067, %v2347, %v2363
        %v2380 = vsel %vm1067, %v2348, %v2364
        %v2381 = vsel %vm1067, %v2349, %v2365
        %v2382 = vsel %vm1067, %v2350, %v2366
        %v2383 = vsel %vm1067, %v2351, %v2367
        %v2384 = vsel %vm1067, %v2352, %v2368
        %v2385 = vsel %vm1067, %v2353, %v2369
        %v2386 = vsel %vm1067, %v2354, %v2370
        %v2387 = vsel %vm1067, %v2355, %v2371
        %v2388 = vsel %vm1067, %v2356, %v2372
        %v2389 = vsel %vm1067, %v2357, %v2373
        %v2390 = vsel %vm1067, %v2358, %v2374
        %v2391 = vsel %vm1067, %v2359, %v2375
        %v2392 = vsel %vm1067, %v2360, %v2344
        %v2393 = vsel %vm1067, %v2361, %v2345
        %v2394 = vsel %vm1067, %v2362, %v2346
        %v2395 = vsel %vm1067, %v2363, %v2347
        %v2396 = vsel %vm1067, %v2364, %v2348
        %v2397 = vsel %vm1067, %v2365, %v2349
        %v2398 = vsel %vm1067, %v2366, %v2350
        %v2399 = vsel %vm1067, %v2367, %v2351
        %v2400 = vsel %vm1067, %v2368, %v2352
        %v2401 = vsel %vm1067, %v2369, %v2353
        %v2402 = vsel %vm1067, %v2370, %v2354
        %v2403 = vsel %vm1067, %v2371, %v2355
        %v2404 = vsel %vm1067, %v2372, %v2356
        %v2405 = vsel %vm1067, %v2373, %v2357
        %v2406 = vsel %vm1067, %v2374, %v2358
        %v2407 = vsel %vm1067, %v2375, %v2359
        %v2408 = vsel %vm1102, %v2376, 0.0
        %v2409 = vsel %vm1103, %v2392, 0.0
        %v2410 = vsel %vm1102, %v2377, 0.0
        %v2411 = vsel %vm1103, %v2393, 0.0
        %v2412 = vsel %vm1102, %v2378, 0.0
        %v2413 = vsel %vm1103, %v2394, 0.0
        %v2414 = vsel %vm1102, %v2379, 0.0
        %v2415 = vsel %vm1103, %v2395, 0.0
        %v2416 = vsel %vm1102, %v2380, 0.0
        %v2417 = vsel %vm1103, %v2396, 0.0
        %v2418 = vsel %vm1102, %v2381, 0.0
        %v2419 = vsel %vm1103, %v2397, 0.0
        %v2420 = vsel %vm1102, %v2382, 0.0
        %v2421 = vsel %vm1103, %v2398, 0.0
        %v2422 = vsel %vm1102, %v2383, 0.0
        %v2423 = vsel %vm1103, %v2399, 0.0
        %v2424 = vsel %vm1102, %v2384, 0.0
        %v2425 = vsel %vm1103, %v2400, 0.0
        %v2426 = vsel %vm1102, %v2385, 0.0
        %v2427 = vsel %vm1103, %v2401, 0.0
        %v2428 = vsel %vm1102, %v2386, 0.0
        %v2429 = vsel %vm1103, %v2402, 0.0
        %v2430 = vsel %vm1102, %v2387, 0.0
        %v2431 = vsel %vm1103, %v2403, 0.0
        %v2432 = vsel %vm1102, %v2388, 0.0
        %v2433 = vsel %vm1103, %v2404, 0.0
        %v2434 = vsel %vm1102, %v2389, 0.0
        %v2435 = vsel %vm1103, %v2405, 0.0
        %v2436 = vsel %vm1102, %v2390, 0.0
        %v2437 = vsel %vm1103, %v2406, 0.0
        %v2438 = vsel %vm1102, %v2391, 0.0
        %v2439 = vsel %vm1103, %v2407, 0.0
        %v2440 = vrot.slane %v2312, 7
        %v2441 = vrot.slane %v2314, 7
        %v2442 = vrot.slane %v2316, 7
        %v2443 = vrot.slane %v2318, 7
        %v2444 = vrot.slane %v2320, 7
        %v2445 = vrot.slane %v2322, 7
        %v2446 = vrot.slane %v2324, 7
        %v2447 = vrot.slane %v2326, 7
        %v2448 = vrot.slane %v2328, 7
        %v2449 = vrot.slane %v2330, 7
        %v2450 = vrot.slane %v2332, 7
        %v2451 = vrot.slane %v2334, 7
        %v2452 = vrot.slane %v2336, 7
        %v2453 = vrot.slane %v2338, 7
        %v2454 = vrot.slane %v2340, 7
        %v2455 = vrot.slane %v2342, 7
        %v2456 = vrot.slane %v2313, 7
        %v2457 = vrot.slane %v2315, 7
        %v2458 = vrot.slane %v2317, 7
        %v2459 = vrot.slane %v2319, 7
        %v2460 = vrot.slane %v2321, 7
        %v2461 = vrot.slane %v2323, 7
        %v2462 = vrot.slane %v2325, 7
        %v2463 = vrot.slane %v2327, 7
        %v2464 = vrot.slane %v2329, 7
        %v2465 = vrot.slane %v2331, 7
        %v2466 = vrot.slane %v2333, 7
        %v2467 = vrot.slane %v2335, 7
        %v2468 = vrot.slane %v2337, 7
        %v2469 = vrot.slane %v2339, 7
        %v2470 = vrot.slane %v2341, 7
        %v2471 = vrot.slane %v2343, 7
        %v2472 = vsel %vm1170, %v2440, %v2456
        %v2473 = vsel %vm1170, %v2441, %v2457
        %v2474 = vsel %vm1170, %v2442, %v2458
        %v2475 = vsel %vm1170, %v2443, %v2459
        %v2476 = vsel %vm1170, %v2444, %v2460
        %v2477 = vsel %vm1170, %v2445, %v2461
        %v2478 = vsel %vm1170, %v2446, %v2462
        %v2479 = vsel %vm1170, %v2447, %v2463
        %v2480 = vsel %vm1170, %v2448, %v2464
        %v2481 = vsel %vm1170, %v2449, %v2465
        %v2482 = vsel %vm1170, %v2450, %v2466
        %v2483 = vsel %vm1170, %v2451, %v2467
        %v2484 = vsel %vm1170, %v2452, %v2468
        %v2485 = vsel %vm1170, %v2453, %v2469
        %v2486 = vsel %vm1170, %v2454, %v2470
        %v2487 = vsel %vm1170, %v2455, %v2471
        %v2488 = vsel %vm1170, %v2456, %v2440
        %v2489 = vsel %vm1170, %v2457, %v2441
        %v2490 = vsel %vm1170, %v2458, %v2442
        %v2491 = vsel %vm1170, %v2459, %v2443
        %v2492 = vsel %vm1170, %v2460, %v2444
        %v2493 = vsel %vm1170, %v2461, %v2445
        %v2494 = vsel %vm1170, %v2462, %v2446
        %v2495 = vsel %vm1170, %v2463, %v2447
        %v2496 = vsel %vm1170, %v2464, %v2448
        %v2497 = vsel %vm1170, %v2465, %v2449
        %v2498 = vsel %vm1170, %v2466, %v2450
        %v2499 = vsel %vm1170, %v2467, %v2451
        %v2500 = vsel %vm1170, %v2468, %v2452
        %v2501 = vsel %vm1170, %v2469, %v2453
        %v2502 = vsel %vm1170, %v2470, %v2454
        %v2503 = vsel %vm1170, %v2471, %v2455
        %v2504 = vsel %vm1205, %v2488, 0.0
        %v2505 = vsel %vm1206, %v2472, 0.0
        %v2506 = vsel %vm1205, %v2489, 0.0
        %v2507 = vsel %vm1206, %v2473, 0.0
        %v2508 = vsel %vm1205, %v2490, 0.0
        %v2509 = vsel %vm1206, %v2474, 0.0
        %v2510 = vsel %vm1205, %v2491, 0.0
        %v2511 = vsel %vm1206, %v2475, 0.0
        %v2512 = vsel %vm1205, %v2492, 0.0
        %v2513 = vsel %vm1206, %v2476, 0.0
        %v2514 = vsel %vm1205, %v2493, 0.0
        %v2515 = vsel %vm1206, %v2477, 0.0
        %v2516 = vsel %vm1205, %v2494, 0.0
        %v2517 = vsel %vm1206, %v2478, 0.0
        %v2518 = vsel %vm1205, %v2495, 0.0
        %v2519 = vsel %vm1206, %v2479, 0.0
        %v2520 = vsel %vm1205, %v2496, 0.0
        %v2521 = vsel %vm1206, %v2480, 0.0
        %v2522 = vsel %vm1205, %v2497, 0.0
        %v2523 = vsel %vm1206, %v2481, 0.0
        %v2524 = vsel %vm1205, %v2498, 0.0
        %v2525 = vsel %vm1206, %v2482, 0.0
        %v2526 = vsel %vm1205, %v2499, 0.0
        %v2527 = vsel %vm1206, %v2483, 0.0
        %v2528 = vsel %vm1205, %v2500, 0.0
        %v2529 = vsel %vm1206, %v2484, 0.0
        %v2530 = vsel %vm1205, %v2501, 0.0
        %v2531 = vsel %vm1206, %v2485, 0.0
        %v2532 = vsel %vm1205, %v2502, 0.0
        %v2533 = vsel %vm1206, %v2486, 0.0
        %v2534 = vsel %vm1205, %v2503, 0.0
        %v2535 = vsel %vm1206, %v2487, 0.0
        %v2536 = vmax.f32 %v2408, %v2504
        %v2537 = vmax.f32 %v2409, %v2505
        %v2538 = vmax.f32 %v2410, %v2506
        %v2539 = vmax.f32 %v2411, %v2507
        %v2540 = vmax.f32 %v2412, %v2508
        %v2541 = vmax.f32 %v2413, %v2509
        %v2542 = vmax.f32 %v2414, %v2510
        %v2543 = vmax.f32 %v2415, %v2511
        %v2544 = vmax.f32 %v2416, %v2512
        %v2545 = vmax.f32 %v2417, %v2513
        %v2546 = vmax.f32 %v2418, %v2514
        %v2547 = vmax.f32 %v2419, %v2515
        %v2548 = vmax.f32 %v2420, %v2516
        %v2549 = vmax.f32 %v2421, %v2517
        %v2550 = vmax.f32 %v2422, %v2518
        %v2551 = vmax.f32 %v2423, %v2519
        %v2552 = vmax.f32 %v2424, %v2520
        %v2553 = vmax.f32 %v2425, %v2521
        %v2554 = vmax.f32 %v2426, %v2522
        %v2555 = vmax.f32 %v2427, %v2523
        %v2556 = vmax.f32 %v2428, %v2524
        %v2557 = vmax.f32 %v2429, %v2525
        %v2558 = vmax.f32 %v2430, %v2526
        %v2559 = vmax.f32 %v2431, %v2527
        %v2560 = vmax.f32 %v2432, %v2528
        %v2561 = vmax.f32 %v2433, %v2529
        %v2562 = vmax.f32 %v2434, %v2530
        %v2563 = vmax.f32 %v2435, %v2531
        %v2564 = vmax.f32 %v2436, %v2532
        %v2565 = vmax.f32 %v2437, %v2533
        %v2566 = vmax.f32 %v2438, %v2534
        %v2567 = vmax.f32 %v2439, %v2535
        %v2568 = vmax.f32 %v2312, %v2536
        %v2569 = vmax.f32 %v2313, %v2537
        %v2570 = vmax.f32 %v2314, %v2538
        %v2571 = vmax.f32 %v2315, %v2539
        %v2572 = vmax.f32 %v2316, %v2540
        %v2573 = vmax.f32 %v2317, %v2541
        %v2574 = vmax.f32 %v2318, %v2542
        %v2575 = vmax.f32 %v2319, %v2543
        %v2576 = vmax.f32 %v2320, %v2544
        %v2577 = vmax.f32 %v2321, %v2545
        %v2578 = vmax.f32 %v2322, %v2546
        %v2579 = vmax.f32 %v2323, %v2547
        %v2580 = vmax.f32 %v2324, %v2548
        %v2581 = vmax.f32 %v2325, %v2549
        %v2582 = vmax.f32 %v2326, %v2550
        %v2583 = vmax.f32 %v2327, %v2551
        %v2584 = vmax.f32 %v2328, %v2552
        %v2585 = vmax.f32 %v2329, %v2553
        %v2586 = vmax.f32 %v2330, %v2554
        %v2587 = vmax.f32 %v2331, %v2555
        %v2588 = vmax.f32 %v2332, %v2556
        %v2589 = vmax.f32 %v2333, %v2557
        %v2590 = vmax.f32 %v2334, %v2558
        %v2591 = vmax.f32 %v2335, %v2559
        %v2592 = vmax.f32 %v2336, %v2560
        %v2593 = vmax.f32 %v2337, %v2561
        %v2594 = vmax.f32 %v2338, %v2562
        %v2595 = vmax.f32 %v2339, %v2563
        %v2596 = vmax.f32 %v2340, %v2564
        %v2597 = vmax.f32 %v2341, %v2565
        %v2598 = vmax.f32 %v2342, %v2566
        %v2599 = vmax.f32 %v2343, %v2567
        %v2600 = vrot.slane %v2312, 2
        %v2601 = vrot.slane %v2314, 2
        %v2602 = vrot.slane %v2316, 2
        %v2603 = vrot.slane %v2318, 2
        %v2604 = vrot.slane %v2320, 2
        %v2605 = vrot.slane %v2322, 2
        %v2606 = vrot.slane %v2324, 2
        %v2607 = vrot.slane %v2326, 2
        %v2608 = vrot.slane %v2328, 2
        %v2609 = vrot.slane %v2330, 2
        %v2610 = vrot.slane %v2332, 2
        %v2611 = vrot.slane %v2334, 2
        %v2612 = vrot.slane %v2336, 2
        %v2613 = vrot.slane %v2338, 2
        %v2614 = vrot.slane %v2340, 2
        %v2615 = vrot.slane %v2342, 2
        %v2616 = vrot.slane %v2313, 2
        %v2617 = vrot.slane %v2315, 2
        %v2618 = vrot.slane %v2317, 2
        %v2619 = vrot.slane %v2319, 2
        %v2620 = vrot.slane %v2321, 2
        %v2621 = vrot.slane %v2323, 2
        %v2622 = vrot.slane %v2325, 2
        %v2623 = vrot.slane %v2327, 2
        %v2624 = vrot.slane %v2329, 2
        %v2625 = vrot.slane %v2331, 2
        %v2626 = vrot.slane %v2333, 2
        %v2627 = vrot.slane %v2335, 2
        %v2628 = vrot.slane %v2337, 2
        %v2629 = vrot.slane %v2339, 2
        %v2630 = vrot.slane %v2341, 2
        %v2631 = vrot.slane %v2343, 2
        %v2632 = vsel %vm1337, %v2600, %v2616
        %v2633 = vsel %vm1337, %v2601, %v2617
        %v2634 = vsel %vm1337, %v2602, %v2618
        %v2635 = vsel %vm1337, %v2603, %v2619
        %v2636 = vsel %vm1337, %v2604, %v2620
        %v2637 = vsel %vm1337, %v2605, %v2621
        %v2638 = vsel %vm1337, %v2606, %v2622
        %v2639 = vsel %vm1337, %v2607, %v2623
        %v2640 = vsel %vm1337, %v2608, %v2624
        %v2641 = vsel %vm1337, %v2609, %v2625
        %v2642 = vsel %vm1337, %v2610, %v2626
        %v2643 = vsel %vm1337, %v2611, %v2627
        %v2644 = vsel %vm1337, %v2612, %v2628
        %v2645 = vsel %vm1337, %v2613, %v2629
        %v2646 = vsel %vm1337, %v2614, %v2630
        %v2647 = vsel %vm1337, %v2615, %v2631
        %v2648 = vsel %vm1337, %v2616, %v2600
        %v2649 = vsel %vm1337, %v2617, %v2601
        %v2650 = vsel %vm1337, %v2618, %v2602
        %v2651 = vsel %vm1337, %v2619, %v2603
        %v2652 = vsel %vm1337, %v2620, %v2604
        %v2653 = vsel %vm1337, %v2621, %v2605
        %v2654 = vsel %vm1337, %v2622, %v2606
        %v2655 = vsel %vm1337, %v2623, %v2607
        %v2656 = vsel %vm1337, %v2624, %v2608
        %v2657 = vsel %vm1337, %v2625, %v2609
        %v2658 = vsel %vm1337, %v2626, %v2610
        %v2659 = vsel %vm1337, %v2627, %v2611
        %v2660 = vsel %vm1337, %v2628, %v2612
        %v2661 = vsel %vm1337, %v2629, %v2613
        %v2662 = vsel %vm1337, %v2630, %v2614
        %v2663 = vsel %vm1337, %v2631, %v2615
        %v2664 = vsel %vm1372, %v2632, 0.0
        %v2665 = vsel %vm1373, %v2648, 0.0
        %v2666 = vsel %vm1372, %v2633, 0.0
        %v2667 = vsel %vm1373, %v2649, 0.0
        %v2668 = vsel %vm1372, %v2634, 0.0
        %v2669 = vsel %vm1373, %v2650, 0.0
        %v2670 = vsel %vm1372, %v2635, 0.0
        %v2671 = vsel %vm1373, %v2651, 0.0
        %v2672 = vsel %vm1372, %v2636, 0.0
        %v2673 = vsel %vm1373, %v2652, 0.0
        %v2674 = vsel %vm1372, %v2637, 0.0
        %v2675 = vsel %vm1373, %v2653, 0.0
        %v2676 = vsel %vm1372, %v2638, 0.0
        %v2677 = vsel %vm1373, %v2654, 0.0
        %v2678 = vsel %vm1372, %v2639, 0.0
        %v2679 = vsel %vm1373, %v2655, 0.0
        %v2680 = vsel %vm1372, %v2640, 0.0
        %v2681 = vsel %vm1373, %v2656, 0.0
        %v2682 = vsel %vm1372, %v2641, 0.0
        %v2683 = vsel %vm1373, %v2657, 0.0
        %v2684 = vsel %vm1372, %v2642, 0.0
        %v2685 = vsel %vm1373, %v2658, 0.0
        %v2686 = vsel %vm1372, %v2643, 0.0
        %v2687 = vsel %vm1373, %v2659, 0.0
        %v2688 = vsel %vm1372, %v2644, 0.0
        %v2689 = vsel %vm1373, %v2660, 0.0
        %v2690 = vsel %vm1372, %v2645, 0.0
        %v2691 = vsel %vm1373, %v2661, 0.0
        %v2692 = vsel %vm1372, %v2646, 0.0
        %v2693 = vsel %vm1373, %v2662, 0.0
        %v2694 = vsel %vm1372, %v2647, 0.0
        %v2695 = vsel %vm1373, %v2663, 0.0
        %v2696 = vrot.slane %v2312, 6
        %v2697 = vrot.slane %v2314, 6
        %v2698 = vrot.slane %v2316, 6
        %v2699 = vrot.slane %v2318, 6
        %v2700 = vrot.slane %v2320, 6
        %v2701 = vrot.slane %v2322, 6
        %v2702 = vrot.slane %v2324, 6
        %v2703 = vrot.slane %v2326, 6
        %v2704 = vrot.slane %v2328, 6
        %v2705 = vrot.slane %v2330, 6
        %v2706 = vrot.slane %v2332, 6
        %v2707 = vrot.slane %v2334, 6
        %v2708 = vrot.slane %v2336, 6
        %v2709 = vrot.slane %v2338, 6
        %v2710 = vrot.slane %v2340, 6
        %v2711 = vrot.slane %v2342, 6
        %v2712 = vrot.slane %v2313, 6
        %v2713 = vrot.slane %v2315, 6
        %v2714 = vrot.slane %v2317, 6
        %v2715 = vrot.slane %v2319, 6
        %v2716 = vrot.slane %v2321, 6
        %v2717 = vrot.slane %v2323, 6
        %v2718 = vrot.slane %v2325, 6
        %v2719 = vrot.slane %v2327, 6
        %v2720 = vrot.slane %v2329, 6
        %v2721 = vrot.slane %v2331, 6
        %v2722 = vrot.slane %v2333, 6
        %v2723 = vrot.slane %v2335, 6
        %v2724 = vrot.slane %v2337, 6
        %v2725 = vrot.slane %v2339, 6
        %v2726 = vrot.slane %v2341, 6
        %v2727 = vrot.slane %v2343, 6
        %v2728 = vsel %vm1440, %v2696, %v2712
        %v2729 = vsel %vm1440, %v2697, %v2713
        %v2730 = vsel %vm1440, %v2698, %v2714
        %v2731 = vsel %vm1440, %v2699, %v2715
        %v2732 = vsel %vm1440, %v2700, %v2716
        %v2733 = vsel %vm1440, %v2701, %v2717
        %v2734 = vsel %vm1440, %v2702, %v2718
        %v2735 = vsel %vm1440, %v2703, %v2719
        %v2736 = vsel %vm1440, %v2704, %v2720
        %v2737 = vsel %vm1440, %v2705, %v2721
        %v2738 = vsel %vm1440, %v2706, %v2722
        %v2739 = vsel %vm1440, %v2707, %v2723
        %v2740 = vsel %vm1440, %v2708, %v2724
        %v2741 = vsel %vm1440, %v2709, %v2725
        %v2742 = vsel %vm1440, %v2710, %v2726
        %v2743 = vsel %vm1440, %v2711, %v2727
        %v2744 = vsel %vm1440, %v2712, %v2696
        %v2745 = vsel %vm1440, %v2713, %v2697
        %v2746 = vsel %vm1440, %v2714, %v2698
        %v2747 = vsel %vm1440, %v2715, %v2699
        %v2748 = vsel %vm1440, %v2716, %v2700
        %v2749 = vsel %vm1440, %v2717, %v2701
        %v2750 = vsel %vm1440, %v2718, %v2702
        %v2751 = vsel %vm1440, %v2719, %v2703
        %v2752 = vsel %vm1440, %v2720, %v2704
        %v2753 = vsel %vm1440, %v2721, %v2705
        %v2754 = vsel %vm1440, %v2722, %v2706
        %v2755 = vsel %vm1440, %v2723, %v2707
        %v2756 = vsel %vm1440, %v2724, %v2708
        %v2757 = vsel %vm1440, %v2725, %v2709
        %v2758 = vsel %vm1440, %v2726, %v2710
        %v2759 = vsel %vm1440, %v2727, %v2711
        %v2760 = vsel %vm1475, %v2744, 0.0
        %v2761 = vsel %vm1476, %v2728, 0.0
        %v2762 = vsel %vm1475, %v2745, 0.0
        %v2763 = vsel %vm1476, %v2729, 0.0
        %v2764 = vsel %vm1475, %v2746, 0.0
        %v2765 = vsel %vm1476, %v2730, 0.0
        %v2766 = vsel %vm1475, %v2747, 0.0
        %v2767 = vsel %vm1476, %v2731, 0.0
        %v2768 = vsel %vm1475, %v2748, 0.0
        %v2769 = vsel %vm1476, %v2732, 0.0
        %v2770 = vsel %vm1475, %v2749, 0.0
        %v2771 = vsel %vm1476, %v2733, 0.0
        %v2772 = vsel %vm1475, %v2750, 0.0
        %v2773 = vsel %vm1476, %v2734, 0.0
        %v2774 = vsel %vm1475, %v2751, 0.0
        %v2775 = vsel %vm1476, %v2735, 0.0
        %v2776 = vsel %vm1475, %v2752, 0.0
        %v2777 = vsel %vm1476, %v2736, 0.0
        %v2778 = vsel %vm1475, %v2753, 0.0
        %v2779 = vsel %vm1476, %v2737, 0.0
        %v2780 = vsel %vm1475, %v2754, 0.0
        %v2781 = vsel %vm1476, %v2738, 0.0
        %v2782 = vsel %vm1475, %v2755, 0.0
        %v2783 = vsel %vm1476, %v2739, 0.0
        %v2784 = vsel %vm1475, %v2756, 0.0
        %v2785 = vsel %vm1476, %v2740, 0.0
        %v2786 = vsel %vm1475, %v2757, 0.0
        %v2787 = vsel %vm1476, %v2741, 0.0
        %v2788 = vsel %vm1475, %v2758, 0.0
        %v2789 = vsel %vm1476, %v2742, 0.0
        %v2790 = vsel %vm1475, %v2759, 0.0
        %v2791 = vsel %vm1476, %v2743, 0.0
        %v2792 = vmax.f32 %v2664, %v2760
        %v2793 = vmax.f32 %v2665, %v2761
        %v2794 = vmax.f32 %v2666, %v2762
        %v2795 = vmax.f32 %v2667, %v2763
        %v2796 = vmax.f32 %v2668, %v2764
        %v2797 = vmax.f32 %v2669, %v2765
        %v2798 = vmax.f32 %v2670, %v2766
        %v2799 = vmax.f32 %v2671, %v2767
        %v2800 = vmax.f32 %v2672, %v2768
        %v2801 = vmax.f32 %v2673, %v2769
        %v2802 = vmax.f32 %v2674, %v2770
        %v2803 = vmax.f32 %v2675, %v2771
        %v2804 = vmax.f32 %v2676, %v2772
        %v2805 = vmax.f32 %v2677, %v2773
        %v2806 = vmax.f32 %v2678, %v2774
        %v2807 = vmax.f32 %v2679, %v2775
        %v2808 = vmax.f32 %v2680, %v2776
        %v2809 = vmax.f32 %v2681, %v2777
        %v2810 = vmax.f32 %v2682, %v2778
        %v2811 = vmax.f32 %v2683, %v2779
        %v2812 = vmax.f32 %v2684, %v2780
        %v2813 = vmax.f32 %v2685, %v2781
        %v2814 = vmax.f32 %v2686, %v2782
        %v2815 = vmax.f32 %v2687, %v2783
        %v2816 = vmax.f32 %v2688, %v2784
        %v2817 = vmax.f32 %v2689, %v2785
        %v2818 = vmax.f32 %v2690, %v2786
        %v2819 = vmax.f32 %v2691, %v2787
        %v2820 = vmax.f32 %v2692, %v2788
        %v2821 = vmax.f32 %v2693, %v2789
        %v2822 = vmax.f32 %v2694, %v2790
        %v2823 = vmax.f32 %v2695, %v2791
        %v2824 = vmax.f32 %v2568, %v2792
        %v2825 = vmax.f32 %v2569, %v2793
        %v2826 = vmax.f32 %v2570, %v2794
        %v2827 = vmax.f32 %v2571, %v2795
        %v2828 = vmax.f32 %v2572, %v2796
        %v2829 = vmax.f32 %v2573, %v2797
        %v2830 = vmax.f32 %v2574, %v2798
        %v2831 = vmax.f32 %v2575, %v2799
        %v2832 = vmax.f32 %v2576, %v2800
        %v2833 = vmax.f32 %v2577, %v2801
        %v2834 = vmax.f32 %v2578, %v2802
        %v2835 = vmax.f32 %v2579, %v2803
        %v2836 = vmax.f32 %v2580, %v2804
        %v2837 = vmax.f32 %v2581, %v2805
        %v2838 = vmax.f32 %v2582, %v2806
        %v2839 = vmax.f32 %v2583, %v2807
        %v2840 = vmax.f32 %v2584, %v2808
        %v2841 = vmax.f32 %v2585, %v2809
        %v2842 = vmax.f32 %v2586, %v2810
        %v2843 = vmax.f32 %v2587, %v2811
        %v2844 = vmax.f32 %v2588, %v2812
        %v2845 = vmax.f32 %v2589, %v2813
        %v2846 = vmax.f32 %v2590, %v2814
        %v2847 = vmax.f32 %v2591, %v2815
        %v2848 = vmax.f32 %v2592, %v2816
        %v2849 = vmax.f32 %v2593, %v2817
        %v2850 = vmax.f32 %v2594, %v2818
        %v2851 = vmax.f32 %v2595, %v2819
        %v2852 = vmax.f32 %v2596, %v2820
        %v2853 = vmax.f32 %v2597, %v2821
        %v2854 = vmax.f32 %v2598, %v2822
        %v2855 = vmax.f32 %v2599, %v2823
        %v2856 = vpack.c.bf16 %v2825, %v2824
        %v2857 = vpack.c.bf16 %v2827, %v2826
        %v2858 = vpack.c.bf16 %v2829, %v2828
        %v2859 = vpack.c.bf16 %v2831, %v2830
        %v2860 = vpack.c.bf16 %v2833, %v2832
        %v2861 = vpack.c.bf16 %v2835, %v2834
        %v2862 = vpack.c.bf16 %v2837, %v2836
        %v2863 = vpack.c.bf16 %v2839, %v2838
        %v2864 = vpack.c.bf16 %v2841, %v2840
        %v2865 = vpack.c.bf16 %v2843, %v2842
        %v2866 = vpack.c.bf16 %v2845, %v2844
        %v2867 = vpack.c.bf16 %v2847, %v2846
        %v2868 = vpack.c.bf16 %v2849, %v2848
        %v2869 = vpack.c.bf16 %v2851, %v2850
        %v2870 = vpack.c.bf16 %v2853, %v2852
        %v2871 = vpack.c.bf16 %v2855, %v2854
        %s2872 = scalar_lea.vmem [#allocation8], 128
        %v2873 = vld [vmem:[%s2872] sm:$0xf]
        %v2874 = vld [vmem:[%s2872 + $0x4] sm:$0xf]
        %v2875 = vld [vmem:[%s2872 + $0x8] sm:$0xf]
        %v2876 = vld [vmem:[%s2872 + $0xc] sm:$0xf]
        %v2877 = vld [vmem:[%s2872 + $0x10] sm:$0xf]
        %v2878 = vld [vmem:[%s2872 + $0x14] sm:$0xf]
        %v2879 = vld [vmem:[%s2872 + $0x18] sm:$0xf]
        %v2880 = vld [vmem:[%s2872 + $0x1c] sm:$0xf]
        %v2881 = vld [vmem:[%s2872 + $0x20] sm:$0xf]
        %v2882 = vld [vmem:[%s2872 + $0x24] sm:$0xf]
        %v2883 = vld [vmem:[%s2872 + $0x28] sm:$0xf]
        %v2884 = vld [vmem:[%s2872 + $0x2c] sm:$0xf]
        %v2885 = vld [vmem:[%s2872 + $0x30] sm:$0xf]
        %v2886 = vld [vmem:[%s2872 + $0x34] sm:$0xf]
        %v2887 = vld [vmem:[%s2872 + $0x38] sm:$0xf]
        %v2888 = vld [vmem:[%s2872 + $0x3c] sm:$0xf]
        %v2905 = vunpack.c.l.b16 %v2873
        %v2906 = vunpack.c.l.b16 %v2874
        %v2907 = vunpack.c.l.b16 %v2875
        %v2908 = vunpack.c.l.b16 %v2876
        %v2909 = vunpack.c.l.b16 %v2877
        %v2910 = vunpack.c.l.b16 %v2878
        %v2911 = vunpack.c.l.b16 %v2879
        %v2912 = vunpack.c.l.b16 %v2880
        %v2913 = vunpack.c.l.b16 %v2881
        %v2914 = vunpack.c.l.b16 %v2882
        %v2915 = vunpack.c.l.b16 %v2883
        %v2916 = vunpack.c.l.b16 %v2884
        %v2917 = vunpack.c.l.b16 %v2885
        %v2918 = vunpack.c.l.b16 %v2886
        %v2919 = vunpack.c.l.b16 %v2887
        %v2920 = vunpack.c.l.b16 %v2888
        %v2921 = vpack.c.b16 %v2906, %v2905
        %v2922 = vpack.c.b16 %v2908, %v2907
        %v2923 = vpack.c.b16 %v2910, %v2909
        %v2924 = vpack.c.b16 %v2912, %v2911
        %v2925 = vpack.c.b16 %v2914, %v2913
        %v2926 = vpack.c.b16 %v2916, %v2915
        %v2927 = vpack.c.b16 %v2918, %v2917
        %v2928 = vpack.c.b16 %v2920, %v2919
        %2937 = vmatprep.subr.bf16.mxu0 0
        %2938 = vmatpush1.bf16.msra.mxu0 %v2928
        %2939 = vmatprep.subr.bf16.mxu0 0
        %2940 = vmatpush1.bf16.msra.mxu0 %v2927
        %2941 = vmatprep.subr.bf16.mxu0 0
        %2942 = vmatpush1.bf16.msra.mxu0 %v2926
        %2943 = vmatprep.subr.bf16.mxu0 0
        %2944 = vmatpush1.bf16.msra.mxu0 %v2925
        %2945 = vmatprep.subr.bf16.mxu0 0
        %2946 = vmatpush1.bf16.msra.mxu0 %v2924
        %2947 = vmatprep.subr.bf16.mxu0 0
        %2948 = vmatpush1.bf16.msra.mxu0 %v2923
        %2949 = vmatprep.subr.bf16.mxu0 0
        %2950 = vmatpush1.bf16.msra.mxu0 %v2922
        %2951 = vmatprep.subr.bf16.mxu0 0
        %2952 = vmatpush1.bf16.msra.mxu0 %v2921
        %2953 = vmatprep.subr.bf16.mxu0 0
        %2954 = vmatpush2.bf16.msra.mxu0 0
        %2955 = vmatprep.subr.bf16.mxu0 0
        %2956 = vmatpush2.bf16.msra.mxu0 0
        %2957 = vmatprep.subr.bf16.mxu0 0
        %2958 = vmatpush2.bf16.msra.mxu0 0
        %2959 = vmatprep.subr.bf16.mxu0 0
        %2960 = vmatpush2.bf16.msra.mxu0 0
        %2961 = vmatprep.subr.bf16.mxu0 0
        %2962 = vmatpush2.bf16.msra.mxu0 0
        %2963 = vmatprep.subr.bf16.mxu0 0
        %2964 = vmatpush2.bf16.msra.mxu0 0
        %2965 = vmatprep.subr.bf16.mxu0 0
        %2966 = vmatpush2.bf16.msra.mxu0 0
        %2967 = vmatprep.subr.bf16.mxu0 0
        %2968 = vmatpush2.bf16.msra.mxu0 0
        %2969 = vmatprep.mubr.bf16.mxu0 0
        %2970 = vmatmul.mubr.bf16.gmra.mxu0 %v2856
        %v2971 = vpop.f32.mrf.mxu0
        %v2972 = vadd.f32 0.0, %v2971
        %v2973 = vpop.f32.mrf.mxu0
        %v2974 = vpop.f32.mrf.mxu0
        %v2975 = vadd.f32 0.0, %v2974
        %v2976 = vpop.f32.mrf.mxu0
        %2977 = vmatprep.mubr.bf16.mxu0 0
        %2978 = vmatmul.mubr.bf16.gmra.mxu0 %v2857
        %v2979 = vpop.f32.mrf.mxu0
        %v2980 = vadd.f32 0.0, %v2979
        %v2981 = vpop.f32.mrf.mxu0
        %v2982 = vpop.f32.mrf.mxu0
        %v2983 = vadd.f32 0.0, %v2982
        %v2984 = vpop.f32.mrf.mxu0
        %2985 = vmatprep.mubr.bf16.mxu0 0
        %2986 = vmatmul.mubr.bf16.gmra.mxu0 %v2858
        %v2987 = vpop.f32.mrf.mxu0
        %v2988 = vadd.f32 0.0, %v2987
        %v2989 = vpop.f32.mrf.mxu0
        %v2990 = vpop.f32.mrf.mxu0
        %v2991 = vadd.f32 0.0, %v2990
        %v2992 = vpop.f32.mrf.mxu0
        %2993 = vmatprep.mubr.bf16.mxu0 0
        %2994 = vmatmul.mubr.bf16.gmra.mxu0 %v2859
        %v2995 = vpop.f32.mrf.mxu0
        %v2996 = vadd.f32 0.0, %v2995
        %v2997 = vpop.f32.mrf.mxu0
        %v2998 = vpop.f32.mrf.mxu0
        %v2999 = vadd.f32 0.0, %v2998
        %v3000 = vpop.f32.mrf.mxu0
        %3001 = vmatprep.mubr.bf16.mxu0 0
        %3002 = vmatmul.mubr.bf16.gmra.mxu0 %v2860
        %v3003 = vpop.f32.mrf.mxu0
        %v3004 = vadd.f32 0.0, %v3003
        %v3005 = vpop.f32.mrf.mxu0
        %v3006 = vpop.f32.mrf.mxu0
        %v3007 = vadd.f32 0.0, %v3006
        %v3008 = vpop.f32.mrf.mxu0
        %3009 = vmatprep.mubr.bf16.mxu0 0
        %3010 = vmatmul.mubr.bf16.gmra.mxu0 %v2861
        %v3011 = vpop.f32.mrf.mxu0
        %v3012 = vadd.f32 0.0, %v3011
        %v3013 = vpop.f32.mrf.mxu0
        %v3014 = vpop.f32.mrf.mxu0
        %v3015 = vadd.f32 0.0, %v3014
        %v3016 = vpop.f32.mrf.mxu0
        %3017 = vmatprep.mubr.bf16.mxu0 0
        %3018 = vmatmul.mubr.bf16.gmra.mxu0 %v2862
        %v3019 = vpop.f32.mrf.mxu0
        %v3020 = vadd.f32 0.0, %v3019
        %v3021 = vpop.f32.mrf.mxu0
        %v3022 = vpop.f32.mrf.mxu0
        %v3023 = vadd.f32 0.0, %v3022
        %v3024 = vpop.f32.mrf.mxu0
        %3025 = vmatprep.mubr.bf16.mxu0 0
        %3026 = vmatmul.mubr.bf16.gmra.mxu0 %v2863
        %v3027 = vpop.f32.mrf.mxu0
        %v3028 = vadd.f32 0.0, %v3027
        %v3029 = vpop.f32.mrf.mxu0
        %v3030 = vpop.f32.mrf.mxu0
        %v3031 = vadd.f32 0.0, %v3030
        %v3032 = vpop.f32.mrf.mxu0
        %3033 = vmatprep.mubr.bf16.mxu0 0
        %3034 = vmatmul.mubr.bf16.gmra.mxu0 %v2864
        %v3035 = vpop.f32.mrf.mxu0
        %v3036 = vadd.f32 0.0, %v3035
        %v3037 = vpop.f32.mrf.mxu0
        %v3038 = vpop.f32.mrf.mxu0
        %v3039 = vadd.f32 0.0, %v3038
        %v3040 = vpop.f32.mrf.mxu0
        %3041 = vmatprep.mubr.bf16.mxu0 0
        %3042 = vmatmul.mubr.bf16.gmra.mxu0 %v2865
        %v3043 = vpop.f32.mrf.mxu0
        %v3044 = vadd.f32 0.0, %v3043
        %v3045 = vpop.f32.mrf.mxu0
        %v3046 = vpop.f32.mrf.mxu0
        %v3047 = vadd.f32 0.0, %v3046
        %v3048 = vpop.f32.mrf.mxu0
        %3049 = vmatprep.mubr.bf16.mxu0 0
        %3050 = vmatmul.mubr.bf16.gmra.mxu0 %v2866
        %v3051 = vpop.f32.mrf.mxu0
        %v3052 = vadd.f32 0.0, %v3051
        %v3053 = vpop.f32.mrf.mxu0
        %v3054 = vpop.f32.mrf.mxu0
        %v3055 = vadd.f32 0.0, %v3054
        %v3056 = vpop.f32.mrf.mxu0
        %3057 = vmatprep.mubr.bf16.mxu0 0
        %3058 = vmatmul.mubr.bf16.gmra.mxu0 %v2867
        %v3059 = vpop.f32.mrf.mxu0
        %v3060 = vadd.f32 0.0, %v3059
        %v3061 = vpop.f32.mrf.mxu0
        %v3062 = vpop.f32.mrf.mxu0
        %v3063 = vadd.f32 0.0, %v3062
        %v3064 = vpop.f32.mrf.mxu0
        %3065 = vmatprep.mubr.bf16.mxu0 0
        %3066 = vmatmul.mubr.bf16.gmra.mxu0 %v2868
        %v3067 = vpop.f32.mrf.mxu0
        %v3068 = vadd.f32 0.0, %v3067
        %v3069 = vpop.f32.mrf.mxu0
        %v3070 = vpop.f32.mrf.mxu0
        %v3071 = vadd.f32 0.0, %v3070
        %v3072 = vpop.f32.mrf.mxu0
        %3073 = vmatprep.mubr.bf16.mxu0 0
        %3074 = vmatmul.mubr.bf16.gmra.mxu0 %v2869
        %v3075 = vpop.f32.mrf.mxu0
        %v3076 = vadd.f32 0.0, %v3075
        %v3077 = vpop.f32.mrf.mxu0
        %v3078 = vpop.f32.mrf.mxu0
        %v3079 = vadd.f32 0.0, %v3078
        %v3080 = vpop.f32.mrf.mxu0
        %3081 = vmatprep.mubr.bf16.mxu0 0
        %3082 = vmatmul.mubr.bf16.gmra.mxu0 %v2870
        %v3083 = vpop.f32.mrf.mxu0
        %v3084 = vadd.f32 0.0, %v3083
        %v3085 = vpop.f32.mrf.mxu0
        %v3086 = vpop.f32.mrf.mxu0
        %v3087 = vadd.f32 0.0, %v3086
        %v3088 = vpop.f32.mrf.mxu0
        %3089 = vmatprep.mubr.bf16.mxu0 0
        %3090 = vmatmul.mubr.bf16.gmra.mxu0 %v2871
        %v3091 = vpop.f32.mrf.mxu0
        %v3092 = vadd.f32 0.0, %v3091
        %v3093 = vpop.f32.mrf.mxu0
        %v3094 = vpop.f32.mrf.mxu0
        %v3095 = vadd.f32 0.0, %v3094
        %v3096 = vpop.f32.mrf.mxu0
        %3097 = vdwg.mxu0
        %v3098 = vadd.f32 %v1898, %v2972
        %v3099 = vadd.f32 %v1901, %v2975
        %v3100 = vadd.f32 %v1906, %v2980
        %v3101 = vadd.f32 %v1909, %v2983
        %v3102 = vadd.f32 %v1914, %v2988
        %v3103 = vadd.f32 %v1917, %v2991
        %v3104 = vadd.f32 %v1922, %v2996
        %v3105 = vadd.f32 %v1925, %v2999
        %v3106 = vadd.f32 %v1930, %v3004
        %v3107 = vadd.f32 %v1933, %v3007
        %v3108 = vadd.f32 %v1938, %v3012
        %v3109 = vadd.f32 %v1941, %v3015
        %v3110 = vadd.f32 %v1946, %v3020
        %v3111 = vadd.f32 %v1949, %v3023
        %v3112 = vadd.f32 %v1954, %v3028
        %v3113 = vadd.f32 %v1957, %v3031
        %v3114 = vadd.f32 %v1962, %v3036
        %v3115 = vadd.f32 %v1965, %v3039
        %v3116 = vadd.f32 %v1970, %v3044
        %v3117 = vadd.f32 %v1973, %v3047
        %v3118 = vadd.f32 %v1978, %v3052
        %v3119 = vadd.f32 %v1981, %v3055
        %v3120 = vadd.f32 %v1986, %v3060
        %v3121 = vadd.f32 %v1989, %v3063
        %v3122 = vadd.f32 %v1994, %v3068
        %v3123 = vadd.f32 %v1997, %v3071
        %v3124 = vadd.f32 %v2002, %v3076
        %v3125 = vadd.f32 %v2005, %v3079
        %v3126 = vadd.f32 %v2010, %v3084
        %v3127 = vadd.f32 %v2013, %v3087
        %v3128 = vadd.f32 %v2018, %v3092
        %v3129 = vadd.f32 %v2021, %v3095
        %3130 = vst [vmem:[%s709] sm:$0xff] %v2824
        %3131 = vst [vmem:[%s709 + $0x8] sm:$0xff] %v2825
        %3132 = vst [vmem:[%s709 + $0x10] sm:$0xff] %v2826
        %3133 = vst [vmem:[%s709 + $0x18] sm:$0xff] %v2827
        %3134 = vst [vmem:[%s709 + $0x20] sm:$0xff] %v2828
        %3135 = vst [vmem:[%s709 + $0x28] sm:$0xff] %v2829
        %3136 = vst [vmem:[%s709 + $0x30] sm:$0xff] %v2830
        %3137 = vst [vmem:[%s709 + $0x38] sm:$0xff] %v2831
        %3138 = vst [vmem:[%s709 + $0x40] sm:$0xff] %v2832
        %3139 = vst [vmem:[%s709 + $0x48] sm:$0xff] %v2833
        %3140 = vst [vmem:[%s709 + $0x50] sm:$0xff] %v2834
        %3141 = vst [vmem:[%s709 + $0x58] sm:$0xff] %v2835
        %3142 = vst [vmem:[%s709 + $0x60] sm:$0xff] %v2836
        %3143 = vst [vmem:[%s709 + $0x68] sm:$0xff] %v2837
        %3144 = vst [vmem:[%s709 + $0x70] sm:$0xff] %v2838
        %3145 = vst [vmem:[%s709 + $0x78] sm:$0xff] %v2839
        %3146 = vst [vmem:[%s709 + $0x80] sm:$0xff] %v2840
        %3147 = vst [vmem:[%s709 + $0x88] sm:$0xff] %v2841
        %3148 = vst [vmem:[%s709 + $0x90] sm:$0xff] %v2842
        %3149 = vst [vmem:[%s709 + $0x98] sm:$0xff] %v2843
        %3150 = vst [vmem:[%s709 + $0xa0] sm:$0xff] %v2844
        %3151 = vst [vmem:[%s709 + $0xa8] sm:$0xff] %v2845
        %3152 = vst [vmem:[%s709 + $0xb0] sm:$0xff] %v2846
        %3153 = vst [vmem:[%s709 + $0xb8] sm:$0xff] %v2847
        %3154 = vst [vmem:[%s709 + $0xc0] sm:$0xff] %v2848
        %3155 = vst [vmem:[%s709 + $0xc8] sm:$0xff] %v2849
        %3156 = vst [vmem:[%s709 + $0xd0] sm:$0xff] %v2850
        %3157 = vst [vmem:[%s709 + $0xd8] sm:$0xff] %v2851
        %3158 = vst [vmem:[%s709 + $0xe0] sm:$0xff] %v2852
        %3159 = vst [vmem:[%s709 + $0xe8] sm:$0xff] %v2853
        %3160 = vst [vmem:[%s709 + $0xf0] sm:$0xff] %v2854
        %3161 = vst [vmem:[%s709 + $0xf8] sm:$0xff] %v2855
        %v3162 = vld [vmem:[#allocation2] sm:$0xff]
        %v3163 = vld [vmem:[#allocation2 + $0x8] sm:$0xff]
        %v3164 = vld [vmem:[#allocation2 + $0x10] sm:$0xff]
        %v3165 = vld [vmem:[#allocation2 + $0x18] sm:$0xff]
        %v3166 = vld [vmem:[#allocation2 + $0x20] sm:$0xff]
        %v3167 = vld [vmem:[#allocation2 + $0x28] sm:$0xff]
        %v3168 = vld [vmem:[#allocation2 + $0x30] sm:$0xff]
        %v3169 = vld [vmem:[#allocation2 + $0x38] sm:$0xff]
        %v3170 = vld [vmem:[#allocation2 + $0x40] sm:$0xff]
        %v3171 = vld [vmem:[#allocation2 + $0x48] sm:$0xff]
        %v3172 = vld [vmem:[#allocation2 + $0x50] sm:$0xff]
        %v3173 = vld [vmem:[#allocation2 + $0x58] sm:$0xff]
        %v3174 = vld [vmem:[#allocation2 + $0x60] sm:$0xff]
        %v3175 = vld [vmem:[#allocation2 + $0x68] sm:$0xff]
        %v3176 = vld [vmem:[#allocation2 + $0x70] sm:$0xff]
        %v3177 = vld [vmem:[#allocation2 + $0x78] sm:$0xff]
        %v3178 = vld [vmem:[#allocation2 + $0x80] sm:$0xff]
        %v3179 = vld [vmem:[#allocation2 + $0x88] sm:$0xff]
        %v3180 = vld [vmem:[#allocation2 + $0x90] sm:$0xff]
        %v3181 = vld [vmem:[#allocation2 + $0x98] sm:$0xff]
        %v3182 = vld [vmem:[#allocation2 + $0xa0] sm:$0xff]
        %v3183 = vld [vmem:[#allocation2 + $0xa8] sm:$0xff]
        %v3184 = vld [vmem:[#allocation2 + $0xb0] sm:$0xff]
        %v3185 = vld [vmem:[#allocation2 + $0xb8] sm:$0xff]
        %v3186 = vld [vmem:[#allocation2 + $0xc0] sm:$0xff]
        %v3187 = vld [vmem:[#allocation2 + $0xc8] sm:$0xff]
        %v3188 = vld [vmem:[#allocation2 + $0xd0] sm:$0xff]
        %v3189 = vld [vmem:[#allocation2 + $0xd8] sm:$0xff]
        %v3190 = vld [vmem:[#allocation2 + $0xe0] sm:$0xff]
        %v3191 = vld [vmem:[#allocation2 + $0xe8] sm:$0xff]
        %v3192 = vld [vmem:[#allocation2 + $0xf0] sm:$0xff]
        %v3193 = vld [vmem:[#allocation2 + $0xf8] sm:$0xff]
        %v3194 = vld [vmem:[%s774] sm:$0xff]
        %v3195 = vld [vmem:[%s774 + $0x8] sm:$0xff]
        %v3196 = vld [vmem:[%s774 + $0x10] sm:$0xff]
        %v3197 = vld [vmem:[%s774 + $0x18] sm:$0xff]
        %v3198 = vld [vmem:[%s774 + $0x20] sm:$0xff]
        %v3199 = vld [vmem:[%s774 + $0x28] sm:$0xff]
        %v3200 = vld [vmem:[%s774 + $0x30] sm:$0xff]
        %v3201 = vld [vmem:[%s774 + $0x38] sm:$0xff]
        %v3202 = vld [vmem:[%s774 + $0x40] sm:$0xff]
        %v3203 = vld [vmem:[%s774 + $0x48] sm:$0xff]
        %v3204 = vld [vmem:[%s774 + $0x50] sm:$0xff]
        %v3205 = vld [vmem:[%s774 + $0x58] sm:$0xff]
        %v3206 = vld [vmem:[%s774 + $0x60] sm:$0xff]
        %v3207 = vld [vmem:[%s774 + $0x68] sm:$0xff]
        %v3208 = vld [vmem:[%s774 + $0x70] sm:$0xff]
        %v3209 = vld [vmem:[%s774 + $0x78] sm:$0xff]
        %v3210 = vld [vmem:[%s774 + $0x80] sm:$0xff]
        %v3211 = vld [vmem:[%s774 + $0x88] sm:$0xff]
        %v3212 = vld [vmem:[%s774 + $0x90] sm:$0xff]
        %v3213 = vld [vmem:[%s774 + $0x98] sm:$0xff]
        %v3214 = vld [vmem:[%s774 + $0xa0] sm:$0xff]
        %v3215 = vld [vmem:[%s774 + $0xa8] sm:$0xff]
        %v3216 = vld [vmem:[%s774 + $0xb0] sm:$0xff]
        %v3217 = vld [vmem:[%s774 + $0xb8] sm:$0xff]
        %v3218 = vld [vmem:[%s774 + $0xc0] sm:$0xff]
        %v3219 = vld [vmem:[%s774 + $0xc8] sm:$0xff]
        %v3220 = vld [vmem:[%s774 + $0xd0] sm:$0xff]
        %v3221 = vld [vmem:[%s774 + $0xd8] sm:$0xff]
        %v3222 = vld [vmem:[%s774 + $0xe0] sm:$0xff]
        %v3223 = vld [vmem:[%s774 + $0xe8] sm:$0xff]
        %v3224 = vld [vmem:[%s774 + $0xf0] sm:$0xff]
        %v3225 = vld [vmem:[%s774 + $0xf8] sm:$0xff]
        %v3226 = vmax.f32 %v3162, %v3194
        %v3227 = vmax.f32 %v3163, %v3195
        %v3228 = vmax.f32 %v3164, %v3196
        %v3229 = vmax.f32 %v3165, %v3197
        %v3230 = vmax.f32 %v3166, %v3198
        %v3231 = vmax.f32 %v3167, %v3199
        %v3232 = vmax.f32 %v3168, %v3200
        %v3233 = vmax.f32 %v3169, %v3201
        %v3234 = vmax.f32 %v3170, %v3202
        %v3235 = vmax.f32 %v3171, %v3203
        %v3236 = vmax.f32 %v3172, %v3204
        %v3237 = vmax.f32 %v3173, %v3205
        %v3238 = vmax.f32 %v3174, %v3206
        %v3239 = vmax.f32 %v3175, %v3207
        %v3240 = vmax.f32 %v3176, %v3208
        %v3241 = vmax.f32 %v3177, %v3209
        %v3242 = vmax.f32 %v3178, %v3210
        %v3243 = vmax.f32 %v3179, %v3211
        %v3244 = vmax.f32 %v3180, %v3212
        %v3245 = vmax.f32 %v3181, %v3213
        %v3246 = vmax.f32 %v3182, %v3214
        %v3247 = vmax.f32 %v3183, %v3215
        %v3248 = vmax.f32 %v3184, %v3216
        %v3249 = vmax.f32 %v3185, %v3217
        %v3250 = vmax.f32 %v3186, %v3218
        %v3251 = vmax.f32 %v3187, %v3219
        %v3252 = vmax.f32 %v3188, %v3220
        %v3253 = vmax.f32 %v3189, %v3221
        %v3254 = vmax.f32 %v3190, %v3222
        %v3255 = vmax.f32 %v3191, %v3223
        %v3256 = vmax.f32 %v3192, %v3224
        %v3257 = vmax.f32 %v3193, %v3225
        %v3258 = vld [vmem:[%s709] sm:$0xff]
        %v3259 = vld [vmem:[%s709 + $0x8] sm:$0xff]
        %v3260 = vld [vmem:[%s709 + $0x10] sm:$0xff]
        %v3261 = vld [vmem:[%s709 + $0x18] sm:$0xff]
        %v3262 = vld [vmem:[%s709 + $0x20] sm:$0xff]
        %v3263 = vld [vmem:[%s709 + $0x28] sm:$0xff]
        %v3264 = vld [vmem:[%s709 + $0x30] sm:$0xff]
        %v3265 = vld [vmem:[%s709 + $0x38] sm:$0xff]
        %v3266 = vld [vmem:[%s709 + $0x40] sm:$0xff]
        %v3267 = vld [vmem:[%s709 + $0x48] sm:$0xff]
        %v3268 = vld [vmem:[%s709 + $0x50] sm:$0xff]
        %v3269 = vld [vmem:[%s709 + $0x58] sm:$0xff]
        %v3270 = vld [vmem:[%s709 + $0x60] sm:$0xff]
        %v3271 = vld [vmem:[%s709 + $0x68] sm:$0xff]
        %v3272 = vld [vmem:[%s709 + $0x70] sm:$0xff]
        %v3273 = vld [vmem:[%s709 + $0x78] sm:$0xff]
        %v3274 = vld [vmem:[%s709 + $0x80] sm:$0xff]
        %v3275 = vld [vmem:[%s709 + $0x88] sm:$0xff]
        %v3276 = vld [vmem:[%s709 + $0x90] sm:$0xff]
        %v3277 = vld [vmem:[%s709 + $0x98] sm:$0xff]
        %v3278 = vld [vmem:[%s709 + $0xa0] sm:$0xff]
        %v3279 = vld [vmem:[%s709 + $0xa8] sm:$0xff]
        %v3280 = vld [vmem:[%s709 + $0xb0] sm:$0xff]
        %v3281 = vld [vmem:[%s709 + $0xb8] sm:$0xff]
        %v3282 = vld [vmem:[%s709 + $0xc0] sm:$0xff]
        %v3283 = vld [vmem:[%s709 + $0xc8] sm:$0xff]
        %v3284 = vld [vmem:[%s709 + $0xd0] sm:$0xff]
        %v3285 = vld [vmem:[%s709 + $0xd8] sm:$0xff]
        %v3286 = vld [vmem:[%s709 + $0xe0] sm:$0xff]
        %v3287 = vld [vmem:[%s709 + $0xe8] sm:$0xff]
        %v3288 = vld [vmem:[%s709 + $0xf0] sm:$0xff]
        %v3289 = vld [vmem:[%s709 + $0xf8] sm:$0xff]
        %v3290 = vmax.f32 %v3226, %v3258
        %v3291 = vmax.f32 %v3227, %v3259
        %v3292 = vmax.f32 %v3228, %v3260
        %v3293 = vmax.f32 %v3229, %v3261
        %v3294 = vmax.f32 %v3230, %v3262
        %v3295 = vmax.f32 %v3231, %v3263
        %v3296 = vmax.f32 %v3232, %v3264
        %v3297 = vmax.f32 %v3233, %v3265
        %v3298 = vmax.f32 %v3234, %v3266
        %v3299 = vmax.f32 %v3235, %v3267
        %v3300 = vmax.f32 %v3236, %v3268
        %v3301 = vmax.f32 %v3237, %v3269
        %v3302 = vmax.f32 %v3238, %v3270
        %v3303 = vmax.f32 %v3239, %v3271
        %v3304 = vmax.f32 %v3240, %v3272
        %v3305 = vmax.f32 %v3241, %v3273
        %v3306 = vmax.f32 %v3242, %v3274
        %v3307 = vmax.f32 %v3243, %v3275
        %v3308 = vmax.f32 %v3244, %v3276
        %v3309 = vmax.f32 %v3245, %v3277
        %v3310 = vmax.f32 %v3246, %v3278
        %v3311 = vmax.f32 %v3247, %v3279
        %v3312 = vmax.f32 %v3248, %v3280
        %v3313 = vmax.f32 %v3249, %v3281
        %v3314 = vmax.f32 %v3250, %v3282
        %v3315 = vmax.f32 %v3251, %v3283
        %v3316 = vmax.f32 %v3252, %v3284
        %v3317 = vmax.f32 %v3253, %v3285
        %v3318 = vmax.f32 %v3254, %v3286
        %v3319 = vmax.f32 %v3255, %v3287
        %v3320 = vmax.f32 %v3256, %v3288
        %v3321 = vmax.f32 %v3257, %v3289
        %v3322 = vld [vmem:[%s903] sm:$0xff]
        %v3323 = vld [vmem:[%s903 + $0x8] sm:$0xff]
        %v3324 = vld [vmem:[%s903 + $0x10] sm:$0xff]
        %v3325 = vld [vmem:[%s903 + $0x18] sm:$0xff]
        %v3326 = vld [vmem:[%s903 + $0x20] sm:$0xff]
        %v3327 = vld [vmem:[%s903 + $0x28] sm:$0xff]
        %v3328 = vld [vmem:[%s903 + $0x30] sm:$0xff]
        %v3329 = vld [vmem:[%s903 + $0x38] sm:$0xff]
        %v3330 = vld [vmem:[%s903 + $0x40] sm:$0xff]
        %v3331 = vld [vmem:[%s903 + $0x48] sm:$0xff]
        %v3332 = vld [vmem:[%s903 + $0x50] sm:$0xff]
        %v3333 = vld [vmem:[%s903 + $0x58] sm:$0xff]
        %v3334 = vld [vmem:[%s903 + $0x60] sm:$0xff]
        %v3335 = vld [vmem:[%s903 + $0x68] sm:$0xff]
        %v3336 = vld [vmem:[%s903 + $0x70] sm:$0xff]
        %v3337 = vld [vmem:[%s903 + $0x78] sm:$0xff]
        %v3338 = vld [vmem:[%s903 + $0x80] sm:$0xff]
        %v3339 = vld [vmem:[%s903 + $0x88] sm:$0xff]
        %v3340 = vld [vmem:[%s903 + $0x90] sm:$0xff]
        %v3341 = vld [vmem:[%s903 + $0x98] sm:$0xff]
        %v3342 = vld [vmem:[%s903 + $0xa0] sm:$0xff]
        %v3343 = vld [vmem:[%s903 + $0xa8] sm:$0xff]
        %v3344 = vld [vmem:[%s903 + $0xb0] sm:$0xff]
        %v3345 = vld [vmem:[%s903 + $0xb8] sm:$0xff]
        %v3346 = vld [vmem:[%s903 + $0xc0] sm:$0xff]
        %v3347 = vld [vmem:[%s903 + $0xc8] sm:$0xff]
        %v3348 = vld [vmem:[%s903 + $0xd0] sm:$0xff]
        %v3349 = vld [vmem:[%s903 + $0xd8] sm:$0xff]
        %v3350 = vld [vmem:[%s903 + $0xe0] sm:$0xff]
        %v3351 = vld [vmem:[%s903 + $0xe8] sm:$0xff]
        %v3352 = vld [vmem:[%s903 + $0xf0] sm:$0xff]
        %v3353 = vld [vmem:[%s903 + $0xf8] sm:$0xff]
        %v3354 = vmax.f32 %v3290, %v3322
        %v3355 = vmax.f32 %v3291, %v3323
        %v3356 = vmax.f32 %v3292, %v3324
        %v3357 = vmax.f32 %v3293, %v3325
        %v3358 = vmax.f32 %v3294, %v3326
        %v3359 = vmax.f32 %v3295, %v3327
        %v3360 = vmax.f32 %v3296, %v3328
        %v3361 = vmax.f32 %v3297, %v3329
        %v3362 = vmax.f32 %v3298, %v3330
        %v3363 = vmax.f32 %v3299, %v3331
        %v3364 = vmax.f32 %v3300, %v3332
        %v3365 = vmax.f32 %v3301, %v3333
        %v3366 = vmax.f32 %v3302, %v3334
        %v3367 = vmax.f32 %v3303, %v3335
        %v3368 = vmax.f32 %v3304, %v3336
        %v3369 = vmax.f32 %v3305, %v3337
        %v3370 = vmax.f32 %v3306, %v3338
        %v3371 = vmax.f32 %v3307, %v3339
        %v3372 = vmax.f32 %v3308, %v3340
        %v3373 = vmax.f32 %v3309, %v3341
        %v3374 = vmax.f32 %v3310, %v3342
        %v3375 = vmax.f32 %v3311, %v3343
        %v3376 = vmax.f32 %v3312, %v3344
        %v3377 = vmax.f32 %v3313, %v3345
        %v3378 = vmax.f32 %v3314, %v3346
        %v3379 = vmax.f32 %v3315, %v3347
        %v3380 = vmax.f32 %v3316, %v3348
        %v3381 = vmax.f32 %v3317, %v3349
        %v3382 = vmax.f32 %v3318, %v3350
        %v3383 = vmax.f32 %v3319, %v3351
        %v3384 = vmax.f32 %v3320, %v3352
        %v3385 = vmax.f32 %v3321, %v3353
        %v3386 = vld [vmem:[%s968] sm:$0xff]
        %v3387 = vld [vmem:[%s968 + $0x8] sm:$0xff]
        %v3388 = vld [vmem:[%s968 + $0x10] sm:$0xff]
        %v3389 = vld [vmem:[%s968 + $0x18] sm:$0xff]
        %v3390 = vld [vmem:[%s968 + $0x20] sm:$0xff]
        %v3391 = vld [vmem:[%s968 + $0x28] sm:$0xff]
        %v3392 = vld [vmem:[%s968 + $0x30] sm:$0xff]
        %v3393 = vld [vmem:[%s968 + $0x38] sm:$0xff]
        %v3394 = vld [vmem:[%s968 + $0x40] sm:$0xff]
        %v3395 = vld [vmem:[%s968 + $0x48] sm:$0xff]
        %v3396 = vld [vmem:[%s968 + $0x50] sm:$0xff]
        %v3397 = vld [vmem:[%s968 + $0x58] sm:$0xff]
        %v3398 = vld [vmem:[%s968 + $0x60] sm:$0xff]
        %v3399 = vld [vmem:[%s968 + $0x68] sm:$0xff]
        %v3400 = vld [vmem:[%s968 + $0x70] sm:$0xff]
        %v3401 = vld [vmem:[%s968 + $0x78] sm:$0xff]
        %v3402 = vld [vmem:[%s968 + $0x80] sm:$0xff]
        %v3403 = vld [vmem:[%s968 + $0x88] sm:$0xff]
        %v3404 = vld [vmem:[%s968 + $0x90] sm:$0xff]
        %v3405 = vld [vmem:[%s968 + $0x98] sm:$0xff]
        %v3406 = vld [vmem:[%s968 + $0xa0] sm:$0xff]
        %v3407 = vld [vmem:[%s968 + $0xa8] sm:$0xff]
        %v3408 = vld [vmem:[%s968 + $0xb0] sm:$0xff]
        %v3409 = vld [vmem:[%s968 + $0xb8] sm:$0xff]
        %v3410 = vld [vmem:[%s968 + $0xc0] sm:$0xff]
        %v3411 = vld [vmem:[%s968 + $0xc8] sm:$0xff]
        %v3412 = vld [vmem:[%s968 + $0xd0] sm:$0xff]
        %v3413 = vld [vmem:[%s968 + $0xd8] sm:$0xff]
        %v3414 = vld [vmem:[%s968 + $0xe0] sm:$0xff]
        %v3415 = vld [vmem:[%s968 + $0xe8] sm:$0xff]
        %v3416 = vld [vmem:[%s968 + $0xf0] sm:$0xff]
        %v3417 = vld [vmem:[%s968 + $0xf8] sm:$0xff]
        %v3418 = vmax.f32 %v3354, %v3386
        %v3419 = vmax.f32 %v3355, %v3387
        %v3420 = vmax.f32 %v3356, %v3388
        %v3421 = vmax.f32 %v3357, %v3389
        %v3422 = vmax.f32 %v3358, %v3390
        %v3423 = vmax.f32 %v3359, %v3391
        %v3424 = vmax.f32 %v3360, %v3392
        %v3425 = vmax.f32 %v3361, %v3393
        %v3426 = vmax.f32 %v3362, %v3394
        %v3427 = vmax.f32 %v3363, %v3395
        %v3428 = vmax.f32 %v3364, %v3396
        %v3429 = vmax.f32 %v3365, %v3397
        %v3430 = vmax.f32 %v3366, %v3398
        %v3431 = vmax.f32 %v3367, %v3399
        %v3432 = vmax.f32 %v3368, %v3400
        %v3433 = vmax.f32 %v3369, %v3401
        %v3434 = vmax.f32 %v3370, %v3402
        %v3435 = vmax.f32 %v3371, %v3403
        %v3436 = vmax.f32 %v3372, %v3404
        %v3437 = vmax.f32 %v3373, %v3405
        %v3438 = vmax.f32 %v3374, %v3406
        %v3439 = vmax.f32 %v3375, %v3407
        %v3440 = vmax.f32 %v3376, %v3408
        %v3441 = vmax.f32 %v3377, %v3409
        %v3442 = vmax.f32 %v3378, %v3410
        %v3443 = vmax.f32 %v3379, %v3411
        %v3444 = vmax.f32 %v3380, %v3412
        %v3445 = vmax.f32 %v3381, %v3413
        %v3446 = vmax.f32 %v3382, %v3414
        %v3447 = vmax.f32 %v3383, %v3415
        %v3448 = vmax.f32 %v3384, %v3416
        %v3449 = vmax.f32 %v3385, %v3417
        %v3450 = vrot.slane %v3418, 1
        %v3451 = vrot.slane %v3420, 1
        %v3452 = vrot.slane %v3422, 1
        %v3453 = vrot.slane %v3424, 1
        %v3454 = vrot.slane %v3426, 1
        %v3455 = vrot.slane %v3428, 1
        %v3456 = vrot.slane %v3430, 1
        %v3457 = vrot.slane %v3432, 1
        %v3458 = vrot.slane %v3434, 1
        %v3459 = vrot.slane %v3436, 1
        %v3460 = vrot.slane %v3438, 1
        %v3461 = vrot.slane %v3440, 1
        %v3462 = vrot.slane %v3442, 1
        %v3463 = vrot.slane %v3444, 1
        %v3464 = vrot.slane %v3446, 1
        %v3465 = vrot.slane %v3448, 1
        %v3466 = vrot.slane %v3419, 1
        %v3467 = vrot.slane %v3421, 1
        %v3468 = vrot.slane %v3423, 1
        %v3469 = vrot.slane %v3425, 1
        %v3470 = vrot.slane %v3427, 1
        %v3471 = vrot.slane %v3429, 1
        %v3472 = vrot.slane %v3431, 1
        %v3473 = vrot.slane %v3433, 1
        %v3474 = vrot.slane %v3435, 1
        %v3475 = vrot.slane %v3437, 1
        %v3476 = vrot.slane %v3439, 1
        %v3477 = vrot.slane %v3441, 1
        %v3478 = vrot.slane %v3443, 1
        %v3479 = vrot.slane %v3445, 1
        %v3480 = vrot.slane %v3447, 1
        %v3481 = vrot.slane %v3449, 1
        %v3482 = vsel %vm1067, %v3450, %v3466
        %v3483 = vsel %vm1067, %v3451, %v3467
        %v3484 = vsel %vm1067, %v3452, %v3468
        %v3485 = vsel %vm1067, %v3453, %v3469
        %v3486 = vsel %vm1067, %v3454, %v3470
        %v3487 = vsel %vm1067, %v3455, %v3471
        %v3488 = vsel %vm1067, %v3456, %v3472
        %v3489 = vsel %vm1067, %v3457, %v3473
        %v3490 = vsel %vm1067, %v3458, %v3474
        %v3491 = vsel %vm1067, %v3459, %v3475
        %v3492 = vsel %vm1067, %v3460, %v3476
        %v3493 = vsel %vm1067, %v3461, %v3477
        %v3494 = vsel %vm1067, %v3462, %v3478
        %v3495 = vsel %vm1067, %v3463, %v3479
        %v3496 = vsel %vm1067, %v3464, %v3480
        %v3497 = vsel %vm1067, %v3465, %v3481
        %v3498 = vsel %vm1067, %v3466, %v3450
        %v3499 = vsel %vm1067, %v3467, %v3451
        %v3500 = vsel %vm1067, %v3468, %v3452
        %v3501 = vsel %vm1067, %v3469, %v3453
        %v3502 = vsel %vm1067, %v3470, %v3454
        %v3503 = vsel %vm1067, %v3471, %v3455
        %v3504 = vsel %vm1067, %v3472, %v3456
        %v3505 = vsel %vm1067, %v3473, %v3457
        %v3506 = vsel %vm1067, %v3474, %v3458
        %v3507 = vsel %vm1067, %v3475, %v3459
        %v3508 = vsel %vm1067, %v3476, %v3460
        %v3509 = vsel %vm1067, %v3477, %v3461
        %v3510 = vsel %vm1067, %v3478, %v3462
        %v3511 = vsel %vm1067, %v3479, %v3463
        %v3512 = vsel %vm1067, %v3480, %v3464
        %v3513 = vsel %vm1067, %v3481, %v3465
        %v3514 = vsel %vm1102, %v3482, 0.0
        %v3515 = vsel %vm1103, %v3498, 0.0
        %v3516 = vsel %vm1102, %v3483, 0.0
        %v3517 = vsel %vm1103, %v3499, 0.0
        %v3518 = vsel %vm1102, %v3484, 0.0
        %v3519 = vsel %vm1103, %v3500, 0.0
        %v3520 = vsel %vm1102, %v3485, 0.0
        %v3521 = vsel %vm1103, %v3501, 0.0
        %v3522 = vsel %vm1102, %v3486, 0.0
        %v3523 = vsel %vm1103, %v3502, 0.0
        %v3524 = vsel %vm1102, %v3487, 0.0
        %v3525 = vsel %vm1103, %v3503, 0.0
        %v3526 = vsel %vm1102, %v3488, 0.0
        %v3527 = vsel %vm1103, %v3504, 0.0
        %v3528 = vsel %vm1102, %v3489, 0.0
        %v3529 = vsel %vm1103, %v3505, 0.0
        %v3530 = vsel %vm1102, %v3490, 0.0
        %v3531 = vsel %vm1103, %v3506, 0.0
        %v3532 = vsel %vm1102, %v3491, 0.0
        %v3533 = vsel %vm1103, %v3507, 0.0
        %v3534 = vsel %vm1102, %v3492, 0.0
        %v3535 = vsel %vm1103, %v3508, 0.0
        %v3536 = vsel %vm1102, %v3493, 0.0
        %v3537 = vsel %vm1103, %v3509, 0.0
        %v3538 = vsel %vm1102, %v3494, 0.0
        %v3539 = vsel %vm1103, %v3510, 0.0
        %v3540 = vsel %vm1102, %v3495, 0.0
        %v3541 = vsel %vm1103, %v3511, 0.0
        %v3542 = vsel %vm1102, %v3496, 0.0
        %v3543 = vsel %vm1103, %v3512, 0.0
        %v3544 = vsel %vm1102, %v3497, 0.0
        %v3545 = vsel %vm1103, %v3513, 0.0
        %v3546 = vrot.slane %v3418, 7
        %v3547 = vrot.slane %v3420, 7
        %v3548 = vrot.slane %v3422, 7
        %v3549 = vrot.slane %v3424, 7
        %v3550 = vrot.slane %v3426, 7
        %v3551 = vrot.slane %v3428, 7
        %v3552 = vrot.slane %v3430, 7
        %v3553 = vrot.slane %v3432, 7
        %v3554 = vrot.slane %v3434, 7
        %v3555 = vrot.slane %v3436, 7
        %v3556 = vrot.slane %v3438, 7
        %v3557 = vrot.slane %v3440, 7
        %v3558 = vrot.slane %v3442, 7
        %v3559 = vrot.slane %v3444, 7
        %v3560 = vrot.slane %v3446, 7
        %v3561 = vrot.slane %v3448, 7
        %v3562 = vrot.slane %v3419, 7
        %v3563 = vrot.slane %v3421, 7
        %v3564 = vrot.slane %v3423, 7
        %v3565 = vrot.slane %v3425, 7
        %v3566 = vrot.slane %v3427, 7
        %v3567 = vrot.slane %v3429, 7
        %v3568 = vrot.slane %v3431, 7
        %v3569 = vrot.slane %v3433, 7
        %v3570 = vrot.slane %v3435, 7
        %v3571 = vrot.slane %v3437, 7
        %v3572 = vrot.slane %v3439, 7
        %v3573 = vrot.slane %v3441, 7
        %v3574 = vrot.slane %v3443, 7
        %v3575 = vrot.slane %v3445, 7
        %v3576 = vrot.slane %v3447, 7
        %v3577 = vrot.slane %v3449, 7
        %v3578 = vsel %vm1170, %v3546, %v3562
        %v3579 = vsel %vm1170, %v3547, %v3563
        %v3580 = vsel %vm1170, %v3548, %v3564
        %v3581 = vsel %vm1170, %v3549, %v3565
        %v3582 = vsel %vm1170, %v3550, %v3566
        %v3583 = vsel %vm1170, %v3551, %v3567
        %v3584 = vsel %vm1170, %v3552, %v3568
        %v3585 = vsel %vm1170, %v3553, %v3569
        %v3586 = vsel %vm1170, %v3554, %v3570
        %v3587 = vsel %vm1170, %v3555, %v3571
        %v3588 = vsel %vm1170, %v3556, %v3572
        %v3589 = vsel %vm1170, %v3557, %v3573
        %v3590 = vsel %vm1170, %v3558, %v3574
        %v3591 = vsel %vm1170, %v3559, %v3575
        %v3592 = vsel %vm1170, %v3560, %v3576
        %v3593 = vsel %vm1170, %v3561, %v3577
        %v3594 = vsel %vm1170, %v3562, %v3546
        %v3595 = vsel %vm1170, %v3563, %v3547
        %v3596 = vsel %vm1170, %v3564, %v3548
        %v3597 = vsel %vm1170, %v3565, %v3549
        %v3598 = vsel %vm1170, %v3566, %v3550
        %v3599 = vsel %vm1170, %v3567, %v3551
        %v3600 = vsel %vm1170, %v3568, %v3552
        %v3601 = vsel %vm1170, %v3569, %v3553
        %v3602 = vsel %vm1170, %v3570, %v3554
        %v3603 = vsel %vm1170, %v3571, %v3555
        %v3604 = vsel %vm1170, %v3572, %v3556
        %v3605 = vsel %vm1170, %v3573, %v3557
        %v3606 = vsel %vm1170, %v3574, %v3558
        %v3607 = vsel %vm1170, %v3575, %v3559
        %v3608 = vsel %vm1170, %v3576, %v3560
        %v3609 = vsel %vm1170, %v3577, %v3561
        %v3610 = vsel %vm1205, %v3594, 0.0
        %v3611 = vsel %vm1206, %v3578, 0.0
        %v3612 = vsel %vm1205, %v3595, 0.0
        %v3613 = vsel %vm1206, %v3579, 0.0
        %v3614 = vsel %vm1205, %v3596, 0.0
        %v3615 = vsel %vm1206, %v3580, 0.0
        %v3616 = vsel %vm1205, %v3597, 0.0
        %v3617 = vsel %vm1206, %v3581, 0.0
        %v3618 = vsel %vm1205, %v3598, 0.0
        %v3619 = vsel %vm1206, %v3582, 0.0
        %v3620 = vsel %vm1205, %v3599, 0.0
        %v3621 = vsel %vm1206, %v3583, 0.0
        %v3622 = vsel %vm1205, %v3600, 0.0
        %v3623 = vsel %vm1206, %v3584, 0.0
        %v3624 = vsel %vm1205, %v3601, 0.0
        %v3625 = vsel %vm1206, %v3585, 0.0
        %v3626 = vsel %vm1205, %v3602, 0.0
        %v3627 = vsel %vm1206, %v3586, 0.0
        %v3628 = vsel %vm1205, %v3603, 0.0
        %v3629 = vsel %vm1206, %v3587, 0.0
        %v3630 = vsel %vm1205, %v3604, 0.0
        %v3631 = vsel %vm1206, %v3588, 0.0
        %v3632 = vsel %vm1205, %v3605, 0.0
        %v3633 = vsel %vm1206, %v3589, 0.0
        %v3634 = vsel %vm1205, %v3606, 0.0
        %v3635 = vsel %vm1206, %v3590, 0.0
        %v3636 = vsel %vm1205, %v3607, 0.0
        %v3637 = vsel %vm1206, %v3591, 0.0
        %v3638 = vsel %vm1205, %v3608, 0.0
        %v3639 = vsel %vm1206, %v3592, 0.0
        %v3640 = vsel %vm1205, %v3609, 0.0
        %v3641 = vsel %vm1206, %v3593, 0.0
        %v3642 = vmax.f32 %v3514, %v3610
        %v3643 = vmax.f32 %v3515, %v3611
        %v3644 = vmax.f32 %v3516, %v3612
        %v3645 = vmax.f32 %v3517, %v3613
        %v3646 = vmax.f32 %v3518, %v3614
        %v3647 = vmax.f32 %v3519, %v3615
        %v3648 = vmax.f32 %v3520, %v3616
        %v3649 = vmax.f32 %v3521, %v3617
        %v3650 = vmax.f32 %v3522, %v3618
        %v3651 = vmax.f32 %v3523, %v3619
        %v3652 = vmax.f32 %v3524, %v3620
        %v3653 = vmax.f32 %v3525, %v3621
        %v3654 = vmax.f32 %v3526, %v3622
        %v3655 = vmax.f32 %v3527, %v3623
        %v3656 = vmax.f32 %v3528, %v3624
        %v3657 = vmax.f32 %v3529, %v3625
        %v3658 = vmax.f32 %v3530, %v3626
        %v3659 = vmax.f32 %v3531, %v3627
        %v3660 = vmax.f32 %v3532, %v3628
        %v3661 = vmax.f32 %v3533, %v3629
        %v3662 = vmax.f32 %v3534, %v3630
        %v3663 = vmax.f32 %v3535, %v3631
        %v3664 = vmax.f32 %v3536, %v3632
        %v3665 = vmax.f32 %v3537, %v3633
        %v3666 = vmax.f32 %v3538, %v3634
        %v3667 = vmax.f32 %v3539, %v3635
        %v3668 = vmax.f32 %v3540, %v3636
        %v3669 = vmax.f32 %v3541, %v3637
        %v3670 = vmax.f32 %v3542, %v3638
        %v3671 = vmax.f32 %v3543, %v3639
        %v3672 = vmax.f32 %v3544, %v3640
        %v3673 = vmax.f32 %v3545, %v3641
        %v3674 = vmax.f32 %v3418, %v3642
        %v3675 = vmax.f32 %v3419, %v3643
        %v3676 = vmax.f32 %v3420, %v3644
        %v3677 = vmax.f32 %v3421, %v3645
        %v3678 = vmax.f32 %v3422, %v3646
        %v3679 = vmax.f32 %v3423, %v3647
        %v3680 = vmax.f32 %v3424, %v3648
        %v3681 = vmax.f32 %v3425, %v3649
        %v3682 = vmax.f32 %v3426, %v3650
        %v3683 = vmax.f32 %v3427, %v3651
        %v3684 = vmax.f32 %v3428, %v3652
        %v3685 = vmax.f32 %v3429, %v3653
        %v3686 = vmax.f32 %v3430, %v3654
        %v3687 = vmax.f32 %v3431, %v3655
        %v3688 = vmax.f32 %v3432, %v3656
        %v3689 = vmax.f32 %v3433, %v3657
        %v3690 = vmax.f32 %v3434, %v3658
        %v3691 = vmax.f32 %v3435, %v3659
        %v3692 = vmax.f32 %v3436, %v3660
        %v3693 = vmax.f32 %v3437, %v3661
        %v3694 = vmax.f32 %v3438, %v3662
        %v3695 = vmax.f32 %v3439, %v3663
        %v3696 = vmax.f32 %v3440, %v3664
        %v3697 = vmax.f32 %v3441, %v3665
        %v3698 = vmax.f32 %v3442, %v3666
        %v3699 = vmax.f32 %v3443, %v3667
        %v3700 = vmax.f32 %v3444, %v3668
        %v3701 = vmax.f32 %v3445, %v3669
        %v3702 = vmax.f32 %v3446, %v3670
        %v3703 = vmax.f32 %v3447, %v3671
        %v3704 = vmax.f32 %v3448, %v3672
        %v3705 = vmax.f32 %v3449, %v3673
        %v3706 = vrot.slane %v3418, 2
        %v3707 = vrot.slane %v3420, 2
        %v3708 = vrot.slane %v3422, 2
        %v3709 = vrot.slane %v3424, 2
        %v3710 = vrot.slane %v3426, 2
        %v3711 = vrot.slane %v3428, 2
        %v3712 = vrot.slane %v3430, 2
        %v3713 = vrot.slane %v3432, 2
        %v3714 = vrot.slane %v3434, 2
        %v3715 = vrot.slane %v3436, 2
        %v3716 = vrot.slane %v3438, 2
        %v3717 = vrot.slane %v3440, 2
        %v3718 = vrot.slane %v3442, 2
        %v3719 = vrot.slane %v3444, 2
        %v3720 = vrot.slane %v3446, 2
        %v3721 = vrot.slane %v3448, 2
        %v3722 = vrot.slane %v3419, 2
        %v3723 = vrot.slane %v3421, 2
        %v3724 = vrot.slane %v3423, 2
        %v3725 = vrot.slane %v3425, 2
        %v3726 = vrot.slane %v3427, 2
        %v3727 = vrot.slane %v3429, 2
        %v3728 = vrot.slane %v3431, 2
        %v3729 = vrot.slane %v3433, 2
        %v3730 = vrot.slane %v3435, 2
        %v3731 = vrot.slane %v3437, 2
        %v3732 = vrot.slane %v3439, 2
        %v3733 = vrot.slane %v3441, 2
        %v3734 = vrot.slane %v3443, 2
        %v3735 = vrot.slane %v3445, 2
        %v3736 = vrot.slane %v3447, 2
        %v3737 = vrot.slane %v3449, 2
        %v3738 = vsel %vm1337, %v3706, %v3722
        %v3739 = vsel %vm1337, %v3707, %v3723
        %v3740 = vsel %vm1337, %v3708, %v3724
        %v3741 = vsel %vm1337, %v3709, %v3725
        %v3742 = vsel %vm1337, %v3710, %v3726
        %v3743 = vsel %vm1337, %v3711, %v3727
        %v3744 = vsel %vm1337, %v3712, %v3728
        %v3745 = vsel %vm1337, %v3713, %v3729
        %v3746 = vsel %vm1337, %v3714, %v3730
        %v3747 = vsel %vm1337, %v3715, %v3731
        %v3748 = vsel %vm1337, %v3716, %v3732
        %v3749 = vsel %vm1337, %v3717, %v3733
        %v3750 = vsel %vm1337, %v3718, %v3734
        %v3751 = vsel %vm1337, %v3719, %v3735
        %v3752 = vsel %vm1337, %v3720, %v3736
        %v3753 = vsel %vm1337, %v3721, %v3737
        %v3754 = vsel %vm1337, %v3722, %v3706
        %v3755 = vsel %vm1337, %v3723, %v3707
        %v3756 = vsel %vm1337, %v3724, %v3708
        %v3757 = vsel %vm1337, %v3725, %v3709
        %v3758 = vsel %vm1337, %v3726, %v3710
        %v3759 = vsel %vm1337, %v3727, %v3711
        %v3760 = vsel %vm1337, %v3728, %v3712
        %v3761 = vsel %vm1337, %v3729, %v3713
        %v3762 = vsel %vm1337, %v3730, %v3714
        %v3763 = vsel %vm1337, %v3731, %v3715
        %v3764 = vsel %vm1337, %v3732, %v3716
        %v3765 = vsel %vm1337, %v3733, %v3717
        %v3766 = vsel %vm1337, %v3734, %v3718
        %v3767 = vsel %vm1337, %v3735, %v3719
        %v3768 = vsel %vm1337, %v3736, %v3720
        %v3769 = vsel %vm1337, %v3737, %v3721
        %v3770 = vsel %vm1372, %v3738, 0.0
        %v3771 = vsel %vm1373, %v3754, 0.0
        %v3772 = vsel %vm1372, %v3739, 0.0
        %v3773 = vsel %vm1373, %v3755, 0.0
        %v3774 = vsel %vm1372, %v3740, 0.0
        %v3775 = vsel %vm1373, %v3756, 0.0
        %v3776 = vsel %vm1372, %v3741, 0.0
        %v3777 = vsel %vm1373, %v3757, 0.0
        %v3778 = vsel %vm1372, %v3742, 0.0
        %v3779 = vsel %vm1373, %v3758, 0.0
        %v3780 = vsel %vm1372, %v3743, 0.0
        %v3781 = vsel %vm1373, %v3759, 0.0
        %v3782 = vsel %vm1372, %v3744, 0.0
        %v3783 = vsel %vm1373, %v3760, 0.0
        %v3784 = vsel %vm1372, %v3745, 0.0
        %v3785 = vsel %vm1373, %v3761, 0.0
        %v3786 = vsel %vm1372, %v3746, 0.0
        %v3787 = vsel %vm1373, %v3762, 0.0
        %v3788 = vsel %vm1372, %v3747, 0.0
        %v3789 = vsel %vm1373, %v3763, 0.0
        %v3790 = vsel %vm1372, %v3748, 0.0
        %v3791 = vsel %vm1373, %v3764, 0.0
        %v3792 = vsel %vm1372, %v3749, 0.0
        %v3793 = vsel %vm1373, %v3765, 0.0
        %v3794 = vsel %vm1372, %v3750, 0.0
        %v3795 = vsel %vm1373, %v3766, 0.0
        %v3796 = vsel %vm1372, %v3751, 0.0
        %v3797 = vsel %vm1373, %v3767, 0.0
        %v3798 = vsel %vm1372, %v3752, 0.0
        %v3799 = vsel %vm1373, %v3768, 0.0
        %v3800 = vsel %vm1372, %v3753, 0.0
        %v3801 = vsel %vm1373, %v3769, 0.0
        %v3802 = vrot.slane %v3418, 6
        %v3803 = vrot.slane %v3420, 6
        %v3804 = vrot.slane %v3422, 6
        %v3805 = vrot.slane %v3424, 6
        %v3806 = vrot.slane %v3426, 6
        %v3807 = vrot.slane %v3428, 6
        %v3808 = vrot.slane %v3430, 6
        %v3809 = vrot.slane %v3432, 6
        %v3810 = vrot.slane %v3434, 6
        %v3811 = vrot.slane %v3436, 6
        %v3812 = vrot.slane %v3438, 6
        %v3813 = vrot.slane %v3440, 6
        %v3814 = vrot.slane %v3442, 6
        %v3815 = vrot.slane %v3444, 6
        %v3816 = vrot.slane %v3446, 6
        %v3817 = vrot.slane %v3448, 6
        %v3818 = vrot.slane %v3419, 6
        %v3819 = vrot.slane %v3421, 6
        %v3820 = vrot.slane %v3423, 6
        %v3821 = vrot.slane %v3425, 6
        %v3822 = vrot.slane %v3427, 6
        %v3823 = vrot.slane %v3429, 6
        %v3824 = vrot.slane %v3431, 6
        %v3825 = vrot.slane %v3433, 6
        %v3826 = vrot.slane %v3435, 6
        %v3827 = vrot.slane %v3437, 6
        %v3828 = vrot.slane %v3439, 6
        %v3829 = vrot.slane %v3441, 6
        %v3830 = vrot.slane %v3443, 6
        %v3831 = vrot.slane %v3445, 6
        %v3832 = vrot.slane %v3447, 6
        %v3833 = vrot.slane %v3449, 6
        %v3834 = vsel %vm1440, %v3802, %v3818
        %v3835 = vsel %vm1440, %v3803, %v3819
        %v3836 = vsel %vm1440, %v3804, %v3820
        %v3837 = vsel %vm1440, %v3805, %v3821
        %v3838 = vsel %vm1440, %v3806, %v3822
        %v3839 = vsel %vm1440, %v3807, %v3823
        %v3840 = vsel %vm1440, %v3808, %v3824
        %v3841 = vsel %vm1440, %v3809, %v3825
        %v3842 = vsel %vm1440, %v3810, %v3826
        %v3843 = vsel %vm1440, %v3811, %v3827
        %v3844 = vsel %vm1440, %v3812, %v3828
        %v3845 = vsel %vm1440, %v3813, %v3829
        %v3846 = vsel %vm1440, %v3814, %v3830
        %v3847 = vsel %vm1440, %v3815, %v3831
        %v3848 = vsel %vm1440, %v3816, %v3832
        %v3849 = vsel %vm1440, %v3817, %v3833
        %v3850 = vsel %vm1440, %v3818, %v3802
        %v3851 = vsel %vm1440, %v3819, %v3803
        %v3852 = vsel %vm1440, %v3820, %v3804
        %v3853 = vsel %vm1440, %v3821, %v3805
        %v3854 = vsel %vm1440, %v3822, %v3806
        %v3855 = vsel %vm1440, %v3823, %v3807
        %v3856 = vsel %vm1440, %v3824, %v3808
        %v3857 = vsel %vm1440, %v3825, %v3809
        %v3858 = vsel %vm1440, %v3826, %v3810
        %v3859 = vsel %vm1440, %v3827, %v3811
        %v3860 = vsel %vm1440, %v3828, %v3812
        %v3861 = vsel %vm1440, %v3829, %v3813
        %v3862 = vsel %vm1440, %v3830, %v3814
        %v3863 = vsel %vm1440, %v3831, %v3815
        %v3864 = vsel %vm1440, %v3832, %v3816
        %v3865 = vsel %vm1440, %v3833, %v3817
        %v3866 = vsel %vm1475, %v3850, 0.0
        %v3867 = vsel %vm1476, %v3834, 0.0
        %v3868 = vsel %vm1475, %v3851, 0.0
        %v3869 = vsel %vm1476, %v3835, 0.0
        %v3870 = vsel %vm1475, %v3852, 0.0
        %v3871 = vsel %vm1476, %v3836, 0.0
        %v3872 = vsel %vm1475, %v3853, 0.0
        %v3873 = vsel %vm1476, %v3837, 0.0
        %v3874 = vsel %vm1475, %v3854, 0.0
        %v3875 = vsel %vm1476, %v3838, 0.0
        %v3876 = vsel %vm1475, %v3855, 0.0
        %v3877 = vsel %vm1476, %v3839, 0.0
        %v3878 = vsel %vm1475, %v3856, 0.0
        %v3879 = vsel %vm1476, %v3840, 0.0
        %v3880 = vsel %vm1475, %v3857, 0.0
        %v3881 = vsel %vm1476, %v3841, 0.0
        %v3882 = vsel %vm1475, %v3858, 0.0
        %v3883 = vsel %vm1476, %v3842, 0.0
        %v3884 = vsel %vm1475, %v3859, 0.0
        %v3885 = vsel %vm1476, %v3843, 0.0
        %v3886 = vsel %vm1475, %v3860, 0.0
        %v3887 = vsel %vm1476, %v3844, 0.0
        %v3888 = vsel %vm1475, %v3861, 0.0
        %v3889 = vsel %vm1476, %v3845, 0.0
        %v3890 = vsel %vm1475, %v3862, 0.0
        %v3891 = vsel %vm1476, %v3846, 0.0
        %v3892 = vsel %vm1475, %v3863, 0.0
        %v3893 = vsel %vm1476, %v3847, 0.0
        %v3894 = vsel %vm1475, %v3864, 0.0
        %v3895 = vsel %vm1476, %v3848, 0.0
        %v3896 = vsel %vm1475, %v3865, 0.0
        %v3897 = vsel %vm1476, %v3849, 0.0
        %v3898 = vmax.f32 %v3770, %v3866
        %v3899 = vmax.f32 %v3771, %v3867
        %v3900 = vmax.f32 %v3772, %v3868
        %v3901 = vmax.f32 %v3773, %v3869
        %v3902 = vmax.f32 %v3774, %v3870
        %v3903 = vmax.f32 %v3775, %v3871
        %v3904 = vmax.f32 %v3776, %v3872
        %v3905 = vmax.f32 %v3777, %v3873
        %v3906 = vmax.f32 %v3778, %v3874
        %v3907 = vmax.f32 %v3779, %v3875
        %v3908 = vmax.f32 %v3780, %v3876
        %v3909 = vmax.f32 %v3781, %v3877
        %v3910 = vmax.f32 %v3782, %v3878
        %v3911 = vmax.f32 %v3783, %v3879
        %v3912 = vmax.f32 %v3784, %v3880
        %v3913 = vmax.f32 %v3785, %v3881
        %v3914 = vmax.f32 %v3786, %v3882
        %v3915 = vmax.f32 %v3787, %v3883
        %v3916 = vmax.f32 %v3788, %v3884
        %v3917 = vmax.f32 %v3789, %v3885
        %v3918 = vmax.f32 %v3790, %v3886
        %v3919 = vmax.f32 %v3791, %v3887
        %v3920 = vmax.f32 %v3792, %v3888
        %v3921 = vmax.f32 %v3793, %v3889
        %v3922 = vmax.f32 %v3794, %v3890
        %v3923 = vmax.f32 %v3795, %v3891
        %v3924 = vmax.f32 %v3796, %v3892
        %v3925 = vmax.f32 %v3797, %v3893
        %v3926 = vmax.f32 %v3798, %v3894
        %v3927 = vmax.f32 %v3799, %v3895
        %v3928 = vmax.f32 %v3800, %v3896
        %v3929 = vmax.f32 %v3801, %v3897
        %v3930 = vmax.f32 %v3674, %v3898
        %v3931 = vmax.f32 %v3675, %v3899
        %v3932 = vmax.f32 %v3676, %v3900
        %v3933 = vmax.f32 %v3677, %v3901
        %v3934 = vmax.f32 %v3678, %v3902
        %v3935 = vmax.f32 %v3679, %v3903
        %v3936 = vmax.f32 %v3680, %v3904
        %v3937 = vmax.f32 %v3681, %v3905
        %v3938 = vmax.f32 %v3682, %v3906
        %v3939 = vmax.f32 %v3683, %v3907
        %v3940 = vmax.f32 %v3684, %v3908
        %v3941 = vmax.f32 %v3685, %v3909
        %v3942 = vmax.f32 %v3686, %v3910
        %v3943 = vmax.f32 %v3687, %v3911
        %v3944 = vmax.f32 %v3688, %v3912
        %v3945 = vmax.f32 %v3689, %v3913
        %v3946 = vmax.f32 %v3690, %v3914
        %v3947 = vmax.f32 %v3691, %v3915
        %v3948 = vmax.f32 %v3692, %v3916
        %v3949 = vmax.f32 %v3693, %v3917
        %v3950 = vmax.f32 %v3694, %v3918
        %v3951 = vmax.f32 %v3695, %v3919
        %v3952 = vmax.f32 %v3696, %v3920
        %v3953 = vmax.f32 %v3697, %v3921
        %v3954 = vmax.f32 %v3698, %v3922
        %v3955 = vmax.f32 %v3699, %v3923
        %v3956 = vmax.f32 %v3700, %v3924
        %v3957 = vmax.f32 %v3701, %v3925
        %v3958 = vmax.f32 %v3702, %v3926
        %v3959 = vmax.f32 %v3703, %v3927
        %v3960 = vmax.f32 %v3704, %v3928
        %v3961 = vmax.f32 %v3705, %v3929
        %v3962 = vpack.c.bf16 %v3931, %v3930
        %v3963 = vpack.c.bf16 %v3933, %v3932
        %v3964 = vpack.c.bf16 %v3935, %v3934
        %v3965 = vpack.c.bf16 %v3937, %v3936
        %v3966 = vpack.c.bf16 %v3939, %v3938
        %v3967 = vpack.c.bf16 %v3941, %v3940
        %v3968 = vpack.c.bf16 %v3943, %v3942
        %v3969 = vpack.c.bf16 %v3945, %v3944
        %v3970 = vpack.c.bf16 %v3947, %v3946
        %v3971 = vpack.c.bf16 %v3949, %v3948
        %v3972 = vpack.c.bf16 %v3951, %v3950
        %v3973 = vpack.c.bf16 %v3953, %v3952
        %v3974 = vpack.c.bf16 %v3955, %v3954
        %v3975 = vpack.c.bf16 %v3957, %v3956
        %v3976 = vpack.c.bf16 %v3959, %v3958
        %v3977 = vpack.c.bf16 %v3961, %v3960
        %s3978 = scalar_lea.vmem [#allocation8], 192
        %v3979 = vld [vmem:[%s3978] sm:$0xf]
        %v3980 = vld [vmem:[%s3978 + $0x4] sm:$0xf]
        %v3981 = vld [vmem:[%s3978 + $0x8] sm:$0xf]
        %v3982 = vld [vmem:[%s3978 + $0xc] sm:$0xf]
        %v3983 = vld [vmem:[%s3978 + $0x10] sm:$0xf]
        %v3984 = vld [vmem:[%s3978 + $0x14] sm:$0xf]
        %v3985 = vld [vmem:[%s3978 + $0x18] sm:$0xf]
        %v3986 = vld [vmem:[%s3978 + $0x1c] sm:$0xf]
        %v3987 = vld [vmem:[%s3978 + $0x20] sm:$0xf]
        %v3988 = vld [vmem:[%s3978 + $0x24] sm:$0xf]
        %v3989 = vld [vmem:[%s3978 + $0x28] sm:$0xf]
        %v3990 = vld [vmem:[%s3978 + $0x2c] sm:$0xf]
        %v3991 = vld [vmem:[%s3978 + $0x30] sm:$0xf]
        %v3992 = vld [vmem:[%s3978 + $0x34] sm:$0xf]
        %v3993 = vld [vmem:[%s3978 + $0x38] sm:$0xf]
        %v3994 = vld [vmem:[%s3978 + $0x3c] sm:$0xf]
        %v4011 = vunpack.c.l.b16 %v3979
        %v4012 = vunpack.c.l.b16 %v3980
        %v4013 = vunpack.c.l.b16 %v3981
        %v4014 = vunpack.c.l.b16 %v3982
        %v4015 = vunpack.c.l.b16 %v3983
        %v4016 = vunpack.c.l.b16 %v3984
        %v4017 = vunpack.c.l.b16 %v3985
        %v4018 = vunpack.c.l.b16 %v3986
        %v4019 = vunpack.c.l.b16 %v3987
        %v4020 = vunpack.c.l.b16 %v3988
        %v4021 = vunpack.c.l.b16 %v3989
        %v4022 = vunpack.c.l.b16 %v3990
        %v4023 = vunpack.c.l.b16 %v3991
        %v4024 = vunpack.c.l.b16 %v3992
        %v4025 = vunpack.c.l.b16 %v3993
        %v4026 = vunpack.c.l.b16 %v3994
        %v4027 = vpack.c.b16 %v4012, %v4011
        %v4028 = vpack.c.b16 %v4014, %v4013
        %v4029 = vpack.c.b16 %v4016, %v4015
        %v4030 = vpack.c.b16 %v4018, %v4017
        %v4031 = vpack.c.b16 %v4020, %v4019
        %v4032 = vpack.c.b16 %v4022, %v4021
        %v4033 = vpack.c.b16 %v4024, %v4023
        %v4034 = vpack.c.b16 %v4026, %v4025
        %4043 = vmatprep.subr.bf16.mxu0 0
        %4044 = vmatpush1.bf16.msra.mxu0 %v4034
        %4045 = vmatprep.subr.bf16.mxu0 0
        %4046 = vmatpush1.bf16.msra.mxu0 %v4033
        %4047 = vmatprep.subr.bf16.mxu0 0
        %4048 = vmatpush1.bf16.msra.mxu0 %v4032
        %4049 = vmatprep.subr.bf16.mxu0 0
        %4050 = vmatpush1.bf16.msra.mxu0 %v4031
        %4051 = vmatprep.subr.bf16.mxu0 0
        %4052 = vmatpush1.bf16.msra.mxu0 %v4030
        %4053 = vmatprep.subr.bf16.mxu0 0
        %4054 = vmatpush1.bf16.msra.mxu0 %v4029
        %4055 = vmatprep.subr.bf16.mxu0 0
        %4056 = vmatpush1.bf16.msra.mxu0 %v4028
        %4057 = vmatprep.subr.bf16.mxu0 0
        %4058 = vmatpush1.bf16.msra.mxu0 %v4027
        %4059 = vmatprep.subr.bf16.mxu0 0
        %4060 = vmatpush2.bf16.msra.mxu0 0
        %4061 = vmatprep.subr.bf16.mxu0 0
        %4062 = vmatpush2.bf16.msra.mxu0 0
        %4063 = vmatprep.subr.bf16.mxu0 0
        %4064 = vmatpush2.bf16.msra.mxu0 0
        %4065 = vmatprep.subr.bf16.mxu0 0
        %4066 = vmatpush2.bf16.msra.mxu0 0
        %4067 = vmatprep.subr.bf16.mxu0 0
        %4068 = vmatpush2.bf16.msra.mxu0 0
        %4069 = vmatprep.subr.bf16.mxu0 0
        %4070 = vmatpush2.bf16.msra.mxu0 0
        %4071 = vmatprep.subr.bf16.mxu0 0
        %4072 = vmatpush2.bf16.msra.mxu0 0
        %4073 = vmatprep.subr.bf16.mxu0 0
        %4074 = vmatpush2.bf16.msra.mxu0 0
        %4075 = vmatprep.mubr.bf16.mxu0 0
        %4076 = vmatmul.mubr.bf16.gmra.mxu0 %v3962
        %v4077 = vpop.f32.mrf.mxu0
        %v4078 = vadd.f32 0.0, %v4077
        %v4079 = vpop.f32.mrf.mxu0
        %v4080 = vpop.f32.mrf.mxu0
        %v4081 = vadd.f32 0.0, %v4080
        %v4082 = vpop.f32.mrf.mxu0
        %4083 = vmatprep.mubr.bf16.mxu0 0
        %4084 = vmatmul.mubr.bf16.gmra.mxu0 %v3963
        %v4085 = vpop.f32.mrf.mxu0
        %v4086 = vadd.f32 0.0, %v4085
        %v4087 = vpop.f32.mrf.mxu0
        %v4088 = vpop.f32.mrf.mxu0
        %v4089 = vadd.f32 0.0, %v4088
        %v4090 = vpop.f32.mrf.mxu0
        %4091 = vmatprep.mubr.bf16.mxu0 0
        %4092 = vmatmul.mubr.bf16.gmra.mxu0 %v3964
        %v4093 = vpop.f32.mrf.mxu0
        %v4094 = vadd.f32 0.0, %v4093
        %v4095 = vpop.f32.mrf.mxu0
        %v4096 = vpop.f32.mrf.mxu0
        %v4097 = vadd.f32 0.0, %v4096
        %v4098 = vpop.f32.mrf.mxu0
        %4099 = vmatprep.mubr.bf16.mxu0 0
        %4100 = vmatmul.mubr.bf16.gmra.mxu0 %v3965
        %v4101 = vpop.f32.mrf.mxu0
        %v4102 = vadd.f32 0.0, %v4101
        %v4103 = vpop.f32.mrf.mxu0
        %v4104 = vpop.f32.mrf.mxu0
        %v4105 = vadd.f32 0.0, %v4104
        %v4106 = vpop.f32.mrf.mxu0
        %4107 = vmatprep.mubr.bf16.mxu0 0
        %4108 = vmatmul.mubr.bf16.gmra.mxu0 %v3966
        %v4109 = vpop.f32.mrf.mxu0
        %v4110 = vadd.f32 0.0, %v4109
        %v4111 = vpop.f32.mrf.mxu0
        %v4112 = vpop.f32.mrf.mxu0
        %v4113 = vadd.f32 0.0, %v4112
        %v4114 = vpop.f32.mrf.mxu0
        %4115 = vmatprep.mubr.bf16.mxu0 0
        %4116 = vmatmul.mubr.bf16.gmra.mxu0 %v3967
        %v4117 = vpop.f32.mrf.mxu0
        %v4118 = vadd.f32 0.0, %v4117
        %v4119 = vpop.f32.mrf.mxu0
        %v4120 = vpop.f32.mrf.mxu0
        %v4121 = vadd.f32 0.0, %v4120
        %v4122 = vpop.f32.mrf.mxu0
        %4123 = vmatprep.mubr.bf16.mxu0 0
        %4124 = vmatmul.mubr.bf16.gmra.mxu0 %v3968
        %v4125 = vpop.f32.mrf.mxu0
        %v4126 = vadd.f32 0.0, %v4125
        %v4127 = vpop.f32.mrf.mxu0
        %v4128 = vpop.f32.mrf.mxu0
        %v4129 = vadd.f32 0.0, %v4128
        %v4130 = vpop.f32.mrf.mxu0
        %4131 = vmatprep.mubr.bf16.mxu0 0
        %4132 = vmatmul.mubr.bf16.gmra.mxu0 %v3969
        %v4133 = vpop.f32.mrf.mxu0
        %v4134 = vadd.f32 0.0, %v4133
        %v4135 = vpop.f32.mrf.mxu0
        %v4136 = vpop.f32.mrf.mxu0
        %v4137 = vadd.f32 0.0, %v4136
        %v4138 = vpop.f32.mrf.mxu0
        %4139 = vmatprep.mubr.bf16.mxu0 0
        %4140 = vmatmul.mubr.bf16.gmra.mxu0 %v3970
        %v4141 = vpop.f32.mrf.mxu0
        %v4142 = vadd.f32 0.0, %v4141
        %v4143 = vpop.f32.mrf.mxu0
        %v4144 = vpop.f32.mrf.mxu0
        %v4145 = vadd.f32 0.0, %v4144
        %v4146 = vpop.f32.mrf.mxu0
        %4147 = vmatprep.mubr.bf16.mxu0 0
        %4148 = vmatmul.mubr.bf16.gmra.mxu0 %v3971
        %v4149 = vpop.f32.mrf.mxu0
        %v4150 = vadd.f32 0.0, %v4149
        %v4151 = vpop.f32.mrf.mxu0
        %v4152 = vpop.f32.mrf.mxu0
        %v4153 = vadd.f32 0.0, %v4152
        %v4154 = vpop.f32.mrf.mxu0
        %4155 = vmatprep.mubr.bf16.mxu0 0
        %4156 = vmatmul.mubr.bf16.gmra.mxu0 %v3972
        %v4157 = vpop.f32.mrf.mxu0
        %v4158 = vadd.f32 0.0, %v4157
        %v4159 = vpop.f32.mrf.mxu0
        %v4160 = vpop.f32.mrf.mxu0
        %v4161 = vadd.f32 0.0, %v4160
        %v4162 = vpop.f32.mrf.mxu0
        %4163 = vmatprep.mubr.bf16.mxu0 0
        %4164 = vmatmul.mubr.bf16.gmra.mxu0 %v3973
        %v4165 = vpop.f32.mrf.mxu0
        %v4166 = vadd.f32 0.0, %v4165
        %v4167 = vpop.f32.mrf.mxu0
        %v4168 = vpop.f32.mrf.mxu0
        %v4169 = vadd.f32 0.0, %v4168
        %v4170 = vpop.f32.mrf.mxu0
        %4171 = vmatprep.mubr.bf16.mxu0 0
        %4172 = vmatmul.mubr.bf16.gmra.mxu0 %v3974
        %v4173 = vpop.f32.mrf.mxu0
        %v4174 = vadd.f32 0.0, %v4173
        %v4175 = vpop.f32.mrf.mxu0
        %v4176 = vpop.f32.mrf.mxu0
        %v4177 = vadd.f32 0.0, %v4176
        %v4178 = vpop.f32.mrf.mxu0
        %4179 = vmatprep.mubr.bf16.mxu0 0
        %4180 = vmatmul.mubr.bf16.gmra.mxu0 %v3975
        %v4181 = vpop.f32.mrf.mxu0
        %v4182 = vadd.f32 0.0, %v4181
        %v4183 = vpop.f32.mrf.mxu0
        %v4184 = vpop.f32.mrf.mxu0
        %v4185 = vadd.f32 0.0, %v4184
        %v4186 = vpop.f32.mrf.mxu0
        %4187 = vmatprep.mubr.bf16.mxu0 0
        %4188 = vmatmul.mubr.bf16.gmra.mxu0 %v3976
        %v4189 = vpop.f32.mrf.mxu0
        %v4190 = vadd.f32 0.0, %v4189
        %v4191 = vpop.f32.mrf.mxu0
        %v4192 = vpop.f32.mrf.mxu0
        %v4193 = vadd.f32 0.0, %v4192
        %v4194 = vpop.f32.mrf.mxu0
        %4195 = vmatprep.mubr.bf16.mxu0 0
        %4196 = vmatmul.mubr.bf16.gmra.mxu0 %v3977
        %v4197 = vpop.f32.mrf.mxu0
        %v4198 = vadd.f32 0.0, %v4197
        %v4199 = vpop.f32.mrf.mxu0
        %v4200 = vpop.f32.mrf.mxu0
        %v4201 = vadd.f32 0.0, %v4200
        %v4202 = vpop.f32.mrf.mxu0
        %4203 = vdwg.mxu0
        %v4204 = vadd.f32 %v3098, %v4078
        %v4205 = vadd.f32 %v3099, %v4081
        %v4206 = vadd.f32 %v3100, %v4086
        %v4207 = vadd.f32 %v3101, %v4089
        %v4208 = vadd.f32 %v3102, %v4094
        %v4209 = vadd.f32 %v3103, %v4097
        %v4210 = vadd.f32 %v3104, %v4102
        %v4211 = vadd.f32 %v3105, %v4105
        %v4212 = vadd.f32 %v3106, %v4110
        %v4213 = vadd.f32 %v3107, %v4113
        %v4214 = vadd.f32 %v3108, %v4118
        %v4215 = vadd.f32 %v3109, %v4121
        %v4216 = vadd.f32 %v3110, %v4126
        %v4217 = vadd.f32 %v3111, %v4129
        %v4218 = vadd.f32 %v3112, %v4134
        %v4219 = vadd.f32 %v3113, %v4137
        %v4220 = vadd.f32 %v3114, %v4142
        %v4221 = vadd.f32 %v3115, %v4145
        %v4222 = vadd.f32 %v3116, %v4150
        %v4223 = vadd.f32 %v3117, %v4153
        %v4224 = vadd.f32 %v3118, %v4158
        %v4225 = vadd.f32 %v3119, %v4161
        %v4226 = vadd.f32 %v3120, %v4166
        %v4227 = vadd.f32 %v3121, %v4169
        %v4228 = vadd.f32 %v3122, %v4174
        %v4229 = vadd.f32 %v3123, %v4177
        %v4230 = vadd.f32 %v3124, %v4182
        %v4231 = vadd.f32 %v3125, %v4185
        %v4232 = vadd.f32 %v3126, %v4190
        %v4233 = vadd.f32 %v3127, %v4193
        %v4234 = vadd.f32 %v3128, %v4198
        %v4235 = vadd.f32 %v3129, %v4201
        %v4236 = vld [vmem:[%s4] sm:$0x1]
        %v4238 = vlaneseq
        %v4239 = vshrl.u32 %v4238, 7
        %v4240 = vsub.s32 0, %v4239
        %v4241 = vrot.slane %v4236, %v4240
        %v4243 = vadd.f32 %v4204, %v4241
        %v4244 = vadd.f32 %v4205, %v4241
        %v4245 = vadd.f32 %v4206, %v4241
        %v4246 = vadd.f32 %v4207, %v4241
        %v4247 = vadd.f32 %v4208, %v4241
        %v4248 = vadd.f32 %v4209, %v4241
        %v4249 = vadd.f32 %v4210, %v4241
        %v4250 = vadd.f32 %v4211, %v4241
        %v4251 = vadd.f32 %v4212, %v4241
        %v4252 = vadd.f32 %v4213, %v4241
        %v4253 = vadd.f32 %v4214, %v4241
        %v4254 = vadd.f32 %v4215, %v4241
        %v4255 = vadd.f32 %v4216, %v4241
        %v4256 = vadd.f32 %v4217, %v4241
        %v4257 = vadd.f32 %v4218, %v4241
        %v4258 = vadd.f32 %v4219, %v4241
        %v4259 = vadd.f32 %v4220, %v4241
        %v4260 = vadd.f32 %v4221, %v4241
        %v4261 = vadd.f32 %v4222, %v4241
        %v4262 = vadd.f32 %v4223, %v4241
        %v4263 = vadd.f32 %v4224, %v4241
        %v4264 = vadd.f32 %v4225, %v4241
        %v4265 = vadd.f32 %v4226, %v4241
        %v4266 = vadd.f32 %v4227, %v4241
        %v4267 = vadd.f32 %v4228, %v4241
        %v4268 = vadd.f32 %v4229, %v4241
        %v4269 = vadd.f32 %v4230, %v4241
        %v4270 = vadd.f32 %v4231, %v4241
        %v4271 = vadd.f32 %v4232, %v4241
        %v4272 = vadd.f32 %v4233, %v4241
        %v4273 = vadd.f32 %v4234, %v4241
        %v4274 = vadd.f32 %v4235, %v4241
        %v4275 = vmax.f32 %v4243, 0.0
        %v4276 = vmax.f32 %v4244, 0.0
        %v4277 = vmax.f32 %v4245, 0.0
        %v4278 = vmax.f32 %v4246, 0.0
        %v4279 = vmax.f32 %v4247, 0.0
        %v4280 = vmax.f32 %v4248, 0.0
        %v4281 = vmax.f32 %v4249, 0.0
        %v4282 = vmax.f32 %v4250, 0.0
        %v4283 = vmax.f32 %v4251, 0.0
        %v4284 = vmax.f32 %v4252, 0.0
        %v4285 = vmax.f32 %v4253, 0.0
        %v4286 = vmax.f32 %v4254, 0.0
        %v4287 = vmax.f32 %v4255, 0.0
        %v4288 = vmax.f32 %v4256, 0.0
        %v4289 = vmax.f32 %v4257, 0.0
        %v4290 = vmax.f32 %v4258, 0.0
        %v4291 = vmax.f32 %v4259, 0.0
        %v4292 = vmax.f32 %v4260, 0.0
        %v4293 = vmax.f32 %v4261, 0.0
        %v4294 = vmax.f32 %v4262, 0.0
        %v4295 = vmax.f32 %v4263, 0.0
        %v4296 = vmax.f32 %v4264, 0.0
        %v4297 = vmax.f32 %v4265, 0.0
        %v4298 = vmax.f32 %v4266, 0.0
        %v4299 = vmax.f32 %v4267, 0.0
        %v4300 = vmax.f32 %v4268, 0.0
        %v4301 = vmax.f32 %v4269, 0.0
        %v4302 = vmax.f32 %v4270, 0.0
        %v4303 = vmax.f32 %v4271, 0.0
        %v4304 = vmax.f32 %v4272, 0.0
        %v4305 = vmax.f32 %v4273, 0.0
        %v4306 = vmax.f32 %v4274, 0.0
        %4307 = vst [vmem:[%s271] sm:$0xff] %v4275
        %4308 = vst [vmem:[%s271 + $0x8] sm:$0xff] %v4276
        %4309 = vst [vmem:[%s271 + $0x10] sm:$0xff] %v4277
        %4310 = vst [vmem:[%s271 + $0x18] sm:$0xff] %v4278
        %4311 = vst [vmem:[%s271 + $0x20] sm:$0xff] %v4279
        %4312 = vst [vmem:[%s271 + $0x28] sm:$0xff] %v4280
        %4313 = vst [vmem:[%s271 + $0x30] sm:$0xff] %v4281
        %4314 = vst [vmem:[%s271 + $0x38] sm:$0xff] %v4282
        %4315 = vst [vmem:[%s271 + $0x40] sm:$0xff] %v4283
        %4316 = vst [vmem:[%s271 + $0x48] sm:$0xff] %v4284
        %4317 = vst [vmem:[%s271 + $0x50] sm:$0xff] %v4285
        %4318 = vst [vmem:[%s271 + $0x58] sm:$0xff] %v4286
        %4319 = vst [vmem:[%s271 + $0x60] sm:$0xff] %v4287
        %4320 = vst [vmem:[%s271 + $0x68] sm:$0xff] %v4288
        %4321 = vst [vmem:[%s271 + $0x70] sm:$0xff] %v4289
        %4322 = vst [vmem:[%s271 + $0x78] sm:$0xff] %v4290
        %4323 = vst [vmem:[%s271 + $0x80] sm:$0xff] %v4291
        %4324 = vst [vmem:[%s271 + $0x88] sm:$0xff] %v4292
        %4325 = vst [vmem:[%s271 + $0x90] sm:$0xff] %v4293
        %4326 = vst [vmem:[%s271 + $0x98] sm:$0xff] %v4294
        %4327 = vst [vmem:[%s271 + $0xa0] sm:$0xff] %v4295
        %4328 = vst [vmem:[%s271 + $0xa8] sm:$0xff] %v4296
        %4329 = vst [vmem:[%s271 + $0xb0] sm:$0xff] %v4297
        %4330 = vst [vmem:[%s271 + $0xb8] sm:$0xff] %v4298
        %4331 = vst [vmem:[%s271 + $0xc0] sm:$0xff] %v4299
        %4332 = vst [vmem:[%s271 + $0xc8] sm:$0xff] %v4300
        %4333 = vst [vmem:[%s271 + $0xd0] sm:$0xff] %v4301
        %4334 = vst [vmem:[%s271 + $0xd8] sm:$0xff] %v4302
        %4335 = vst [vmem:[%s271 + $0xe0] sm:$0xff] %v4303
        %4336 = vst [vmem:[%s271 + $0xe8] sm:$0xff] %v4304
        %4337 = vst [vmem:[%s271 + $0xf0] sm:$0xff] %v4305
        %4338 = vst [vmem:[%s271 + $0xf8] sm:$0xff] %v4306
        %s4339 = sand.u32 %s141, 1
        %s4340 = scalar_lea.sflag [#allocation5], %s4339
        %s4341 = sand.u32 %s141, 1
        %s4342 = smul.addr %s4341, 256
        %s4343 = scalar_lea.vmem [#allocation9], %s4342
        // Predicated region
        $region53: #{tpu_custom_call.1} parent=39 // pred_check
          %p4344 = pneg %p151
        $region54: #{tpu_custom_call.1} parent=39 // pred_check_branch
          %4346 = sbr.rel (%p4344) target = $region56
        $region55: #{tpu_custom_call.1} parent=39 // pred_region
          %s4348 = ssub.s32 4096, 4096
          %4349 = vsyncadd %s4340, %s4348
          %s4350 = smul.addr %s23, 32
          %s4351 = smul.addr %s4350, 128
          %s4352 = scalar_lea.hbm %s5, %s4351
          %s4353 = sshll.u32 %s4343, 4
          %s4354 = int_to_ptr.vmem [resolvable:$true] %s4353
          %4359 = dma.vmem_to_hbm [thread:$0]  %s4354, 4096, %s4352, %s4340, 128, 128, 8
        $region56: #{tpu_custom_call.1} parent=39 // pred_fallthru
          _
      $region40: #{tpu_custom_call.1} parent=5 // pred_fallthru
        _
      %p4360 = scmp.le.s32.totalorder 2, %s18
      // Predicated region
      $region57: #{tpu_custom_call.1} parent=5 // pred_check
        %p4361 = pneg %p4360
      $region58: #{tpu_custom_call.1} parent=5 // pred_check_branch
        %4363 = sbr.rel (%p4361) target = $region60
      $region59: #{tpu_custom_call.1} parent=5 // pred_region
        %s4364 = ssub.s32 %s18, 2
        // Predicated region
        $region61: #{tpu_custom_call.1} parent=59 // pred_check
          %p4365 = pneg %p157
        $region62: #{tpu_custom_call.1} parent=59 // pred_check_branch
          %4367 = sbr.rel (%p4365) target = $region64
        $region63: #{tpu_custom_call.1} parent=59 // pred_region
          %s4368 = sand.u32 %s142, 1
          %s4369 = scalar_lea.sflag [#allocation5], %s4368
          %s4370 = sand.u32 %s142, 1
          %s4371 = smul.addr %s4370, 256
          %s4372 = scalar_lea.vmem [#allocation9], %s4371
          %4373 = dma.done %s4369, 4096
        $region64: #{tpu_custom_call.1} parent=59 // pred_fallthru
          _
      $region60: #{tpu_custom_call.1} parent=5 // pred_fallthru
        _
    $region6: #{tpu_custom_call.1} parent=1 // loop_footer
      %s22 = sadd.s32 1, %s18
    $region7: #{tpu_custom_call.1} parent=1 // loop_footer_branch
      %17 = sbr.rel target = $region3
    $region8: #{tpu_custom_call.1} parent=1 // loop_exit
      _
    %4374 = vsyncpa [#allocation4], 1
    %s4375 = scalar_lea.sflag [#allocation4], 1
    %4376 = vsyncpa %s4375, 1
    %4377 = vsyncpa [#allocation7], 1
    %4378 = vsyncpa [#allocation5], 1
    %s4379 = scalar_lea.sflag [#allocation5], 1
    %4380 = vsyncpa %s4379, 1

// kernel: tpu_custom_call.1
$region0: #{tpu_custom_call.1}
  #allocation0 [shape = 'u32[]', space=smem, size = 0x4, offset = 0x4, fixed_abs, tag = 'smem constant byte address 0x4 - core index']
  #allocation1 [shape = 'u32[144,128]{1,0:T(1,128)}', space=vmem, size = 0x12000, scoped, tag = 'internal scratch']
  #allocation2 [shape = 'f32[20,16,128]{2,1,0:T(8,128)}', space=vmem, size = 0x28000, scoped, tag = 'scratch operand']
  %s0 = inlined_call_operand.hbm [shape: bf16[2,16,16,128], index: 0, kind: input, shape index: {}]
  %s1 = inlined_call_operand.hbm [shape: bf16[128,128], index: 1, kind: input, shape index: {}]
  %s2 = inlined_call_operand.vmem [shape: f32[1,128], index: 2, kind: input, shape index: {}]
  %s3 = inlined_call_operand.hbm [shape: bf16[4,128,128], index: 3, kind: input, shape index: {}]
  %s4 = inlined_call_operand.vmem [shape: f32[1,128], index: 4, kind: input, shape index: {}]
  %s5 = inlined_call_operand.hbm [shape: f32[2,16,16,128], index: 5, kind: output, shape index: {}]
  %s6 = sld [smem:[#allocation0]]
  $region65: #{tpu_custom_call.1} parent=0
    _
  %s8 = ssub.s32 1, %s6
  %s9 = scalar_select 0, %s8, %s6
  $region1: #{tpu_custom_call.1} parent=0
    #allocation3 [shape = 'u8[131072]{0}', space=vmem, size = 0x20000, scoped, tag = 'input window, operand 0']
    #allocation4 [shape = 's32[2]{0}', space=sflag, size = 0x8, scoped, tag = 'scoped memory for tpu_custom_call.1']
    #allocation5 [shape = 's32[2]{0}', space=sflag, size = 0x8, scoped, tag = 'scoped memory for tpu_custom_call.1']
    #allocation6 [shape = 'u8[32768]{0}', space=vmem, size = 0x8000, scoped, tag = 'input window, operand 1, single buffered']
    #allocation7 [shape = 's32[1]{0}', space=sflag, size = 0x4, scoped, tag = 'scoped memory for tpu_custom_call.1']
    #allocation8 [shape = 'u8[131072]{0}', space=vmem, size = 0x20000, scoped, tag = 'input window, operand 3, single buffered']
    #allocation9 [shape = 'u8[262144]{0}', space=vmem, size = 0x40000, scoped, tag = 'output window, operand 0']
    %10 = vsyncpa [#allocation4], 0
    %s11 = scalar_lea.sflag [#allocation4], 1
    %12 = vsyncpa %s11, 0
    %13 = vsyncpa [#allocation7], 0
    %14 = vsyncpa [#allocation5], 0
    %s15 = scalar_lea.sflag [#allocation5], 1
    %16 = vsyncpa %s15, 0
    loop: start=0, step=1, limit=4
    $region2: #{tpu_custom_call.1} parent=1 // loop_pre_header
      _
    $region3: #{tpu_custom_call.1} parent=1 // loop_header
      %s18 = sphi 0, %s22
      %p19 = scmp.ge.s32.totalorder %s18, 4
      %s28 = sphi 0, %s30
      %s31 = sphi 0, %s28
      %s32 = sphi 0, %s31
      %s48 = sphi 0, %s32
      %s52 = sphi 0, %s52
      %s54 = sphi 0, %s52
      %s55 = sphi 0, %s54
      %s69 = sphi 0, %s55
      %s73 = sphi 0, %s73
      %s75 = sphi 0, %s73
      %s76 = sphi 0, %s75
      %s90 = sphi 0, %s76
      %s94 = sphi 0, %s94
      %s96 = sphi 0, %s94
      %s97 = sphi 0, %s96
      %s111 = sphi 0, %s97
      %s115 = sphi 0, %s115
      %s117 = sphi 0, %s115
      %s118 = sphi 0, %s117
      %s132 = sphi 0, %s118
      %s138 = sphi 0, %s140
      %s141 = sphi 0, %s138
      %s142 = sphi 0, %s141
      %s158 = sphi 0, %s142
    $region4: #{tpu_custom_call.1} parent=1 // loop_header_branch
      %21 = sbr.rel (%p19) target = $region8
    $region5: #{tpu_custom_call.1} parent=1 // loop_body
      %s23 = ssub.s32 %s18, 1
      %s24 = ssub.s32 %s18, 2
      %s25 = sadd.s32 %s18, 1
      %s26 = ssub.s32 %s18, %s25
      %p27 = scmp.eq.s32.totalorder %s26, 0
      %s29 = sadd.s32 %s28, 1
      %s30 = scalar_select %p27, %s28, %s29
      %p33 = pneg %p27
      %p34 = scmp.eq.s32.totalorder %s18, 1
      %p35 = por %p33, %p34
      %p36 = scmp.ne.s32.totalorder %s28, %s31
      %p37 = scmp.eq.s32.totalorder %s18, 0
      %p38 = por %p36, %p37
      %p39 = scmp.ne.s32.totalorder %s28, %s31
      %p40 = scmp.eq.s32.totalorder %s23, 1
      %p41 = por %p39, %p40
      %p42 = scmp.ne.s32.totalorder %s31, %s32
      %p43 = scmp.eq.s32.totalorder %s23, 0
      %p44 = por %p42, %p43
      %p45 = scmp.ne.s32.totalorder %s31, %s32
      %p46 = scmp.eq.s32.totalorder %s24, 1
      %p47 = por %p45, %p46
      %p49 = scmp.ne.s32.totalorder %s32, %s48
      %p50 = scmp.eq.s32.totalorder %s24, 0
      %p51 = por %p49, %p50
      %s53 = sadd.s32 %s52, 1
      %p56 = scmp.eq.s32.totalorder %s18, 1
      %p57 = scmp.ne.s32.totalorder %s52, %s54
      %p58 = scmp.eq.s32.totalorder %s18, 0
      %p59 = por %p57, %p58
      %p60 = scmp.ne.s32.totalorder %s52, %s54
      %p61 = scmp.eq.s32.totalorder %s23, 1
      %p62 = por %p60, %p61
      %p63 = scmp.ne.s32.totalorder %s54, %s55
      %p64 = scmp.eq.s32.totalorder %s23, 0
      %p65 = por %p63, %p64
      %p66 = scmp.ne.s32.totalorder %s54, %s55
      %p67 = scmp.eq.s32.totalorder %s24, 1
      %p68 = por %p66, %p67
      %p70 = scmp.ne.s32.totalorder %s55, %s69
      %p71 = scmp.eq.s32.totalorder %s24, 0
      %p72 = por %p70, %p71
      %s74 = sadd.s32 %s73, 1
      %p77 = scmp.eq.s32.totalorder %s18, 1
      %p78 = scmp.ne.s32.totalorder %s73, %s75
      %p79 = scmp.eq.s32.totalorder %s18, 0
      %p80 = por %p78, %p79
      %p81 = scmp.ne.s32.totalorder %s73, %s75
      %p82 = scmp.eq.s32.totalorder %s23, 1
      %p83 = por %p81, %p82
      %p84 = scmp.ne.s32.totalorder %s75, %s76
      %p85 = scmp.eq.s32.totalorder %s23, 0
      %p86 = por %p84, %p85
      %p87 = scmp.ne.s32.totalorder %s75, %s76
      %p88 = scmp.eq.s32.totalorder %s24, 1
      %p89 = por %p87, %p88
      %p91 = scmp.ne.s32.totalorder %s76, %s90
      %p92 = scmp.eq.s32.totalorder %s24, 0
      %p93 = por %p91, %p92
      %s95 = sadd.s32 %s94, 1
      %p98 = scmp.eq.s32.totalorder %s18, 1
      %p99 = scmp.ne.s32.totalorder %s94, %s96
      %p100 = scmp.eq.s32.totalorder %s18, 0
      %p101 = por %p99, %p100
      %p102 = scmp.ne.s32.totalorder %s94, %s96
      %p103 = scmp.eq.s32.totalorder %s23, 1
      %p104 = por %p102, %p103
      %p105 = scmp.ne.s32.totalorder %s96, %s97
      %p106 = scmp.eq.s32.totalorder %s23, 0
      %p107 = por %p105, %p106
      %p108 = scmp.ne.s32.totalorder %s96, %s97
      %p109 = scmp.eq.s32.totalorder %s24, 1
      %p110 = por %p108, %p109
      %p112 = scmp.ne.s32.totalorder %s97, %s111
      %p113 = scmp.eq.s32.totalorder %s24, 0
      %p114 = por %p112, %p113
      %s116 = sadd.s32 %s115, 1
      %p119 = scmp.eq.s32.totalorder %s18, 1
      %p120 = scmp.ne.s32.totalorder %s115, %s117
      %p121 = scmp.eq.s32.totalorder %s18, 0
      %p122 = por %p120, %p121
      %p123 = scmp.ne.s32.totalorder %s115, %s117
      %p124 = scmp.eq.s32.totalorder %s23, 1
      %p125 = por %p123, %p124
      %p126 = scmp.ne.s32.totalorder %s117, %s118
      %p127 = scmp.eq.s32.totalorder %s23, 0
      %p128 = por %p126, %p127
      %p129 = scmp.ne.s32.totalorder %s117, %s118
      %p130 = scmp.eq.s32.totalorder %s24, 1
      %p131 = por %p129, %p130
      %p133 = scmp.ne.s32.totalorder %s118, %s132
      %p134 = scmp.eq.s32.totalorder %s24, 0
      %p135 = por %p133, %p134
      %s136 = ssub.s32 %s18, %s25
      %p137 = scmp.eq.s32.totalorder %s136, 0
      %s139 = sadd.s32 %s138, 1
      %s140 = scalar_select %p137, %s138, %s139
      %p143 = pneg %p137
      %p144 = scmp.eq.s32.totalorder %s18, 1
      %p145 = por %p143, %p144
      %p146 = scmp.ne.s32.totalorder %s138, %s141
      %p147 = scmp.eq.s32.totalorder %s18, 0
      %p148 = por %p146, %p147
      %p149 = scmp.ne.s32.totalorder %s138, %s141
      %p150 = scmp.eq.s32.totalorder %s23, 1
      %p151 = por %p149, %p150
      %p152 = scmp.ne.s32.totalorder %s141, %s142
      %p153 = scmp.eq.s32.totalorder %s23, 0
      %p154 = por %p152, %p153
      %p155 = scmp.ne.s32.totalorder %s141, %s142
      %p156 = scmp.eq.s32.totalorder %s24, 1
      %p157 = por %p155, %p156
      %p159 = scmp.ne.s32.totalorder %s142, %s158
      %p160 = scmp.eq.s32.totalorder %s24, 0
      %p161 = por %p159, %p160
      %p162 = scmp.le.s32.totalorder 1, %s18
      %p163 = scmp.lt.s32.totalorder %s18, 3
      %p164 = pnand %p162, %p163
      %p165 = pneg %p164
      // Predicated region
      $region9: #{tpu_custom_call.1} parent=5 // pred_check
        _
      $region10: #{tpu_custom_call.1} parent=5 // pred_check_branch
        %167 = sbr.rel (%p164) target = $region12
      $region11: #{tpu_custom_call.1} parent=5 // pred_region
        %s168 = ssub.s32 %s18, 1
        // Predicated region
        $region13: #{tpu_custom_call.1} parent=11 // pred_check
          %p169 = pneg %p65
        $region14: #{tpu_custom_call.1} parent=11 // pred_check_branch
          %171 = sbr.rel (%p169) target = $region16
        $region15: #{tpu_custom_call.1} parent=11 // pred_region
          %s173 = ssub.s32 1024, 1024
          %174 = vsyncadd [#allocation7], %s173
          %s175 = sshll.u32 [#allocation6], 4
          %s176 = int_to_ptr.vmem [resolvable:$true] %s175
          %181 = dma.hbm_to_vmem [thread:$0]  %s1, 1024, %s176, [#allocation7], 64, 64, 4
        $region16: #{tpu_custom_call.1} parent=11 // pred_fallthru
          _
        // Predicated region
        $region17: #{tpu_custom_call.1} parent=11 // pred_check
          %p182 = pneg %p86
        $region18: #{tpu_custom_call.1} parent=11 // pred_check_branch
          %184 = sbr.rel (%p182) target = $region20
        $region19: #{tpu_custom_call.1} parent=11 // pred_region
          _
        $region20: #{tpu_custom_call.1} parent=11 // pred_fallthru
          _
        // Predicated region
        $region21: #{tpu_custom_call.1} parent=11 // pred_check
          %p185 = pneg %p107
        $region22: #{tpu_custom_call.1} parent=11 // pred_check_branch
          %187 = sbr.rel (%p185) target = $region24
        $region23: #{tpu_custom_call.1} parent=11 // pred_region
          %s189 = ssub.s32 4096, 4096
          %190 = vsyncadd [#allocation7], %s189
          %s191 = sshll.u32 [#allocation8], 4
          %s192 = int_to_ptr.vmem [resolvable:$true] %s191
          %197 = dma.hbm_to_vmem [thread:$0]  %s3, 4096, %s192, [#allocation7], 64, 64, 4
        $region24: #{tpu_custom_call.1} parent=11 // pred_fallthru
          _
        // Predicated region
        $region25: #{tpu_custom_call.1} parent=11 // pred_check
          %p198 = pneg %p128
        $region26: #{tpu_custom_call.1} parent=11 // pred_check_branch
          %200 = sbr.rel (%p198) target = $region28
        $region27: #{tpu_custom_call.1} parent=11 // pred_region
          _
        $region28: #{tpu_custom_call.1} parent=11 // pred_fallthru
          _
      $region12: #{tpu_custom_call.1} parent=5 // pred_fallthru
        _
      %p201 = scmp.lt.s32.totalorder %s18, 2
      // Predicated region
      $region29: #{tpu_custom_call.1} parent=5 // pred_check
        %p202 = pneg %p201
      $region30: #{tpu_custom_call.1} parent=5 // pred_check_branch
        %204 = sbr.rel (%p202) target = $region32
      $region31: #{tpu_custom_call.1} parent=5 // pred_region
        // Predicated region
        $region33: #{tpu_custom_call.1} parent=31 // pred_check
          %p205 = pneg %p38
        $region34: #{tpu_custom_call.1} parent=31 // pred_check_branch
          %207 = sbr.rel (%p205) target = $region36
        $region35: #{tpu_custom_call.1} parent=31 // pred_region
          %s208 = sand.u32 %s28, 1
          %s209 = scalar_lea.sflag [#allocation4], %s208
          %s210 = sand.u32 %s28, 1
          %s211 = smul.addr %s210, 128
          %s212 = scalar_lea.vmem [#allocation3], %s211
          %s214 = ssub.s32 2048, 2048
          %215 = vsyncadd %s209, %s214
          %s216 = smul.addr %s18, 32
          %s217 = smul.addr %s216, 64
          %s218 = scalar_lea.hbm %s0, %s217
          %s219 = sshll.u32 %s212, 4
          %s220 = int_to_ptr.vmem [resolvable:$true] %s219
          %225 = dma.hbm_to_vmem [thread:$0]  %s218, 2048, %s220, %s209, 64, 64, 4
        $region36: #{tpu_custom_call.1} parent=31 // pred_fallthru
          _
      $region32: #{tpu_custom_call.1} parent=5 // pred_fallthru
        _
      %p226 = scmp.le.s32.totalorder 1, %s18
      %p227 = scmp.lt.s32.totalorder %s18, 3
      %p228 = pnand %p226, %p227
      %p229 = pneg %p228
      // Predicated region
      $region37: #{tpu_custom_call.1} parent=5 // pred_check
        _
      $region38: #{tpu_custom_call.1} parent=5 // pred_check_branch
        %231 = sbr.rel (%p228) target = $region40
      $region39: #{tpu_custom_call.1} parent=5 // pred_region
        %s232 = ssub.s32 %s18, 1
        %s233 = sand.u32 %s31, 1
        %s234 = scalar_lea.sflag [#allocation4], %s233
        %s235 = sand.u32 %s31, 1
        %s236 = smul.addr %s235, 128
        %s237 = scalar_lea.vmem [#allocation3], %s236
        // Predicated region
        $region41: #{tpu_custom_call.1} parent=39 // pred_check
          %p238 = pneg %p44
        $region42: #{tpu_custom_call.1} parent=39 // pred_check_branch
          %240 = sbr.rel (%p238) target = $region44
        $region43: #{tpu_custom_call.1} parent=39 // pred_region
          %241 = dma.done %s234, 2048
        $region44: #{tpu_custom_call.1} parent=39 // pred_fallthru
          _
        // Predicated region
        $region45: #{tpu_custom_call.1} parent=39 // pred_check
          %p242 = pneg %p65
        $region46: #{tpu_custom_call.1} parent=39 // pred_check_branch
          %244 = sbr.rel (%p242) target = $region48
        $region47: #{tpu_custom_call.1} parent=39 // pred_region
          %245 = dma.done [#allocation7], 1024
        $region48: #{tpu_custom_call.1} parent=39 // pred_fallthru
          _
        // Predicated region
        $region49: #{tpu_custom_call.1} parent=39 // pred_check
          %p246 = pneg %p107
        $region50: #{tpu_custom_call.1} parent=39 // pred_check_branch
          %248 = sbr.rel (%p246) target = $region52
        $region51: #{tpu_custom_call.1} parent=39 // pred_region
          %249 = dma.done [#allocation7], 4096
        $region52: #{tpu_custom_call.1} parent=39 // pred_fallthru
          _
        %s250 = sand.u32 %s31, 1
        %s251 = scalar_lea.sflag [#allocation4], %s250
        %s252 = sand.u32 %s31, 1
        %s253 = smul.addr %s252, 128
        %s254 = scalar_lea.vmem [#allocation3], %s253
        %p255 = pneg %p44
        %p256 = pneg %p41
        %p257 = pneg %p65
        %p258 = pneg %p62
        %p259 = pneg %p86
        %p260 = pneg %p83
        %p261 = pneg %p107
        %p262 = pneg %p104
        %p263 = pneg %p128
        %p264 = pneg %p125
        %p265 = pneg %p154
        %p266 = pneg %p151
        %s267 = sand.u32 %s141, 1
        %s268 = scalar_lea.sflag [#allocation5], %s267
        %s269 = sand.u32 %s141, 1
        %s270 = smul.addr %s269, 256
        %s271 = scalar_lea.vmem [#allocation9], %s270
        %273 = vst [vmem:[#allocation2] sm:$0xff] 0.0
        %274 = vst [vmem:[#allocation2 + $0x8] sm:$0xff] 0.0
        %275 = vst [vmem:[#allocation2 + $0x10] sm:$0xff] 0.0
        %276 = vst [vmem:[#allocation2 + $0x18] sm:$0xff] 0.0
        %s277 = scalar_lea.vmem [#allocation2], 288
        %278 = vst [vmem:[%s277] sm:$0xff] 0.0
        %279 = vst [vmem:[%s277 + $0x8] sm:$0xff] 0.0
        %280 = vst [vmem:[%s277 + $0x10] sm:$0xff] 0.0
        %281 = vst [vmem:[%s277 + $0x18] sm:$0xff] 0.0
        %v282 = vld [vmem:[%s237] sm:$0xf]
        %v283 = vld [vmem:[%s237 + $0x4] sm:$0xf]
        %v284 = vld [vmem:[%s237 + $0x8] sm:$0xf]
        %v285 = vld [vmem:[%s237 + $0xc] sm:$0xf]
        %v286 = vld [vmem:[%s237 + $0x10] sm:$0xf]
        %v287 = vld [vmem:[%s237 + $0x14] sm:$0xf]
        %v288 = vld [vmem:[%s237 + $0x18] sm:$0xf]
        %v289 = vld [vmem:[%s237 + $0x1c] sm:$0xf]
        %v290 = vld [vmem:[%s237 + $0x20] sm:$0xf]
        %v291 = vld [vmem:[%s237 + $0x24] sm:$0xf]
        %v292 = vld [vmem:[%s237 + $0x28] sm:$0xf]
        %v293 = vld [vmem:[%s237 + $0x2c] sm:$0xf]
        %v294 = vld [vmem:[%s237 + $0x30] sm:$0xf]
        %v295 = vld [vmem:[%s237 + $0x34] sm:$0xf]
        %v296 = vld [vmem:[%s237 + $0x38] sm:$0xf]
        %v297 = vld [vmem:[%s237 + $0x3c] sm:$0xf]
        %v298 = vld [vmem:[%s237 + $0x40] sm:$0xf]
        %v299 = vld [vmem:[%s237 + $0x44] sm:$0xf]
        %v300 = vld [vmem:[%s237 + $0x48] sm:$0xf]
        %v301 = vld [vmem:[%s237 + $0x4c] sm:$0xf]
        %v302 = vld [vmem:[%s237 + $0x50] sm:$0xf]
        %v303 = vld [vmem:[%s237 + $0x54] sm:$0xf]
        %v304 = vld [vmem:[%s237 + $0x58] sm:$0xf]
        %v305 = vld [vmem:[%s237 + $0x5c] sm:$0xf]
        %v306 = vld [vmem:[%s237 + $0x60] sm:$0xf]
        %v307 = vld [vmem:[%s237 + $0x64] sm:$0xf]
        %v308 = vld [vmem:[%s237 + $0x68] sm:$0xf]
        %v309 = vld [vmem:[%s237 + $0x6c] sm:$0xf]
        %v310 = vld [vmem:[%s237 + $0x70] sm:$0xf]
        %v311 = vld [vmem:[%s237 + $0x74] sm:$0xf]
        %v312 = vld [vmem:[%s237 + $0x78] sm:$0xf]
        %v313 = vld [vmem:[%s237 + $0x7c] sm:$0xf]
        %v314 = vld [vmem:[#allocation6] sm:$0xf]
        %v315 = vld [vmem:[#allocation6 + $0x4] sm:$0xf]
        %v316 = vld [vmem:[#allocation6 + $0x8] sm:$0xf]
        %v317 = vld [vmem:[#allocation6 + $0xc] sm:$0xf]
        %v318 = vld [vmem:[#allocation6 + $0x10] sm:$0xf]
        %v319 = vld [vmem:[#allocation6 + $0x14] sm:$0xf]
        %v320 = vld [vmem:[#allocation6 + $0x18] sm:$0xf]
        %v321 = vld [vmem:[#allocation6 + $0x1c] sm:$0xf]
        %v322 = vld [vmem:[#allocation6 + $0x20] sm:$0xf]
        %v323 = vld [vmem:[#allocation6 + $0x24] sm:$0xf]
        %v324 = vld [vmem:[#allocation6 + $0x28] sm:$0xf]
        %v325 = vld [vmem:[#allocation6 + $0x2c] sm:$0xf]
        %v326 = vld [vmem:[#allocation6 + $0x30] sm:$0xf]
        %v327 = vld [vmem:[#allocation6 + $0x34] sm:$0xf]
        %v328 = vld [vmem:[#allocation6 + $0x38] sm:$0xf]
        %v329 = vld [vmem:[#allocation6 + $0x3c] sm:$0xf]
        %v330 = vld [vmem:[%s2] sm:$0x1]
        %v332 = vlaneseq
        %v333 = vshrl.u32 %v332, 7
        %v334 = vsub.s32 0, %v333
        %v335 = vrot.slane %v330, %v334
        %v369 = vunpack.c.l.b16 %v282
        %v370 = vunpack.c.l.b16 %v283
        %v371 = vunpack.c.l.b16 %v284
        %v372 = vunpack.c.l.b16 %v285
        %v373 = vunpack.c.l.b16 %v286
        %v374 = vunpack.c.l.b16 %v287
        %v375 = vunpack.c.l.b16 %v288
        %v376 = vunpack.c.l.b16 %v289
        %v377 = vunpack.c.l.b16 %v290
        %v378 = vunpack.c.l.b16 %v291
        %v379 = vunpack.c.l.b16 %v292
        %v380 = vunpack.c.l.b16 %v293
        %v381 = vunpack.c.l.b16 %v294
        %v382 = vunpack.c.l.b16 %v295
        %v383 = vunpack.c.l.b16 %v296
        %v384 = vunpack.c.l.b16 %v297
        %v385 = vunpack.c.l.b16 %v298
        %v386 = vunpack.c.l.b16 %v299
        %v387 = vunpack.c.l.b16 %v300
        %v388 = vunpack.c.l.b16 %v301
        %v389 = vunpack.c.l.b16 %v302
        %v390 = vunpack.c.l.b16 %v303
        %v391 = vunpack.c.l.b16 %v304
        %v392 = vunpack.c.l.b16 %v305
        %v393 = vunpack.c.l.b16 %v306
        %v394 = vunpack.c.l.b16 %v307
        %v395 = vunpack.c.l.b16 %v308
        %v396 = vunpack.c.l.b16 %v309
        %v397 = vunpack.c.l.b16 %v310
        %v398 = vunpack.c.l.b16 %v311
        %v399 = vunpack.c.l.b16 %v312
        %v400 = vunpack.c.l.b16 %v313
        %v401 = vpack.c.b16 %v370, %v369
        %v402 = vpack.c.b16 %v372, %v371
        %v403 = vpack.c.b16 %v374, %v373
        %v404 = vpack.c.b16 %v376, %v375
        %v405 = vpack.c.b16 %v378, %v377
        %v406 = vpack.c.b16 %v380, %v379
        %v407 = vpack.c.b16 %v382, %v381
        %v408 = vpack.c.b16 %v384, %v383
        %v409 = vpack.c.b16 %v386, %v385
        %v410 = vpack.c.b16 %v388, %v387
        %v411 = vpack.c.b16 %v390, %v389
        %v412 = vpack.c.b16 %v392, %v391
        %v413 = vpack.c.b16 %v394, %v393
        %v414 = vpack.c.b16 %v396, %v395
        %v415 = vpack.c.b16 %v398, %v397
        %v416 = vpack.c.b16 %v400, %v399
        %v449 = vunpack.c.l.b16 %v314
        %v450 = vunpack.c.l.b16 %v315
        %v451 = vunpack.c.l.b16 %v316
        %v452 = vunpack.c.l.b16 %v317
        %v453 = vunpack.c.l.b16 %v318
        %v454 = vunpack.c.l.b16 %v319
        %v455 = vunpack.c.l.b16 %v320
        %v456 = vunpack.c.l.b16 %v321
        %v457 = vunpack.c.l.b16 %v322
        %v458 = vunpack.c.l.b16 %v323
        %v459 = vunpack.c.l.b16 %v324
        %v460 = vunpack.c.l.b16 %v325
        %v461 = vunpack.c.l.b16 %v326
        %v462 = vunpack.c.l.b16 %v327
        %v463 = vunpack.c.l.b16 %v328
        %v464 = vunpack.c.l.b16 %v329
        %v465 = vpack.c.b16 %v450, %v449
        %v466 = vpack.c.b16 %v452, %v451
        %v467 = vpack.c.b16 %v454, %v453
        %v468 = vpack.c.b16 %v456, %v455
        %v469 = vpack.c.b16 %v458, %v457
        %v470 = vpack.c.b16 %v460, %v459
        %v471 = vpack.c.b16 %v462, %v461
        %v472 = vpack.c.b16 %v464, %v463
        %481 = vmatprep.subr.bf16.mxu0 0
        %482 = vmatpush1.bf16.msra.mxu0 %v472
        %483 = vmatprep.subr.bf16.mxu0 0
        %484 = vmatpush1.bf16.msra.mxu0 %v471
        %485 = vmatprep.subr.bf16.mxu0 0
        %486 = vmatpush1.bf16.msra.mxu0 %v470
        %487 = vmatprep.subr.bf16.mxu0 0
        %488 = vmatpush1.bf16.msra.mxu0 %v469
        %489 = vmatprep.subr.bf16.mxu0 0
        %490 = vmatpush1.bf16.msra.mxu0 %v468
        %491 = vmatprep.subr.bf16.mxu0 0
        %492 = vmatpush1.bf16.msra.mxu0 %v467
        %493 = vmatprep.subr.bf16.mxu0 0
        %494 = vmatpush1.bf16.msra.mxu0 %v466
        %495 = vmatprep.subr.bf16.mxu0 0
        %496 = vmatpush1.bf16.msra.mxu0 %v465
        %497 = vmatprep.subr.bf16.mxu0 0
        %498 = vmatpush2.bf16.msra.mxu0 0
        %499 = vmatprep.subr.bf16.mxu0 0
        %500 = vmatpush2.bf16.msra.mxu0 0
        %501 = vmatprep.subr.bf16.mxu0 0
        %502 = vmatpush2.bf16.msra.mxu0 0
        %503 = vmatprep.subr.bf16.mxu0 0
        %504 = vmatpush2.bf16.msra.mxu0 0
        %505 = vmatprep.subr.bf16.mxu0 0
        %506 = vmatpush2.bf16.msra.mxu0 0
        %507 = vmatprep.subr.bf16.mxu0 0
        %508 = vmatpush2.bf16.msra.mxu0 0
        %509 = vmatprep.subr.bf16.mxu0 0
        %510 = vmatpush2.bf16.msra.mxu0 0
        %511 = vmatprep.subr.bf16.mxu0 0
        %512 = vmatpush2.bf16.msra.mxu0 0
        %513 = vmatprep.mubr.bf16.mxu0 0
        %514 = vmatmul.mubr.bf16.gmra.mxu0 %v401
        %v515 = vpop.f32.mrf.mxu0
        %v516 = vadd.f32 %v335, %v515
        %v517 = vpop.f32.mrf.mxu0
        %v518 = vpop.f32.mrf.mxu0
        %v519 = vadd.f32 %v335, %v518
        %v520 = vpop.f32.mrf.mxu0
        %521 = vmatprep.mubr.bf16.mxu0 0
        %522 = vmatmul.mubr.bf16.gmra.mxu0 %v402
        %v523 = vpop.f32.mrf.mxu0
        %v524 = vadd.f32 %v335, %v523
        %v525 = vpop.f32.mrf.mxu0
        %v526 = vpop.f32.mrf.mxu0
        %v527 = vadd.f32 %v335, %v526
        %v528 = vpop.f32.mrf.mxu0
        %529 = vmatprep.mubr.bf16.mxu0 0
        %530 = vmatmul.mubr.bf16.gmra.mxu0 %v403
        %v531 = vpop.f32.mrf.mxu0
        %v532 = vadd.f32 %v335, %v531
        %v533 = vpop.f32.mrf.mxu0
        %v534 = vpop.f32.mrf.mxu0
        %v535 = vadd.f32 %v335, %v534
        %v536 = vpop.f32.mrf.mxu0
        %537 = vmatprep.mubr.bf16.mxu0 0
        %538 = vmatmul.mubr.bf16.gmra.mxu0 %v404
        %v539 = vpop.f32.mrf.mxu0
        %v540 = vadd.f32 %v335, %v539
        %v541 = vpop.f32.mrf.mxu0
        %v542 = vpop.f32.mrf.mxu0
        %v543 = vadd.f32 %v335, %v542
        %v544 = vpop.f32.mrf.mxu0
        %545 = vmatprep.mubr.bf16.mxu0 0
        %546 = vmatmul.mubr.bf16.gmra.mxu0 %v405
        %v547 = vpop.f32.mrf.mxu0
        %v548 = vadd.f32 %v335, %v547
        %v549 = vpop.f32.mrf.mxu0
        %v550 = vpop.f32.mrf.mxu0
        %v551 = vadd.f32 %v335, %v550
        %v552 = vpop.f32.mrf.mxu0
        %553 = vmatprep.mubr.bf16.mxu0 0
        %554 = vmatmul.mubr.bf16.gmra.mxu0 %v406
        %v555 = vpop.f32.mrf.mxu0
        %v556 = vadd.f32 %v335, %v555
        %v557 = vpop.f32.mrf.mxu0
        %v558 = vpop.f32.mrf.mxu0
        %v559 = vadd.f32 %v335, %v558
        %v560 = vpop.f32.mrf.mxu0
        %561 = vmatprep.mubr.bf16.mxu0 0
        %562 = vmatmul.mubr.bf16.gmra.mxu0 %v407
        %v563 = vpop.f32.mrf.mxu0
        %v564 = vadd.f32 %v335, %v563
        %v565 = vpop.f32.mrf.mxu0
        %v566 = vpop.f32.mrf.mxu0
        %v567 = vadd.f32 %v335, %v566
        %v568 = vpop.f32.mrf.mxu0
        %569 = vmatprep.mubr.bf16.mxu0 0
        %570 = vmatmul.mubr.bf16.gmra.mxu0 %v408
        %v571 = vpop.f32.mrf.mxu0
        %v572 = vadd.f32 %v335, %v571
        %v573 = vpop.f32.mrf.mxu0
        %v574 = vpop.f32.mrf.mxu0
        %v575 = vadd.f32 %v335, %v574
        %v576 = vpop.f32.mrf.mxu0
        %577 = vmatprep.mubr.bf16.mxu0 0
        %578 = vmatmul.mubr.bf16.gmra.mxu0 %v409
        %v579 = vpop.f32.mrf.mxu0
        %v580 = vadd.f32 %v335, %v579
        %v581 = vpop.f32.mrf.mxu0
        %v582 = vpop.f32.mrf.mxu0
        %v583 = vadd.f32 %v335, %v582
        %v584 = vpop.f32.mrf.mxu0
        %585 = vmatprep.mubr.bf16.mxu0 0
        %586 = vmatmul.mubr.bf16.gmra.mxu0 %v410
        %v587 = vpop.f32.mrf.mxu0
        %v588 = vadd.f32 %v335, %v587
        %v589 = vpop.f32.mrf.mxu0
        %v590 = vpop.f32.mrf.mxu0
        %v591 = vadd.f32 %v335, %v590
        %v592 = vpop.f32.mrf.mxu0
        %593 = vmatprep.mubr.bf16.mxu0 0
        %594 = vmatmul.mubr.bf16.gmra.mxu0 %v411
        %v595 = vpop.f32.mrf.mxu0
        %v596 = vadd.f32 %v335, %v595
        %v597 = vpop.f32.mrf.mxu0
        %v598 = vpop.f32.mrf.mxu0
        %v599 = vadd.f32 %v335, %v598
        %v600 = vpop.f32.mrf.mxu0
        %601 = vmatprep.mubr.bf16.mxu0 0
        %602 = vmatmul.mubr.bf16.gmra.mxu0 %v412
        %v603 = vpop.f32.mrf.mxu0
        %v604 = vadd.f32 %v335, %v603
        %v605 = vpop.f32.mrf.mxu0
        %v606 = vpop.f32.mrf.mxu0
        %v607 = vadd.f32 %v335, %v606
        %v608 = vpop.f32.mrf.mxu0
        %609 = vmatprep.mubr.bf16.mxu0 0
        %610 = vmatmul.mubr.bf16.gmra.mxu0 %v413
        %v611 = vpop.f32.mrf.mxu0
        %v612 = vadd.f32 %v335, %v611
        %v613 = vpop.f32.mrf.mxu0
        %v614 = vpop.f32.mrf.mxu0
        %v615 = vadd.f32 %v335, %v614
        %v616 = vpop.f32.mrf.mxu0
        %617 = vmatprep.mubr.bf16.mxu0 0
        %618 = vmatmul.mubr.bf16.gmra.mxu0 %v414
        %v619 = vpop.f32.mrf.mxu0
        %v620 = vadd.f32 %v335, %v619
        %v621 = vpop.f32.mrf.mxu0
        %v622 = vpop.f32.mrf.mxu0
        %v623 = vadd.f32 %v335, %v622
        %v624 = vpop.f32.mrf.mxu0
        %625 = vmatprep.mubr.bf16.mxu0 0
        %626 = vmatmul.mubr.bf16.gmra.mxu0 %v415
        %v627 = vpop.f32.mrf.mxu0
        %v628 = vadd.f32 %v335, %v627
        %v629 = vpop.f32.mrf.mxu0
        %v630 = vpop.f32.mrf.mxu0
        %v631 = vadd.f32 %v335, %v630
        %v632 = vpop.f32.mrf.mxu0
        %633 = vmatprep.mubr.bf16.mxu0 0
        %634 = vmatmul.mubr.bf16.gmra.mxu0 %v416
        %v635 = vpop.f32.mrf.mxu0
        %v636 = vadd.f32 %v335, %v635
        %v637 = vpop.f32.mrf.mxu0
        %v638 = vpop.f32.mrf.mxu0
        %v639 = vadd.f32 %v335, %v638
        %v640 = vpop.f32.mrf.mxu0
        %641 = vdwg.mxu0
        %v642 = vmax.f32 %v516, 0.0
        %v643 = vmax.f32 %v519, 0.0
        %v644 = vmax.f32 %v524, 0.0
        %v645 = vmax.f32 %v527, 0.0
        %v646 = vmax.f32 %v532, 0.0
        %v647 = vmax.f32 %v535, 0.0
        %v648 = vmax.f32 %v540, 0.0
        %v649 = vmax.f32 %v543, 0.0
        %v650 = vmax.f32 %v548, 0.0
        %v651 = vmax.f32 %v551, 0.0
        %v652 = vmax.f32 %v556, 0.0
        %v653 = vmax.f32 %v559, 0.0
        %v654 = vmax.f32 %v564, 0.0
        %v655 = vmax.f32 %v567, 0.0
        %v656 = vmax.f32 %v572, 0.0
        %v657 = vmax.f32 %v575, 0.0
        %v658 = vmax.f32 %v580, 0.0
        %v659 = vmax.f32 %v583, 0.0
        %v660 = vmax.f32 %v588, 0.0
        %v661 = vmax.f32 %v591, 0.0
        %v662 = vmax.f32 %v596, 0.0
        %v663 = vmax.f32 %v599, 0.0
        %v664 = vmax.f32 %v604, 0.0
        %v665 = vmax.f32 %v607, 0.0
        %v666 = vmax.f32 %v612, 0.0
        %v667 = vmax.f32 %v615, 0.0
        %v668 = vmax.f32 %v620, 0.0
        %v669 = vmax.f32 %v623, 0.0
        %v670 = vmax.f32 %v628, 0.0
        %v671 = vmax.f32 %v631, 0.0
        %v672 = vmax.f32 %v636, 0.0
        %v673 = vmax.f32 %v639, 0.0
        %v674 = vlaneseq
        %v675 = vshrl.u32 %v674, 7
        %v676 = vadd.s32 %v675, 8
        %v677 = vpack.c.bf16 %v643, %v642
        %v678 = vpack.c.bf16 %v645, %v644
        %v679 = vpack.c.bf16 %v647, %v646
        %v680 = vpack.c.bf16 %v649, %v648
        %v681 = vpack.c.bf16 %v651, %v650
        %v682 = vpack.c.bf16 %v653, %v652
        %v683 = vpack.c.bf16 %v655, %v654
        %v684 = vpack.c.bf16 %v657, %v656
        %v685 = vpack.c.bf16 %v659, %v658
        %v686 = vpack.c.bf16 %v661, %v660
        %v687 = vpack.c.bf16 %v663, %v662
        %v688 = vpack.c.bf16 %v665, %v664
        %v689 = vpack.c.bf16 %v667, %v666
        %v690 = vpack.c.bf16 %v669, %v668
        %v691 = vpack.c.bf16 %v671, %v670
        %v692 = vpack.c.bf16 %v673, %v672
        %v693 = vld [vmem:[#allocation8] sm:$0xf]
        %v694 = vld [vmem:[#allocation8 + $0x4] sm:$0xf]
        %v695 = vld [vmem:[#allocation8 + $0x8] sm:$0xf]
        %v696 = vld [vmem:[#allocation8 + $0xc] sm:$0xf]
        %v697 = vld [vmem:[#allocation8 + $0x10] sm:$0xf]
        %v698 = vld [vmem:[#allocation8 + $0x14] sm:$0xf]
        %v699 = vld [vmem:[#allocation8 + $0x18] sm:$0xf]
        %v700 = vld [vmem:[#allocation8 + $0x1c] sm:$0xf]
        %v701 = vld [vmem:[#allocation8 + $0x20] sm:$0xf]
        %v702 = vld [vmem:[#allocation8 + $0x24] sm:$0xf]
        %v703 = vld [vmem:[#allocation8 + $0x28] sm:$0xf]
        %v704 = vld [vmem:[#allocation8 + $0x2c] sm:$0xf]
        %v705 = vld [vmem:[#allocation8 + $0x30] sm:$0xf]
        %v706 = vld [vmem:[#allocation8 + $0x34] sm:$0xf]
        %v707 = vld [vmem:[#allocation8 + $0x38] sm:$0xf]
        %v708 = vld [vmem:[#allocation8 + $0x3c] sm:$0xf]
        %s709 = scalar_lea.vmem [#allocation2], 32
        %710 = vst [vmem:[%s709] sm:$0xff] %v642
        %711 = vst [vmem:[%s709 + $0x8] sm:$0xff] %v643
        %712 = vst [vmem:[%s709 + $0x10] sm:$0xff] %v644
        %713 = vst [vmem:[%s709 + $0x18] sm:$0xff] %v645
        %714 = vst [vmem:[%s709 + $0x20] sm:$0xff] %v646
        %715 = vst [vmem:[%s709 + $0x28] sm:$0xff] %v647
        %716 = vst [vmem:[%s709 + $0x30] sm:$0xff] %v648
        %717 = vst [vmem:[%s709 + $0x38] sm:$0xff] %v649
        %718 = vst [vmem:[%s709 + $0x40] sm:$0xff] %v650
        %719 = vst [vmem:[%s709 + $0x48] sm:$0xff] %v651
        %720 = vst [vmem:[%s709 + $0x50] sm:$0xff] %v652
        %721 = vst [vmem:[%s709 + $0x58] sm:$0xff] %v653
        %722 = vst [vmem:[%s709 + $0x60] sm:$0xff] %v654
        %723 = vst [vmem:[%s709 + $0x68] sm:$0xff] %v655
        %724 = vst [vmem:[%s709 + $0x70] sm:$0xff] %v656
        %725 = vst [vmem:[%s709 + $0x78] sm:$0xff] %v657
        %726 = vst [vmem:[%s709 + $0x80] sm:$0xff] %v658
        %727 = vst [vmem:[%s709 + $0x88] sm:$0xff] %v659
        %728 = vst [vmem:[%s709 + $0x90] sm:$0xff] %v660
        %729 = vst [vmem:[%s709 + $0x98] sm:$0xff] %v661
        %730 = vst [vmem:[%s709 + $0xa0] sm:$0xff] %v662
        %731 = vst [vmem:[%s709 + $0xa8] sm:$0xff] %v663
        %732 = vst [vmem:[%s709 + $0xb0] sm:$0xff] %v664
        %733 = vst [vmem:[%s709 + $0xb8] sm:$0xff] %v665
        %734 = vst [vmem:[%s709 + $0xc0] sm:$0xff] %v666
        %735 = vst [vmem:[%s709 + $0xc8] sm:$0xff] %v667
        %736 = vst [vmem:[%s709 + $0xd0] sm:$0xff] %v668
        %737 = vst [vmem:[%s709 + $0xd8] sm:$0xff] %v669
        %738 = vst [vmem:[%s709 + $0xe0] sm:$0xff] %v670
        %739 = vst [vmem:[%s709 + $0xe8] sm:$0xff] %v671
        %740 = vst [vmem:[%s709 + $0xf0] sm:$0xff] %v672
        %741 = vst [vmem:[%s709 + $0xf8] sm:$0xff] %v673
        %v742 = vld [vmem:[#allocation2] sm:$0xff]
        %v743 = vld [vmem:[#allocation2 + $0x8] sm:$0xff]
        %v744 = vld [vmem:[#allocation2 + $0x10] sm:$0xff]
        %v745 = vld [vmem:[#allocation2 + $0x18] sm:$0xff]
        %v746 = vld [vmem:[#allocation2 + $0x20] sm:$0xff]
        %v747 = vld [vmem:[#allocation2 + $0x28] sm:$0xff]
        %v748 = vld [vmem:[#allocation2 + $0x30] sm:$0xff]
        %v749 = vld [vmem:[#allocation2 + $0x38] sm:$0xff]
        %v750 = vld [vmem:[#allocation2 + $0x40] sm:$0xff]
        %v751 = vld [vmem:[#allocation2 + $0x48] sm:$0xff]
        %v752 = vld [vmem:[#allocation2 + $0x50] sm:$0xff]
        %v753 = vld [vmem:[#allocation2 + $0x58] sm:$0xff]
        %v754 = vld [vmem:[#allocation2 + $0x60] sm:$0xff]
        %v755 = vld [vmem:[#allocation2 + $0x68] sm:$0xff]
        %v756 = vld [vmem:[#allocation2 + $0x70] sm:$0xff]
        %v757 = vld [vmem:[#allocation2 + $0x78] sm:$0xff]
        %v758 = vld [vmem:[#allocation2 + $0x80] sm:$0xff]
        %v759 = vld [vmem:[#allocation2 + $0x88] sm:$0xff]
        %v760 = vld [vmem:[#allocation2 + $0x90] sm:$0xff]
        %v761 = vld [vmem:[#allocation2 + $0x98] sm:$0xff]
        %v762 = vld [vmem:[#allocation2 + $0xa0] sm:$0xff]
        %v763 = vld [vmem:[#allocation2 + $0xa8] sm:$0xff]
        %v764 = vld [vmem:[#allocation2 + $0xb0] sm:$0xff]
        %v765 = vld [vmem:[#allocation2 + $0xb8] sm:$0xff]
        %v766 = vld [vmem:[#allocation2 + $0xc0] sm:$0xff]
        %v767 = vld [vmem:[#allocation2 + $0xc8] sm:$0xff]
        %v768 = vld [vmem:[#allocation2 + $0xd0] sm:$0xff]
        %v769 = vld [vmem:[#allocation2 + $0xd8] sm:$0xff]
        %v770 = vld [vmem:[#allocation2 + $0xe0] sm:$0xff]
        %v771 = vld [vmem:[#allocation2 + $0xe8] sm:$0xff]
        %v772 = vld [vmem:[#allocation2 + $0xf0] sm:$0xff]
        %v773 = vld [vmem:[#allocation2 + $0xf8] sm:$0xff]
        %s774 = scalar_lea.vmem [#allocation2], 16
        %v775 = vld [vmem:[%s774] sm:$0xff]
        %v776 = vld [vmem:[%s774 + $0x8] sm:$0xff]
        %v777 = vld [vmem:[%s774 + $0x10] sm:$0xff]
        %v778 = vld [vmem:[%s774 + $0x18] sm:$0xff]
        %v779 = vld [vmem:[%s774 + $0x20] sm:$0xff]
        %v780 = vld [vmem:[%s774 + $0x28] sm:$0xff]
        %v781 = vld [vmem:[%s774 + $0x30] sm:$0xff]
        %v782 = vld [vmem:[%s774 + $0x38] sm:$0xff]
        %v783 = vld [vmem:[%s774 + $0x40] sm:$0xff]
        %v784 = vld [vmem:[%s774 + $0x48] sm:$0xff]
        %v785 = vld [vmem:[%s774 + $0x50] sm:$0xff]
        %v786 = vld [vmem:[%s774 + $0x58] sm:$0xff]
        %v787 = vld [vmem:[%s774 + $0x60] sm:$0xff]
        %v788 = vld [vmem:[%s774 + $0x68] sm:$0xff]
        %v789 = vld [vmem:[%s774 + $0x70] sm:$0xff]
        %v790 = vld [vmem:[%s774 + $0x78] sm:$0xff]
        %v791 = vld [vmem:[%s774 + $0x80] sm:$0xff]
        %v792 = vld [vmem:[%s774 + $0x88] sm:$0xff]
        %v793 = vld [vmem:[%s774 + $0x90] sm:$0xff]
        %v794 = vld [vmem:[%s774 + $0x98] sm:$0xff]
        %v795 = vld [vmem:[%s774 + $0xa0] sm:$0xff]
        %v796 = vld [vmem:[%s774 + $0xa8] sm:$0xff]
        %v797 = vld [vmem:[%s774 + $0xb0] sm:$0xff]
        %v798 = vld [vmem:[%s774 + $0xb8] sm:$0xff]
        %v799 = vld [vmem:[%s774 + $0xc0] sm:$0xff]
        %v800 = vld [vmem:[%s774 + $0xc8] sm:$0xff]
        %v801 = vld [vmem:[%s774 + $0xd0] sm:$0xff]
        %v802 = vld [vmem:[%s774 + $0xd8] sm:$0xff]
        %v803 = vld [vmem:[%s774 + $0xe0] sm:$0xff]
        %v804 = vld [vmem:[%s774 + $0xe8] sm:$0xff]
        %v805 = vld [vmem:[%s774 + $0xf0] sm:$0xff]
        %v806 = vld [vmem:[%s774 + $0xf8] sm:$0xff]
        %v807 = vmax.f32 %v742, %v775
        %v808 = vmax.f32 %v743, %v776
        %v809 = vmax.f32 %v744, %v777
        %v810 = vmax.f32 %v745, %v778
        %v811 = vmax.f32 %v746, %v779
        %v812 = vmax.f32 %v747, %v780
        %v813 = vmax.f32 %v748, %v781
        %v814 = vmax.f32 %v749, %v782
        %v815 = vmax.f32 %v750, %v783
        %v816 = vmax.f32 %v751, %v784
        %v817 = vmax.f32 %v752, %v785
        %v818 = vmax.f32 %v753, %v786
        %v819 = vmax.f32 %v754, %v787
        %v820 = vmax.f32 %v755, %v788
        %v821 = vmax.f32 %v756, %v789
        %v822 = vmax.f32 %v757, %v790
        %v823 = vmax.f32 %v758, %v791
        %v824 = vmax.f32 %v759, %v792
        %v825 = vmax.f32 %v760, %v793
        %v826 = vmax.f32 %v761, %v794
        %v827 = vmax.f32 %v762, %v795
        %v828 = vmax.f32 %v763, %v796
        %v829 = vmax.f32 %v764, %v797
        %v830 = vmax.f32 %v765, %v798
        %v831 = vmax.f32 %v766, %v799
        %v832 = vmax.f32 %v767, %v800
        %v833 = vmax.f32 %v768, %v801
        %v834 = vmax.f32 %v769, %v802
        %v835 = vmax.f32 %v770, %v803
        %v836 = vmax.f32 %v771, %v804
        %v837 = vmax.f32 %v772, %v805
        %v838 = vmax.f32 %v773, %v806
        %v839 = vld [vmem:[%s709] sm:$0xff]
        %v840 = vld [vmem:[%s709 + $0x8] sm:$0xff]
        %v841 = vld [vmem:[%s709 + $0x10] sm:$0xff]
        %v842 = vld [vmem:[%s709 + $0x18] sm:$0xff]
        %v843 = vld [vmem:[%s709 + $0x20] sm:$0xff]
        %v844 = vld [vmem:[%s709 + $0x28] sm:$0xff]
        %v845 = vld [vmem:[%s709 + $0x30] sm:$0xff]
        %v846 = vld [vmem:[%s709 + $0x38] sm:$0xff]
        %v847 = vld [vmem:[%s709 + $0x40] sm:$0xff]
        %v848 = vld [vmem:[%s709 + $0x48] sm:$0xff]
        %v849 = vld [vmem:[%s709 + $0x50] sm:$0xff]
        %v850 = vld [vmem:[%s709 + $0x58] sm:$0xff]
        %v851 = vld [vmem:[%s709 + $0x60] sm:$0xff]
        %v852 = vld [vmem:[%s709 + $0x68] sm:$0xff]
        %v853 = vld [vmem:[%s709 + $0x70] sm:$0xff]
        %v854 = vld [vmem:[%s709 + $0x78] sm:$0xff]
        %v855 = vld [vmem:[%s709 + $0x80] sm:$0xff]
        %v856 = vld [vmem:[%s709 + $0x88] sm:$0xff]
        %v857 = vld [vmem:[%s709 + $0x90] sm:$0xff]
        %v858 = vld [vmem:[%s709 + $0x98] sm:$0xff]
        %v859 = vld [vmem:[%s709 + $0xa0] sm:$0xff]
        %v860 = vld [vmem:[%s709 + $0xa8] sm:$0xff]
        %v861 = vld [vmem:[%s709 + $0xb0] sm:$0xff]
        %v862 = vld [vmem:[%s709 + $0xb8] sm:$0xff]
        %v863 = vld [vmem:[%s709 + $0xc0] sm:$0xff]
        %v864 = vld [vmem:[%s709 + $0xc8] sm:$0xff]
        %v865 = vld [vmem:[%s709 + $0xd0] sm:$0xff]
        %v866 = vld [vmem:[%s709 + $0xd8] sm:$0xff]
        %v867 = vld [vmem:[%s709 + $0xe0] sm:$0xff]
        %v868 = vld [vmem:[%s709 + $0xe8] sm:$0xff]
        %v869 = vld [vmem:[%s709 + $0xf0] sm:$0xff]
        %v870 = vld [vmem:[%s709 + $0xf8] sm:$0xff]
        %v871 = vmax.f32 %v807, %v839
        %v872 = vmax.f32 %v808, %v840
        %v873 = vmax.f32 %v809, %v841
        %v874 = vmax.f32 %v810, %v842
        %v875 = vmax.f32 %v811, %v843
        %v876 = vmax.f32 %v812, %v844
        %v877 = vmax.f32 %v813, %v845
        %v878 = vmax.f32 %v814, %v846
        %v879 = vmax.f32 %v815, %v847
        %v880 = vmax.f32 %v816, %v848
        %v881 = vmax.f32 %v817, %v849
        %v882 = vmax.f32 %v818, %v850
        %v883 = vmax.f32 %v819, %v851
        %v884 = vmax.f32 %v820, %v852
        %v885 = vmax.f32 %v821, %v853
        %v886 = vmax.f32 %v822, %v854
        %v887 = vmax.f32 %v823, %v855
        %v888 = vmax.f32 %v824, %v856
        %v889 = vmax.f32 %v825, %v857
        %v890 = vmax.f32 %v826, %v858
        %v891 = vmax.f32 %v827, %v859
        %v892 = vmax.f32 %v828, %v860
        %v893 = vmax.f32 %v829, %v861
        %v894 = vmax.f32 %v830, %v862
        %v895 = vmax.f32 %v831, %v863
        %v896 = vmax.f32 %v832, %v864
        %v897 = vmax.f32 %v833, %v865
        %v898 = vmax.f32 %v834, %v866
        %v899 = vmax.f32 %v835, %v867
        %v900 = vmax.f32 %v836, %v868
        %v901 = vmax.f32 %v837, %v869
        %v902 = vmax.f32 %v838, %v870
        %s903 = scalar_lea.vmem [#allocation2], 48
        %v904 = vld [vmem:[%s903] sm:$0xff]
        %v905 = vld [vmem:[%s903 + $0x8] sm:$0xff]
        %v906 = vld [vmem:[%s903 + $0x10] sm:$0xff]
        %v907 = vld [vmem:[%s903 + $0x18] sm:$0xff]
        %v908 = vld [vmem:[%s903 + $0x20] sm:$0xff]
        %v909 = vld [vmem:[%s903 + $0x28] sm:$0xff]
        %v910 = vld [vmem:[%s903 + $0x30] sm:$0xff]
        %v911 = vld [vmem:[%s903 + $0x38] sm:$0xff]
        %v912 = vld [vmem:[%s903 + $0x40] sm:$0xff]
        %v913 = vld [vmem:[%s903 + $0x48] sm:$0xff]
        %v914 = vld [vmem:[%s903 + $0x50] sm:$0xff]
        %v915 = vld [vmem:[%s903 + $0x58] sm:$0xff]
        %v916 = vld [vmem:[%s903 + $0x60] sm:$0xff]
        %v917 = vld [vmem:[%s903 + $0x68] sm:$0xff]
        %v918 = vld [vmem:[%s903 + $0x70] sm:$0xff]
        %v919 = vld [vmem:[%s903 + $0x78] sm:$0xff]
        %v920 = vld [vmem:[%s903 + $0x80] sm:$0xff]
        %v921 = vld [vmem:[%s903 + $0x88] sm:$0xff]
        %v922 = vld [vmem:[%s903 + $0x90] sm:$0xff]
        %v923 = vld [vmem:[%s903 + $0x98] sm:$0xff]
        %v924 = vld [vmem:[%s903 + $0xa0] sm:$0xff]
        %v925 = vld [vmem:[%s903 + $0xa8] sm:$0xff]
        %v926 = vld [vmem:[%s903 + $0xb0] sm:$0xff]
        %v927 = vld [vmem:[%s903 + $0xb8] sm:$0xff]
        %v928 = vld [vmem:[%s903 + $0xc0] sm:$0xff]
        %v929 = vld [vmem:[%s903 + $0xc8] sm:$0xff]
        %v930 = vld [vmem:[%s903 + $0xd0] sm:$0xff]
        %v931 = vld [vmem:[%s903 + $0xd8] sm:$0xff]
        %v932 = vld [vmem:[%s903 + $0xe0] sm:$0xff]
        %v933 = vld [vmem:[%s903 + $0xe8] sm:$0xff]
        %v934 = vld [vmem:[%s903 + $0xf0] sm:$0xff]
        %v935 = vld [vmem:[%s903 + $0xf8] sm:$0xff]
        %v936 = vmax.f32 %v871, %v904
        %v937 = vmax.f32 %v872, %v905
        %v938 = vmax.f32 %v873, %v906
        %v939 = vmax.f32 %v874, %v907
        %v940 = vmax.f32 %v875, %v908
        %v941 = vmax.f32 %v876, %v909
        %v942 = vmax.f32 %v877, %v910
        %v943 = vmax.f32 %v878, %v911
        %v944 = vmax.f32 %v879, %v912
        %v945 = vmax.f32 %v880, %v913
        %v946 = vmax.f32 %v881, %v914
        %v947 = vmax.f32 %v882, %v915
        %v948 = vmax.f32 %v883, %v916
        %v949 = vmax.f32 %v884, %v917
        %v950 = vmax.f32 %v885, %v918
        %v951 = vmax.f32 %v886, %v919
        %v952 = vmax.f32 %v887, %v920
        %v953 = vmax.f32 %v888, %v921
        %v954 = vmax.f32 %v889, %v922
        %v955 = vmax.f32 %v890, %v923
        %v956 = vmax.f32 %v891, %v924
        %v957 = vmax.f32 %v892, %v925
        %v958 = vmax.f32 %v893, %v926
        %v959 = vmax.f32 %v894, %v927
        %v960 = vmax.f32 %v895, %v928
        %v961 = vmax.f32 %v896, %v929
        %v962 = vmax.f32 %v897, %v930
        %v963 = vmax.f32 %v898, %v931
        %v964 = vmax.f32 %v899, %v932
        %v965 = vmax.f32 %v900, %v933
        %v966 = vmax.f32 %v901, %v934
        %v967 = vmax.f32 %v902, %v935
        %s968 = scalar_lea.vmem [#allocation2], 64
        %v969 = vld [vmem:[%s968] sm:$0xff]
        %v970 = vld [vmem:[%s968 + $0x8] sm:$0xff]
        %v971 = vld [vmem:[%s968 + $0x10] sm:$0xff]
        %v972 = vld [vmem:[%s968 + $0x18] sm:$0xff]
        %v973 = vld [vmem:[%s968 + $0x20] sm:$0xff]
        %v974 = vld [vmem:[%s968 + $0x28] sm:$0xff]
        %v975 = vld [vmem:[%s968 + $0x30] sm:$0xff]
        %v976 = vld [vmem:[%s968 + $0x38] sm:$0xff]
        %v977 = vld [vmem:[%s968 + $0x40] sm:$0xff]
        %v978 = vld [vmem:[%s968 + $0x48] sm:$0xff]
        %v979 = vld [vmem:[%s968 + $0x50] sm:$0xff]
        %v980 = vld [vmem:[%s968 + $0x58] sm:$0xff]
        %v981 = vld [vmem:[%s968 + $0x60] sm:$0xff]
        %v982 = vld [vmem:[%s968 + $0x68] sm:$0xff]
        %v983 = vld [vmem:[%s968 + $0x70] sm:$0xff]
        %v984 = vld [vmem:[%s968 + $0x78] sm:$0xff]
        %v985 = vld [vmem:[%s968 + $0x80] sm:$0xff]
        %v986 = vld [vmem:[%s968 + $0x88] sm:$0xff]
        %v987 = vld [vmem:[%s968 + $0x90] sm:$0xff]
        %v988 = vld [vmem:[%s968 + $0x98] sm:$0xff]
        %v989 = vld [vmem:[%s968 + $0xa0] sm:$0xff]
        %v990 = vld [vmem:[%s968 + $0xa8] sm:$0xff]
        %v991 = vld [vmem:[%s968 + $0xb0] sm:$0xff]
        %v992 = vld [vmem:[%s968 + $0xb8] sm:$0xff]
        %v993 = vld [vmem:[%s968 + $0xc0] sm:$0xff]
        %v994 = vld [vmem:[%s968 + $0xc8] sm:$0xff]
        %v995 = vld [vmem:[%s968 + $0xd0] sm:$0xff]
        %v996 = vld [vmem:[%s968 + $0xd8] sm:$0xff]
        %v997 = vld [vmem:[%s968 + $0xe0] sm:$0xff]
        %v998 = vld [vmem:[%s968 + $0xe8] sm:$0xff]
        %v999 = vld [vmem:[%s968 + $0xf0] sm:$0xff]
        %v1000 = vld [vmem:[%s968 + $0xf8] sm:$0xff]
        %v1001 = vmax.f32 %v936, %v969
        %v1002 = vmax.f32 %v937, %v970
        %v1003 = vmax.f32 %v938, %v971
        %v1004 = vmax.f32 %v939, %v972
        %v1005 = vmax.f32 %v940, %v973
        %v1006 = vmax.f32 %v941, %v974
        %v1007 = vmax.f32 %v942, %v975
        %v1008 = vmax.f32 %v943, %v976
        %v1009 = vmax.f32 %v944, %v977
        %v1010 = vmax.f32 %v945, %v978
        %v1011 = vmax.f32 %v946, %v979
        %v1012 = vmax.f32 %v947, %v980
        %v1013 = vmax.f32 %v948, %v981
        %v1014 = vmax.f32 %v949, %v982
        %v1015 = vmax.f32 %v950, %v983
        %v1016 = vmax.f32 %v951, %v984
        %v1017 = vmax.f32 %v952, %v985
        %v1018 = vmax.f32 %v953, %v986
        %v1019 = vmax.f32 %v954, %v987
        %v1020 = vmax.f32 %v955, %v988
        %v1021 = vmax.f32 %v956, %v989
        %v1022 = vmax.f32 %v957, %v990
        %v1023 = vmax.f32 %v958, %v991
        %v1024 = vmax.f32 %v959, %v992
        %v1025 = vmax.f32 %v960, %v993
        %v1026 = vmax.f32 %v961, %v994
        %v1027 = vmax.f32 %v962, %v995
        %v1028 = vmax.f32 %v963, %v996
        %v1029 = vmax.f32 %v964, %v997
        %v1030 = vmax.f32 %v965, %v998
        %v1031 = vmax.f32 %v966, %v999
        %v1032 = vmax.f32 %v967, %v1000
        %vm1033 = vcmp.lt.s32.totalorder %v675, 15
        %vm1034 = vcmp.lt.s32.totalorder %v676, 15
        %v1035 = vrot.slane %v1001, 1
        %v1036 = vrot.slane %v1003, 1
        %v1037 = vrot.slane %v1005, 1
        %v1038 = vrot.slane %v1007, 1
        %v1039 = vrot.slane %v1009, 1
        %v1040 = vrot.slane %v1011, 1
        %v1041 = vrot.slane %v1013, 1
        %v1042 = vrot.slane %v1015, 1
        %v1043 = vrot.slane %v1017, 1
        %v1044 = vrot.slane %v1019, 1
        %v1045 = vrot.slane %v1021, 1
        %v1046 = vrot.slane %v1023, 1
        %v1047 = vrot.slane %v1025, 1
        %v1048 = vrot.slane %v1027, 1
        %v1049 = vrot.slane %v1029, 1
        %v1050 = vrot.slane %v1031, 1
        %v1051 = vrot.slane %v1002, 1
        %v1052 = vrot.slane %v1004, 1
        %v1053 = vrot.slane %v1006, 1
        %v1054 = vrot.slane %v1008, 1
        %v1055 = vrot.slane %v1010, 1
        %v1056 = vrot.slane %v1012, 1
        %v1057 = vrot.slane %v1014, 1
        %v1058 = vrot.slane %v1016, 1
        %v1059 = vrot.slane %v1018, 1
        %v1060 = vrot.slane %v1020, 1
        %v1061 = vrot.slane %v1022, 1
        %v1062 = vrot.slane %v1024, 1
        %v1063 = vrot.slane %v1026, 1
        %v1064 = vrot.slane %v1028, 1
        %v1065 = vrot.slane %v1030, 1
        %v1066 = vrot.slane %v1032, 1
        %vm1067 = vcmp.lt.s32.totalorder %v675, 7
        %v1068 = vsel %vm1067, %v1035, %v1051
        %v1069 = vsel %vm1067, %v1036, %v1052
        %v1070 = vsel %vm1067, %v1037, %v1053
        %v1071 = vsel %vm1067, %v1038, %v1054
        %v1072 = vsel %vm1067, %v1039, %v1055
        %v1073 = vsel %vm1067, %v1040, %v1056
        %v1074 = vsel %vm1067, %v1041, %v1057
        %v1075 = vsel %vm1067, %v1042, %v1058
        %v1076 = vsel %vm1067, %v1043, %v1059
        %v1077 = vsel %vm1067, %v1044, %v1060
        %v1078 = vsel %vm1067, %v1045, %v1061
        %v1079 = vsel %vm1067, %v1046, %v1062
        %v1080 = vsel %vm1067, %v1047, %v1063
        %v1081 = vsel %vm1067, %v1048, %v1064
        %v1082 = vsel %vm1067, %v1049, %v1065
        %v1083 = vsel %vm1067, %v1050, %v1066
        %v1084 = vsel %vm1067, %v1051, %v1035
        %v1085 = vsel %vm1067, %v1052, %v1036
        %v1086 = vsel %vm1067, %v1053, %v1037
        %v1087 = vsel %vm1067, %v1054, %v1038
        %v1088 = vsel %vm1067, %v1055, %v1039
        %v1089 = vsel %vm1067, %v1056, %v1040
        %v1090 = vsel %vm1067, %v1057, %v1041
        %v1091 = vsel %vm1067, %v1058, %v1042
        %v1092 = vsel %vm1067, %v1059, %v1043
        %v1093 = vsel %vm1067, %v1060, %v1044
        %v1094 = vsel %vm1067, %v1061, %v1045
        %v1095 = vsel %vm1067, %v1062, %v1046
        %v1096 = vsel %vm1067, %v1063, %v1047
        %v1097 = vsel %vm1067, %v1064, %v1048
        %v1098 = vsel %vm1067, %v1065, %v1049
        %v1099 = vsel %vm1067, %v1066, %v1050
        %v1100 = vsel %vm1033, 1, 0
        %v1101 = vsel %vm1034, 1, 0
        %vm1102 = vcmp.eq.s32.totalorder %v1100, 1
        %vm1103 = vcmp.eq.s32.totalorder %v1101, 1
        %v1104 = vsel %vm1102, %v1068, 0.0
        %v1105 = vsel %vm1103, %v1084, 0.0
        %v1106 = vsel %vm1102, %v1069, 0.0
        %v1107 = vsel %vm1103, %v1085, 0.0
        %v1108 = vsel %vm1102, %v1070, 0.0
        %v1109 = vsel %vm1103, %v1086, 0.0
        %v1110 = vsel %vm1102, %v1071, 0.0
        %v1111 = vsel %vm1103, %v1087, 0.0
        %v1112 = vsel %vm1102, %v1072, 0.0
        %v1113 = vsel %vm1103, %v1088, 0.0
        %v1114 = vsel %vm1102, %v1073, 0.0
        %v1115 = vsel %vm1103, %v1089, 0.0
        %v1116 = vsel %vm1102, %v1074, 0.0
        %v1117 = vsel %vm1103, %v1090, 0.0
        %v1118 = vsel %vm1102, %v1075, 0.0
        %v1119 = vsel %vm1103, %v1091, 0.0
        %v1120 = vsel %vm1102, %v1076, 0.0
        %v1121 = vsel %vm1103, %v1092, 0.0
        %v1122 = vsel %vm1102, %v1077, 0.0
        %v1123 = vsel %vm1103, %v1093, 0.0
        %v1124 = vsel %vm1102, %v1078, 0.0
        %v1125 = vsel %vm1103, %v1094, 0.0
        %v1126 = vsel %vm1102, %v1079, 0.0
        %v1127 = vsel %vm1103, %v1095, 0.0
        %v1128 = vsel %vm1102, %v1080, 0.0
        %v1129 = vsel %vm1103, %v1096, 0.0
        %v1130 = vsel %vm1102, %v1081, 0.0
        %v1131 = vsel %vm1103, %v1097, 0.0
        %v1132 = vsel %vm1102, %v1082, 0.0
        %v1133 = vsel %vm1103, %v1098, 0.0
        %v1134 = vsel %vm1102, %v1083, 0.0
        %v1135 = vsel %vm1103, %v1099, 0.0
        %vm1136 = vcmp.ge.s32.totalorder %v675, 1
        %vm1137 = vcmp.ge.s32.totalorder %v676, 1
        %v1138 = vrot.slane %v1001, 7
        %v1139 = vrot.slane %v1003, 7
        %v1140 = vrot.slane %v1005, 7
        %v1141 = vrot.slane %v1007, 7
        %v1142 = vrot.slane %v1009, 7
        %v1143 = vrot.slane %v1011, 7
        %v1144 = vrot.slane %v1013, 7
        %v1145 = vrot.slane %v1015, 7
        %v1146 = vrot.slane %v1017, 7
        %v1147 = vrot.slane %v1019, 7
        %v1148 = vrot.slane %v1021, 7
        %v1149 = vrot.slane %v1023, 7
        %v1150 = vrot.slane %v1025, 7
        %v1151 = vrot.slane %v1027, 7
        %v1152 = vrot.slane %v1029, 7
        %v1153 = vrot.slane %v1031, 7
        %v1154 = vrot.slane %v1002, 7
        %v1155 = vrot.slane %v1004, 7
        %v1156 = vrot.slane %v1006, 7
        %v1157 = vrot.slane %v1008, 7
        %v1158 = vrot.slane %v1010, 7
        %v1159 = vrot.slane %v1012, 7
        %v1160 = vrot.slane %v1014, 7
        %v1161 = vrot.slane %v1016, 7
        %v1162 = vrot.slane %v1018, 7
        %v1163 = vrot.slane %v1020, 7
        %v1164 = vrot.slane %v1022, 7
        %v1165 = vrot.slane %v1024, 7
        %v1166 = vrot.slane %v1026, 7
        %v1167 = vrot.slane %v1028, 7
        %v1168 = vrot.slane %v1030, 7
        %v1169 = vrot.slane %v1032, 7
        %vm1170 = vcmp.lt.s32.totalorder %v675, 1
        %v1171 = vsel %vm1170, %v1138, %v1154
        %v1172 = vsel %vm1170, %v1139, %v1155
        %v1173 = vsel %vm1170, %v1140, %v1156
        %v1174 = vsel %vm1170, %v1141, %v1157
        %v1175 = vsel %vm1170, %v1142, %v1158
        %v1176 = vsel %vm1170, %v1143, %v1159
        %v1177 = vsel %vm1170, %v1144, %v1160
        %v1178 = vsel %vm1170, %v1145, %v1161
        %v1179 = vsel %vm1170, %v1146, %v1162
        %v1180 = vsel %vm1170, %v1147, %v1163
        %v1181 = vsel %vm1170, %v1148, %v1164
        %v1182 = vsel %vm1170, %v1149, %v1165
        %v1183 = vsel %vm1170, %v1150, %v1166
        %v1184 = vsel %vm1170, %v1151, %v1167
        %v1185 = vsel %vm1170, %v1152, %v1168
        %v1186 = vsel %vm1170, %v1153, %v1169
        %v1187 = vsel %vm1170, %v1154, %v1138
        %v1188 = vsel %vm1170, %v1155, %v1139
        %v1189 = vsel %vm1170, %v1156, %v1140
        %v1190 = vsel %vm1170, %v1157, %v1141
        %v1191 = vsel %vm1170, %v1158, %v1142
        %v1192 = vsel %vm1170, %v1159, %v1143
        %v1193 = vsel %vm1170, %v1160, %v1144
        %v1194 = vsel %vm1170, %v1161, %v1145
        %v1195 = vsel %vm1170, %v1162, %v1146
        %v1196 = vsel %vm1170, %v1163, %v1147
        %v1197 = vsel %vm1170, %v1164, %v1148
        %v1198 = vsel %vm1170, %v1165, %v1149
        %v1199 = vsel %vm1170, %v1166, %v1150
        %v1200 = vsel %vm1170, %v1167, %v1151
        %v1201 = vsel %vm1170, %v1168, %v1152
        %v1202 = vsel %vm1170, %v1169, %v1153
        %v1203 = vsel %vm1136, 1, 0
        %v1204 = vsel %vm1137, 1, 0
        %vm1205 = vcmp.eq.s32.totalorder %v1203, 1
        %vm1206 = vcmp.eq.s32.totalorder %v1204, 1
        %v1207 = vsel %vm1205, %v1187, 0.0
        %v1208 = vsel %vm1206, %v1171, 0.0
        %v1209 = vsel %vm1205, %v1188, 0.0
        %v1210 = vsel %vm1206, %v1172, 0.0
        %v1211 = vsel %vm1205, %v1189, 0.0
        %v1212 = vsel %vm1206, %v1173, 0.0
        %v1213 = vsel %vm1205, %v1190, 0.0
        %v1214 = vsel %vm1206, %v1174, 0.0
        %v1215 = vsel %vm1205, %v1191, 0.0
        %v1216 = vsel %vm1206, %v1175, 0.0
        %v1217 = vsel %vm1205, %v1192, 0.0
        %v1218 = vsel %vm1206, %v1176, 0.0
        %v1219 = vsel %vm1205, %v1193, 0.0
        %v1220 = vsel %vm1206, %v1177, 0.0
        %v1221 = vsel %vm1205, %v1194, 0.0
        %v1222 = vsel %vm1206, %v1178, 0.0
        %v1223 = vsel %vm1205, %v1195, 0.0
        %v1224 = vsel %vm1206, %v1179, 0.0
        %v1225 = vsel %vm1205, %v1196, 0.0
        %v1226 = vsel %vm1206, %v1180, 0.0
        %v1227 = vsel %vm1205, %v1197, 0.0
        %v1228 = vsel %vm1206, %v1181, 0.0
        %v1229 = vsel %vm1205, %v1198, 0.0
        %v1230 = vsel %vm1206, %v1182, 0.0
        %v1231 = vsel %vm1205, %v1199, 0.0
        %v1232 = vsel %vm1206, %v1183, 0.0
        %v1233 = vsel %vm1205, %v1200, 0.0
        %v1234 = vsel %vm1206, %v1184, 0.0
        %v1235 = vsel %vm1205, %v1201, 0.0
        %v1236 = vsel %vm1206, %v1185, 0.0
        %v1237 = vsel %vm1205, %v1202, 0.0
        %v1238 = vsel %vm1206, %v1186, 0.0
        %v1239 = vmax.f32 %v1104, %v1207
        %v1240 = vmax.f32 %v1105, %v1208
        %v1241 = vmax.f32 %v1106, %v1209
        %v1242 = vmax.f32 %v1107, %v1210
        %v1243 = vmax.f32 %v1108, %v1211
        %v1244 = vmax.f32 %v1109, %v1212
        %v1245 = vmax.f32 %v1110, %v1213
        %v1246 = vmax.f32 %v1111, %v1214
        %v1247 = vmax.f32 %v1112, %v1215
        %v1248 = vmax.f32 %v1113, %v1216
        %v1249 = vmax.f32 %v1114, %v1217
        %v1250 = vmax.f32 %v1115, %v1218
        %v1251 = vmax.f32 %v1116, %v1219
        %v1252 = vmax.f32 %v1117, %v1220
        %v1253 = vmax.f32 %v1118, %v1221
        %v1254 = vmax.f32 %v1119, %v1222
        %v1255 = vmax.f32 %v1120, %v1223
        %v1256 = vmax.f32 %v1121, %v1224
        %v1257 = vmax.f32 %v1122, %v1225
        %v1258 = vmax.f32 %v1123, %v1226
        %v1259 = vmax.f32 %v1124, %v1227
        %v1260 = vmax.f32 %v1125, %v1228
        %v1261 = vmax.f32 %v1126, %v1229
        %v1262 = vmax.f32 %v1127, %v1230
        %v1263 = vmax.f32 %v1128, %v1231
        %v1264 = vmax.f32 %v1129, %v1232
        %v1265 = vmax.f32 %v1130, %v1233
        %v1266 = vmax.f32 %v1131, %v1234
        %v1267 = vmax.f32 %v1132, %v1235
        %v1268 = vmax.f32 %v1133, %v1236
        %v1269 = vmax.f32 %v1134, %v1237
        %v1270 = vmax.f32 %v1135, %v1238
        %v1271 = vmax.f32 %v1001, %v1239
        %v1272 = vmax.f32 %v1002, %v1240
        %v1273 = vmax.f32 %v1003, %v1241
        %v1274 = vmax.f32 %v1004, %v1242
        %v1275 = vmax.f32 %v1005, %v1243
        %v1276 = vmax.f32 %v1006, %v1244
        %v1277 = vmax.f32 %v1007, %v1245
        %v1278 = vmax.f32 %v1008, %v1246
        %v1279 = vmax.f32 %v1009, %v1247
        %v1280 = vmax.f32 %v1010, %v1248
        %v1281 = vmax.f32 %v1011, %v1249
        %v1282 = vmax.f32 %v1012, %v1250
        %v1283 = vmax.f32 %v1013, %v1251
        %v1284 = vmax.f32 %v1014, %v1252
        %v1285 = vmax.f32 %v1015, %v1253
        %v1286 = vmax.f32 %v1016, %v1254
        %v1287 = vmax.f32 %v1017, %v1255
        %v1288 = vmax.f32 %v1018, %v1256
        %v1289 = vmax.f32 %v1019, %v1257
        %v1290 = vmax.f32 %v1020, %v1258
        %v1291 = vmax.f32 %v1021, %v1259
        %v1292 = vmax.f32 %v1022, %v1260
        %v1293 = vmax.f32 %v1023, %v1261
        %v1294 = vmax.f32 %v1024, %v1262
        %v1295 = vmax.f32 %v1025, %v1263
        %v1296 = vmax.f32 %v1026, %v1264
        %v1297 = vmax.f32 %v1027, %v1265
        %v1298 = vmax.f32 %v1028, %v1266
        %v1299 = vmax.f32 %v1029, %v1267
        %v1300 = vmax.f32 %v1030, %v1268
        %v1301 = vmax.f32 %v1031, %v1269
        %v1302 = vmax.f32 %v1032, %v1270
        %vm1303 = vcmp.lt.s32.totalorder %v675, 14
        %vm1304 = vcmp.lt.s32.totalorder %v676, 14
        %v1305 = vrot.slane %v1001, 2
        %v1306 = vrot.slane %v1003, 2
        %v1307 = vrot.slane %v1005, 2
        %v1308 = vrot.slane %v1007, 2
        %v1309 = vrot.slane %v1009, 2
        %v1310 = vrot.slane %v1011, 2
        %v1311 = vrot.slane %v1013, 2
        %v1312 = vrot.slane %v1015, 2
        %v1313 = vrot.slane %v1017, 2
        %v1314 = vrot.slane %v1019, 2
        %v1315 = vrot.slane %v1021, 2
        %v1316 = vrot.slane %v1023, 2
        %v1317 = vrot.slane %v1025, 2
        %v1318 = vrot.slane %v1027, 2
        %v1319 = vrot.slane %v1029, 2
        %v1320 = vrot.slane %v1031, 2
        %v1321 = vrot.slane %v1002, 2
        %v1322 = vrot.slane %v1004, 2
        %v1323 = vrot.slane %v1006, 2
        %v1324 = vrot.slane %v1008, 2
        %v1325 = vrot.slane %v1010, 2
        %v1326 = vrot.slane %v1012, 2
        %v1327 = vrot.slane %v1014, 2
        %v1328 = vrot.slane %v1016, 2
        %v1329 = vrot.slane %v1018, 2
        %v1330 = vrot.slane %v1020, 2
        %v1331 = vrot.slane %v1022, 2
        %v1332 = vrot.slane %v1024, 2
        %v1333 = vrot.slane %v1026, 2
        %v1334 = vrot.slane %v1028, 2
        %v1335 = vrot.slane %v1030, 2
        %v1336 = vrot.slane %v1032, 2
        %vm1337 = vcmp.lt.s32.totalorder %v675, 6
        %v1338 = vsel %vm1337, %v1305, %v1321
        %v1339 = vsel %vm1337, %v1306, %v1322
        %v1340 = vsel %vm1337, %v1307, %v1323
        %v1341 = vsel %vm1337, %v1308, %v1324
        %v1342 = vsel %vm1337, %v1309, %v1325
        %v1343 = vsel %vm1337, %v1310, %v1326
        %v1344 = vsel %vm1337, %v1311, %v1327
        %v1345 = vsel %vm1337, %v1312, %v1328
        %v1346 = vsel %vm1337, %v1313, %v1329
        %v1347 = vsel %vm1337, %v1314, %v1330
        %v1348 = vsel %vm1337, %v1315, %v1331
        %v1349 = vsel %vm1337, %v1316, %v1332
        %v1350 = vsel %vm1337, %v1317, %v1333
        %v1351 = vsel %vm1337, %v1318, %v1334
        %v1352 = vsel %vm1337, %v1319, %v1335
        %v1353 = vsel %vm1337, %v1320, %v1336
        %v1354 = vsel %vm1337, %v1321, %v1305
        %v1355 = vsel %vm1337, %v1322, %v1306
        %v1356 = vsel %vm1337, %v1323, %v1307
        %v1357 = vsel %vm1337, %v1324, %v1308
        %v1358 = vsel %vm1337, %v1325, %v1309
        %v1359 = vsel %vm1337, %v1326, %v1310
        %v1360 = vsel %vm1337, %v1327, %v1311
        %v1361 = vsel %vm1337, %v1328, %v1312
        %v1362 = vsel %vm1337, %v1329, %v1313
        %v1363 = vsel %vm1337, %v1330, %v1314
        %v1364 = vsel %vm1337, %v1331, %v1315
        %v1365 = vsel %vm1337, %v1332, %v1316
        %v1366 = vsel %vm1337, %v1333, %v1317
        %v1367 = vsel %vm1337, %v1334, %v1318
        %v1368 = vsel %vm1337, %v1335, %v1319
        %v1369 = vsel %vm1337, %v1336, %v1320
        %v1370 = vsel %vm1303, 1, 0
        %v1371 = vsel %vm1304, 1, 0
        %vm1372 = vcmp.eq.s32.totalorder %v1370, 1
        %vm1373 = vcmp.eq.s32.totalorder %v1371, 1
        %v1374 = vsel %vm1372, %v1338, 0.0
        %v1375 = vsel %vm1373, %v1354, 0.0
        %v1376 = vsel %vm1372, %v1339, 0.0
        %v1377 = vsel %vm1373, %v1355, 0.0
        %v1378 = vsel %vm1372, %v1340, 0.0
        %v1379 = vsel %vm1373, %v1356, 0.0
        %v1380 = vsel %vm1372, %v1341, 0.0
        %v1381 = vsel %vm1373, %v1357, 0.0
        %v1382 = vsel %vm1372, %v1342, 0.0
        %v1383 = vsel %vm1373, %v1358, 0.0
        %v1384 = vsel %vm1372, %v1343, 0.0
        %v1385 = vsel %vm1373, %v1359, 0.0
        %v1386 = vsel %vm1372, %v1344, 0.0
        %v1387 = vsel %vm1373, %v1360, 0.0
        %v1388 = vsel %vm1372, %v1345, 0.0
        %v1389 = vsel %vm1373, %v1361, 0.0
        %v1390 = vsel %vm1372, %v1346, 0.0
        %v1391 = vsel %vm1373, %v1362, 0.0
        %v1392 = vsel %vm1372, %v1347, 0.0
        %v1393 = vsel %vm1373, %v1363, 0.0
        %v1394 = vsel %vm1372, %v1348, 0.0
        %v1395 = vsel %vm1373, %v1364, 0.0
        %v1396 = vsel %vm1372, %v1349, 0.0
        %v1397 = vsel %vm1373, %v1365, 0.0
        %v1398 = vsel %vm1372, %v1350, 0.0
        %v1399 = vsel %vm1373, %v1366, 0.0
        %v1400 = vsel %vm1372, %v1351, 0.0
        %v1401 = vsel %vm1373, %v1367, 0.0
        %v1402 = vsel %vm1372, %v1352, 0.0
        %v1403 = vsel %vm1373, %v1368, 0.0
        %v1404 = vsel %vm1372, %v1353, 0.0
        %v1405 = vsel %vm1373, %v1369, 0.0
        %vm1406 = vcmp.ge.s32.totalorder %v675, 2
        %vm1407 = vcmp.ge.s32.totalorder %v676, 2
        %v1408 = vrot.slane %v1001, 6
        %v1409 = vrot.slane %v1003, 6
        %v1410 = vrot.slane %v1005, 6
        %v1411 = vrot.slane %v1007, 6
        %v1412 = vrot.slane %v1009, 6
        %v1413 = vrot.slane %v1011, 6
        %v1414 = vrot.slane %v1013, 6
        %v1415 = vrot.slane %v1015, 6
        %v1416 = vrot.slane %v1017, 6
        %v1417 = vrot.slane %v1019, 6
        %v1418 = vrot.slane %v1021, 6
        %v1419 = vrot.slane %v1023, 6
        %v1420 = vrot.slane %v1025, 6
        %v1421 = vrot.slane %v1027, 6
        %v1422 = vrot.slane %v1029, 6
        %v1423 = vrot.slane %v1031, 6
        %v1424 = vrot.slane %v1002, 6
        %v1425 = vrot.slane %v1004, 6
        %v1426 = vrot.slane %v1006, 6
        %v1427 = vrot.slane %v1008, 6
        %v1428 = vrot.slane %v1010, 6
        %v1429 = vrot.slane %v1012, 6
        %v1430 = vrot.slane %v1014, 6
        %v1431 = vrot.slane %v1016, 6
        %v1432 = vrot.slane %v1018, 6
        %v1433 = vrot.slane %v1020, 6
        %v1434 = vrot.slane %v1022, 6
        %v1435 = vrot.slane %v1024, 6
        %v1436 = vrot.slane %v1026, 6
        %v1437 = vrot.slane %v1028, 6
        %v1438 = vrot.slane %v1030, 6
        %v1439 = vrot.slane %v1032, 6
        %vm1440 = vcmp.lt.s32.totalorder %v675, 2
        %v1441 = vsel %vm1440, %v1408, %v1424
        %v1442 = vsel %vm1440, %v1409, %v1425
        %v1443 = vsel %vm1440, %v1410, %v1426
        %v1444 = vsel %vm1440, %v1411, %v1427
        %v1445 = vsel %vm1440, %v1412, %v1428
        %v1446 = vsel %vm1440, %v1413, %v1429
        %v1447 = vsel %vm1440, %v1414, %v1430
        %v1448 = vsel %vm1440, %v1415, %v1431
        %v1449 = vsel %vm1440, %v1416, %v1432
        %v1450 = vsel %vm1440, %v1417, %v1433
        %v1451 = vsel %vm1440, %v1418, %v1434
        %v1452 = vsel %vm1440, %v1419, %v1435
        %v1453 = vsel %vm1440, %v1420, %v1436
        %v1454 = vsel %vm1440, %v1421, %v1437
        %v1455 = vsel %vm1440, %v1422, %v1438
        %v1456 = vsel %vm1440, %v1423, %v1439
        %v1457 = vsel %vm1440, %v1424, %v1408
        %v1458 = vsel %vm1440, %v1425, %v1409
        %v1459 = vsel %vm1440, %v1426, %v1410
        %v1460 = vsel %vm1440, %v1427, %v1411
        %v1461 = vsel %vm1440, %v1428, %v1412
        %v1462 = vsel %vm1440, %v1429, %v1413
        %v1463 = vsel %vm1440, %v1430, %v1414
        %v1464 = vsel %vm1440, %v1431, %v1415
        %v1465 = vsel %vm1440, %v1432, %v1416
        %v1466 = vsel %vm1440, %v1433, %v1417
        %v1467 = vsel %vm1440, %v1434, %v1418
        %v1468 = vsel %vm1440, %v1435, %v1419
        %v1469 = vsel %vm1440, %v1436, %v1420
        %v1470 = vsel %vm1440, %v1437, %v1421
        %v1471 = vsel %vm1440, %v1438, %v1422
        %v1472 = vsel %vm1440, %v1439, %v1423
        %v1473 = vsel %vm1406, 1, 0
        %v1474 = vsel %vm1407, 1, 0
        %vm1475 = vcmp.eq.s32.totalorder %v1473, 1
        %vm1476 = vcmp.eq.s32.totalorder %v1474, 1
        %v1477 = vsel %vm1475, %v1457, 0.0
        %v1478 = vsel %vm1476, %v1441, 0.0
        %v1479 = vsel %vm1475, %v1458, 0.0
        %v1480 = vsel %vm1476, %v1442, 0.0
        %v1481 = vsel %vm1475, %v1459, 0.0
        %v1482 = vsel %vm1476, %v1443, 0.0
        %v1483 = vsel %vm1475, %v1460, 0.0
        %v1484 = vsel %vm1476, %v1444, 0.0
        %v1485 = vsel %vm1475, %v1461, 0.0
        %v1486 = vsel %vm1476, %v1445, 0.0
        %v1487 = vsel %vm1475, %v1462, 0.0
        %v1488 = vsel %vm1476, %v1446, 0.0
        %v1489 = vsel %vm1475, %v1463, 0.0
        %v1490 = vsel %vm1476, %v1447, 0.0
        %v1491 = vsel %vm1475, %v1464, 0.0
        %v1492 = vsel %vm1476, %v1448, 0.0
        %v1493 = vsel %vm1475, %v1465, 0.0
        %v1494 = vsel %vm1476, %v1449, 0.0
        %v1495 = vsel %vm1475, %v1466, 0.0
        %v1496 = vsel %vm1476, %v1450, 0.0
        %v1497 = vsel %vm1475, %v1467, 0.0
        %v1498 = vsel %vm1476, %v1451, 0.0
        %v1499 = vsel %vm1475, %v1468, 0.0
        %v1500 = vsel %vm1476, %v1452, 0.0
        %v1501 = vsel %vm1475, %v1469, 0.0
        %v1502 = vsel %vm1476, %v1453, 0.0
        %v1503 = vsel %vm1475, %v1470, 0.0
        %v1504 = vsel %vm1476, %v1454, 0.0
        %v1505 = vsel %vm1475, %v1471, 0.0
        %v1506 = vsel %vm1476, %v1455, 0.0
        %v1507 = vsel %vm1475, %v1472, 0.0
        %v1508 = vsel %vm1476, %v1456, 0.0
        %v1509 = vmax.f32 %v1374, %v1477
        %v1510 = vmax.f32 %v1375, %v1478
        %v1511 = vmax.f32 %v1376, %v1479
        %v1512 = vmax.f32 %v1377, %v1480
        %v1513 = vmax.f32 %v1378, %v1481
        %v1514 = vmax.f32 %v1379, %v1482
        %v1515 = vmax.f32 %v1380, %v1483
        %v1516 = vmax.f32 %v1381, %v1484
        %v1517 = vmax.f32 %v1382, %v1485
        %v1518 = vmax.f32 %v1383, %v1486
        %v1519 = vmax.f32 %v1384, %v1487
        %v1520 = vmax.f32 %v1385, %v1488
        %v1521 = vmax.f32 %v1386, %v1489
        %v1522 = vmax.f32 %v1387, %v1490
        %v1523 = vmax.f32 %v1388, %v1491
        %v1524 = vmax.f32 %v1389, %v1492
        %v1525 = vmax.f32 %v1390, %v1493
        %v1526 = vmax.f32 %v1391, %v1494
        %v1527 = vmax.f32 %v1392, %v1495
        %v1528 = vmax.f32 %v1393, %v1496
        %v1529 = vmax.f32 %v1394, %v1497
        %v1530 = vmax.f32 %v1395, %v1498
        %v1531 = vmax.f32 %v1396, %v1499
        %v1532 = vmax.f32 %v1397, %v1500
        %v1533 = vmax.f32 %v1398, %v1501
        %v1534 = vmax.f32 %v1399, %v1502
        %v1535 = vmax.f32 %v1400, %v1503
        %v1536 = vmax.f32 %v1401, %v1504
        %v1537 = vmax.f32 %v1402, %v1505
        %v1538 = vmax.f32 %v1403, %v1506
        %v1539 = vmax.f32 %v1404, %v1507
        %v1540 = vmax.f32 %v1405, %v1508
        %v1541 = vmax.f32 %v1271, %v1509
        %v1542 = vmax.f32 %v1272, %v1510
        %v1543 = vmax.f32 %v1273, %v1511
        %v1544 = vmax.f32 %v1274, %v1512
        %v1545 = vmax.f32 %v1275, %v1513
        %v1546 = vmax.f32 %v1276, %v1514
        %v1547 = vmax.f32 %v1277, %v1515
        %v1548 = vmax.f32 %v1278, %v1516
        %v1549 = vmax.f32 %v1279, %v1517
        %v1550 = vmax.f32 %v1280, %v1518
        %v1551 = vmax.f32 %v1281, %v1519
        %v1552 = vmax.f32 %v1282, %v1520
        %v1553 = vmax.f32 %v1283, %v1521
        %v1554 = vmax.f32 %v1284, %v1522
        %v1555 = vmax.f32 %v1285, %v1523
        %v1556 = vmax.f32 %v1286, %v1524
        %v1557 = vmax.f32 %v1287, %v1525
        %v1558 = vmax.f32 %v1288, %v1526
        %v1559 = vmax.f32 %v1289, %v1527
        %v1560 = vmax.f32 %v1290, %v1528
        %v1561 = vmax.f32 %v1291, %v1529
        %v1562 = vmax.f32 %v1292, %v1530
        %v1563 = vmax.f32 %v1293, %v1531
        %v1564 = vmax.f32 %v1294, %v1532
        %v1565 = vmax.f32 %v1295, %v1533
        %v1566 = vmax.f32 %v1296, %v1534
        %v1567 = vmax.f32 %v1297, %v1535
        %v1568 = vmax.f32 %v1298, %v1536
        %v1569 = vmax.f32 %v1299, %v1537
        %v1570 = vmax.f32 %v1300, %v1538
        %v1571 = vmax.f32 %v1301, %v1539
        %v1572 = vmax.f32 %v1302, %v1540
        %v1573 = vpack.c.bf16 %v1542, %v1541
        %v1574 = vpack.c.bf16 %v1544, %v1543
        %v1575 = vpack.c.bf16 %v1546, %v1545
        %v1576 = vpack.c.bf16 %v1548, %v1547
        %v1577 = vpack.c.bf16 %v1550, %v1549
        %v1578 = vpack.c.bf16 %v1552, %v1551
        %v1579 = vpack.c.bf16 %v1554, %v1553
        %v1580 = vpack.c.bf16 %v1556, %v1555
        %v1581 = vpack.c.bf16 %v1558, %v1557
        %v1582 = vpack.c.bf16 %v1560, %v1559
        %v1583 = vpack.c.bf16 %v1562, %v1561
        %v1584 = vpack.c.bf16 %v1564, %v1563
        %v1585 = vpack.c.bf16 %v1566, %v1565
        %v1586 = vpack.c.bf16 %v1568, %v1567
        %v1587 = vpack.c.bf16 %v1570, %v1569
        %v1588 = vpack.c.bf16 %v1572, %v1571
        %s1589 = scalar_lea.vmem [#allocation8], 64
        %v1590 = vld [vmem:[%s1589] sm:$0xf]
        %v1591 = vld [vmem:[%s1589 + $0x4] sm:$0xf]
        %v1592 = vld [vmem:[%s1589 + $0x8] sm:$0xf]
        %v1593 = vld [vmem:[%s1589 + $0xc] sm:$0xf]
        %v1594 = vld [vmem:[%s1589 + $0x10] sm:$0xf]
        %v1595 = vld [vmem:[%s1589 + $0x14] sm:$0xf]
        %v1596 = vld [vmem:[%s1589 + $0x18] sm:$0xf]
        %v1597 = vld [vmem:[%s1589 + $0x1c] sm:$0xf]
        %v1598 = vld [vmem:[%s1589 + $0x20] sm:$0xf]
        %v1599 = vld [vmem:[%s1589 + $0x24] sm:$0xf]
        %v1600 = vld [vmem:[%s1589 + $0x28] sm:$0xf]
        %v1601 = vld [vmem:[%s1589 + $0x2c] sm:$0xf]
        %v1602 = vld [vmem:[%s1589 + $0x30] sm:$0xf]
        %v1603 = vld [vmem:[%s1589 + $0x34] sm:$0xf]
        %v1604 = vld [vmem:[%s1589 + $0x38] sm:$0xf]
        %v1605 = vld [vmem:[%s1589 + $0x3c] sm:$0xf]
        %v1622 = vunpack.c.l.b16 %v1590
        %v1623 = vunpack.c.l.b16 %v1591
        %v1624 = vunpack.c.l.b16 %v1592
        %v1625 = vunpack.c.l.b16 %v1593
        %v1626 = vunpack.c.l.b16 %v1594
        %v1627 = vunpack.c.l.b16 %v1595
        %v1628 = vunpack.c.l.b16 %v1596
        %v1629 = vunpack.c.l.b16 %v1597
        %v1630 = vunpack.c.l.b16 %v1598
        %v1631 = vunpack.c.l.b16 %v1599
        %v1632 = vunpack.c.l.b16 %v1600
        %v1633 = vunpack.c.l.b16 %v1601
        %v1634 = vunpack.c.l.b16 %v1602
        %v1635 = vunpack.c.l.b16 %v1603
        %v1636 = vunpack.c.l.b16 %v1604
        %v1637 = vunpack.c.l.b16 %v1605
        %v1638 = vpack.c.b16 %v1623, %v1622
        %v1639 = vpack.c.b16 %v1625, %v1624
        %v1640 = vpack.c.b16 %v1627, %v1626
        %v1641 = vpack.c.b16 %v1629, %v1628
        %v1642 = vpack.c.b16 %v1631, %v1630
        %v1643 = vpack.c.b16 %v1633, %v1632
        %v1644 = vpack.c.b16 %v1635, %v1634
        %v1645 = vpack.c.b16 %v1637, %v1636
        %1654 = vmatprep.subr.bf16.mxu0 0
        %1655 = vmatpush1.bf16.msra.mxu0 %v1645
        %1656 = vmatprep.subr.bf16.mxu0 0
        %1657 = vmatpush1.bf16.msra.mxu0 %v1644
        %1658 = vmatprep.subr.bf16.mxu0 0
        %1659 = vmatpush1.bf16.msra.mxu0 %v1643
        %1660 = vmatprep.subr.bf16.mxu0 0
        %1661 = vmatpush1.bf16.msra.mxu0 %v1642
        %1662 = vmatprep.subr.bf16.mxu0 0
        %1663 = vmatpush1.bf16.msra.mxu0 %v1641
        %1664 = vmatprep.subr.bf16.mxu0 0
        %1665 = vmatpush1.bf16.msra.mxu0 %v1640
        %1666 = vmatprep.subr.bf16.mxu0 0
        %1667 = vmatpush1.bf16.msra.mxu0 %v1639
        %1668 = vmatprep.subr.bf16.mxu0 0
        %1669 = vmatpush1.bf16.msra.mxu0 %v1638
        %1670 = vmatprep.subr.bf16.mxu0 0
        %1671 = vmatpush2.bf16.msra.mxu0 0
        %1672 = vmatprep.subr.bf16.mxu0 0
        %1673 = vmatpush2.bf16.msra.mxu0 0
        %1674 = vmatprep.subr.bf16.mxu0 0
        %1675 = vmatpush2.bf16.msra.mxu0 0
        %1676 = vmatprep.subr.bf16.mxu0 0
        %1677 = vmatpush2.bf16.msra.mxu0 0
        %1678 = vmatprep.subr.bf16.mxu0 0
        %1679 = vmatpush2.bf16.msra.mxu0 0
        %1680 = vmatprep.subr.bf16.mxu0 0
        %1681 = vmatpush2.bf16.msra.mxu0 0
        %1682 = vmatprep.subr.bf16.mxu0 0
        %1683 = vmatpush2.bf16.msra.mxu0 0
        %1684 = vmatprep.subr.bf16.mxu0 0
        %1685 = vmatpush2.bf16.msra.mxu0 0
        %1686 = vmatprep.mubr.bf16.mxu0 0
        %1687 = vmatmul.mubr.bf16.gmra.mxu0 %v1573
        %v1688 = vpop.f32.mrf.mxu0
        %v1689 = vadd.f32 0.0, %v1688
        %v1690 = vpop.f32.mrf.mxu0
        %v1691 = vpop.f32.mrf.mxu0
        %v1692 = vadd.f32 0.0, %v1691
        %v1693 = vpop.f32.mrf.mxu0
        %1694 = vmatprep.mubr.bf16.mxu0 0
        %1695 = vmatmul.mubr.bf16.gmra.mxu0 %v1574
        %v1696 = vpop.f32.mrf.mxu0
        %v1697 = vadd.f32 0.0, %v1696
        %v1698 = vpop.f32.mrf.mxu0
        %v1699 = vpop.f32.mrf.mxu0
        %v1700 = vadd.f32 0.0, %v1699
        %v1701 = vpop.f32.mrf.mxu0
        %1702 = vmatprep.mubr.bf16.mxu0 0
        %1703 = vmatmul.mubr.bf16.gmra.mxu0 %v1575
        %v1704 = vpop.f32.mrf.mxu0
        %v1705 = vadd.f32 0.0, %v1704
        %v1706 = vpop.f32.mrf.mxu0
        %v1707 = vpop.f32.mrf.mxu0
        %v1708 = vadd.f32 0.0, %v1707
        %v1709 = vpop.f32.mrf.mxu0
        %1710 = vmatprep.mubr.bf16.mxu0 0
        %1711 = vmatmul.mubr.bf16.gmra.mxu0 %v1576
        %v1712 = vpop.f32.mrf.mxu0
        %v1713 = vadd.f32 0.0, %v1712
        %v1714 = vpop.f32.mrf.mxu0
        %v1715 = vpop.f32.mrf.mxu0
        %v1716 = vadd.f32 0.0, %v1715
        %v1717 = vpop.f32.mrf.mxu0
        %1718 = vmatprep.mubr.bf16.mxu0 0
        %1719 = vmatmul.mubr.bf16.gmra.mxu0 %v1577
        %v1720 = vpop.f32.mrf.mxu0
        %v1721 = vadd.f32 0.0, %v1720
        %v1722 = vpop.f32.mrf.mxu0
        %v1723 = vpop.f32.mrf.mxu0
        %v1724 = vadd.f32 0.0, %v1723
        %v1725 = vpop.f32.mrf.mxu0
        %1726 = vmatprep.mubr.bf16.mxu0 0
        %1727 = vmatmul.mubr.bf16.gmra.mxu0 %v1578
        %v1728 = vpop.f32.mrf.mxu0
        %v1729 = vadd.f32 0.0, %v1728
        %v1730 = vpop.f32.mrf.mxu0
        %v1731 = vpop.f32.mrf.mxu0
        %v1732 = vadd.f32 0.0, %v1731
        %v1733 = vpop.f32.mrf.mxu0
        %1734 = vmatprep.mubr.bf16.mxu0 0
        %1735 = vmatmul.mubr.bf16.gmra.mxu0 %v1579
        %v1736 = vpop.f32.mrf.mxu0
        %v1737 = vadd.f32 0.0, %v1736
        %v1738 = vpop.f32.mrf.mxu0
        %v1739 = vpop.f32.mrf.mxu0
        %v1740 = vadd.f32 0.0, %v1739
        %v1741 = vpop.f32.mrf.mxu0
        %1742 = vmatprep.mubr.bf16.mxu0 0
        %1743 = vmatmul.mubr.bf16.gmra.mxu0 %v1580
        %v1744 = vpop.f32.mrf.mxu0
        %v1745 = vadd.f32 0.0, %v1744
        %v1746 = vpop.f32.mrf.mxu0
        %v1747 = vpop.f32.mrf.mxu0
        %v1748 = vadd.f32 0.0, %v1747
        %v1749 = vpop.f32.mrf.mxu0
        %1750 = vmatprep.mubr.bf16.mxu0 0
        %1751 = vmatmul.mubr.bf16.gmra.mxu0 %v1581
        %v1752 = vpop.f32.mrf.mxu0
        %v1753 = vadd.f32 0.0, %v1752
        %v1754 = vpop.f32.mrf.mxu0
        %v1755 = vpop.f32.mrf.mxu0
        %v1756 = vadd.f32 0.0, %v1755
        %v1757 = vpop.f32.mrf.mxu0
        %1758 = vmatprep.mubr.bf16.mxu0 0
        %1759 = vmatmul.mubr.bf16.gmra.mxu0 %v1582
        %v1760 = vpop.f32.mrf.mxu0
        %v1761 = vadd.f32 0.0, %v1760
        %v1762 = vpop.f32.mrf.mxu0
        %v1763 = vpop.f32.mrf.mxu0
        %v1764 = vadd.f32 0.0, %v1763
        %v1765 = vpop.f32.mrf.mxu0
        %1766 = vmatprep.mubr.bf16.mxu0 0
        %1767 = vmatmul.mubr.bf16.gmra.mxu0 %v1583
        %v1768 = vpop.f32.mrf.mxu0
        %v1769 = vadd.f32 0.0, %v1768
        %v1770 = vpop.f32.mrf.mxu0
        %v1771 = vpop.f32.mrf.mxu0
        %v1772 = vadd.f32 0.0, %v1771
        %v1773 = vpop.f32.mrf.mxu0
        %1774 = vmatprep.mubr.bf16.mxu0 0
        %1775 = vmatmul.mubr.bf16.gmra.mxu0 %v1584
        %v1776 = vpop.f32.mrf.mxu0
        %v1777 = vadd.f32 0.0, %v1776
        %v1778 = vpop.f32.mrf.mxu0
        %v1779 = vpop.f32.mrf.mxu0
        %v1780 = vadd.f32 0.0, %v1779
        %v1781 = vpop.f32.mrf.mxu0
        %1782 = vmatprep.mubr.bf16.mxu0 0
        %1783 = vmatmul.mubr.bf16.gmra.mxu0 %v1585
        %v1784 = vpop.f32.mrf.mxu0
        %v1785 = vadd.f32 0.0, %v1784
        %v1786 = vpop.f32.mrf.mxu0
        %v1787 = vpop.f32.mrf.mxu0
        %v1788 = vadd.f32 0.0, %v1787
        %v1789 = vpop.f32.mrf.mxu0
        %1790 = vmatprep.mubr.bf16.mxu0 0
        %1791 = vmatmul.mubr.bf16.gmra.mxu0 %v1586
        %v1792 = vpop.f32.mrf.mxu0
        %v1793 = vadd.f32 0.0, %v1792
        %v1794 = vpop.f32.mrf.mxu0
        %v1795 = vpop.f32.mrf.mxu0
        %v1796 = vadd.f32 0.0, %v1795
        %v1797 = vpop.f32.mrf.mxu0
        %1798 = vmatprep.mubr.bf16.mxu0 0
        %1799 = vmatmul.mubr.bf16.gmra.mxu0 %v1587
        %v1800 = vpop.f32.mrf.mxu0
        %v1801 = vadd.f32 0.0, %v1800
        %v1802 = vpop.f32.mrf.mxu0
        %v1803 = vpop.f32.mrf.mxu0
        %v1804 = vadd.f32 0.0, %v1803
        %v1805 = vpop.f32.mrf.mxu0
        %1806 = vmatprep.mubr.bf16.mxu0 0
        %1807 = vmatmul.mubr.bf16.gmra.mxu0 %v1588
        %v1808 = vpop.f32.mrf.mxu0
        %v1809 = vadd.f32 0.0, %v1808
        %v1810 = vpop.f32.mrf.mxu0
        %v1811 = vpop.f32.mrf.mxu0
        %v1812 = vadd.f32 0.0, %v1811
        %v1813 = vpop.f32.mrf.mxu0
        %1814 = vdwg.mxu0
        %v1831 = vunpack.c.l.b16 %v693
        %v1832 = vunpack.c.l.b16 %v694
        %v1833 = vunpack.c.l.b16 %v695
        %v1834 = vunpack.c.l.b16 %v696
        %v1835 = vunpack.c.l.b16 %v697
        %v1836 = vunpack.c.l.b16 %v698
        %v1837 = vunpack.c.l.b16 %v699
        %v1838 = vunpack.c.l.b16 %v700
        %v1839 = vunpack.c.l.b16 %v701
        %v1840 = vunpack.c.l.b16 %v702
        %v1841 = vunpack.c.l.b16 %v703
        %v1842 = vunpack.c.l.b16 %v704
        %v1843 = vunpack.c.l.b16 %v705
        %v1844 = vunpack.c.l.b16 %v706
        %v1845 = vunpack.c.l.b16 %v707
        %v1846 = vunpack.c.l.b16 %v708
        %v1847 = vpack.c.b16 %v1832, %v1831
        %v1848 = vpack.c.b16 %v1834, %v1833
        %v1849 = vpack.c.b16 %v1836, %v1835
        %v1850 = vpack.c.b16 %v1838, %v1837
        %v1851 = vpack.c.b16 %v1840, %v1839
        %v1852 = vpack.c.b16 %v1842, %v1841
        %v1853 = vpack.c.b16 %v1844, %v1843
        %v1854 = vpack.c.b16 %v1846, %v1845
        %1863 = vmatprep.subr.bf16.mxu0 0
        %1864 = vmatpush1.bf16.msra.mxu0 %v1854
        %1865 = vmatprep.subr.bf16.mxu0 0
        %1866 = vmatpush1.bf16.msra.mxu0 %v1853
        %1867 = vmatprep.subr.bf16.mxu0 0
        %1868 = vmatpush1.bf16.msra.mxu0 %v1852
        %1869 = vmatprep.subr.bf16.mxu0 0
        %1870 = vmatpush1.bf16.msra.mxu0 %v1851
        %1871 = vmatprep.subr.bf16.mxu0 0
        %1872 = vmatpush1.bf16.msra.mxu0 %v1850
        %1873 = vmatprep.subr.bf16.mxu0 0
        %1874 = vmatpush1.bf16.msra.mxu0 %v1849
        %1875 = vmatprep.subr.bf16.mxu0 0
        %1876 = vmatpush1.bf16.msra.mxu0 %v1848
        %1877 = vmatprep.subr.bf16.mxu0 0
        %1878 = vmatpush1.bf16.msra.mxu0 %v1847
        %1879 = vmatprep.subr.bf16.mxu0 0
        %1880 = vmatpush2.bf16.msra.mxu0 0
        %1881 = vmatprep.subr.bf16.mxu0 0
        %1882 = vmatpush2.bf16.msra.mxu0 0
        %1883 = vmatprep.subr.bf16.mxu0 0
        %1884 = vmatpush2.bf16.msra.mxu0 0
        %1885 = vmatprep.subr.bf16.mxu0 0
        %1886 = vmatpush2.bf16.msra.mxu0 0
        %1887 = vmatprep.subr.bf16.mxu0 0
        %1888 = vmatpush2.bf16.msra.mxu0 0
        %1889 = vmatprep.subr.bf16.mxu0 0
        %1890 = vmatpush2.bf16.msra.mxu0 0
        %1891 = vmatprep.subr.bf16.mxu0 0
        %1892 = vmatpush2.bf16.msra.mxu0 0
        %1893 = vmatprep.subr.bf16.mxu0 0
        %1894 = vmatpush2.bf16.msra.mxu0 0
        %1895 = vmatprep.mubr.bf16.mxu0 0
        %1896 = vmatmul.mubr.bf16.gmra.mxu0 %v677
        %v1897 = vpop.f32.mrf.mxu0
        %v1898 = vadd.f32 %v1689, %v1897
        %v1899 = vpop.f32.mrf.mxu0
        %v1900 = vpop.f32.mrf.mxu0
        %v1901 = vadd.f32 %v1692, %v1900
        %v1902 = vpop.f32.mrf.mxu0
        %1903 = vmatprep.mubr.bf16.mxu0 0
        %1904 = vmatmul.mubr.bf16.gmra.mxu0 %v678
        %v1905 = vpop.f32.mrf.mxu0
        %v1906 = vadd.f32 %v1697, %v1905
        %v1907 = vpop.f32.mrf.mxu0
        %v1908 = vpop.f32.mrf.mxu0
        %v1909 = vadd.f32 %v1700, %v1908
        %v1910 = vpop.f32.mrf.mxu0
        %1911 = vmatprep.mubr.bf16.mxu0 0
        %1912 = vmatmul.mubr.bf16.gmra.mxu0 %v679
        %v1913 = vpop.f32.mrf.mxu0
        %v1914 = vadd.f32 %v1705, %v1913
        %v1915 = vpop.f32.mrf.mxu0
        %v1916 = vpop.f32.mrf.mxu0
        %v1917 = vadd.f32 %v1708, %v1916
        %v1918 = vpop.f32.mrf.mxu0
        %1919 = vmatprep.mubr.bf16.mxu0 0
        %1920 = vmatmul.mubr.bf16.gmra.mxu0 %v680
        %v1921 = vpop.f32.mrf.mxu0
        %v1922 = vadd.f32 %v1713, %v1921
        %v1923 = vpop.f32.mrf.mxu0
        %v1924 = vpop.f32.mrf.mxu0
        %v1925 = vadd.f32 %v1716, %v1924
        %v1926 = vpop.f32.mrf.mxu0
        %1927 = vmatprep.mubr.bf16.mxu0 0
        %1928 = vmatmul.mubr.bf16.gmra.mxu0 %v681
        %v1929 = vpop.f32.mrf.mxu0
        %v1930 = vadd.f32 %v1721, %v1929
        %v1931 = vpop.f32.mrf.mxu0
        %v1932 = vpop.f32.mrf.mxu0
        %v1933 = vadd.f32 %v1724, %v1932
        %v1934 = vpop.f32.mrf.mxu0
        %1935 = vmatprep.mubr.bf16.mxu0 0
        %1936 = vmatmul.mubr.bf16.gmra.mxu0 %v682
        %v1937 = vpop.f32.mrf.mxu0
        %v1938 = vadd.f32 %v1729, %v1937
        %v1939 = vpop.f32.mrf.mxu0
        %v1940 = vpop.f32.mrf.mxu0
        %v1941 = vadd.f32 %v1732, %v1940
        %v1942 = vpop.f32.mrf.mxu0
        %1943 = vmatprep.mubr.bf16.mxu0 0
        %1944 = vmatmul.mubr.bf16.gmra.mxu0 %v683
        %v1945 = vpop.f32.mrf.mxu0
        %v1946 = vadd.f32 %v1737, %v1945
        %v1947 = vpop.f32.mrf.mxu0
        %v1948 = vpop.f32.mrf.mxu0
        %v1949 = vadd.f32 %v1740, %v1948
        %v1950 = vpop.f32.mrf.mxu0
        %1951 = vmatprep.mubr.bf16.mxu0 0
        %1952 = vmatmul.mubr.bf16.gmra.mxu0 %v684
        %v1953 = vpop.f32.mrf.mxu0
        %v1954 = vadd.f32 %v1745, %v1953
        %v1955 = vpop.f32.mrf.mxu0
        %v1956 = vpop.f32.mrf.mxu0
        %v1957 = vadd.f32 %v1748, %v1956
        %v1958 = vpop.f32.mrf.mxu0
        %1959 = vmatprep.mubr.bf16.mxu0 0
        %1960 = vmatmul.mubr.bf16.gmra.mxu0 %v685
        %v1961 = vpop.f32.mrf.mxu0
        %v1962 = vadd.f32 %v1753, %v1961
        %v1963 = vpop.f32.mrf.mxu0
        %v1964 = vpop.f32.mrf.mxu0
        %v1965 = vadd.f32 %v1756, %v1964
        %v1966 = vpop.f32.mrf.mxu0
        %1967 = vmatprep.mubr.bf16.mxu0 0
        %1968 = vmatmul.mubr.bf16.gmra.mxu0 %v686
        %v1969 = vpop.f32.mrf.mxu0
        %v1970 = vadd.f32 %v1761, %v1969
        %v1971 = vpop.f32.mrf.mxu0
        %v1972 = vpop.f32.mrf.mxu0
        %v1973 = vadd.f32 %v1764, %v1972
        %v1974 = vpop.f32.mrf.mxu0
        %1975 = vmatprep.mubr.bf16.mxu0 0
        %1976 = vmatmul.mubr.bf16.gmra.mxu0 %v687
        %v1977 = vpop.f32.mrf.mxu0
        %v1978 = vadd.f32 %v1769, %v1977
        %v1979 = vpop.f32.mrf.mxu0
        %v1980 = vpop.f32.mrf.mxu0
        %v1981 = vadd.f32 %v1772, %v1980
        %v1982 = vpop.f32.mrf.mxu0
        %1983 = vmatprep.mubr.bf16.mxu0 0
        %1984 = vmatmul.mubr.bf16.gmra.mxu0 %v688
        %v1985 = vpop.f32.mrf.mxu0
        %v1986 = vadd.f32 %v1777, %v1985
        %v1987 = vpop.f32.mrf.mxu0
        %v1988 = vpop.f32.mrf.mxu0
        %v1989 = vadd.f32 %v1780, %v1988
        %v1990 = vpop.f32.mrf.mxu0
        %1991 = vmatprep.mubr.bf16.mxu0 0
        %1992 = vmatmul.mubr.bf16.gmra.mxu0 %v689
        %v1993 = vpop.f32.mrf.mxu0
        %v1994 = vadd.f32 %v1785, %v1993
        %v1995 = vpop.f32.mrf.mxu0
        %v1996 = vpop.f32.mrf.mxu0
        %v1997 = vadd.f32 %v1788, %v1996
        %v1998 = vpop.f32.mrf.mxu0
        %1999 = vmatprep.mubr.bf16.mxu0 0
        %2000 = vmatmul.mubr.bf16.gmra.mxu0 %v690
        %v2001 = vpop.f32.mrf.mxu0
        %v2002 = vadd.f32 %v1793, %v2001
        %v2003 = vpop.f32.mrf.mxu0
        %v2004 = vpop.f32.mrf.mxu0
        %v2005 = vadd.f32 %v1796, %v2004
        %v2006 = vpop.f32.mrf.mxu0
        %2007 = vmatprep.mubr.bf16.mxu0 0
        %2008 = vmatmul.mubr.bf16.gmra.mxu0 %v691
        %v2009 = vpop.f32.mrf.mxu0
        %v2010 = vadd.f32 %v1801, %v2009
        %v2011 = vpop.f32.mrf.mxu0
        %v2012 = vpop.f32.mrf.mxu0
        %v2013 = vadd.f32 %v1804, %v2012
        %v2014 = vpop.f32.mrf.mxu0
        %2015 = vmatprep.mubr.bf16.mxu0 0
        %2016 = vmatmul.mubr.bf16.gmra.mxu0 %v692
        %v2017 = vpop.f32.mrf.mxu0
        %v2018 = vadd.f32 %v1809, %v2017
        %v2019 = vpop.f32.mrf.mxu0
        %v2020 = vpop.f32.mrf.mxu0
        %v2021 = vadd.f32 %v1812, %v2020
        %v2022 = vpop.f32.mrf.mxu0
        %2023 = vdwg.mxu0
        %2024 = vst [vmem:[%s709] sm:$0xff] %v1541
        %2025 = vst [vmem:[%s709 + $0x8] sm:$0xff] %v1542
        %2026 = vst [vmem:[%s709 + $0x10] sm:$0xff] %v1543
        %2027 = vst [vmem:[%s709 + $0x18] sm:$0xff] %v1544
        %2028 = vst [vmem:[%s709 + $0x20] sm:$0xff] %v1545
        %2029 = vst [vmem:[%s709 + $0x28] sm:$0xff] %v1546
        %2030 = vst [vmem:[%s709 + $0x30] sm:$0xff] %v1547
        %2031 = vst [vmem:[%s709 + $0x38] sm:$0xff] %v1548
        %2032 = vst [vmem:[%s709 + $0x40] sm:$0xff] %v1549
        %2033 = vst [vmem:[%s709 + $0x48] sm:$0xff] %v1550
        %2034 = vst [vmem:[%s709 + $0x50] sm:$0xff] %v1551
        %2035 = vst [vmem:[%s709 + $0x58] sm:$0xff] %v1552
        %2036 = vst [vmem:[%s709 + $0x60] sm:$0xff] %v1553
        %2037 = vst [vmem:[%s709 + $0x68] sm:$0xff] %v1554
        %2038 = vst [vmem:[%s709 + $0x70] sm:$0xff] %v1555
        %2039 = vst [vmem:[%s709 + $0x78] sm:$0xff] %v1556
        %2040 = vst [vmem:[%s709 + $0x80] sm:$0xff] %v1557
        %2041 = vst [vmem:[%s709 + $0x88] sm:$0xff] %v1558
        %2042 = vst [vmem:[%s709 + $0x90] sm:$0xff] %v1559
        %2043 = vst [vmem:[%s709 + $0x98] sm:$0xff] %v1560
        %2044 = vst [vmem:[%s709 + $0xa0] sm:$0xff] %v1561
        %2045 = vst [vmem:[%s709 + $0xa8] sm:$0xff] %v1562
        %2046 = vst [vmem:[%s709 + $0xb0] sm:$0xff] %v1563
        %2047 = vst [vmem:[%s709 + $0xb8] sm:$0xff] %v1564
        %2048 = vst [vmem:[%s709 + $0xc0] sm:$0xff] %v1565
        %2049 = vst [vmem:[%s709 + $0xc8] sm:$0xff] %v1566
        %2050 = vst [vmem:[%s709 + $0xd0] sm:$0xff] %v1567
        %2051 = vst [vmem:[%s709 + $0xd8] sm:$0xff] %v1568
        %2052 = vst [vmem:[%s709 + $0xe0] sm:$0xff] %v1569
        %2053 = vst [vmem:[%s709 + $0xe8] sm:$0xff] %v1570
        %2054 = vst [vmem:[%s709 + $0xf0] sm:$0xff] %v1571
        %2055 = vst [vmem:[%s709 + $0xf8] sm:$0xff] %v1572
        %v2056 = vld [vmem:[#allocation2] sm:$0xff]
        %v2057 = vld [vmem:[#allocation2 + $0x8] sm:$0xff]
        %v2058 = vld [vmem:[#allocation2 + $0x10] sm:$0xff]
        %v2059 = vld [vmem:[#allocation2 + $0x18] sm:$0xff]
        %v2060 = vld [vmem:[#allocation2 + $0x20] sm:$0xff]
        %v2061 = vld [vmem:[#allocation2 + $0x28] sm:$0xff]
        %v2062 = vld [vmem:[#allocation2 + $0x30] sm:$0xff]
        %v2063 = vld [vmem:[#allocation2 + $0x38] sm:$0xff]
        %v2064 = vld [vmem:[#allocation2 + $0x40] sm:$0xff]
        %v2065 = vld [vmem:[#allocation2 + $0x48] sm:$0xff]
        %v2066 = vld [vmem:[#allocation2 + $0x50] sm:$0xff]
        %v2067 = vld [vmem:[#allocation2 + $0x58] sm:$0xff]
        %v2068 = vld [vmem:[#allocation2 + $0x60] sm:$0xff]
        %v2069 = vld [vmem:[#allocation2 + $0x68] sm:$0xff]
        %v2070 = vld [vmem:[#allocation2 + $0x70] sm:$0xff]
        %v2071 = vld [vmem:[#allocation2 + $0x78] sm:$0xff]
        %v2072 = vld [vmem:[#allocation2 + $0x80] sm:$0xff]
        %v2073 = vld [vmem:[#allocation2 + $0x88] sm:$0xff]
        %v2074 = vld [vmem:[#allocation2 + $0x90] sm:$0xff]
        %v2075 = vld [vmem:[#allocation2 + $0x98] sm:$0xff]
        %v2076 = vld [vmem:[#allocation2 + $0xa0] sm:$0xff]
        %v2077 = vld [vmem:[#allocation2 + $0xa8] sm:$0xff]
        %v2078 = vld [vmem:[#allocation2 + $0xb0] sm:$0xff]
        %v2079 = vld [vmem:[#allocation2 + $0xb8] sm:$0xff]
        %v2080 = vld [vmem:[#allocation2 + $0xc0] sm:$0xff]
        %v2081 = vld [vmem:[#allocation2 + $0xc8] sm:$0xff]
        %v2082 = vld [vmem:[#allocation2 + $0xd0] sm:$0xff]
        %v2083 = vld [vmem:[#allocation2 + $0xd8] sm:$0xff]
        %v2084 = vld [vmem:[#allocation2 + $0xe0] sm:$0xff]
        %v2085 = vld [vmem:[#allocation2 + $0xe8] sm:$0xff]
        %v2086 = vld [vmem:[#allocation2 + $0xf0] sm:$0xff]
        %v2087 = vld [vmem:[#allocation2 + $0xf8] sm:$0xff]
        %v2088 = vld [vmem:[%s774] sm:$0xff]
        %v2089 = vld [vmem:[%s774 + $0x8] sm:$0xff]
        %v2090 = vld [vmem:[%s774 + $0x10] sm:$0xff]
        %v2091 = vld [vmem:[%s774 + $0x18] sm:$0xff]
        %v2092 = vld [vmem:[%s774 + $0x20] sm:$0xff]
        %v2093 = vld [vmem:[%s774 + $0x28] sm:$0xff]
        %v2094 = vld [vmem:[%s774 + $0x30] sm:$0xff]
        %v2095 = vld [vmem:[%s774 + $0x38] sm:$0xff]
        %v2096 = vld [vmem:[%s774 + $0x40] sm:$0xff]
        %v2097 = vld [vmem:[%s774 + $0x48] sm:$0xff]
        %v2098 = vld [vmem:[%s774 + $0x50] sm:$0xff]
        %v2099 = vld [vmem:[%s774 + $0x58] sm:$0xff]
        %v2100 = vld [vmem:[%s774 + $0x60] sm:$0xff]
        %v2101 = vld [vmem:[%s774 + $0x68] sm:$0xff]
        %v2102 = vld [vmem:[%s774 + $0x70] sm:$0xff]
        %v2103 = vld [vmem:[%s774 + $0x78] sm:$0xff]
        %v2104 = vld [vmem:[%s774 + $0x80] sm:$0xff]
        %v2105 = vld [vmem:[%s774 + $0x88] sm:$0xff]
        %v2106 = vld [vmem:[%s774 + $0x90] sm:$0xff]
        %v2107 = vld [vmem:[%s774 + $0x98] sm:$0xff]
        %v2108 = vld [vmem:[%s774 + $0xa0] sm:$0xff]
        %v2109 = vld [vmem:[%s774 + $0xa8] sm:$0xff]
        %v2110 = vld [vmem:[%s774 + $0xb0] sm:$0xff]
        %v2111 = vld [vmem:[%s774 + $0xb8] sm:$0xff]
        %v2112 = vld [vmem:[%s774 + $0xc0] sm:$0xff]
        %v2113 = vld [vmem:[%s774 + $0xc8] sm:$0xff]
        %v2114 = vld [vmem:[%s774 + $0xd0] sm:$0xff]
        %v2115 = vld [vmem:[%s774 + $0xd8] sm:$0xff]
        %v2116 = vld [vmem:[%s774 + $0xe0] sm:$0xff]
        %v2117 = vld [vmem:[%s774 + $0xe8] sm:$0xff]
        %v2118 = vld [vmem:[%s774 + $0xf0] sm:$0xff]
        %v2119 = vld [vmem:[%s774 + $0xf8] sm:$0xff]
        %v2120 = vmax.f32 %v2056, %v2088
        %v2121 = vmax.f32 %v2057, %v2089
        %v2122 = vmax.f32 %v2058, %v2090
        %v2123 = vmax.f32 %v2059, %v2091
        %v2124 = vmax.f32 %v2060, %v2092
        %v2125 = vmax.f32 %v2061, %v2093
        %v2126 = vmax.f32 %v2062, %v2094
        %v2127 = vmax.f32 %v2063, %v2095
        %v2128 = vmax.f32 %v2064, %v2096
        %v2129 = vmax.f32 %v2065, %v2097
        %v2130 = vmax.f32 %v2066, %v2098
        %v2131 = vmax.f32 %v2067, %v2099
        %v2132 = vmax.f32 %v2068, %v2100
        %v2133 = vmax.f32 %v2069, %v2101
        %v2134 = vmax.f32 %v2070, %v2102
        %v2135 = vmax.f32 %v2071, %v2103
        %v2136 = vmax.f32 %v2072, %v2104
        %v2137 = vmax.f32 %v2073, %v2105
        %v2138 = vmax.f32 %v2074, %v2106
        %v2139 = vmax.f32 %v2075, %v2107
        %v2140 = vmax.f32 %v2076, %v2108
        %v2141 = vmax.f32 %v2077, %v2109
        %v2142 = vmax.f32 %v2078, %v2110
        %v2143 = vmax.f32 %v2079, %v2111
        %v2144 = vmax.f32 %v2080, %v2112
        %v2145 = vmax.f32 %v2081, %v2113
        %v2146 = vmax.f32 %v2082, %v2114
        %v2147 = vmax.f32 %v2083, %v2115
        %v2148 = vmax.f32 %v2084, %v2116
        %v2149 = vmax.f32 %v2085, %v2117
        %v2150 = vmax.f32 %v2086, %v2118
        %v2151 = vmax.f32 %v2087, %v2119
        %v2152 = vld [vmem:[%s709] sm:$0xff]
        %v2153 = vld [vmem:[%s709 + $0x8] sm:$0xff]
        %v2154 = vld [vmem:[%s709 + $0x10] sm:$0xff]
        %v2155 = vld [vmem:[%s709 + $0x18] sm:$0xff]
        %v2156 = vld [vmem:[%s709 + $0x20] sm:$0xff]
        %v2157 = vld [vmem:[%s709 + $0x28] sm:$0xff]
        %v2158 = vld [vmem:[%s709 + $0x30] sm:$0xff]
        %v2159 = vld [vmem:[%s709 + $0x38] sm:$0xff]
        %v2160 = vld [vmem:[%s709 + $0x40] sm:$0xff]
        %v2161 = vld [vmem:[%s709 + $0x48] sm:$0xff]
        %v2162 = vld [vmem:[%s709 + $0x50] sm:$0xff]
        %v2163 = vld [vmem:[%s709 + $0x58] sm:$0xff]
        %v2164 = vld [vmem:[%s709 + $0x60] sm:$0xff]
        %v2165 = vld [vmem:[%s709 + $0x68] sm:$0xff]
        %v2166 = vld [vmem:[%s709 + $0x70] sm:$0xff]
        %v2167 = vld [vmem:[%s709 + $0x78] sm:$0xff]
        %v2168 = vld [vmem:[%s709 + $0x80] sm:$0xff]
        %v2169 = vld [vmem:[%s709 + $0x88] sm:$0xff]
        %v2170 = vld [vmem:[%s709 + $0x90] sm:$0xff]
        %v2171 = vld [vmem:[%s709 + $0x98] sm:$0xff]
        %v2172 = vld [vmem:[%s709 + $0xa0] sm:$0xff]
        %v2173 = vld [vmem:[%s709 + $0xa8] sm:$0xff]
        %v2174 = vld [vmem:[%s709 + $0xb0] sm:$0xff]
        %v2175 = vld [vmem:[%s709 + $0xb8] sm:$0xff]
        %v2176 = vld [vmem:[%s709 + $0xc0] sm:$0xff]
        %v2177 = vld [vmem:[%s709 + $0xc8] sm:$0xff]
        %v2178 = vld [vmem:[%s709 + $0xd0] sm:$0xff]
        %v2179 = vld [vmem:[%s709 + $0xd8] sm:$0xff]
        %v2180 = vld [vmem:[%s709 + $0xe0] sm:$0xff]
        %v2181 = vld [vmem:[%s709 + $0xe8] sm:$0xff]
        %v2182 = vld [vmem:[%s709 + $0xf0] sm:$0xff]
        %v2183 = vld [vmem:[%s709 + $0xf8] sm:$0xff]
        %v2184 = vmax.f32 %v2120, %v2152
        %v2185 = vmax.f32 %v2121, %v2153
        %v2186 = vmax.f32 %v2122, %v2154
        %v2187 = vmax.f32 %v2123, %v2155
        %v2188 = vmax.f32 %v2124, %v2156
        %v2189 = vmax.f32 %v2125, %v2157
        %v2190 = vmax.f32 %v2126, %v2158
        %v2191 = vmax.f32 %v2127, %v2159
        %v2192 = vmax.f32 %v2128, %v2160
        %v2193 = vmax.f32 %v2129, %v2161
        %v2194 = vmax.f32 %v2130, %v2162
        %v2195 = vmax.f32 %v2131, %v2163
        %v2196 = vmax.f32 %v2132, %v2164
        %v2197 = vmax.f32 %v2133, %v2165
        %v2198 = vmax.f32 %v2134, %v2166
        %v2199 = vmax.f32 %v2135, %v2167
        %v2200 = vmax.f32 %v2136, %v2168
        %v2201 = vmax.f32 %v2137, %v2169
        %v2202 = vmax.f32 %v2138, %v2170
        %v2203 = vmax.f32 %v2139, %v2171
        %v2204 = vmax.f32 %v2140, %v2172
        %v2205 = vmax.f32 %v2141, %v2173
        %v2206 = vmax.f32 %v2142, %v2174
        %v2207 = vmax.f32 %v2143, %v2175
        %v2208 = vmax.f32 %v2144, %v2176
        %v2209 = vmax.f32 %v2145, %v2177
        %v2210 = vmax.f32 %v2146, %v2178
        %v2211 = vmax.f32 %v2147, %v2179
        %v2212 = vmax.f32 %v2148, %v2180
        %v2213 = vmax.f32 %v2149, %v2181
        %v2214 = vmax.f32 %v2150, %v2182
        %v2215 = vmax.f32 %v2151, %v2183
        %v2216 = vld [vmem:[%s903] sm:$0xff]
        %v2217 = vld [vmem:[%s903 + $0x8] sm:$0xff]
        %v2218 = vld [vmem:[%s903 + $0x10] sm:$0xff]
        %v2219 = vld [vmem:[%s903 + $0x18] sm:$0xff]
        %v2220 = vld [vmem:[%s903 + $0x20] sm:$0xff]
        %v2221 = vld [vmem:[%s903 + $0x28] sm:$0xff]
        %v2222 = vld [vmem:[%s903 + $0x30] sm:$0xff]
        %v2223 = vld [vmem:[%s903 + $0x38] sm:$0xff]
        %v2224 = vld [vmem:[%s903 + $0x40] sm:$0xff]
        %v2225 = vld [vmem:[%s903 + $0x48] sm:$0xff]
        %v2226 = vld [vmem:[%s903 + $0x50] sm:$0xff]
        %v2227 = vld [vmem:[%s903 + $0x58] sm:$0xff]
        %v2228 = vld [vmem:[%s903 + $0x60] sm:$0xff]
        %v2229 = vld [vmem:[%s903 + $0x68] sm:$0xff]
        %v2230 = vld [vmem:[%s903 + $0x70] sm:$0xff]
        %v2231 = vld [vmem:[%s903 + $0x78] sm:$0xff]
        %v2232 = vld [vmem:[%s903 + $0x80] sm:$0xff]
        %v2233 = vld [vmem:[%s903 + $0x88] sm:$0xff]
        %v2234 = vld [vmem:[%s903 + $0x90] sm:$0xff]
        %v2235 = vld [vmem:[%s903 + $0x98] sm:$0xff]
        %v2236 = vld [vmem:[%s903 + $0xa0] sm:$0xff]
        %v2237 = vld [vmem:[%s903 + $0xa8] sm:$0xff]
        %v2238 = vld [vmem:[%s903 + $0xb0] sm:$0xff]
        %v2239 = vld [vmem:[%s903 + $0xb8] sm:$0xff]
        %v2240 = vld [vmem:[%s903 + $0xc0] sm:$0xff]
        %v2241 = vld [vmem:[%s903 + $0xc8] sm:$0xff]
        %v2242 = vld [vmem:[%s903 + $0xd0] sm:$0xff]
        %v2243 = vld [vmem:[%s903 + $0xd8] sm:$0xff]
        %v2244 = vld [vmem:[%s903 + $0xe0] sm:$0xff]
        %v2245 = vld [vmem:[%s903 + $0xe8] sm:$0xff]
        %v2246 = vld [vmem:[%s903 + $0xf0] sm:$0xff]
        %v2247 = vld [vmem:[%s903 + $0xf8] sm:$0xff]
        %v2248 = vmax.f32 %v2184, %v2216
        %v2249 = vmax.f32 %v2185, %v2217
        %v2250 = vmax.f32 %v2186, %v2218
        %v2251 = vmax.f32 %v2187, %v2219
        %v2252 = vmax.f32 %v2188, %v2220
        %v2253 = vmax.f32 %v2189, %v2221
        %v2254 = vmax.f32 %v2190, %v2222
        %v2255 = vmax.f32 %v2191, %v2223
        %v2256 = vmax.f32 %v2192, %v2224
        %v2257 = vmax.f32 %v2193, %v2225
        %v2258 = vmax.f32 %v2194, %v2226
        %v2259 = vmax.f32 %v2195, %v2227
        %v2260 = vmax.f32 %v2196, %v2228
        %v2261 = vmax.f32 %v2197, %v2229
        %v2262 = vmax.f32 %v2198, %v2230
        %v2263 = vmax.f32 %v2199, %v2231
        %v2264 = vmax.f32 %v2200, %v2232
        %v2265 = vmax.f32 %v2201, %v2233
        %v2266 = vmax.f32 %v2202, %v2234
        %v2267 = vmax.f32 %v2203, %v2235
        %v2268 = vmax.f32 %v2204, %v2236
        %v2269 = vmax.f32 %v2205, %v2237
        %v2270 = vmax.f32 %v2206, %v2238
        %v2271 = vmax.f32 %v2207, %v2239
        %v2272 = vmax.f32 %v2208, %v2240
        %v2273 = vmax.f32 %v2209, %v2241
        %v2274 = vmax.f32 %v2210, %v2242
        %v2275 = vmax.f32 %v2211, %v2243
        %v2276 = vmax.f32 %v2212, %v2244
        %v2277 = vmax.f32 %v2213, %v2245
        %v2278 = vmax.f32 %v2214, %v2246
        %v2279 = vmax.f32 %v2215, %v2247
        %v2280 = vld [vmem:[%s968] sm:$0xff]
        %v2281 = vld [vmem:[%s968 + $0x8] sm:$0xff]
        %v2282 = vld [vmem:[%s968 + $0x10] sm:$0xff]
        %v2283 = vld [vmem:[%s968 + $0x18] sm:$0xff]
        %v2284 = vld [vmem:[%s968 + $0x20] sm:$0xff]
        %v2285 = vld [vmem:[%s968 + $0x28] sm:$0xff]
        %v2286 = vld [vmem:[%s968 + $0x30] sm:$0xff]
        %v2287 = vld [vmem:[%s968 + $0x38] sm:$0xff]
        %v2288 = vld [vmem:[%s968 + $0x40] sm:$0xff]
        %v2289 = vld [vmem:[%s968 + $0x48] sm:$0xff]
        %v2290 = vld [vmem:[%s968 + $0x50] sm:$0xff]
        %v2291 = vld [vmem:[%s968 + $0x58] sm:$0xff]
        %v2292 = vld [vmem:[%s968 + $0x60] sm:$0xff]
        %v2293 = vld [vmem:[%s968 + $0x68] sm:$0xff]
        %v2294 = vld [vmem:[%s968 + $0x70] sm:$0xff]
        %v2295 = vld [vmem:[%s968 + $0x78] sm:$0xff]
        %v2296 = vld [vmem:[%s968 + $0x80] sm:$0xff]
        %v2297 = vld [vmem:[%s968 + $0x88] sm:$0xff]
        %v2298 = vld [vmem:[%s968 + $0x90] sm:$0xff]
        %v2299 = vld [vmem:[%s968 + $0x98] sm:$0xff]
        %v2300 = vld [vmem:[%s968 + $0xa0] sm:$0xff]
        %v2301 = vld [vmem:[%s968 + $0xa8] sm:$0xff]
        %v2302 = vld [vmem:[%s968 + $0xb0] sm:$0xff]
        %v2303 = vld [vmem:[%s968 + $0xb8] sm:$0xff]
        %v2304 = vld [vmem:[%s968 + $0xc0] sm:$0xff]
        %v2305 = vld [vmem:[%s968 + $0xc8] sm:$0xff]
        %v2306 = vld [vmem:[%s968 + $0xd0] sm:$0xff]
        %v2307 = vld [vmem:[%s968 + $0xd8] sm:$0xff]
        %v2308 = vld [vmem:[%s968 + $0xe0] sm:$0xff]
        %v2309 = vld [vmem:[%s968 + $0xe8] sm:$0xff]
        %v2310 = vld [vmem:[%s968 + $0xf0] sm:$0xff]
        %v2311 = vld [vmem:[%s968 + $0xf8] sm:$0xff]
        %v2312 = vmax.f32 %v2248, %v2280
        %v2313 = vmax.f32 %v2249, %v2281
        %v2314 = vmax.f32 %v2250, %v2282
        %v2315 = vmax.f32 %v2251, %v2283
        %v2316 = vmax.f32 %v2252, %v2284
        %v2317 = vmax.f32 %v2253, %v2285
        %v2318 = vmax.f32 %v2254, %v2286
        %v2319 = vmax.f32 %v2255, %v2287
        %v2320 = vmax.f32 %v2256, %v2288
        %v2321 = vmax.f32 %v2257, %v2289
        %v2322 = vmax.f32 %v2258, %v2290
        %v2323 = vmax.f32 %v2259, %v2291
        %v2324 = vmax.f32 %v2260, %v2292
        %v2325 = vmax.f32 %v2261, %v2293
        %v2326 = vmax.f32 %v2262, %v2294
        %v2327 = vmax.f32 %v2263, %v2295
        %v2328 = vmax.f32 %v2264, %v2296
        %v2329 = vmax.f32 %v2265, %v2297
        %v2330 = vmax.f32 %v2266, %v2298
        %v2331 = vmax.f32 %v2267, %v2299
        %v2332 = vmax.f32 %v2268, %v2300
        %v2333 = vmax.f32 %v2269, %v2301
        %v2334 = vmax.f32 %v2270, %v2302
        %v2335 = vmax.f32 %v2271, %v2303
        %v2336 = vmax.f32 %v2272, %v2304
        %v2337 = vmax.f32 %v2273, %v2305
        %v2338 = vmax.f32 %v2274, %v2306
        %v2339 = vmax.f32 %v2275, %v2307
        %v2340 = vmax.f32 %v2276, %v2308
        %v2341 = vmax.f32 %v2277, %v2309
        %v2342 = vmax.f32 %v2278, %v2310
        %v2343 = vmax.f32 %v2279, %v2311
        %v2344 = vrot.slane %v2312, 1
        %v2345 = vrot.slane %v2314, 1
        %v2346 = vrot.slane %v2316, 1
        %v2347 = vrot.slane %v2318, 1
        %v2348 = vrot.slane %v2320, 1
        %v2349 = vrot.slane %v2322, 1
        %v2350 = vrot.slane %v2324, 1
        %v2351 = vrot.slane %v2326, 1
        %v2352 = vrot.slane %v2328, 1
        %v2353 = vrot.slane %v2330, 1
        %v2354 = vrot.slane %v2332, 1
        %v2355 = vrot.slane %v2334, 1
        %v2356 = vrot.slane %v2336, 1
        %v2357 = vrot.slane %v2338, 1
        %v2358 = vrot.slane %v2340, 1
        %v2359 = vrot.slane %v2342, 1
        %v2360 = vrot.slane %v2313, 1
        %v2361 = vrot.slane %v2315, 1
        %v2362 = vrot.slane %v2317, 1
        %v2363 = vrot.slane %v2319, 1
        %v2364 = vrot.slane %v2321, 1
        %v2365 = vrot.slane %v2323, 1
        %v2366 = vrot.slane %v2325, 1
        %v2367 = vrot.slane %v2327, 1
        %v2368 = vrot.slane %v2329, 1
        %v2369 = vrot.slane %v2331, 1
        %v2370 = vrot.slane %v2333, 1
        %v2371 = vrot.slane %v2335, 1
        %v2372 = vrot.slane %v2337, 1
        %v2373 = vrot.slane %v2339, 1
        %v2374 = vrot.slane %v2341, 1
        %v2375 = vrot.slane %v2343, 1
        %v2376 = vsel %vm1067, %v2344, %v2360
        %v2377 = vsel %vm1067, %v2345, %v2361
        %v2378 = vsel %vm1067, %v2346, %v2362
        %v2379 = vsel %vm1067, %v2347, %v2363
        %v2380 = vsel %vm1067, %v2348, %v2364
        %v2381 = vsel %vm1067, %v2349, %v2365
        %v2382 = vsel %vm1067, %v2350, %v2366
        %v2383 = vsel %vm1067, %v2351, %v2367
        %v2384 = vsel %vm1067, %v2352, %v2368
        %v2385 = vsel %vm1067, %v2353, %v2369
        %v2386 = vsel %vm1067, %v2354, %v2370
        %v2387 = vsel %vm1067, %v2355, %v2371
        %v2388 = vsel %vm1067, %v2356, %v2372
        %v2389 = vsel %vm1067, %v2357, %v2373
        %v2390 = vsel %vm1067, %v2358, %v2374
        %v2391 = vsel %vm1067, %v2359, %v2375
        %v2392 = vsel %vm1067, %v2360, %v2344
        %v2393 = vsel %vm1067, %v2361, %v2345
        %v2394 = vsel %vm1067, %v2362, %v2346
        %v2395 = vsel %vm1067, %v2363, %v2347
        %v2396 = vsel %vm1067, %v2364, %v2348
        %v2397 = vsel %vm1067, %v2365, %v2349
        %v2398 = vsel %vm1067, %v2366, %v2350
        %v2399 = vsel %vm1067, %v2367, %v2351
        %v2400 = vsel %vm1067, %v2368, %v2352
        %v2401 = vsel %vm1067, %v2369, %v2353
        %v2402 = vsel %vm1067, %v2370, %v2354
        %v2403 = vsel %vm1067, %v2371, %v2355
        %v2404 = vsel %vm1067, %v2372, %v2356
        %v2405 = vsel %vm1067, %v2373, %v2357
        %v2406 = vsel %vm1067, %v2374, %v2358
        %v2407 = vsel %vm1067, %v2375, %v2359
        %v2408 = vsel %vm1102, %v2376, 0.0
        %v2409 = vsel %vm1103, %v2392, 0.0
        %v2410 = vsel %vm1102, %v2377, 0.0
        %v2411 = vsel %vm1103, %v2393, 0.0
        %v2412 = vsel %vm1102, %v2378, 0.0
        %v2413 = vsel %vm1103, %v2394, 0.0
        %v2414 = vsel %vm1102, %v2379, 0.0
        %v2415 = vsel %vm1103, %v2395, 0.0
        %v2416 = vsel %vm1102, %v2380, 0.0
        %v2417 = vsel %vm1103, %v2396, 0.0
        %v2418 = vsel %vm1102, %v2381, 0.0
        %v2419 = vsel %vm1103, %v2397, 0.0
        %v2420 = vsel %vm1102, %v2382, 0.0
        %v2421 = vsel %vm1103, %v2398, 0.0
        %v2422 = vsel %vm1102, %v2383, 0.0
        %v2423 = vsel %vm1103, %v2399, 0.0
        %v2424 = vsel %vm1102, %v2384, 0.0
        %v2425 = vsel %vm1103, %v2400, 0.0
        %v2426 = vsel %vm1102, %v2385, 0.0
        %v2427 = vsel %vm1103, %v2401, 0.0
        %v2428 = vsel %vm1102, %v2386, 0.0
        %v2429 = vsel %vm1103, %v2402, 0.0
        %v2430 = vsel %vm1102, %v2387, 0.0
        %v2431 = vsel %vm1103, %v2403, 0.0
        %v2432 = vsel %vm1102, %v2388, 0.0
        %v2433 = vsel %vm1103, %v2404, 0.0
        %v2434 = vsel %vm1102, %v2389, 0.0
        %v2435 = vsel %vm1103, %v2405, 0.0
        %v2436 = vsel %vm1102, %v2390, 0.0
        %v2437 = vsel %vm1103, %v2406, 0.0
        %v2438 = vsel %vm1102, %v2391, 0.0
        %v2439 = vsel %vm1103, %v2407, 0.0
        %v2440 = vrot.slane %v2312, 7
        %v2441 = vrot.slane %v2314, 7
        %v2442 = vrot.slane %v2316, 7
        %v2443 = vrot.slane %v2318, 7
        %v2444 = vrot.slane %v2320, 7
        %v2445 = vrot.slane %v2322, 7
        %v2446 = vrot.slane %v2324, 7
        %v2447 = vrot.slane %v2326, 7
        %v2448 = vrot.slane %v2328, 7
        %v2449 = vrot.slane %v2330, 7
        %v2450 = vrot.slane %v2332, 7
        %v2451 = vrot.slane %v2334, 7
        %v2452 = vrot.slane %v2336, 7
        %v2453 = vrot.slane %v2338, 7
        %v2454 = vrot.slane %v2340, 7
        %v2455 = vrot.slane %v2342, 7
        %v2456 = vrot.slane %v2313, 7
        %v2457 = vrot.slane %v2315, 7
        %v2458 = vrot.slane %v2317, 7
        %v2459 = vrot.slane %v2319, 7
        %v2460 = vrot.slane %v2321, 7
        %v2461 = vrot.slane %v2323, 7
        %v2462 = vrot.slane %v2325, 7
        %v2463 = vrot.slane %v2327, 7
        %v2464 = vrot.slane %v2329, 7
        %v2465 = vrot.slane %v2331, 7
        %v2466 = vrot.slane %v2333, 7
        %v2467 = vrot.slane %v2335, 7
        %v2468 = vrot.slane %v2337, 7
        %v2469 = vrot.slane %v2339, 7
        %v2470 = vrot.slane %v2341, 7
        %v2471 = vrot.slane %v2343, 7
        %v2472 = vsel %vm1170, %v2440, %v2456
        %v2473 = vsel %vm1170, %v2441, %v2457
        %v2474 = vsel %vm1170, %v2442, %v2458
        %v2475 = vsel %vm1170, %v2443, %v2459
        %v2476 = vsel %vm1170, %v2444, %v2460
        %v2477 = vsel %vm1170, %v2445, %v2461
        %v2478 = vsel %vm1170, %v2446, %v2462
        %v2479 = vsel %vm1170, %v2447, %v2463
        %v2480 = vsel %vm1170, %v2448, %v2464
        %v2481 = vsel %vm1170, %v2449, %v2465
        %v2482 = vsel %vm1170, %v2450, %v2466
        %v2483 = vsel %vm1170, %v2451, %v2467
        %v2484 = vsel %vm1170, %v2452, %v2468
        %v2485 = vsel %vm1170, %v2453, %v2469
        %v2486 = vsel %vm1170, %v2454, %v2470
        %v2487 = vsel %vm1170, %v2455, %v2471
        %v2488 = vsel %vm1170, %v2456, %v2440
        %v2489 = vsel %vm1170, %v2457, %v2441
        %v2490 = vsel %vm1170, %v2458, %v2442
        %v2491 = vsel %vm1170, %v2459, %v2443
        %v2492 = vsel %vm1170, %v2460, %v2444
        %v2493 = vsel %vm1170, %v2461, %v2445
        %v2494 = vsel %vm1170, %v2462, %v2446
        %v2495 = vsel %vm1170, %v2463, %v2447
        %v2496 = vsel %vm1170, %v2464, %v2448
        %v2497 = vsel %vm1170, %v2465, %v2449
        %v2498 = vsel %vm1170, %v2466, %v2450
        %v2499 = vsel %vm1170, %v2467, %v2451
        %v2500 = vsel %vm1170, %v2468, %v2452
        %v2501 = vsel %vm1170, %v2469, %v2453
        %v2502 = vsel %vm1170, %v2470, %v2454
        %v2503 = vsel %vm1170, %v2471, %v2455
        %v2504 = vsel %vm1205, %v2488, 0.0
        %v2505 = vsel %vm1206, %v2472, 0.0
        %v2506 = vsel %vm1205, %v2489, 0.0
        %v2507 = vsel %vm1206, %v2473, 0.0
        %v2508 = vsel %vm1205, %v2490, 0.0
        %v2509 = vsel %vm1206, %v2474, 0.0
        %v2510 = vsel %vm1205, %v2491, 0.0
        %v2511 = vsel %vm1206, %v2475, 0.0
        %v2512 = vsel %vm1205, %v2492, 0.0
        %v2513 = vsel %vm1206, %v2476, 0.0
        %v2514 = vsel %vm1205, %v2493, 0.0
        %v2515 = vsel %vm1206, %v2477, 0.0
        %v2516 = vsel %vm1205, %v2494, 0.0
        %v2517 = vsel %vm1206, %v2478, 0.0
        %v2518 = vsel %vm1205, %v2495, 0.0
        %v2519 = vsel %vm1206, %v2479, 0.0
        %v2520 = vsel %vm1205, %v2496, 0.0
        %v2521 = vsel %vm1206, %v2480, 0.0
        %v2522 = vsel %vm1205, %v2497, 0.0
        %v2523 = vsel %vm1206, %v2481, 0.0
        %v2524 = vsel %vm1205, %v2498, 0.0
        %v2525 = vsel %vm1206, %v2482, 0.0
        %v2526 = vsel %vm1205, %v2499, 0.0
        %v2527 = vsel %vm1206, %v2483, 0.0
        %v2528 = vsel %vm1205, %v2500, 0.0
        %v2529 = vsel %vm1206, %v2484, 0.0
        %v2530 = vsel %vm1205, %v2501, 0.0
        %v2531 = vsel %vm1206, %v2485, 0.0
        %v2532 = vsel %vm1205, %v2502, 0.0
        %v2533 = vsel %vm1206, %v2486, 0.0
        %v2534 = vsel %vm1205, %v2503, 0.0
        %v2535 = vsel %vm1206, %v2487, 0.0
        %v2536 = vmax.f32 %v2408, %v2504
        %v2537 = vmax.f32 %v2409, %v2505
        %v2538 = vmax.f32 %v2410, %v2506
        %v2539 = vmax.f32 %v2411, %v2507
        %v2540 = vmax.f32 %v2412, %v2508
        %v2541 = vmax.f32 %v2413, %v2509
        %v2542 = vmax.f32 %v2414, %v2510
        %v2543 = vmax.f32 %v2415, %v2511
        %v2544 = vmax.f32 %v2416, %v2512
        %v2545 = vmax.f32 %v2417, %v2513
        %v2546 = vmax.f32 %v2418, %v2514
        %v2547 = vmax.f32 %v2419, %v2515
        %v2548 = vmax.f32 %v2420, %v2516
        %v2549 = vmax.f32 %v2421, %v2517
        %v2550 = vmax.f32 %v2422, %v2518
        %v2551 = vmax.f32 %v2423, %v2519
        %v2552 = vmax.f32 %v2424, %v2520
        %v2553 = vmax.f32 %v2425, %v2521
        %v2554 = vmax.f32 %v2426, %v2522
        %v2555 = vmax.f32 %v2427, %v2523
        %v2556 = vmax.f32 %v2428, %v2524
        %v2557 = vmax.f32 %v2429, %v2525
        %v2558 = vmax.f32 %v2430, %v2526
        %v2559 = vmax.f32 %v2431, %v2527
        %v2560 = vmax.f32 %v2432, %v2528
        %v2561 = vmax.f32 %v2433, %v2529
        %v2562 = vmax.f32 %v2434, %v2530
        %v2563 = vmax.f32 %v2435, %v2531
        %v2564 = vmax.f32 %v2436, %v2532
        %v2565 = vmax.f32 %v2437, %v2533
        %v2566 = vmax.f32 %v2438, %v2534
        %v2567 = vmax.f32 %v2439, %v2535
        %v2568 = vmax.f32 %v2312, %v2536
        %v2569 = vmax.f32 %v2313, %v2537
        %v2570 = vmax.f32 %v2314, %v2538
        %v2571 = vmax.f32 %v2315, %v2539
        %v2572 = vmax.f32 %v2316, %v2540
        %v2573 = vmax.f32 %v2317, %v2541
        %v2574 = vmax.f32 %v2318, %v2542
        %v2575 = vmax.f32 %v2319, %v2543
        %v2576 = vmax.f32 %v2320, %v2544
        %v2577 = vmax.f32 %v2321, %v2545
        %v2578 = vmax.f32 %v2322, %v2546
        %v2579 = vmax.f32 %v2323, %v2547
        %v2580 = vmax.f32 %v2324, %v2548
        %v2581 = vmax.f32 %v2325, %v2549
        %v2582 = vmax.f32 %v2326, %v2550
        %v2583 = vmax.f32 %v2327, %v2551
        %v2584 = vmax.f32 %v2328, %v2552
        %v2585 = vmax.f32 %v2329, %v2553
        %v2586 = vmax.f32 %v2330, %v2554
        %v2587 = vmax.f32 %v2331, %v2555
        %v2588 = vmax.f32 %v2332, %v2556
        %v2589 = vmax.f32 %v2333, %v2557
        %v2590 = vmax.f32 %v2334, %v2558
        %v2591 = vmax.f32 %v2335, %v2559
        %v2592 = vmax.f32 %v2336, %v2560
        %v2593 = vmax.f32 %v2337, %v2561
        %v2594 = vmax.f32 %v2338, %v2562
        %v2595 = vmax.f32 %v2339, %v2563
        %v2596 = vmax.f32 %v2340, %v2564
        %v2597 = vmax.f32 %v2341, %v2565
        %v2598 = vmax.f32 %v2342, %v2566
        %v2599 = vmax.f32 %v2343, %v2567
        %v2600 = vrot.slane %v2312, 2
        %v2601 = vrot.slane %v2314, 2
        %v2602 = vrot.slane %v2316, 2
        %v2603 = vrot.slane %v2318, 2
        %v2604 = vrot.slane %v2320, 2
        %v2605 = vrot.slane %v2322, 2
        %v2606 = vrot.slane %v2324, 2
        %v2607 = vrot.slane %v2326, 2
        %v2608 = vrot.slane %v2328, 2
        %v2609 = vrot.slane %v2330, 2
        %v2610 = vrot.slane %v2332, 2
        %v2611 = vrot.slane %v2334, 2
        %v2612 = vrot.slane %v2336, 2
        %v2613 = vrot.slane %v2338, 2
        %v2614 = vrot.slane %v2340, 2
        %v2615 = vrot.slane %v2342, 2
        %v2616 = vrot.slane %v2313, 2
        %v2617 = vrot.slane %v2315, 2
        %v2618 = vrot.slane %v2317, 2
        %v2619 = vrot.slane %v2319, 2
        %v2620 = vrot.slane %v2321, 2
        %v2621 = vrot.slane %v2323, 2
        %v2622 = vrot.slane %v2325, 2
        %v2623 = vrot.slane %v2327, 2
        %v2624 = vrot.slane %v2329, 2
        %v2625 = vrot.slane %v2331, 2
        %v2626 = vrot.slane %v2333, 2
        %v2627 = vrot.slane %v2335, 2
        %v2628 = vrot.slane %v2337, 2
        %v2629 = vrot.slane %v2339, 2
        %v2630 = vrot.slane %v2341, 2
        %v2631 = vrot.slane %v2343, 2
        %v2632 = vsel %vm1337, %v2600, %v2616
        %v2633 = vsel %vm1337, %v2601, %v2617
        %v2634 = vsel %vm1337, %v2602, %v2618
        %v2635 = vsel %vm1337, %v2603, %v2619
        %v2636 = vsel %vm1337, %v2604, %v2620
        %v2637 = vsel %vm1337, %v2605, %v2621
        %v2638 = vsel %vm1337, %v2606, %v2622
        %v2639 = vsel %vm1337, %v2607, %v2623
        %v2640 = vsel %vm1337, %v2608, %v2624
        %v2641 = vsel %vm1337, %v2609, %v2625
        %v2642 = vsel %vm1337, %v2610, %v2626
        %v2643 = vsel %vm1337, %v2611, %v2627
        %v2644 = vsel %vm1337, %v2612, %v2628
        %v2645 = vsel %vm1337, %v2613, %v2629
        %v2646 = vsel %vm1337, %v2614, %v2630
        %v2647 = vsel %vm1337, %v2615, %v2631
        %v2648 = vsel %vm1337, %v2616, %v2600
        %v2649 = vsel %vm1337, %v2617, %v2601
        %v2650 = vsel %vm1337, %v2618, %v2602
        %v2651 = vsel %vm1337, %v2619, %v2603
        %v2652 = vsel %vm1337, %v2620, %v2604
        %v2653 = vsel %vm1337, %v2621, %v2605
        %v2654 = vsel %vm1337, %v2622, %v2606
        %v2655 = vsel %vm1337, %v2623, %v2607
        %v2656 = vsel %vm1337, %v2624, %v2608
        %v2657 = vsel %vm1337, %v2625, %v2609
        %v2658 = vsel %vm1337, %v2626, %v2610
        %v2659 = vsel %vm1337, %v2627, %v2611
        %v2660 = vsel %vm1337, %v2628, %v2612
        %v2661 = vsel %vm1337, %v2629, %v2613
        %v2662 = vsel %vm1337, %v2630, %v2614
        %v2663 = vsel %vm1337, %v2631, %v2615
        %v2664 = vsel %vm1372, %v2632, 0.0
        %v2665 = vsel %vm1373, %v2648, 0.0
        %v2666 = vsel %vm1372, %v2633, 0.0
        %v2667 = vsel %vm1373, %v2649, 0.0
        %v2668 = vsel %vm1372, %v2634, 0.0
        %v2669 = vsel %vm1373, %v2650, 0.0
        %v2670 = vsel %vm1372, %v2635, 0.0
        %v2671 = vsel %vm1373, %v2651, 0.0
        %v2672 = vsel %vm1372, %v2636, 0.0
        %v2673 = vsel %vm1373, %v2652, 0.0
        %v2674 = vsel %vm1372, %v2637, 0.0
        %v2675 = vsel %vm1373, %v2653, 0.0
        %v2676 = vsel %vm1372, %v2638, 0.0
        %v2677 = vsel %vm1373, %v2654, 0.0
        %v2678 = vsel %vm1372, %v2639, 0.0
        %v2679 = vsel %vm1373, %v2655, 0.0
        %v2680 = vsel %vm1372, %v2640, 0.0
        %v2681 = vsel %vm1373, %v2656, 0.0
        %v2682 = vsel %vm1372, %v2641, 0.0
        %v2683 = vsel %vm1373, %v2657, 0.0
        %v2684 = vsel %vm1372, %v2642, 0.0
        %v2685 = vsel %vm1373, %v2658, 0.0
        %v2686 = vsel %vm1372, %v2643, 0.0
        %v2687 = vsel %vm1373, %v2659, 0.0
        %v2688 = vsel %vm1372, %v2644, 0.0
        %v2689 = vsel %vm1373, %v2660, 0.0
        %v2690 = vsel %vm1372, %v2645, 0.0
        %v2691 = vsel %vm1373, %v2661, 0.0
        %v2692 = vsel %vm1372, %v2646, 0.0
        %v2693 = vsel %vm1373, %v2662, 0.0
        %v2694 = vsel %vm1372, %v2647, 0.0
        %v2695 = vsel %vm1373, %v2663, 0.0
        %v2696 = vrot.slane %v2312, 6
        %v2697 = vrot.slane %v2314, 6
        %v2698 = vrot.slane %v2316, 6
        %v2699 = vrot.slane %v2318, 6
        %v2700 = vrot.slane %v2320, 6
        %v2701 = vrot.slane %v2322, 6
        %v2702 = vrot.slane %v2324, 6
        %v2703 = vrot.slane %v2326, 6
        %v2704 = vrot.slane %v2328, 6
        %v2705 = vrot.slane %v2330, 6
        %v2706 = vrot.slane %v2332, 6
        %v2707 = vrot.slane %v2334, 6
        %v2708 = vrot.slane %v2336, 6
        %v2709 = vrot.slane %v2338, 6
        %v2710 = vrot.slane %v2340, 6
        %v2711 = vrot.slane %v2342, 6
        %v2712 = vrot.slane %v2313, 6
        %v2713 = vrot.slane %v2315, 6
        %v2714 = vrot.slane %v2317, 6
        %v2715 = vrot.slane %v2319, 6
        %v2716 = vrot.slane %v2321, 6
        %v2717 = vrot.slane %v2323, 6
        %v2718 = vrot.slane %v2325, 6
        %v2719 = vrot.slane %v2327, 6
        %v2720 = vrot.slane %v2329, 6
        %v2721 = vrot.slane %v2331, 6
        %v2722 = vrot.slane %v2333, 6
        %v2723 = vrot.slane %v2335, 6
        %v2724 = vrot.slane %v2337, 6
        %v2725 = vrot.slane %v2339, 6
        %v2726 = vrot.slane %v2341, 6
        %v2727 = vrot.slane %v2343, 6
        %v2728 = vsel %vm1440, %v2696, %v2712
        %v2729 = vsel %vm1440, %v2697, %v2713
        %v2730 = vsel %vm1440, %v2698, %v2714
        %v2731 = vsel %vm1440, %v2699, %v2715
        %v2732 = vsel %vm1440, %v2700, %v2716
        %v2733 = vsel %vm1440, %v2701, %v2717
        %v2734 = vsel %vm1440, %v2702, %v2718
        %v2735 = vsel %vm1440, %v2703, %v2719
        %v2736 = vsel %vm1440, %v2704, %v2720
        %v2737 = vsel %vm1440, %v2705, %v2721
        %v2738 = vsel %vm1440, %v2706, %v2722
        %v2739 = vsel %vm1440, %v2707, %v2723
        %v2740 = vsel %vm1440, %v2708, %v2724
        %v2741 = vsel %vm1440, %v2709, %v2725
        %v2742 = vsel %vm1440, %v2710, %v2726
        %v2743 = vsel %vm1440, %v2711, %v2727
        %v2744 = vsel %vm1440, %v2712, %v2696
        %v2745 = vsel %vm1440, %v2713, %v2697
        %v2746 = vsel %vm1440, %v2714, %v2698
        %v2747 = vsel %vm1440, %v2715, %v2699
        %v2748 = vsel %vm1440, %v2716, %v2700
        %v2749 = vsel %vm1440, %v2717, %v2701
        %v2750 = vsel %vm1440, %v2718, %v2702
        %v2751 = vsel %vm1440, %v2719, %v2703
        %v2752 = vsel %vm1440, %v2720, %v2704
        %v2753 = vsel %vm1440, %v2721, %v2705
        %v2754 = vsel %vm1440, %v2722, %v2706
        %v2755 = vsel %vm1440, %v2723, %v2707
        %v2756 = vsel %vm1440, %v2724, %v2708
        %v2757 = vsel %vm1440, %v2725, %v2709
        %v2758 = vsel %vm1440, %v2726, %v2710
        %v2759 = vsel %vm1440, %v2727, %v2711
        %v2760 = vsel %vm1475, %v2744, 0.0
        %v2761 = vsel %vm1476, %v2728, 0.0
        %v2762 = vsel %vm1475, %v2745, 0.0
        %v2763 = vsel %vm1476, %v2729, 0.0
        %v2764 = vsel %vm1475, %v2746, 0.0
        %v2765 = vsel %vm1476, %v2730, 0.0
        %v2766 = vsel %vm1475, %v2747, 0.0
        %v2767 = vsel %vm1476, %v2731, 0.0
        %v2768 = vsel %vm1475, %v2748, 0.0
        %v2769 = vsel %vm1476, %v2732, 0.0
        %v2770 = vsel %vm1475, %v2749, 0.0
        %v2771 = vsel %vm1476, %v2733, 0.0
        %v2772 = vsel %vm1475, %v2750, 0.0
        %v2773 = vsel %vm1476, %v2734, 0.0
        %v2774 = vsel %vm1475, %v2751, 0.0
        %v2775 = vsel %vm1476, %v2735, 0.0
        %v2776 = vsel %vm1475, %v2752, 0.0
        %v2777 = vsel %vm1476, %v2736, 0.0
        %v2778 = vsel %vm1475, %v2753, 0.0
        %v2779 = vsel %vm1476, %v2737, 0.0
        %v2780 = vsel %vm1475, %v2754, 0.0
        %v2781 = vsel %vm1476, %v2738, 0.0
        %v2782 = vsel %vm1475, %v2755, 0.0
        %v2783 = vsel %vm1476, %v2739, 0.0
        %v2784 = vsel %vm1475, %v2756, 0.0
        %v2785 = vsel %vm1476, %v2740, 0.0
        %v2786 = vsel %vm1475, %v2757, 0.0
        %v2787 = vsel %vm1476, %v2741, 0.0
        %v2788 = vsel %vm1475, %v2758, 0.0
        %v2789 = vsel %vm1476, %v2742, 0.0
        %v2790 = vsel %vm1475, %v2759, 0.0
        %v2791 = vsel %vm1476, %v2743, 0.0
        %v2792 = vmax.f32 %v2664, %v2760
        %v2793 = vmax.f32 %v2665, %v2761
        %v2794 = vmax.f32 %v2666, %v2762
        %v2795 = vmax.f32 %v2667, %v2763
        %v2796 = vmax.f32 %v2668, %v2764
        %v2797 = vmax.f32 %v2669, %v2765
        %v2798 = vmax.f32 %v2670, %v2766
        %v2799 = vmax.f32 %v2671, %v2767
        %v2800 = vmax.f32 %v2672, %v2768
        %v2801 = vmax.f32 %v2673, %v2769
        %v2802 = vmax.f32 %v2674, %v2770
        %v2803 = vmax.f32 %v2675, %v2771
        %v2804 = vmax.f32 %v2676, %v2772
        %v2805 = vmax.f32 %v2677, %v2773
        %v2806 = vmax.f32 %v2678, %v2774
        %v2807 = vmax.f32 %v2679, %v2775
        %v2808 = vmax.f32 %v2680, %v2776
        %v2809 = vmax.f32 %v2681, %v2777
        %v2810 = vmax.f32 %v2682, %v2778
        %v2811 = vmax.f32 %v2683, %v2779
        %v2812 = vmax.f32 %v2684, %v2780
        %v2813 = vmax.f32 %v2685, %v2781
        %v2814 = vmax.f32 %v2686, %v2782
        %v2815 = vmax.f32 %v2687, %v2783
        %v2816 = vmax.f32 %v2688, %v2784
        %v2817 = vmax.f32 %v2689, %v2785
        %v2818 = vmax.f32 %v2690, %v2786
        %v2819 = vmax.f32 %v2691, %v2787
        %v2820 = vmax.f32 %v2692, %v2788
        %v2821 = vmax.f32 %v2693, %v2789
        %v2822 = vmax.f32 %v2694, %v2790
        %v2823 = vmax.f32 %v2695, %v2791
        %v2824 = vmax.f32 %v2568, %v2792
        %v2825 = vmax.f32 %v2569, %v2793
        %v2826 = vmax.f32 %v2570, %v2794
        %v2827 = vmax.f32 %v2571, %v2795
        %v2828 = vmax.f32 %v2572, %v2796
        %v2829 = vmax.f32 %v2573, %v2797
        %v2830 = vmax.f32 %v2574, %v2798
        %v2831 = vmax.f32 %v2575, %v2799
        %v2832 = vmax.f32 %v2576, %v2800
        %v2833 = vmax.f32 %v2577, %v2801
        %v2834 = vmax.f32 %v2578, %v2802
        %v2835 = vmax.f32 %v2579, %v2803
        %v2836 = vmax.f32 %v2580, %v2804
        %v2837 = vmax.f32 %v2581, %v2805
        %v2838 = vmax.f32 %v2582, %v2806
        %v2839 = vmax.f32 %v2583, %v2807
        %v2840 = vmax.f32 %v2584, %v2808
        %v2841 = vmax.f32 %v2585, %v2809
        %v2842 = vmax.f32 %v2586, %v2810
        %v2843 = vmax.f32 %v2587, %v2811
        %v2844 = vmax.f32 %v2588, %v2812
        %v2845 = vmax.f32 %v2589, %v2813
        %v2846 = vmax.f32 %v2590, %v2814
        %v2847 = vmax.f32 %v2591, %v2815
        %v2848 = vmax.f32 %v2592, %v2816
        %v2849 = vmax.f32 %v2593, %v2817
        %v2850 = vmax.f32 %v2594, %v2818
        %v2851 = vmax.f32 %v2595, %v2819
        %v2852 = vmax.f32 %v2596, %v2820
        %v2853 = vmax.f32 %v2597, %v2821
        %v2854 = vmax.f32 %v2598, %v2822
        %v2855 = vmax.f32 %v2599, %v2823
        %v2856 = vpack.c.bf16 %v2825, %v2824
        %v2857 = vpack.c.bf16 %v2827, %v2826
        %v2858 = vpack.c.bf16 %v2829, %v2828
        %v2859 = vpack.c.bf16 %v2831, %v2830
        %v2860 = vpack.c.bf16 %v2833, %v2832
        %v2861 = vpack.c.bf16 %v2835, %v2834
        %v2862 = vpack.c.bf16 %v2837, %v2836
        %v2863 = vpack.c.bf16 %v2839, %v2838
        %v2864 = vpack.c.bf16 %v2841, %v2840
        %v2865 = vpack.c.bf16 %v2843, %v2842
        %v2866 = vpack.c.bf16 %v2845, %v2844
        %v2867 = vpack.c.bf16 %v2847, %v2846
        %v2868 = vpack.c.bf16 %v2849, %v2848
        %v2869 = vpack.c.bf16 %v2851, %v2850
        %v2870 = vpack.c.bf16 %v2853, %v2852
        %v2871 = vpack.c.bf16 %v2855, %v2854
        %s2872 = scalar_lea.vmem [#allocation8], 128
        %v2873 = vld [vmem:[%s2872] sm:$0xf]
        %v2874 = vld [vmem:[%s2872 + $0x4] sm:$0xf]
        %v2875 = vld [vmem:[%s2872 + $0x8] sm:$0xf]
        %v2876 = vld [vmem:[%s2872 + $0xc] sm:$0xf]
        %v2877 = vld [vmem:[%s2872 + $0x10] sm:$0xf]
        %v2878 = vld [vmem:[%s2872 + $0x14] sm:$0xf]
        %v2879 = vld [vmem:[%s2872 + $0x18] sm:$0xf]
        %v2880 = vld [vmem:[%s2872 + $0x1c] sm:$0xf]
        %v2881 = vld [vmem:[%s2872 + $0x20] sm:$0xf]
        %v2882 = vld [vmem:[%s2872 + $0x24] sm:$0xf]
        %v2883 = vld [vmem:[%s2872 + $0x28] sm:$0xf]
        %v2884 = vld [vmem:[%s2872 + $0x2c] sm:$0xf]
        %v2885 = vld [vmem:[%s2872 + $0x30] sm:$0xf]
        %v2886 = vld [vmem:[%s2872 + $0x34] sm:$0xf]
        %v2887 = vld [vmem:[%s2872 + $0x38] sm:$0xf]
        %v2888 = vld [vmem:[%s2872 + $0x3c] sm:$0xf]
        %v2905 = vunpack.c.l.b16 %v2873
        %v2906 = vunpack.c.l.b16 %v2874
        %v2907 = vunpack.c.l.b16 %v2875
        %v2908 = vunpack.c.l.b16 %v2876
        %v2909 = vunpack.c.l.b16 %v2877
        %v2910 = vunpack.c.l.b16 %v2878
        %v2911 = vunpack.c.l.b16 %v2879
        %v2912 = vunpack.c.l.b16 %v2880
        %v2913 = vunpack.c.l.b16 %v2881
        %v2914 = vunpack.c.l.b16 %v2882
        %v2915 = vunpack.c.l.b16 %v2883
        %v2916 = vunpack.c.l.b16 %v2884
        %v2917 = vunpack.c.l.b16 %v2885
        %v2918 = vunpack.c.l.b16 %v2886
        %v2919 = vunpack.c.l.b16 %v2887
        %v2920 = vunpack.c.l.b16 %v2888
        %v2921 = vpack.c.b16 %v2906, %v2905
        %v2922 = vpack.c.b16 %v2908, %v2907
        %v2923 = vpack.c.b16 %v2910, %v2909
        %v2924 = vpack.c.b16 %v2912, %v2911
        %v2925 = vpack.c.b16 %v2914, %v2913
        %v2926 = vpack.c.b16 %v2916, %v2915
        %v2927 = vpack.c.b16 %v2918, %v2917
        %v2928 = vpack.c.b16 %v2920, %v2919
        %2937 = vmatprep.subr.bf16.mxu0 0
        %2938 = vmatpush1.bf16.msra.mxu0 %v2928
        %2939 = vmatprep.subr.bf16.mxu0 0
        %2940 = vmatpush1.bf16.msra.mxu0 %v2927
        %2941 = vmatprep.subr.bf16.mxu0 0
        %2942 = vmatpush1.bf16.msra.mxu0 %v2926
        %2943 = vmatprep.subr.bf16.mxu0 0
        %2944 = vmatpush1.bf16.msra.mxu0 %v2925
        %2945 = vmatprep.subr.bf16.mxu0 0
        %2946 = vmatpush1.bf16.msra.mxu0 %v2924
        %2947 = vmatprep.subr.bf16.mxu0 0
        %2948 = vmatpush1.bf16.msra.mxu0 %v2923
        %2949 = vmatprep.subr.bf16.mxu0 0
        %2950 = vmatpush1.bf16.msra.mxu0 %v2922
        %2951 = vmatprep.subr.bf16.mxu0 0
        %2952 = vmatpush1.bf16.msra.mxu0 %v2921
        %2953 = vmatprep.subr.bf16.mxu0 0
        %2954 = vmatpush2.bf16.msra.mxu0 0
        %2955 = vmatprep.subr.bf16.mxu0 0
        %2956 = vmatpush2.bf16.msra.mxu0 0
        %2957 = vmatprep.subr.bf16.mxu0 0
        %2958 = vmatpush2.bf16.msra.mxu0 0
        %2959 = vmatprep.subr.bf16.mxu0 0
        %2960 = vmatpush2.bf16.msra.mxu0 0
        %2961 = vmatprep.subr.bf16.mxu0 0
        %2962 = vmatpush2.bf16.msra.mxu0 0
        %2963 = vmatprep.subr.bf16.mxu0 0
        %2964 = vmatpush2.bf16.msra.mxu0 0
        %2965 = vmatprep.subr.bf16.mxu0 0
        %2966 = vmatpush2.bf16.msra.mxu0 0
        %2967 = vmatprep.subr.bf16.mxu0 0
        %2968 = vmatpush2.bf16.msra.mxu0 0
        %2969 = vmatprep.mubr.bf16.mxu0 0
        %2970 = vmatmul.mubr.bf16.gmra.mxu0 %v2856
        %v2971 = vpop.f32.mrf.mxu0
        %v2972 = vadd.f32 0.0, %v2971
        %v2973 = vpop.f32.mrf.mxu0
        %v2974 = vpop.f32.mrf.mxu0
        %v2975 = vadd.f32 0.0, %v2974
        %v2976 = vpop.f32.mrf.mxu0
        %2977 = vmatprep.mubr.bf16.mxu0 0
        %2978 = vmatmul.mubr.bf16.gmra.mxu0 %v2857
        %v2979 = vpop.f32.mrf.mxu0
        %v2980 = vadd.f32 0.0, %v2979
        %v2981 = vpop.f32.mrf.mxu0
        %v2982 = vpop.f32.mrf.mxu0
        %v2983 = vadd.f32 0.0, %v2982
        %v2984 = vpop.f32.mrf.mxu0
        %2985 = vmatprep.mubr.bf16.mxu0 0
        %2986 = vmatmul.mubr.bf16.gmra.mxu0 %v2858
        %v2987 = vpop.f32.mrf.mxu0
        %v2988 = vadd.f32 0.0, %v2987
        %v2989 = vpop.f32.mrf.mxu0
        %v2990 = vpop.f32.mrf.mxu0
        %v2991 = vadd.f32 0.0, %v2990
        %v2992 = vpop.f32.mrf.mxu0
        %2993 = vmatprep.mubr.bf16.mxu0 0
        %2994 = vmatmul.mubr.bf16.gmra.mxu0 %v2859
        %v2995 = vpop.f32.mrf.mxu0
        %v2996 = vadd.f32 0.0, %v2995
        %v2997 = vpop.f32.mrf.mxu0
        %v2998 = vpop.f32.mrf.mxu0
        %v2999 = vadd.f32 0.0, %v2998
        %v3000 = vpop.f32.mrf.mxu0
        %3001 = vmatprep.mubr.bf16.mxu0 0
        %3002 = vmatmul.mubr.bf16.gmra.mxu0 %v2860
        %v3003 = vpop.f32.mrf.mxu0
        %v3004 = vadd.f32 0.0, %v3003
        %v3005 = vpop.f32.mrf.mxu0
        %v3006 = vpop.f32.mrf.mxu0
        %v3007 = vadd.f32 0.0, %v3006
        %v3008 = vpop.f32.mrf.mxu0
        %3009 = vmatprep.mubr.bf16.mxu0 0
        %3010 = vmatmul.mubr.bf16.gmra.mxu0 %v2861
        %v3011 = vpop.f32.mrf.mxu0
        %v3012 = vadd.f32 0.0, %v3011
        %v3013 = vpop.f32.mrf.mxu0
        %v3014 = vpop.f32.mrf.mxu0
        %v3015 = vadd.f32 0.0, %v3014
        %v3016 = vpop.f32.mrf.mxu0
        %3017 = vmatprep.mubr.bf16.mxu0 0
        %3018 = vmatmul.mubr.bf16.gmra.mxu0 %v2862
        %v3019 = vpop.f32.mrf.mxu0
        %v3020 = vadd.f32 0.0, %v3019
        %v3021 = vpop.f32.mrf.mxu0
        %v3022 = vpop.f32.mrf.mxu0
        %v3023 = vadd.f32 0.0, %v3022
        %v3024 = vpop.f32.mrf.mxu0
        %3025 = vmatprep.mubr.bf16.mxu0 0
        %3026 = vmatmul.mubr.bf16.gmra.mxu0 %v2863
        %v3027 = vpop.f32.mrf.mxu0
        %v3028 = vadd.f32 0.0, %v3027
        %v3029 = vpop.f32.mrf.mxu0
        %v3030 = vpop.f32.mrf.mxu0
        %v3031 = vadd.f32 0.0, %v3030
        %v3032 = vpop.f32.mrf.mxu0
        %3033 = vmatprep.mubr.bf16.mxu0 0
        %3034 = vmatmul.mubr.bf16.gmra.mxu0 %v2864
        %v3035 = vpop.f32.mrf.mxu0
        %v3036 = vadd.f32 0.0, %v3035
        %v3037 = vpop.f32.mrf.mxu0
        %v3038 = vpop.f32.mrf.mxu0
        %v3039 = vadd.f32 0.0, %v3038
        %v3040 = vpop.f32.mrf.mxu0
        %3041 = vmatprep.mubr.bf16.mxu0 0
        %3042 = vmatmul.mubr.bf16.gmra.mxu0 %v2865
        %v3043 = vpop.f32.mrf.mxu0
        %v3044 = vadd.f32 0.0, %v3043
        %v3045 = vpop.f32.mrf.mxu0
        %v3046 = vpop.f32.mrf.mxu0
        %v3047 = vadd.f32 0.0, %v3046
        %v3048 = vpop.f32.mrf.mxu0
        %3049 = vmatprep.mubr.bf16.mxu0 0
        %3050 = vmatmul.mubr.bf16.gmra.mxu0 %v2866
        %v3051 = vpop.f32.mrf.mxu0
        %v3052 = vadd.f32 0.0, %v3051
        %v3053 = vpop.f32.mrf.mxu0
        %v3054 = vpop.f32.mrf.mxu0
        %v3055 = vadd.f32 0.0, %v3054
        %v3056 = vpop.f32.mrf.mxu0
        %3057 = vmatprep.mubr.bf16.mxu0 0
        %3058 = vmatmul.mubr.bf16.gmra.mxu0 %v2867
        %v3059 = vpop.f32.mrf.mxu0
        %v3060 = vadd.f32 0.0, %v3059
        %v3061 = vpop.f32.mrf.mxu0
        %v3062 = vpop.f32.mrf.mxu0
        %v3063 = vadd.f32 0.0, %v3062
        %v3064 = vpop.f32.mrf.mxu0
        %3065 = vmatprep.mubr.bf16.mxu0 0
        %3066 = vmatmul.mubr.bf16.gmra.mxu0 %v2868
        %v3067 = vpop.f32.mrf.mxu0
        %v3068 = vadd.f32 0.0, %v3067
        %v3069 = vpop.f32.mrf.mxu0
        %v3070 = vpop.f32.mrf.mxu0
        %v3071 = vadd.f32 0.0, %v3070
        %v3072 = vpop.f32.mrf.mxu0
        %3073 = vmatprep.mubr.bf16.mxu0 0
        %3074 = vmatmul.mubr.bf16.gmra.mxu0 %v2869
        %v3075 = vpop.f32.mrf.mxu0
        %v3076 = vadd.f32 0.0, %v3075
        %v3077 = vpop.f32.mrf.mxu0
        %v3078 = vpop.f32.mrf.mxu0
        %v3079 = vadd.f32 0.0, %v3078
        %v3080 = vpop.f32.mrf.mxu0
        %3081 = vmatprep.mubr.bf16.mxu0 0
        %3082 = vmatmul.mubr.bf16.gmra.mxu0 %v2870
        %v3083 = vpop.f32.mrf.mxu0
        %v3084 = vadd.f32 0.0, %v3083
        %v3085 = vpop.f32.mrf.mxu0
        %v3086 = vpop.f32.mrf.mxu0
        %v3087 = vadd.f32 0.0, %v3086
        %v3088 = vpop.f32.mrf.mxu0
        %3089 = vmatprep.mubr.bf16.mxu0 0
        %3090 = vmatmul.mubr.bf16.gmra.mxu0 %v2871
        %v3091 = vpop.f32.mrf.mxu0
        %v3092 = vadd.f32 0.0, %v3091
        %v3093 = vpop.f32.mrf.mxu0
        %v3094 = vpop.f32.mrf.mxu0
        %v3095 = vadd.f32 0.0, %v3094
        %v3096 = vpop.f32.mrf.mxu0
        %3097 = vdwg.mxu0
        %v3098 = vadd.f32 %v1898, %v2972
        %v3099 = vadd.f32 %v1901, %v2975
        %v3100 = vadd.f32 %v1906, %v2980
        %v3101 = vadd.f32 %v1909, %v2983
        %v3102 = vadd.f32 %v1914, %v2988
        %v3103 = vadd.f32 %v1917, %v2991
        %v3104 = vadd.f32 %v1922, %v2996
        %v3105 = vadd.f32 %v1925, %v2999
        %v3106 = vadd.f32 %v1930, %v3004
        %v3107 = vadd.f32 %v1933, %v3007
        %v3108 = vadd.f32 %v1938, %v3012
        %v3109 = vadd.f32 %v1941, %v3015
        %v3110 = vadd.f32 %v1946, %v3020
        %v3111 = vadd.f32 %v1949, %v3023
        %v3112 = vadd.f32 %v1954, %v3028
        %v3113 = vadd.f32 %v1957, %v3031
        %v3114 = vadd.f32 %v1962, %v3036
        %v3115 = vadd.f32 %v1965, %v3039
        %v3116 = vadd.f32 %v1970, %v3044
        %v3117 = vadd.f32 %v1973, %v3047
        %v3118 = vadd.f32 %v1978, %v3052
        %v3119 = vadd.f32 %v1981, %v3055
        %v3120 = vadd.f32 %v1986, %v3060
        %v3121 = vadd.f32 %v1989, %v3063
        %v3122 = vadd.f32 %v1994, %v3068
        %v3123 = vadd.f32 %v1997, %v3071
        %v3124 = vadd.f32 %v2002, %v3076
        %v3125 = vadd.f32 %v2005, %v3079
        %v3126 = vadd.f32 %v2010, %v3084
        %v3127 = vadd.f32 %v2013, %v3087
        %v3128 = vadd.f32 %v2018, %v3092
        %v3129 = vadd.f32 %v2021, %v3095
        %3130 = vst [vmem:[%s709] sm:$0xff] %v2824
        %3131 = vst [vmem:[%s709 + $0x8] sm:$0xff] %v2825
        %3132 = vst [vmem:[%s709 + $0x10] sm:$0xff] %v2826
        %3133 = vst [vmem:[%s709 + $0x18] sm:$0xff] %v2827
        %3134 = vst [vmem:[%s709 + $0x20] sm:$0xff] %v2828
        %3135 = vst [vmem:[%s709 + $0x28] sm:$0xff] %v2829
        %3136 = vst [vmem:[%s709 + $0x30] sm:$0xff] %v2830
        %3137 = vst [vmem:[%s709 + $0x38] sm:$0xff] %v2831
        %3138 = vst [vmem:[%s709 + $0x40] sm:$0xff] %v2832
        %3139 = vst [vmem:[%s709 + $0x48] sm:$0xff] %v2833
        %3140 = vst [vmem:[%s709 + $0x50] sm:$0xff] %v2834
        %3141 = vst [vmem:[%s709 + $0x58] sm:$0xff] %v2835
        %3142 = vst [vmem:[%s709 + $0x60] sm:$0xff] %v2836
        %3143 = vst [vmem:[%s709 + $0x68] sm:$0xff] %v2837
        %3144 = vst [vmem:[%s709 + $0x70] sm:$0xff] %v2838
        %3145 = vst [vmem:[%s709 + $0x78] sm:$0xff] %v2839
        %3146 = vst [vmem:[%s709 + $0x80] sm:$0xff] %v2840
        %3147 = vst [vmem:[%s709 + $0x88] sm:$0xff] %v2841
        %3148 = vst [vmem:[%s709 + $0x90] sm:$0xff] %v2842
        %3149 = vst [vmem:[%s709 + $0x98] sm:$0xff] %v2843
        %3150 = vst [vmem:[%s709 + $0xa0] sm:$0xff] %v2844
        %3151 = vst [vmem:[%s709 + $0xa8] sm:$0xff] %v2845
        %3152 = vst [vmem:[%s709 + $0xb0] sm:$0xff] %v2846
        %3153 = vst [vmem:[%s709 + $0xb8] sm:$0xff] %v2847
        %3154 = vst [vmem:[%s709 + $0xc0] sm:$0xff] %v2848
        %3155 = vst [vmem:[%s709 + $0xc8] sm:$0xff] %v2849
        %3156 = vst [vmem:[%s709 + $0xd0] sm:$0xff] %v2850
        %3157 = vst [vmem:[%s709 + $0xd8] sm:$0xff] %v2851
        %3158 = vst [vmem:[%s709 + $0xe0] sm:$0xff] %v2852
        %3159 = vst [vmem:[%s709 + $0xe8] sm:$0xff] %v2853
        %3160 = vst [vmem:[%s709 + $0xf0] sm:$0xff] %v2854
        %3161 = vst [vmem:[%s709 + $0xf8] sm:$0xff] %v2855
        %v3162 = vld [vmem:[#allocation2] sm:$0xff]
        %v3163 = vld [vmem:[#allocation2 + $0x8] sm:$0xff]
        %v3164 = vld [vmem:[#allocation2 + $0x10] sm:$0xff]
        %v3165 = vld [vmem:[#allocation2 + $0x18] sm:$0xff]
        %v3166 = vld [vmem:[#allocation2 + $0x20] sm:$0xff]
        %v3167 = vld [vmem:[#allocation2 + $0x28] sm:$0xff]
        %v3168 = vld [vmem:[#allocation2 + $0x30] sm:$0xff]
        %v3169 = vld [vmem:[#allocation2 + $0x38] sm:$0xff]
        %v3170 = vld [vmem:[#allocation2 + $0x40] sm:$0xff]
        %v3171 = vld [vmem:[#allocation2 + $0x48] sm:$0xff]
        %v3172 = vld [vmem:[#allocation2 + $0x50] sm:$0xff]
        %v3173 = vld [vmem:[#allocation2 + $0x58] sm:$0xff]
        %v3174 = vld [vmem:[#allocation2 + $0x60] sm:$0xff]
        %v3175 = vld [vmem:[#allocation2 + $0x68] sm:$0xff]
        %v3176 = vld [vmem:[#allocation2 + $0x70] sm:$0xff]
        %v3177 = vld [vmem:[#allocation2 + $0x78] sm:$0xff]
        %v3178 = vld [vmem:[#allocation2 + $0x80] sm:$0xff]
        %v3179 = vld [vmem:[#allocation2 + $0x88] sm:$0xff]
        %v3180 = vld [vmem:[#allocation2 + $0x90] sm:$0xff]
        %v3181 = vld [vmem:[#allocation2 + $0x98] sm:$0xff]
        %v3182 = vld [vmem:[#allocation2 + $0xa0] sm:$0xff]
        %v3183 = vld [vmem:[#allocation2 + $0xa8] sm:$0xff]
        %v3184 = vld [vmem:[#allocation2 + $0xb0] sm:$0xff]
        %v3185 = vld [vmem:[#allocation2 + $0xb8] sm:$0xff]
        %v3186 = vld [vmem:[#allocation2 + $0xc0] sm:$0xff]
        %v3187 = vld [vmem:[#allocation2 + $0xc8] sm:$0xff]
        %v3188 = vld [vmem:[#allocation2 + $0xd0] sm:$0xff]
        %v3189 = vld [vmem:[#allocation2 + $0xd8] sm:$0xff]
        %v3190 = vld [vmem:[#allocation2 + $0xe0] sm:$0xff]
        %v3191 = vld [vmem:[#allocation2 + $0xe8] sm:$0xff]
        %v3192 = vld [vmem:[#allocation2 + $0xf0] sm:$0xff]
        %v3193 = vld [vmem:[#allocation2 + $0xf8] sm:$0xff]
        %v3194 = vld [vmem:[%s774] sm:$0xff]
        %v3195 = vld [vmem:[%s774 + $0x8] sm:$0xff]
        %v3196 = vld [vmem:[%s774 + $0x10] sm:$0xff]
        %v3197 = vld [vmem:[%s774 + $0x18] sm:$0xff]
        %v3198 = vld [vmem:[%s774 + $0x20] sm:$0xff]
        %v3199 = vld [vmem:[%s774 + $0x28] sm:$0xff]
        %v3200 = vld [vmem:[%s774 + $0x30] sm:$0xff]
        %v3201 = vld [vmem:[%s774 + $0x38] sm:$0xff]
        %v3202 = vld [vmem:[%s774 + $0x40] sm:$0xff]
        %v3203 = vld [vmem:[%s774 + $0x48] sm:$0xff]
        %v3204 = vld [vmem:[%s774 + $0x50] sm:$0xff]
        %v3205 = vld [vmem:[%s774 + $0x58] sm:$0xff]
        %v3206 = vld [vmem:[%s774 + $0x60] sm:$0xff]
        %v3207 = vld [vmem:[%s774 + $0x68] sm:$0xff]
        %v3208 = vld [vmem:[%s774 + $0x70] sm:$0xff]
        %v3209 = vld [vmem:[%s774 + $0x78] sm:$0xff]
        %v3210 = vld [vmem:[%s774 + $0x80] sm:$0xff]
        %v3211 = vld [vmem:[%s774 + $0x88] sm:$0xff]
        %v3212 = vld [vmem:[%s774 + $0x90] sm:$0xff]
        %v3213 = vld [vmem:[%s774 + $0x98] sm:$0xff]
        %v3214 = vld [vmem:[%s774 + $0xa0] sm:$0xff]
        %v3215 = vld [vmem:[%s774 + $0xa8] sm:$0xff]
        %v3216 = vld [vmem:[%s774 + $0xb0] sm:$0xff]
        %v3217 = vld [vmem:[%s774 + $0xb8] sm:$0xff]
        %v3218 = vld [vmem:[%s774 + $0xc0] sm:$0xff]
        %v3219 = vld [vmem:[%s774 + $0xc8] sm:$0xff]
        %v3220 = vld [vmem:[%s774 + $0xd0] sm:$0xff]
        %v3221 = vld [vmem:[%s774 + $0xd8] sm:$0xff]
        %v3222 = vld [vmem:[%s774 + $0xe0] sm:$0xff]
        %v3223 = vld [vmem:[%s774 + $0xe8] sm:$0xff]
        %v3224 = vld [vmem:[%s774 + $0xf0] sm:$0xff]
        %v3225 = vld [vmem:[%s774 + $0xf8] sm:$0xff]
        %v3226 = vmax.f32 %v3162, %v3194
        %v3227 = vmax.f32 %v3163, %v3195
        %v3228 = vmax.f32 %v3164, %v3196
        %v3229 = vmax.f32 %v3165, %v3197
        %v3230 = vmax.f32 %v3166, %v3198
        %v3231 = vmax.f32 %v3167, %v3199
        %v3232 = vmax.f32 %v3168, %v3200
        %v3233 = vmax.f32 %v3169, %v3201
        %v3234 = vmax.f32 %v3170, %v3202
        %v3235 = vmax.f32 %v3171, %v3203
        %v3236 = vmax.f32 %v3172, %v3204
        %v3237 = vmax.f32 %v3173, %v3205
        %v3238 = vmax.f32 %v3174, %v3206
        %v3239 = vmax.f32 %v3175, %v3207
        %v3240 = vmax.f32 %v3176, %v3208
        %v3241 = vmax.f32 %v3177, %v3209
        %v3242 = vmax.f32 %v3178, %v3210
        %v3243 = vmax.f32 %v3179, %v3211
        %v3244 = vmax.f32 %v3180, %v3212
        %v3245 = vmax.f32 %v3181, %v3213
        %v3246 = vmax.f32 %v3182, %v3214
        %v3247 = vmax.f32 %v3183, %v3215
        %v3248 = vmax.f32 %v3184, %v3216
        %v3249 = vmax.f32 %v3185, %v3217
        %v3250 = vmax.f32 %v3186, %v3218
        %v3251 = vmax.f32 %v3187, %v3219
        %v3252 = vmax.f32 %v3188, %v3220
        %v3253 = vmax.f32 %v3189, %v3221
        %v3254 = vmax.f32 %v3190, %v3222
        %v3255 = vmax.f32 %v3191, %v3223
        %v3256 = vmax.f32 %v3192, %v3224
        %v3257 = vmax.f32 %v3193, %v3225
        %v3258 = vld [vmem:[%s709] sm:$0xff]
        %v3259 = vld [vmem:[%s709 + $0x8] sm:$0xff]
        %v3260 = vld [vmem:[%s709 + $0x10] sm:$0xff]
        %v3261 = vld [vmem:[%s709 + $0x18] sm:$0xff]
        %v3262 = vld [vmem:[%s709 + $0x20] sm:$0xff]
        %v3263 = vld [vmem:[%s709 + $0x28] sm:$0xff]
        %v3264 = vld [vmem:[%s709 + $0x30] sm:$0xff]
        %v3265 = vld [vmem:[%s709 + $0x38] sm:$0xff]
        %v3266 = vld [vmem:[%s709 + $0x40] sm:$0xff]
        %v3267 = vld [vmem:[%s709 + $0x48] sm:$0xff]
        %v3268 = vld [vmem:[%s709 + $0x50] sm:$0xff]
        %v3269 = vld [vmem:[%s709 + $0x58] sm:$0xff]
        %v3270 = vld [vmem:[%s709 + $0x60] sm:$0xff]
        %v3271 = vld [vmem:[%s709 + $0x68] sm:$0xff]
        %v3272 = vld [vmem:[%s709 + $0x70] sm:$0xff]
        %v3273 = vld [vmem:[%s709 + $0x78] sm:$0xff]
        %v3274 = vld [vmem:[%s709 + $0x80] sm:$0xff]
        %v3275 = vld [vmem:[%s709 + $0x88] sm:$0xff]
        %v3276 = vld [vmem:[%s709 + $0x90] sm:$0xff]
        %v3277 = vld [vmem:[%s709 + $0x98] sm:$0xff]
        %v3278 = vld [vmem:[%s709 + $0xa0] sm:$0xff]
        %v3279 = vld [vmem:[%s709 + $0xa8] sm:$0xff]
        %v3280 = vld [vmem:[%s709 + $0xb0] sm:$0xff]
        %v3281 = vld [vmem:[%s709 + $0xb8] sm:$0xff]
        %v3282 = vld [vmem:[%s709 + $0xc0] sm:$0xff]
        %v3283 = vld [vmem:[%s709 + $0xc8] sm:$0xff]
        %v3284 = vld [vmem:[%s709 + $0xd0] sm:$0xff]
        %v3285 = vld [vmem:[%s709 + $0xd8] sm:$0xff]
        %v3286 = vld [vmem:[%s709 + $0xe0] sm:$0xff]
        %v3287 = vld [vmem:[%s709 + $0xe8] sm:$0xff]
        %v3288 = vld [vmem:[%s709 + $0xf0] sm:$0xff]
        %v3289 = vld [vmem:[%s709 + $0xf8] sm:$0xff]
        %v3290 = vmax.f32 %v3226, %v3258
        %v3291 = vmax.f32 %v3227, %v3259
        %v3292 = vmax.f32 %v3228, %v3260
        %v3293 = vmax.f32 %v3229, %v3261
        %v3294 = vmax.f32 %v3230, %v3262
        %v3295 = vmax.f32 %v3231, %v3263
        %v3296 = vmax.f32 %v3232, %v3264
        %v3297 = vmax.f32 %v3233, %v3265
        %v3298 = vmax.f32 %v3234, %v3266
        %v3299 = vmax.f32 %v3235, %v3267
        %v3300 = vmax.f32 %v3236, %v3268
        %v3301 = vmax.f32 %v3237, %v3269
        %v3302 = vmax.f32 %v3238, %v3270
        %v3303 = vmax.f32 %v3239, %v3271
        %v3304 = vmax.f32 %v3240, %v3272
        %v3305 = vmax.f32 %v3241, %v3273
        %v3306 = vmax.f32 %v3242, %v3274
        %v3307 = vmax.f32 %v3243, %v3275
        %v3308 = vmax.f32 %v3244, %v3276
        %v3309 = vmax.f32 %v3245, %v3277
        %v3310 = vmax.f32 %v3246, %v3278
        %v3311 = vmax.f32 %v3247, %v3279
        %v3312 = vmax.f32 %v3248, %v3280
        %v3313 = vmax.f32 %v3249, %v3281
        %v3314 = vmax.f32 %v3250, %v3282
        %v3315 = vmax.f32 %v3251, %v3283
        %v3316 = vmax.f32 %v3252, %v3284
        %v3317 = vmax.f32 %v3253, %v3285
        %v3318 = vmax.f32 %v3254, %v3286
        %v3319 = vmax.f32 %v3255, %v3287
        %v3320 = vmax.f32 %v3256, %v3288
        %v3321 = vmax.f32 %v3257, %v3289
        %v3322 = vld [vmem:[%s903] sm:$0xff]
        %v3323 = vld [vmem:[%s903 + $0x8] sm:$0xff]
        %v3324 = vld [vmem:[%s903 + $0x10] sm:$0xff]
        %v3325 = vld [vmem:[%s903 + $0x18] sm:$0xff]
        %v3326 = vld [vmem:[%s903 + $0x20] sm:$0xff]
        %v3327 = vld [vmem:[%s903 + $0x28] sm:$0xff]
        %v3328 = vld [vmem:[%s903 + $0x30] sm:$0xff]
        %v3329 = vld [vmem:[%s903 + $0x38] sm:$0xff]
        %v3330 = vld [vmem:[%s903 + $0x40] sm:$0xff]
        %v3331 = vld [vmem:[%s903 + $0x48] sm:$0xff]
        %v3332 = vld [vmem:[%s903 + $0x50] sm:$0xff]
        %v3333 = vld [vmem:[%s903 + $0x58] sm:$0xff]
        %v3334 = vld [vmem:[%s903 + $0x60] sm:$0xff]
        %v3335 = vld [vmem:[%s903 + $0x68] sm:$0xff]
        %v3336 = vld [vmem:[%s903 + $0x70] sm:$0xff]
        %v3337 = vld [vmem:[%s903 + $0x78] sm:$0xff]
        %v3338 = vld [vmem:[%s903 + $0x80] sm:$0xff]
        %v3339 = vld [vmem:[%s903 + $0x88] sm:$0xff]
        %v3340 = vld [vmem:[%s903 + $0x90] sm:$0xff]
        %v3341 = vld [vmem:[%s903 + $0x98] sm:$0xff]
        %v3342 = vld [vmem:[%s903 + $0xa0] sm:$0xff]
        %v3343 = vld [vmem:[%s903 + $0xa8] sm:$0xff]
        %v3344 = vld [vmem:[%s903 + $0xb0] sm:$0xff]
        %v3345 = vld [vmem:[%s903 + $0xb8] sm:$0xff]
        %v3346 = vld [vmem:[%s903 + $0xc0] sm:$0xff]
        %v3347 = vld [vmem:[%s903 + $0xc8] sm:$0xff]
        %v3348 = vld [vmem:[%s903 + $0xd0] sm:$0xff]
        %v3349 = vld [vmem:[%s903 + $0xd8] sm:$0xff]
        %v3350 = vld [vmem:[%s903 + $0xe0] sm:$0xff]
        %v3351 = vld [vmem:[%s903 + $0xe8] sm:$0xff]
        %v3352 = vld [vmem:[%s903 + $0xf0] sm:$0xff]
        %v3353 = vld [vmem:[%s903 + $0xf8] sm:$0xff]
        %v3354 = vmax.f32 %v3290, %v3322
        %v3355 = vmax.f32 %v3291, %v3323
        %v3356 = vmax.f32 %v3292, %v3324
        %v3357 = vmax.f32 %v3293, %v3325
        %v3358 = vmax.f32 %v3294, %v3326
        %v3359 = vmax.f32 %v3295, %v3327
        %v3360 = vmax.f32 %v3296, %v3328
        %v3361 = vmax.f32 %v3297, %v3329
        %v3362 = vmax.f32 %v3298, %v3330
        %v3363 = vmax.f32 %v3299, %v3331
        %v3364 = vmax.f32 %v3300, %v3332
        %v3365 = vmax.f32 %v3301, %v3333
        %v3366 = vmax.f32 %v3302, %v3334
        %v3367 = vmax.f32 %v3303, %v3335
        %v3368 = vmax.f32 %v3304, %v3336
        %v3369 = vmax.f32 %v3305, %v3337
        %v3370 = vmax.f32 %v3306, %v3338
        %v3371 = vmax.f32 %v3307, %v3339
        %v3372 = vmax.f32 %v3308, %v3340
        %v3373 = vmax.f32 %v3309, %v3341
        %v3374 = vmax.f32 %v3310, %v3342
        %v3375 = vmax.f32 %v3311, %v3343
        %v3376 = vmax.f32 %v3312, %v3344
        %v3377 = vmax.f32 %v3313, %v3345
        %v3378 = vmax.f32 %v3314, %v3346
        %v3379 = vmax.f32 %v3315, %v3347
        %v3380 = vmax.f32 %v3316, %v3348
        %v3381 = vmax.f32 %v3317, %v3349
        %v3382 = vmax.f32 %v3318, %v3350
        %v3383 = vmax.f32 %v3319, %v3351
        %v3384 = vmax.f32 %v3320, %v3352
        %v3385 = vmax.f32 %v3321, %v3353
        %v3386 = vld [vmem:[%s968] sm:$0xff]
        %v3387 = vld [vmem:[%s968 + $0x8] sm:$0xff]
        %v3388 = vld [vmem:[%s968 + $0x10] sm:$0xff]
        %v3389 = vld [vmem:[%s968 + $0x18] sm:$0xff]
        %v3390 = vld [vmem:[%s968 + $0x20] sm:$0xff]
        %v3391 = vld [vmem:[%s968 + $0x28] sm:$0xff]
        %v3392 = vld [vmem:[%s968 + $0x30] sm:$0xff]
        %v3393 = vld [vmem:[%s968 + $0x38] sm:$0xff]
        %v3394 = vld [vmem:[%s968 + $0x40] sm:$0xff]
        %v3395 = vld [vmem:[%s968 + $0x48] sm:$0xff]
        %v3396 = vld [vmem:[%s968 + $0x50] sm:$0xff]
        %v3397 = vld [vmem:[%s968 + $0x58] sm:$0xff]
        %v3398 = vld [vmem:[%s968 + $0x60] sm:$0xff]
        %v3399 = vld [vmem:[%s968 + $0x68] sm:$0xff]
        %v3400 = vld [vmem:[%s968 + $0x70] sm:$0xff]
        %v3401 = vld [vmem:[%s968 + $0x78] sm:$0xff]
        %v3402 = vld [vmem:[%s968 + $0x80] sm:$0xff]
        %v3403 = vld [vmem:[%s968 + $0x88] sm:$0xff]
        %v3404 = vld [vmem:[%s968 + $0x90] sm:$0xff]
        %v3405 = vld [vmem:[%s968 + $0x98] sm:$0xff]
        %v3406 = vld [vmem:[%s968 + $0xa0] sm:$0xff]
        %v3407 = vld [vmem:[%s968 + $0xa8] sm:$0xff]
        %v3408 = vld [vmem:[%s968 + $0xb0] sm:$0xff]
        %v3409 = vld [vmem:[%s968 + $0xb8] sm:$0xff]
        %v3410 = vld [vmem:[%s968 + $0xc0] sm:$0xff]
        %v3411 = vld [vmem:[%s968 + $0xc8] sm:$0xff]
        %v3412 = vld [vmem:[%s968 + $0xd0] sm:$0xff]
        %v3413 = vld [vmem:[%s968 + $0xd8] sm:$0xff]
        %v3414 = vld [vmem:[%s968 + $0xe0] sm:$0xff]
        %v3415 = vld [vmem:[%s968 + $0xe8] sm:$0xff]
        %v3416 = vld [vmem:[%s968 + $0xf0] sm:$0xff]
        %v3417 = vld [vmem:[%s968 + $0xf8] sm:$0xff]
        %v3418 = vmax.f32 %v3354, %v3386
        %v3419 = vmax.f32 %v3355, %v3387
        %v3420 = vmax.f32 %v3356, %v3388
        %v3421 = vmax.f32 %v3357, %v3389
        %v3422 = vmax.f32 %v3358, %v3390
        %v3423 = vmax.f32 %v3359, %v3391
        %v3424 = vmax.f32 %v3360, %v3392
        %v3425 = vmax.f32 %v3361, %v3393
        %v3426 = vmax.f32 %v3362, %v3394
        %v3427 = vmax.f32 %v3363, %v3395
        %v3428 = vmax.f32 %v3364, %v3396
        %v3429 = vmax.f32 %v3365, %v3397
        %v3430 = vmax.f32 %v3366, %v3398
        %v3431 = vmax.f32 %v3367, %v3399
        %v3432 = vmax.f32 %v3368, %v3400
        %v3433 = vmax.f32 %v3369, %v3401
        %v3434 = vmax.f32 %v3370, %v3402
        %v3435 = vmax.f32 %v3371, %v3403
        %v3436 = vmax.f32 %v3372, %v3404
        %v3437 = vmax.f32 %v3373, %v3405
        %v3438 = vmax.f32 %v3374, %v3406
        %v3439 = vmax.f32 %v3375, %v3407
        %v3440 = vmax.f32 %v3376, %v3408
        %v3441 = vmax.f32 %v3377, %v3409
        %v3442 = vmax.f32 %v3378, %v3410
        %v3443 = vmax.f32 %v3379, %v3411
        %v3444 = vmax.f32 %v3380, %v3412
        %v3445 = vmax.f32 %v3381, %v3413
        %v3446 = vmax.f32 %v3382, %v3414
        %v3447 = vmax.f32 %v3383, %v3415
        %v3448 = vmax.f32 %v3384, %v3416
        %v3449 = vmax.f32 %v3385, %v3417
        %v3450 = vrot.slane %v3418, 1
        %v3451 = vrot.slane %v3420, 1
        %v3452 = vrot.slane %v3422, 1
        %v3453 = vrot.slane %v3424, 1
        %v3454 = vrot.slane %v3426, 1
        %v3455 = vrot.slane %v3428, 1
        %v3456 = vrot.slane %v3430, 1
        %v3457 = vrot.slane %v3432, 1
        %v3458 = vrot.slane %v3434, 1
        %v3459 = vrot.slane %v3436, 1
        %v3460 = vrot.slane %v3438, 1
        %v3461 = vrot.slane %v3440, 1
        %v3462 = vrot.slane %v3442, 1
        %v3463 = vrot.slane %v3444, 1
        %v3464 = vrot.slane %v3446, 1
        %v3465 = vrot.slane %v3448, 1
        %v3466 = vrot.slane %v3419, 1
        %v3467 = vrot.slane %v3421, 1
        %v3468 = vrot.slane %v3423, 1
        %v3469 = vrot.slane %v3425, 1
        %v3470 = vrot.slane %v3427, 1
        %v3471 = vrot.slane %v3429, 1
        %v3472 = vrot.slane %v3431, 1
        %v3473 = vrot.slane %v3433, 1
        %v3474 = vrot.slane %v3435, 1
        %v3475 = vrot.slane %v3437, 1
        %v3476 = vrot.slane %v3439, 1
        %v3477 = vrot.slane %v3441, 1
        %v3478 = vrot.slane %v3443, 1
        %v3479 = vrot.slane %v3445, 1
        %v3480 = vrot.slane %v3447, 1
        %v3481 = vrot.slane %v3449, 1
        %v3482 = vsel %vm1067, %v3450, %v3466
        %v3483 = vsel %vm1067, %v3451, %v3467
        %v3484 = vsel %vm1067, %v3452, %v3468
        %v3485 = vsel %vm1067, %v3453, %v3469
        %v3486 = vsel %vm1067, %v3454, %v3470
        %v3487 = vsel %vm1067, %v3455, %v3471
        %v3488 = vsel %vm1067, %v3456, %v3472
        %v3489 = vsel %vm1067, %v3457, %v3473
        %v3490 = vsel %vm1067, %v3458, %v3474
        %v3491 = vsel %vm1067, %v3459, %v3475
        %v3492 = vsel %vm1067, %v3460, %v3476
        %v3493 = vsel %vm1067, %v3461, %v3477
        %v3494 = vsel %vm1067, %v3462, %v3478
        %v3495 = vsel %vm1067, %v3463, %v3479
        %v3496 = vsel %vm1067, %v3464, %v3480
        %v3497 = vsel %vm1067, %v3465, %v3481
        %v3498 = vsel %vm1067, %v3466, %v3450
        %v3499 = vsel %vm1067, %v3467, %v3451
        %v3500 = vsel %vm1067, %v3468, %v3452
        %v3501 = vsel %vm1067, %v3469, %v3453
        %v3502 = vsel %vm1067, %v3470, %v3454
        %v3503 = vsel %vm1067, %v3471, %v3455
        %v3504 = vsel %vm1067, %v3472, %v3456
        %v3505 = vsel %vm1067, %v3473, %v3457
        %v3506 = vsel %vm1067, %v3474, %v3458
        %v3507 = vsel %vm1067, %v3475, %v3459
        %v3508 = vsel %vm1067, %v3476, %v3460
        %v3509 = vsel %vm1067, %v3477, %v3461
        %v3510 = vsel %vm1067, %v3478, %v3462
        %v3511 = vsel %vm1067, %v3479, %v3463
        %v3512 = vsel %vm1067, %v3480, %v3464
        %v3513 = vsel %vm1067, %v3481, %v3465
        %v3514 = vsel %vm1102, %v3482, 0.0
        %v3515 = vsel %vm1103, %v3498, 0.0
        %v3516 = vsel %vm1102, %v3483, 0.0
        %v3517 = vsel %vm1103, %v3499, 0.0
        %v3518 = vsel %vm1102, %v3484, 0.0
        %v3519 = vsel %vm1103, %v3500, 0.0
        %v3520 = vsel %vm1102, %v3485, 0.0
        %v3521 = vsel %vm1103, %v3501, 0.0
        %v3522 = vsel %vm1102, %v3486, 0.0
        %v3523 = vsel %vm1103, %v3502, 0.0
        %v3524 = vsel %vm1102, %v3487, 0.0
        %v3525 = vsel %vm1103, %v3503, 0.0
        %v3526 = vsel %vm1102, %v3488, 0.0
        %v3527 = vsel %vm1103, %v3504, 0.0
        %v3528 = vsel %vm1102, %v3489, 0.0
        %v3529 = vsel %vm1103, %v3505, 0.0
        %v3530 = vsel %vm1102, %v3490, 0.0
        %v3531 = vsel %vm1103, %v3506, 0.0
        %v3532 = vsel %vm1102, %v3491, 0.0
        %v3533 = vsel %vm1103, %v3507, 0.0
        %v3534 = vsel %vm1102, %v3492, 0.0
        %v3535 = vsel %vm1103, %v3508, 0.0
        %v3536 = vsel %vm1102, %v3493, 0.0
        %v3537 = vsel %vm1103, %v3509, 0.0
        %v3538 = vsel %vm1102, %v3494, 0.0
        %v3539 = vsel %vm1103, %v3510, 0.0
        %v3540 = vsel %vm1102, %v3495, 0.0
        %v3541 = vsel %vm1103, %v3511, 0.0
        %v3542 = vsel %vm1102, %v3496, 0.0
        %v3543 = vsel %vm1103, %v3512, 0.0
        %v3544 = vsel %vm1102, %v3497, 0.0
        %v3545 = vsel %vm1103, %v3513, 0.0
        %v3546 = vrot.slane %v3418, 7
        %v3547 = vrot.slane %v3420, 7
        %v3548 = vrot.slane %v3422, 7
        %v3549 = vrot.slane %v3424, 7
        %v3550 = vrot.slane %v3426, 7
        %v3551 = vrot.slane %v3428, 7
        %v3552 = vrot.slane %v3430, 7
        %v3553 = vrot.slane %v3432, 7
        %v3554 = vrot.slane %v3434, 7
        %v3555 = vrot.slane %v3436, 7
        %v3556 = vrot.slane %v3438, 7
        %v3557 = vrot.slane %v3440, 7
        %v3558 = vrot.slane %v3442, 7
        %v3559 = vrot.slane %v3444, 7
        %v3560 = vrot.slane %v3446, 7
        %v3561 = vrot.slane %v3448, 7
        %v3562 = vrot.slane %v3419, 7
        %v3563 = vrot.slane %v3421, 7
        %v3564 = vrot.slane %v3423, 7
        %v3565 = vrot.slane %v3425, 7
        %v3566 = vrot.slane %v3427, 7
        %v3567 = vrot.slane %v3429, 7
        %v3568 = vrot.slane %v3431, 7
        %v3569 = vrot.slane %v3433, 7
        %v3570 = vrot.slane %v3435, 7
        %v3571 = vrot.slane %v3437, 7
        %v3572 = vrot.slane %v3439, 7
        %v3573 = vrot.slane %v3441, 7
        %v3574 = vrot.slane %v3443, 7
        %v3575 = vrot.slane %v3445, 7
        %v3576 = vrot.slane %v3447, 7
        %v3577 = vrot.slane %v3449, 7
        %v3578 = vsel %vm1170, %v3546, %v3562
        %v3579 = vsel %vm1170, %v3547, %v3563
        %v3580 = vsel %vm1170, %v3548, %v3564
        %v3581 = vsel %vm1170, %v3549, %v3565
        %v3582 = vsel %vm1170, %v3550, %v3566
        %v3583 = vsel %vm1170, %v3551, %v3567
        %v3584 = vsel %vm1170, %v3552, %v3568
        %v3585 = vsel %vm1170, %v3553, %v3569
        %v3586 = vsel %vm1170, %v3554, %v3570
        %v3587 = vsel %vm1170, %v3555, %v3571
        %v3588 = vsel %vm1170, %v3556, %v3572
        %v3589 = vsel %vm1170, %v3557, %v3573
        %v3590 = vsel %vm1170, %v3558, %v3574
        %v3591 = vsel %vm1170, %v3559, %v3575
        %v3592 = vsel %vm1170, %v3560, %v3576
        %v3593 = vsel %vm1170, %v3561, %v3577
        %v3594 = vsel %vm1170, %v3562, %v3546
        %v3595 = vsel %vm1170, %v3563, %v3547
        %v3596 = vsel %vm1170, %v3564, %v3548
        %v3597 = vsel %vm1170, %v3565, %v3549
        %v3598 = vsel %vm1170, %v3566, %v3550
        %v3599 = vsel %vm1170, %v3567, %v3551
        %v3600 = vsel %vm1170, %v3568, %v3552
        %v3601 = vsel %vm1170, %v3569, %v3553
        %v3602 = vsel %vm1170, %v3570, %v3554
        %v3603 = vsel %vm1170, %v3571, %v3555
        %v3604 = vsel %vm1170, %v3572, %v3556
        %v3605 = vsel %vm1170, %v3573, %v3557
        %v3606 = vsel %vm1170, %v3574, %v3558
        %v3607 = vsel %vm1170, %v3575, %v3559
        %v3608 = vsel %vm1170, %v3576, %v3560
        %v3609 = vsel %vm1170, %v3577, %v3561
        %v3610 = vsel %vm1205, %v3594, 0.0
        %v3611 = vsel %vm1206, %v3578, 0.0
        %v3612 = vsel %vm1205, %v3595, 0.0
        %v3613 = vsel %vm1206, %v3579, 0.0
        %v3614 = vsel %vm1205, %v3596, 0.0
        %v3615 = vsel %vm1206, %v3580, 0.0
        %v3616 = vsel %vm1205, %v3597, 0.0
        %v3617 = vsel %vm1206, %v3581, 0.0
        %v3618 = vsel %vm1205, %v3598, 0.0
        %v3619 = vsel %vm1206, %v3582, 0.0
        %v3620 = vsel %vm1205, %v3599, 0.0
        %v3621 = vsel %vm1206, %v3583, 0.0
        %v3622 = vsel %vm1205, %v3600, 0.0
        %v3623 = vsel %vm1206, %v3584, 0.0
        %v3624 = vsel %vm1205, %v3601, 0.0
        %v3625 = vsel %vm1206, %v3585, 0.0
        %v3626 = vsel %vm1205, %v3602, 0.0
        %v3627 = vsel %vm1206, %v3586, 0.0
        %v3628 = vsel %vm1205, %v3603, 0.0
        %v3629 = vsel %vm1206, %v3587, 0.0
        %v3630 = vsel %vm1205, %v3604, 0.0
        %v3631 = vsel %vm1206, %v3588, 0.0
        %v3632 = vsel %vm1205, %v3605, 0.0
        %v3633 = vsel %vm1206, %v3589, 0.0
        %v3634 = vsel %vm1205, %v3606, 0.0
        %v3635 = vsel %vm1206, %v3590, 0.0
        %v3636 = vsel %vm1205, %v3607, 0.0
        %v3637 = vsel %vm1206, %v3591, 0.0
        %v3638 = vsel %vm1205, %v3608, 0.0
        %v3639 = vsel %vm1206, %v3592, 0.0
        %v3640 = vsel %vm1205, %v3609, 0.0
        %v3641 = vsel %vm1206, %v3593, 0.0
        %v3642 = vmax.f32 %v3514, %v3610
        %v3643 = vmax.f32 %v3515, %v3611
        %v3644 = vmax.f32 %v3516, %v3612
        %v3645 = vmax.f32 %v3517, %v3613
        %v3646 = vmax.f32 %v3518, %v3614
        %v3647 = vmax.f32 %v3519, %v3615
        %v3648 = vmax.f32 %v3520, %v3616
        %v3649 = vmax.f32 %v3521, %v3617
        %v3650 = vmax.f32 %v3522, %v3618
        %v3651 = vmax.f32 %v3523, %v3619
        %v3652 = vmax.f32 %v3524, %v3620
        %v3653 = vmax.f32 %v3525, %v3621
        %v3654 = vmax.f32 %v3526, %v3622
        %v3655 = vmax.f32 %v3527, %v3623
        %v3656 = vmax.f32 %v3528, %v3624
        %v3657 = vmax.f32 %v3529, %v3625
        %v3658 = vmax.f32 %v3530, %v3626
        %v3659 = vmax.f32 %v3531, %v3627
        %v3660 = vmax.f32 %v3532, %v3628
        %v3661 = vmax.f32 %v3533, %v3629
        %v3662 = vmax.f32 %v3534, %v3630
        %v3663 = vmax.f32 %v3535, %v3631
        %v3664 = vmax.f32 %v3536, %v3632
        %v3665 = vmax.f32 %v3537, %v3633
        %v3666 = vmax.f32 %v3538, %v3634
        %v3667 = vmax.f32 %v3539, %v3635
        %v3668 = vmax.f32 %v3540, %v3636
        %v3669 = vmax.f32 %v3541, %v3637
        %v3670 = vmax.f32 %v3542, %v3638
        %v3671 = vmax.f32 %v3543, %v3639
        %v3672 = vmax.f32 %v3544, %v3640
        %v3673 = vmax.f32 %v3545, %v3641
        %v3674 = vmax.f32 %v3418, %v3642
        %v3675 = vmax.f32 %v3419, %v3643
        %v3676 = vmax.f32 %v3420, %v3644
        %v3677 = vmax.f32 %v3421, %v3645
        %v3678 = vmax.f32 %v3422, %v3646
        %v3679 = vmax.f32 %v3423, %v3647
        %v3680 = vmax.f32 %v3424, %v3648
        %v3681 = vmax.f32 %v3425, %v3649
        %v3682 = vmax.f32 %v3426, %v3650
        %v3683 = vmax.f32 %v3427, %v3651
        %v3684 = vmax.f32 %v3428, %v3652
        %v3685 = vmax.f32 %v3429, %v3653
        %v3686 = vmax.f32 %v3430, %v3654
        %v3687 = vmax.f32 %v3431, %v3655
        %v3688 = vmax.f32 %v3432, %v3656
        %v3689 = vmax.f32 %v3433, %v3657
        %v3690 = vmax.f32 %v3434, %v3658
        %v3691 = vmax.f32 %v3435, %v3659
        %v3692 = vmax.f32 %v3436, %v3660
        %v3693 = vmax.f32 %v3437, %v3661
        %v3694 = vmax.f32 %v3438, %v3662
        %v3695 = vmax.f32 %v3439, %v3663
        %v3696 = vmax.f32 %v3440, %v3664
        %v3697 = vmax.f32 %v3441, %v3665
        %v3698 = vmax.f32 %v3442, %v3666
        %v3699 = vmax.f32 %v3443, %v3667
        %v3700 = vmax.f32 %v3444, %v3668
        %v3701 = vmax.f32 %v3445, %v3669
        %v3702 = vmax.f32 %v3446, %v3670
        %v3703 = vmax.f32 %v3447, %v3671
        %v3704 = vmax.f32 %v3448, %v3672
        %v3705 = vmax.f32 %v3449, %v3673
        %v3706 = vrot.slane %v3418, 2
        %v3707 = vrot.slane %v3420, 2
        %v3708 = vrot.slane %v3422, 2
        %v3709 = vrot.slane %v3424, 2
        %v3710 = vrot.slane %v3426, 2
        %v3711 = vrot.slane %v3428, 2
        %v3712 = vrot.slane %v3430, 2
        %v3713 = vrot.slane %v3432, 2
        %v3714 = vrot.slane %v3434, 2
        %v3715 = vrot.slane %v3436, 2
        %v3716 = vrot.slane %v3438, 2
        %v3717 = vrot.slane %v3440, 2
        %v3718 = vrot.slane %v3442, 2
        %v3719 = vrot.slane %v3444, 2
        %v3720 = vrot.slane %v3446, 2
        %v3721 = vrot.slane %v3448, 2
        %v3722 = vrot.slane %v3419, 2
        %v3723 = vrot.slane %v3421, 2
        %v3724 = vrot.slane %v3423, 2
        %v3725 = vrot.slane %v3425, 2
        %v3726 = vrot.slane %v3427, 2
        %v3727 = vrot.slane %v3429, 2
        %v3728 = vrot.slane %v3431, 2
        %v3729 = vrot.slane %v3433, 2
        %v3730 = vrot.slane %v3435, 2
        %v3731 = vrot.slane %v3437, 2
        %v3732 = vrot.slane %v3439, 2
        %v3733 = vrot.slane %v3441, 2
        %v3734 = vrot.slane %v3443, 2
        %v3735 = vrot.slane %v3445, 2
        %v3736 = vrot.slane %v3447, 2
        %v3737 = vrot.slane %v3449, 2
        %v3738 = vsel %vm1337, %v3706, %v3722
        %v3739 = vsel %vm1337, %v3707, %v3723
        %v3740 = vsel %vm1337, %v3708, %v3724
        %v3741 = vsel %vm1337, %v3709, %v3725
        %v3742 = vsel %vm1337, %v3710, %v3726
        %v3743 = vsel %vm1337, %v3711, %v3727
        %v3744 = vsel %vm1337, %v3712, %v3728
        %v3745 = vsel %vm1337, %v3713, %v3729
        %v3746 = vsel %vm1337, %v3714, %v3730
        %v3747 = vsel %vm1337, %v3715, %v3731
        %v3748 = vsel %vm1337, %v3716, %v3732
        %v3749 = vsel %vm1337, %v3717, %v3733
        %v3750 = vsel %vm1337, %v3718, %v3734
        %v3751 = vsel %vm1337, %v3719, %v3735
        %v3752 = vsel %vm1337, %v3720, %v3736
        %v3753 = vsel %vm1337, %v3721, %v3737
        %v3754 = vsel %vm1337, %v3722, %v3706
        %v3755 = vsel %vm1337, %v3723, %v3707
        %v3756 = vsel %vm1337, %v3724, %v3708
        %v3757 = vsel %vm1337, %v3725, %v3709
        %v3758 = vsel %vm1337, %v3726, %v3710
        %v3759 = vsel %vm1337, %v3727, %v3711
        %v3760 = vsel %vm1337, %v3728, %v3712
        %v3761 = vsel %vm1337, %v3729, %v3713
        %v3762 = vsel %vm1337, %v3730, %v3714
        %v3763 = vsel %vm1337, %v3731, %v3715
        %v3764 = vsel %vm1337, %v3732, %v3716
        %v3765 = vsel %vm1337, %v3733, %v3717
        %v3766 = vsel %vm1337, %v3734, %v3718
        %v3767 = vsel %vm1337, %v3735, %v3719
        %v3768 = vsel %vm1337, %v3736, %v3720
        %v3769 = vsel %vm1337, %v3737, %v3721
        %v3770 = vsel %vm1372, %v3738, 0.0
        %v3771 = vsel %vm1373, %v3754, 0.0
        %v3772 = vsel %vm1372, %v3739, 0.0
        %v3773 = vsel %vm1373, %v3755, 0.0
        %v3774 = vsel %vm1372, %v3740, 0.0
        %v3775 = vsel %vm1373, %v3756, 0.0
        %v3776 = vsel %vm1372, %v3741, 0.0
        %v3777 = vsel %vm1373, %v3757, 0.0
        %v3778 = vsel %vm1372, %v3742, 0.0
        %v3779 = vsel %vm1373, %v3758, 0.0
        %v3780 = vsel %vm1372, %v3743, 0.0
        %v3781 = vsel %vm1373, %v3759, 0.0
        %v3782 = vsel %vm1372, %v3744, 0.0
        %v3783 = vsel %vm1373, %v3760, 0.0
        %v3784 = vsel %vm1372, %v3745, 0.0
        %v3785 = vsel %vm1373, %v3761, 0.0
        %v3786 = vsel %vm1372, %v3746, 0.0
        %v3787 = vsel %vm1373, %v3762, 0.0
        %v3788 = vsel %vm1372, %v3747, 0.0
        %v3789 = vsel %vm1373, %v3763, 0.0
        %v3790 = vsel %vm1372, %v3748, 0.0
        %v3791 = vsel %vm1373, %v3764, 0.0
        %v3792 = vsel %vm1372, %v3749, 0.0
        %v3793 = vsel %vm1373, %v3765, 0.0
        %v3794 = vsel %vm1372, %v3750, 0.0
        %v3795 = vsel %vm1373, %v3766, 0.0
        %v3796 = vsel %vm1372, %v3751, 0.0
        %v3797 = vsel %vm1373, %v3767, 0.0
        %v3798 = vsel %vm1372, %v3752, 0.0
        %v3799 = vsel %vm1373, %v3768, 0.0
        %v3800 = vsel %vm1372, %v3753, 0.0
        %v3801 = vsel %vm1373, %v3769, 0.0
        %v3802 = vrot.slane %v3418, 6
        %v3803 = vrot.slane %v3420, 6
        %v3804 = vrot.slane %v3422, 6
        %v3805 = vrot.slane %v3424, 6
        %v3806 = vrot.slane %v3426, 6
        %v3807 = vrot.slane %v3428, 6
        %v3808 = vrot.slane %v3430, 6
        %v3809 = vrot.slane %v3432, 6
        %v3810 = vrot.slane %v3434, 6
        %v3811 = vrot.slane %v3436, 6
        %v3812 = vrot.slane %v3438, 6
        %v3813 = vrot.slane %v3440, 6
        %v3814 = vrot.slane %v3442, 6
        %v3815 = vrot.slane %v3444, 6
        %v3816 = vrot.slane %v3446, 6
        %v3817 = vrot.slane %v3448, 6
        %v3818 = vrot.slane %v3419, 6
        %v3819 = vrot.slane %v3421, 6
        %v3820 = vrot.slane %v3423, 6
        %v3821 = vrot.slane %v3425, 6
        %v3822 = vrot.slane %v3427, 6
        %v3823 = vrot.slane %v3429, 6
        %v3824 = vrot.slane %v3431, 6
        %v3825 = vrot.slane %v3433, 6
        %v3826 = vrot.slane %v3435, 6
        %v3827 = vrot.slane %v3437, 6
        %v3828 = vrot.slane %v3439, 6
        %v3829 = vrot.slane %v3441, 6
        %v3830 = vrot.slane %v3443, 6
        %v3831 = vrot.slane %v3445, 6
        %v3832 = vrot.slane %v3447, 6
        %v3833 = vrot.slane %v3449, 6
        %v3834 = vsel %vm1440, %v3802, %v3818
        %v3835 = vsel %vm1440, %v3803, %v3819
        %v3836 = vsel %vm1440, %v3804, %v3820
        %v3837 = vsel %vm1440, %v3805, %v3821
        %v3838 = vsel %vm1440, %v3806, %v3822
        %v3839 = vsel %vm1440, %v3807, %v3823
        %v3840 = vsel %vm1440, %v3808, %v3824
        %v3841 = vsel %vm1440, %v3809, %v3825
        %v3842 = vsel %vm1440, %v3810, %v3826
        %v3843 = vsel %vm1440, %v3811, %v3827
        %v3844 = vsel %vm1440, %v3812, %v3828
        %v3845 = vsel %vm1440, %v3813, %v3829
        %v3846 = vsel %vm1440, %v3814, %v3830
        %v3847 = vsel %vm1440, %v3815, %v3831
        %v3848 = vsel %vm1440, %v3816, %v3832
        %v3849 = vsel %vm1440, %v3817, %v3833
        %v3850 = vsel %vm1440, %v3818, %v3802
        %v3851 = vsel %vm1440, %v3819, %v3803
        %v3852 = vsel %vm1440, %v3820, %v3804
        %v3853 = vsel %vm1440, %v3821, %v3805
        %v3854 = vsel %vm1440, %v3822, %v3806
        %v3855 = vsel %vm1440, %v3823, %v3807
        %v3856 = vsel %vm1440, %v3824, %v3808
        %v3857 = vsel %vm1440, %v3825, %v3809
        %v3858 = vsel %vm1440, %v3826, %v3810
        %v3859 = vsel %vm1440, %v3827, %v3811
        %v3860 = vsel %vm1440, %v3828, %v3812
        %v3861 = vsel %vm1440, %v3829, %v3813
        %v3862 = vsel %vm1440, %v3830, %v3814
        %v3863 = vsel %vm1440, %v3831, %v3815
        %v3864 = vsel %vm1440, %v3832, %v3816
        %v3865 = vsel %vm1440, %v3833, %v3817
        %v3866 = vsel %vm1475, %v3850, 0.0
        %v3867 = vsel %vm1476, %v3834, 0.0
        %v3868 = vsel %vm1475, %v3851, 0.0
        %v3869 = vsel %vm1476, %v3835, 0.0
        %v3870 = vsel %vm1475, %v3852, 0.0
        %v3871 = vsel %vm1476, %v3836, 0.0
        %v3872 = vsel %vm1475, %v3853, 0.0
        %v3873 = vsel %vm1476, %v3837, 0.0
        %v3874 = vsel %vm1475, %v3854, 0.0
        %v3875 = vsel %vm1476, %v3838, 0.0
        %v3876 = vsel %vm1475, %v3855, 0.0
        %v3877 = vsel %vm1476, %v3839, 0.0
        %v3878 = vsel %vm1475, %v3856, 0.0
        %v3879 = vsel %vm1476, %v3840, 0.0
        %v3880 = vsel %vm1475, %v3857, 0.0
        %v3881 = vsel %vm1476, %v3841, 0.0
        %v3882 = vsel %vm1475, %v3858, 0.0
        %v3883 = vsel %vm1476, %v3842, 0.0
        %v3884 = vsel %vm1475, %v3859, 0.0
        %v3885 = vsel %vm1476, %v3843, 0.0
        %v3886 = vsel %vm1475, %v3860, 0.0
        %v3887 = vsel %vm1476, %v3844, 0.0
        %v3888 = vsel %vm1475, %v3861, 0.0
        %v3889 = vsel %vm1476, %v3845, 0.0
        %v3890 = vsel %vm1475, %v3862, 0.0
        %v3891 = vsel %vm1476, %v3846, 0.0
        %v3892 = vsel %vm1475, %v3863, 0.0
        %v3893 = vsel %vm1476, %v3847, 0.0
        %v3894 = vsel %vm1475, %v3864, 0.0
        %v3895 = vsel %vm1476, %v3848, 0.0
        %v3896 = vsel %vm1475, %v3865, 0.0
        %v3897 = vsel %vm1476, %v3849, 0.0
        %v3898 = vmax.f32 %v3770, %v3866
        %v3899 = vmax.f32 %v3771, %v3867
        %v3900 = vmax.f32 %v3772, %v3868
        %v3901 = vmax.f32 %v3773, %v3869
        %v3902 = vmax.f32 %v3774, %v3870
        %v3903 = vmax.f32 %v3775, %v3871
        %v3904 = vmax.f32 %v3776, %v3872
        %v3905 = vmax.f32 %v3777, %v3873
        %v3906 = vmax.f32 %v3778, %v3874
        %v3907 = vmax.f32 %v3779, %v3875
        %v3908 = vmax.f32 %v3780, %v3876
        %v3909 = vmax.f32 %v3781, %v3877
        %v3910 = vmax.f32 %v3782, %v3878
        %v3911 = vmax.f32 %v3783, %v3879
        %v3912 = vmax.f32 %v3784, %v3880
        %v3913 = vmax.f32 %v3785, %v3881
        %v3914 = vmax.f32 %v3786, %v3882
        %v3915 = vmax.f32 %v3787, %v3883
        %v3916 = vmax.f32 %v3788, %v3884
        %v3917 = vmax.f32 %v3789, %v3885
        %v3918 = vmax.f32 %v3790, %v3886
        %v3919 = vmax.f32 %v3791, %v3887
        %v3920 = vmax.f32 %v3792, %v3888
        %v3921 = vmax.f32 %v3793, %v3889
        %v3922 = vmax.f32 %v3794, %v3890
        %v3923 = vmax.f32 %v3795, %v3891
        %v3924 = vmax.f32 %v3796, %v3892
        %v3925 = vmax.f32 %v3797, %v3893
        %v3926 = vmax.f32 %v3798, %v3894
        %v3927 = vmax.f32 %v3799, %v3895
        %v3928 = vmax.f32 %v3800, %v3896
        %v3929 = vmax.f32 %v3801, %v3897
        %v3930 = vmax.f32 %v3674, %v3898
        %v3931 = vmax.f32 %v3675, %v3899
        %v3932 = vmax.f32 %v3676, %v3900
        %v3933 = vmax.f32 %v3677, %v3901
        %v3934 = vmax.f32 %v3678, %v3902
        %v3935 = vmax.f32 %v3679, %v3903
        %v3936 = vmax.f32 %v3680, %v3904
        %v3937 = vmax.f32 %v3681, %v3905
        %v3938 = vmax.f32 %v3682, %v3906
        %v3939 = vmax.f32 %v3683, %v3907
        %v3940 = vmax.f32 %v3684, %v3908
        %v3941 = vmax.f32 %v3685, %v3909
        %v3942 = vmax.f32 %v3686, %v3910
        %v3943 = vmax.f32 %v3687, %v3911
        %v3944 = vmax.f32 %v3688, %v3912
        %v3945 = vmax.f32 %v3689, %v3913
        %v3946 = vmax.f32 %v3690, %v3914
        %v3947 = vmax.f32 %v3691, %v3915
        %v3948 = vmax.f32 %v3692, %v3916
        %v3949 = vmax.f32 %v3693, %v3917
        %v3950 = vmax.f32 %v3694, %v3918
        %v3951 = vmax.f32 %v3695, %v3919
        %v3952 = vmax.f32 %v3696, %v3920
        %v3953 = vmax.f32 %v3697, %v3921
        %v3954 = vmax.f32 %v3698, %v3922
        %v3955 = vmax.f32 %v3699, %v3923
        %v3956 = vmax.f32 %v3700, %v3924
        %v3957 = vmax.f32 %v3701, %v3925
        %v3958 = vmax.f32 %v3702, %v3926
        %v3959 = vmax.f32 %v3703, %v3927
        %v3960 = vmax.f32 %v3704, %v3928
        %v3961 = vmax.f32 %v3705, %v3929
        %v3962 = vpack.c.bf16 %v3931, %v3930
        %v3963 = vpack.c.bf16 %v3933, %v3932
        %v3964 = vpack.c.bf16 %v3935, %v3934
        %v3965 = vpack.c.bf16 %v3937, %v3936
        %v3966 = vpack.c.bf16 %v3939, %v3938
        %v3967 = vpack.c.bf16 %v3941, %v3940
        %v3968 = vpack.c.bf16 %v3943, %v3942
        %v3969 = vpack.c.bf16 %v3945, %v3944
        %v3970 = vpack.c.bf16 %v3947, %v3946
        %v3971 = vpack.c.bf16 %v3949, %v3948
        %v3972 = vpack.c.bf16 %v3951, %v3950
        %v3973 = vpack.c.bf16 %v3953, %v3952
        %v3974 = vpack.c.bf16 %v3955, %v3954
        %v3975 = vpack.c.bf16 %v3957, %v3956
        %v3976 = vpack.c.bf16 %v3959, %v3958
        %v3977 = vpack.c.bf16 %v3961, %v3960
        %s3978 = scalar_lea.vmem [#allocation8], 192
        %v3979 = vld [vmem:[%s3978] sm:$0xf]
        %v3980 = vld [vmem:[%s3978 + $0x4] sm:$0xf]
        %v3981 = vld [vmem:[%s3978 + $0x8] sm:$0xf]
        %v3982 = vld [vmem:[%s3978 + $0xc] sm:$0xf]
        %v3983 = vld [vmem:[%s3978 + $0x10] sm:$0xf]
        %v3984 = vld [vmem:[%s3978 + $0x14] sm:$0xf]
        %v3985 = vld [vmem:[%s3978 + $0x18] sm:$0xf]
        %v3986 = vld [vmem:[%s3978 + $0x1c] sm:$0xf]
        %v3987 = vld [vmem:[%s3978 + $0x20] sm:$0xf]
        %v3988 = vld [vmem:[%s3978 + $0x24] sm:$0xf]
        %v3989 = vld [vmem:[%s3978 + $0x28] sm:$0xf]
        %v3990 = vld [vmem:[%s3978 + $0x2c] sm:$0xf]
        %v3991 = vld [vmem:[%s3978 + $0x30] sm:$0xf]
        %v3992 = vld [vmem:[%s3978 + $0x34] sm:$0xf]
        %v3993 = vld [vmem:[%s3978 + $0x38] sm:$0xf]
        %v3994 = vld [vmem:[%s3978 + $0x3c] sm:$0xf]
        %v4011 = vunpack.c.l.b16 %v3979
        %v4012 = vunpack.c.l.b16 %v3980
        %v4013 = vunpack.c.l.b16 %v3981
        %v4014 = vunpack.c.l.b16 %v3982
        %v4015 = vunpack.c.l.b16 %v3983
        %v4016 = vunpack.c.l.b16 %v3984
        %v4017 = vunpack.c.l.b16 %v3985
        %v4018 = vunpack.c.l.b16 %v3986
        %v4019 = vunpack.c.l.b16 %v3987
        %v4020 = vunpack.c.l.b16 %v3988
        %v4021 = vunpack.c.l.b16 %v3989
        %v4022 = vunpack.c.l.b16 %v3990
        %v4023 = vunpack.c.l.b16 %v3991
        %v4024 = vunpack.c.l.b16 %v3992
        %v4025 = vunpack.c.l.b16 %v3993
        %v4026 = vunpack.c.l.b16 %v3994
        %v4027 = vpack.c.b16 %v4012, %v4011
        %v4028 = vpack.c.b16 %v4014, %v4013
        %v4029 = vpack.c.b16 %v4016, %v4015
        %v4030 = vpack.c.b16 %v4018, %v4017
        %v4031 = vpack.c.b16 %v4020, %v4019
        %v4032 = vpack.c.b16 %v4022, %v4021
        %v4033 = vpack.c.b16 %v4024, %v4023
        %v4034 = vpack.c.b16 %v4026, %v4025
        %4043 = vmatprep.subr.bf16.mxu0 0
        %4044 = vmatpush1.bf16.msra.mxu0 %v4034
        %4045 = vmatprep.subr.bf16.mxu0 0
        %4046 = vmatpush1.bf16.msra.mxu0 %v4033
        %4047 = vmatprep.subr.bf16.mxu0 0
        %4048 = vmatpush1.bf16.msra.mxu0 %v4032
        %4049 = vmatprep.subr.bf16.mxu0 0
        %4050 = vmatpush1.bf16.msra.mxu0 %v4031
        %4051 = vmatprep.subr.bf16.mxu0 0
        %4052 = vmatpush1.bf16.msra.mxu0 %v4030
        %4053 = vmatprep.subr.bf16.mxu0 0
        %4054 = vmatpush1.bf16.msra.mxu0 %v4029
        %4055 = vmatprep.subr.bf16.mxu0 0
        %4056 = vmatpush1.bf16.msra.mxu0 %v4028
        %4057 = vmatprep.subr.bf16.mxu0 0
        %4058 = vmatpush1.bf16.msra.mxu0 %v4027
        %4059 = vmatprep.subr.bf16.mxu0 0
        %4060 = vmatpush2.bf16.msra.mxu0 0
        %4061 = vmatprep.subr.bf16.mxu0 0
        %4062 = vmatpush2.bf16.msra.mxu0 0
        %4063 = vmatprep.subr.bf16.mxu0 0
        %4064 = vmatpush2.bf16.msra.mxu0 0
        %4065 = vmatprep.subr.bf16.mxu0 0
        %4066 = vmatpush2.bf16.msra.mxu0 0
        %4067 = vmatprep.subr.bf16.mxu0 0
        %4068 = vmatpush2.bf16.msra.mxu0 0
        %4069 = vmatprep.subr.bf16.mxu0 0
        %4070 = vmatpush2.bf16.msra.mxu0 0
        %4071 = vmatprep.subr.bf16.mxu0 0
        %4072 = vmatpush2.bf16.msra.mxu0 0
        %4073 = vmatprep.subr.bf16.mxu0 0
        %4074 = vmatpush2.bf16.msra.mxu0 0
        %4075 = vmatprep.mubr.bf16.mxu0 0
        %4076 = vmatmul.mubr.bf16.gmra.mxu0 %v3962
        %v4077 = vpop.f32.mrf.mxu0
        %v4078 = vadd.f32 0.0, %v4077
        %v4079 = vpop.f32.mrf.mxu0
        %v4080 = vpop.f32.mrf.mxu0
        %v4081 = vadd.f32 0.0, %v4080
        %v4082 = vpop.f32.mrf.mxu0
        %4083 = vmatprep.mubr.bf16.mxu0 0
        %4084 = vmatmul.mubr.bf16.gmra.mxu0 %v3963
        %v4085 = vpop.f32.mrf.mxu0
        %v4086 = vadd.f32 0.0, %v4085
        %v4087 = vpop.f32.mrf.mxu0
        %v4088 = vpop.f32.mrf.mxu0
        %v4089 = vadd.f32 0.0, %v4088
        %v4090 = vpop.f32.mrf.mxu0
        %4091 = vmatprep.mubr.bf16.mxu0 0
        %4092 = vmatmul.mubr.bf16.gmra.mxu0 %v3964
        %v4093 = vpop.f32.mrf.mxu0
        %v4094 = vadd.f32 0.0, %v4093
        %v4095 = vpop.f32.mrf.mxu0
        %v4096 = vpop.f32.mrf.mxu0
        %v4097 = vadd.f32 0.0, %v4096
        %v4098 = vpop.f32.mrf.mxu0
        %4099 = vmatprep.mubr.bf16.mxu0 0
        %4100 = vmatmul.mubr.bf16.gmra.mxu0 %v3965
        %v4101 = vpop.f32.mrf.mxu0
        %v4102 = vadd.f32 0.0, %v4101
        %v4103 = vpop.f32.mrf.mxu0
        %v4104 = vpop.f32.mrf.mxu0
        %v4105 = vadd.f32 0.0, %v4104
        %v4106 = vpop.f32.mrf.mxu0
        %4107 = vmatprep.mubr.bf16.mxu0 0
        %4108 = vmatmul.mubr.bf16.gmra.mxu0 %v3966
        %v4109 = vpop.f32.mrf.mxu0
        %v4110 = vadd.f32 0.0, %v4109
        %v4111 = vpop.f32.mrf.mxu0
        %v4112 = vpop.f32.mrf.mxu0
        %v4113 = vadd.f32 0.0, %v4112
        %v4114 = vpop.f32.mrf.mxu0
        %4115 = vmatprep.mubr.bf16.mxu0 0
        %4116 = vmatmul.mubr.bf16.gmra.mxu0 %v3967
        %v4117 = vpop.f32.mrf.mxu0
        %v4118 = vadd.f32 0.0, %v4117
        %v4119 = vpop.f32.mrf.mxu0
        %v4120 = vpop.f32.mrf.mxu0
        %v4121 = vadd.f32 0.0, %v4120
        %v4122 = vpop.f32.mrf.mxu0
        %4123 = vmatprep.mubr.bf16.mxu0 0
        %4124 = vmatmul.mubr.bf16.gmra.mxu0 %v3968
        %v4125 = vpop.f32.mrf.mxu0
        %v4126 = vadd.f32 0.0, %v4125
        %v4127 = vpop.f32.mrf.mxu0
        %v4128 = vpop.f32.mrf.mxu0
        %v4129 = vadd.f32 0.0, %v4128
        %v4130 = vpop.f32.mrf.mxu0
        %4131 = vmatprep.mubr.bf16.mxu0 0
        %4132 = vmatmul.mubr.bf16.gmra.mxu0 %v3969
        %v4133 = vpop.f32.mrf.mxu0
        %v4134 = vadd.f32 0.0, %v4133
        %v4135 = vpop.f32.mrf.mxu0
        %v4136 = vpop.f32.mrf.mxu0
        %v4137 = vadd.f32 0.0, %v4136
        %v4138 = vpop.f32.mrf.mxu0
        %4139 = vmatprep.mubr.bf16.mxu0 0
        %4140 = vmatmul.mubr.bf16.gmra.mxu0 %v3970
        %v4141 = vpop.f32.mrf.mxu0
        %v4142 = vadd.f32 0.0, %v4141
        %v4143 = vpop.f32.mrf.mxu0
        %v4144 = vpop.f32.mrf.mxu0
        %v4145 = vadd.f32 0.0, %v4144
        %v4146 = vpop.f32.mrf.mxu0
        %4147 = vmatprep.mubr.bf16.mxu0 0
        %4148 = vmatmul.mubr.bf16.gmra.mxu0 %v3971
        %v4149 = vpop.f32.mrf.mxu0
        %v4150 = vadd.f32 0.0, %v4149
        %v4151 = vpop.f32.mrf.mxu0
        %v4152 = vpop.f32.mrf.mxu0
        %v4153 = vadd.f32 0.0, %v4152
        %v4154 = vpop.f32.mrf.mxu0
        %4155 = vmatprep.mubr.bf16.mxu0 0
        %4156 = vmatmul.mubr.bf16.gmra.mxu0 %v3972
        %v4157 = vpop.f32.mrf.mxu0
        %v4158 = vadd.f32 0.0, %v4157
        %v4159 = vpop.f32.mrf.mxu0
        %v4160 = vpop.f32.mrf.mxu0
        %v4161 = vadd.f32 0.0, %v4160
        %v4162 = vpop.f32.mrf.mxu0
        %4163 = vmatprep.mubr.bf16.mxu0 0
        %4164 = vmatmul.mubr.bf16.gmra.mxu0 %v3973
        %v4165 = vpop.f32.mrf.mxu0
        %v4166 = vadd.f32 0.0, %v4165
        %v4167 = vpop.f32.mrf.mxu0
        %v4168 = vpop.f32.mrf.mxu0
        %v4169 = vadd.f32 0.0, %v4168
        %v4170 = vpop.f32.mrf.mxu0
        %4171 = vmatprep.mubr.bf16.mxu0 0
        %4172 = vmatmul.mubr.bf16.gmra.mxu0 %v3974
        %v4173 = vpop.f32.mrf.mxu0
        %v4174 = vadd.f32 0.0, %v4173
        %v4175 = vpop.f32.mrf.mxu0
        %v4176 = vpop.f32.mrf.mxu0
        %v4177 = vadd.f32 0.0, %v4176
        %v4178 = vpop.f32.mrf.mxu0
        %4179 = vmatprep.mubr.bf16.mxu0 0
        %4180 = vmatmul.mubr.bf16.gmra.mxu0 %v3975
        %v4181 = vpop.f32.mrf.mxu0
        %v4182 = vadd.f32 0.0, %v4181
        %v4183 = vpop.f32.mrf.mxu0
        %v4184 = vpop.f32.mrf.mxu0
        %v4185 = vadd.f32 0.0, %v4184
        %v4186 = vpop.f32.mrf.mxu0
        %4187 = vmatprep.mubr.bf16.mxu0 0
        %4188 = vmatmul.mubr.bf16.gmra.mxu0 %v3976
        %v4189 = vpop.f32.mrf.mxu0
        %v4190 = vadd.f32 0.0, %v4189
        %v4191 = vpop.f32.mrf.mxu0
        %v4192 = vpop.f32.mrf.mxu0
        %v4193 = vadd.f32 0.0, %v4192
        %v4194 = vpop.f32.mrf.mxu0
        %4195 = vmatprep.mubr.bf16.mxu0 0
        %4196 = vmatmul.mubr.bf16.gmra.mxu0 %v3977
        %v4197 = vpop.f32.mrf.mxu0
        %v4198 = vadd.f32 0.0, %v4197
        %v4199 = vpop.f32.mrf.mxu0
        %v4200 = vpop.f32.mrf.mxu0
        %v4201 = vadd.f32 0.0, %v4200
        %v4202 = vpop.f32.mrf.mxu0
        %4203 = vdwg.mxu0
        %v4204 = vadd.f32 %v3098, %v4078
        %v4205 = vadd.f32 %v3099, %v4081
        %v4206 = vadd.f32 %v3100, %v4086
        %v4207 = vadd.f32 %v3101, %v4089
        %v4208 = vadd.f32 %v3102, %v4094
        %v4209 = vadd.f32 %v3103, %v4097
        %v4210 = vadd.f32 %v3104, %v4102
        %v4211 = vadd.f32 %v3105, %v4105
        %v4212 = vadd.f32 %v3106, %v4110
        %v4213 = vadd.f32 %v3107, %v4113
        %v4214 = vadd.f32 %v3108, %v4118
        %v4215 = vadd.f32 %v3109, %v4121
        %v4216 = vadd.f32 %v3110, %v4126
        %v4217 = vadd.f32 %v3111, %v4129
        %v4218 = vadd.f32 %v3112, %v4134
        %v4219 = vadd.f32 %v3113, %v4137
        %v4220 = vadd.f32 %v3114, %v4142
        %v4221 = vadd.f32 %v3115, %v4145
        %v4222 = vadd.f32 %v3116, %v4150
        %v4223 = vadd.f32 %v3117, %v4153
        %v4224 = vadd.f32 %v3118, %v4158
        %v4225 = vadd.f32 %v3119, %v4161
        %v4226 = vadd.f32 %v3120, %v4166
        %v4227 = vadd.f32 %v3121, %v4169
        %v4228 = vadd.f32 %v3122, %v4174
        %v4229 = vadd.f32 %v3123, %v4177
        %v4230 = vadd.f32 %v3124, %v4182
        %v4231 = vadd.f32 %v3125, %v4185
        %v4232 = vadd.f32 %v3126, %v4190
        %v4233 = vadd.f32 %v3127, %v4193
        %v4234 = vadd.f32 %v3128, %v4198
        %v4235 = vadd.f32 %v3129, %v4201
        %v4236 = vld [vmem:[%s4] sm:$0x1]
        %v4238 = vlaneseq
        %v4239 = vshrl.u32 %v4238, 7
        %v4240 = vsub.s32 0, %v4239
        %v4241 = vrot.slane %v4236, %v4240
        %v4243 = vadd.f32 %v4204, %v4241
        %v4244 = vadd.f32 %v4205, %v4241
        %v4245 = vadd.f32 %v4206, %v4241
        %v4246 = vadd.f32 %v4207, %v4241
        %v4247 = vadd.f32 %v4208, %v4241
        %v4248 = vadd.f32 %v4209, %v4241
        %v4249 = vadd.f32 %v4210, %v4241
        %v4250 = vadd.f32 %v4211, %v4241
        %v4251 = vadd.f32 %v4212, %v4241
        %v4252 = vadd.f32 %v4213, %v4241
        %v4253 = vadd.f32 %v4214, %v4241
        %v4254 = vadd.f32 %v4215, %v4241
        %v4255 = vadd.f32 %v4216, %v4241
        %v4256 = vadd.f32 %v4217, %v4241
        %v4257 = vadd.f32 %v4218, %v4241
        %v4258 = vadd.f32 %v4219, %v4241
        %v4259 = vadd.f32 %v4220, %v4241
        %v4260 = vadd.f32 %v4221, %v4241
        %v4261 = vadd.f32 %v4222, %v4241
        %v4262 = vadd.f32 %v4223, %v4241
        %v4263 = vadd.f32 %v4224, %v4241
        %v4264 = vadd.f32 %v4225, %v4241
        %v4265 = vadd.f32 %v4226, %v4241
        %v4266 = vadd.f32 %v4227, %v4241
        %v4267 = vadd.f32 %v4228, %v4241
        %v4268 = vadd.f32 %v4229, %v4241
        %v4269 = vadd.f32 %v4230, %v4241
        %v4270 = vadd.f32 %v4231, %v4241
        %v4271 = vadd.f32 %v4232, %v4241
        %v4272 = vadd.f32 %v4233, %v4241
        %v4273 = vadd.f32 %v4234, %v4241
        %v4274 = vadd.f32 %v4235, %v4241
        %v4275 = vmax.f32 %v4243, 0.0
        %v4276 = vmax.f32 %v4244, 0.0
        %v4277 = vmax.f32 %v4245, 0.0
        %v4278 = vmax.f32 %v4246, 0.0
        %v4279 = vmax.f32 %v4247, 0.0
        %v4280 = vmax.f32 %v4248, 0.0
        %v4281 = vmax.f32 %v4249, 0.0
        %v4282 = vmax.f32 %v4250, 0.0
        %v4283 = vmax.f32 %v4251, 0.0
        %v4284 = vmax.f32 %v4252, 0.0
        %v4285 = vmax.f32 %v4253, 0.0
        %v4286 = vmax.f32 %v4254, 0.0
        %v4287 = vmax.f32 %v4255, 0.0
        %v4288 = vmax.f32 %v4256, 0.0
        %v4289 = vmax.f32 %v4257, 0.0
        %v4290 = vmax.f32 %v4258, 0.0
        %v4291 = vmax.f32 %v4259, 0.0
        %v4292 = vmax.f32 %v4260, 0.0
        %v4293 = vmax.f32 %v4261, 0.0
        %v4294 = vmax.f32 %v4262, 0.0
        %v4295 = vmax.f32 %v4263, 0.0
        %v4296 = vmax.f32 %v4264, 0.0
        %v4297 = vmax.f32 %v4265, 0.0
        %v4298 = vmax.f32 %v4266, 0.0
        %v4299 = vmax.f32 %v4267, 0.0
        %v4300 = vmax.f32 %v4268, 0.0
        %v4301 = vmax.f32 %v4269, 0.0
        %v4302 = vmax.f32 %v4270, 0.0
        %v4303 = vmax.f32 %v4271, 0.0
        %v4304 = vmax.f32 %v4272, 0.0
        %v4305 = vmax.f32 %v4273, 0.0
        %v4306 = vmax.f32 %v4274, 0.0
        %4307 = vst [vmem:[%s271] sm:$0xff] %v4275
        %4308 = vst [vmem:[%s271 + $0x8] sm:$0xff] %v4276
        %4309 = vst [vmem:[%s271 + $0x10] sm:$0xff] %v4277
        %4310 = vst [vmem:[%s271 + $0x18] sm:$0xff] %v4278
        %4311 = vst [vmem:[%s271 + $0x20] sm:$0xff] %v4279
        %4312 = vst [vmem:[%s271 + $0x28] sm:$0xff] %v4280
        %4313 = vst [vmem:[%s271 + $0x30] sm:$0xff] %v4281
        %4314 = vst [vmem:[%s271 + $0x38] sm:$0xff] %v4282
        %4315 = vst [vmem:[%s271 + $0x40] sm:$0xff] %v4283
        %4316 = vst [vmem:[%s271 + $0x48] sm:$0xff] %v4284
        %4317 = vst [vmem:[%s271 + $0x50] sm:$0xff] %v4285
        %4318 = vst [vmem:[%s271 + $0x58] sm:$0xff] %v4286
        %4319 = vst [vmem:[%s271 + $0x60] sm:$0xff] %v4287
        %4320 = vst [vmem:[%s271 + $0x68] sm:$0xff] %v4288
        %4321 = vst [vmem:[%s271 + $0x70] sm:$0xff] %v4289
        %4322 = vst [vmem:[%s271 + $0x78] sm:$0xff] %v4290
        %4323 = vst [vmem:[%s271 + $0x80] sm:$0xff] %v4291
        %4324 = vst [vmem:[%s271 + $0x88] sm:$0xff] %v4292
        %4325 = vst [vmem:[%s271 + $0x90] sm:$0xff] %v4293
        %4326 = vst [vmem:[%s271 + $0x98] sm:$0xff] %v4294
        %4327 = vst [vmem:[%s271 + $0xa0] sm:$0xff] %v4295
        %4328 = vst [vmem:[%s271 + $0xa8] sm:$0xff] %v4296
        %4329 = vst [vmem:[%s271 + $0xb0] sm:$0xff] %v4297
        %4330 = vst [vmem:[%s271 + $0xb8] sm:$0xff] %v4298
        %4331 = vst [vmem:[%s271 + $0xc0] sm:$0xff] %v4299
        %4332 = vst [vmem:[%s271 + $0xc8] sm:$0xff] %v4300
        %4333 = vst [vmem:[%s271 + $0xd0] sm:$0xff] %v4301
        %4334 = vst [vmem:[%s271 + $0xd8] sm:$0xff] %v4302
        %4335 = vst [vmem:[%s271 + $0xe0] sm:$0xff] %v4303
        %4336 = vst [vmem:[%s271 + $0xe8] sm:$0xff] %v4304
        %4337 = vst [vmem:[%s271 + $0xf0] sm:$0xff] %v4305
        %4338 = vst [vmem:[%s271 + $0xf8] sm:$0xff] %v4306
        %s4339 = sand.u32 %s141, 1
        %s4340 = scalar_lea.sflag [#allocation5], %s4339
        %s4341 = sand.u32 %s141, 1
        %s4342 = smul.addr %s4341, 256
        %s4343 = scalar_lea.vmem [#allocation9], %s4342
        // Predicated region
        $region53: #{tpu_custom_call.1} parent=39 // pred_check
          %p4344 = pneg %p151
        $region54: #{tpu_custom_call.1} parent=39 // pred_check_branch
          %4346 = sbr.rel (%p4344) target = $region56
        $region55: #{tpu_custom_call.1} parent=39 // pred_region
          %s4348 = ssub.s32 4096, 4096
          %4349 = vsyncadd %s4340, %s4348
          %s4350 = smul.addr %s23, 32
          %s4351 = smul.addr %s4350, 128
          %s4352 = scalar_lea.hbm %s5, %s4351
          %s4353 = sshll.u32 %s4343, 4
          %s4354 = int_to_ptr.vmem [resolvable:$true] %s4353
          %4359 = dma.vmem_to_hbm [thread:$0]  %s4354, 4096, %s4352, %s4340, 128, 128, 8
        $region56: #{tpu_custom_call.1} parent=39 // pred_fallthru
          _
      $region40: #{tpu_custom_call.1} parent=5 // pred_fallthru
        _
      %p4360 = scmp.le.s32.totalorder 2, %s18
      // Predicated region
      $region57: #{tpu_custom_call.1} parent=5 // pred_check
        %p4361 = pneg %p4360
      $region58: #{tpu_custom_call.1} parent=5 // pred_check_branch
        %4363 = sbr.rel (%p4361) target = $region60
      $region59: #{tpu_custom_call.1} parent=5 // pred_region
        %s4364 = ssub.s32 %s18, 2
        // Predicated region
        $region61: #{tpu_custom_call.1} parent=59 // pred_check
          %p4365 = pneg %p157
        $region62: #{tpu_custom_call.1} parent=59 // pred_check_branch
          %4367 = sbr.rel (%p4365) target = $region64
        $region63: #{tpu_custom_call.1} parent=59 // pred_region
          %s4368 = sand.u32 %s142, 1
          %s4369 = scalar_lea.sflag [#allocation5], %s4368
          %s4370 = sand.u32 %s142, 1
          %s4371 = smul.addr %s4370, 256
          %s4372 = scalar_lea.vmem [#allocation9], %s4371
          %4373 = dma.done %s4369, 4096
        $region64: #{tpu_custom_call.1} parent=59 // pred_fallthru
          _
      $region60: #{tpu_custom_call.1} parent=5 // pred_fallthru
        _
    $region6: #{tpu_custom_call.1} parent=1 // loop_footer
      %s22 = sadd.s32 1, %s18
    $region7: #{tpu_custom_call.1} parent=1 // loop_footer_branch
      %17 = sbr.rel target = $region3
    $region8: #{tpu_custom_call.1} parent=1 // loop_exit
      _
    %4374 = vsyncpa [#allocation4], 1
    %s4375 = scalar_lea.sflag [#allocation4], 1
    %4376 = vsyncpa %s4375, 1
    %4377 = vsyncpa [#allocation7], 1
    %4378 = vsyncpa [#allocation5], 1
    %s4379 = scalar_lea.sflag [#allocation5], 1
    %4380 = vsyncpa %s4379, 1

</llo_original>
